<compile_context>
chip_gen: v7x
topology: tpu7x:2x2x1
jax: 0.10.0
libtpu: 0.0.40
codegen_flags: <defaults>
</compile_context>

<pallas_src>
import math
import numpy as np
import jax
import jax.numpy as jnp
from jax.experimental import pallas as pl
from jax.experimental.pallas import tpu as pltpu

# ----------------------------- small-config hyperparams -----------------------------
IMG_SIZE = 16
PATCH = 4
IN_CHANS = 3
EMBED_DIM = 32
DEPTH = 2
NUM_HEADS = 4
DEC_EMBED_DIM = 16
DEC_DEPTH = 1
DEC_NUM_HEADS = 4
MLP_RATIO = 4.0
MASK_RATIO = 0.75
NORM_PIX_LOSS = False
BATCH = 2

GRID = IMG_SIZE // PATCH               # 4
NUM_PATCHES = GRID * GRID              # 16
PATCH_DIM = IN_CHANS * PATCH * PATCH   # 48

LN_EPS = 1e-6                          # reference MAE uses partial(nn.LayerNorm, eps=1e-6)

VMEM_SPEC = pl.BlockSpec(memory_space=pltpu.MemorySpace.VMEM)


# ----------------------------- sincos positional embedding --------------------------
def _sincos_1d(embed_dim, pos):
    omega = np.arange(embed_dim // 2, dtype=np.float64)
    omega /= embed_dim / 2.0
    omega = 1.0 / 10000 ** omega
    pos = pos.reshape(-1)
    out = np.einsum("m,d->md", pos, omega)
    return np.concatenate([np.sin(out), np.cos(out)], axis=1)


def get_2d_sincos_pos_embed(embed_dim, grid_size, cls_token=False):
    grid_h = np.arange(grid_size, dtype=np.float32)
    grid_w = np.arange(grid_size, dtype=np.float32)
    grid = np.meshgrid(grid_w, grid_h)
    grid = np.stack(grid, axis=0).reshape([2, 1, grid_size, grid_size])
    emb_h = _sincos_1d(embed_dim // 2, grid[0])
    emb_w = _sincos_1d(embed_dim // 2, grid[1])
    pos = np.concatenate([emb_h, emb_w], axis=1)
    if cls_token:
        pos = np.concatenate([np.zeros([1, embed_dim]), pos], axis=0)
    return pos.astype(np.float32)


# ----------------------------- in-kernel math helpers --------------------------------
def _layernorm(x, w, b, eps=LN_EPS):
    mu = jnp.mean(x, axis=-1, keepdims=True)
    xc = x - mu
    var = jnp.mean(xc * xc, axis=-1, keepdims=True)
    return xc * jax.lax.rsqrt(var + eps) * w + b


def _gelu_exact(x):
    # nn.GELU default (erf-based)
    return 0.5 * x * (1.0 + jax.lax.erf(x * 0.7071067811865476))


def _softmax_last(x):
    m = jnp.max(x, axis=-1, keepdims=True)
    e = jnp.exp(x - m)
    return e * pl.reciprocal(jnp.sum(e, axis=-1, keepdims=True), approx=True)


def _block(x, ln1w, ln1b, qkvw, qkvb, pjw_h, pjb, ln2w, ln2b,
           f1w, f1b, f2w, f2b, num_heads):
    """One pre-LN transformer block. pjw_h is the proj weight reshaped [H, hd, dim]
    so the output projection is folded per head (no concat / no unaligned slices).
    The attention scale is pre-baked into the Q columns of qkvw/qkvb at init."""
    T, dim = x.shape
    hd = dim // num_heads

    # --- attention branch ---
    h = _layernorm(x, ln1w, ln1b)
    qkv = jnp.dot(h, qkvw, preferred_element_type=jnp.float32) + qkvb    # [T, 3*dim]
    attn = jnp.zeros((T, dim), jnp.float32)
    for i in range(num_heads):
        q = qkv[:, i * hd:(i + 1) * hd]
        k = qkv[:, dim + i * hd: dim + (i + 1) * hd]
        v = qkv[:, 2 * dim + i * hd: 2 * dim + (i + 1) * hd]
        s = jnp.dot(q, k.T, preferred_element_type=jnp.float32)          # [T, T]
        p = _softmax_last(s)
        ho = jnp.dot(p, v, preferred_element_type=jnp.float32)           # [T, hd]
        attn = attn + jnp.dot(ho, pjw_h[i], preferred_element_type=jnp.float32)
    x = x + attn + pjb

    # --- MLP branch ---
    h = _layernorm(x, ln2w, ln2b)
    h = jnp.dot(h, f1w, preferred_element_type=jnp.float32) + f1b
    h = _gelu_exact(h)
    h = jnp.dot(h, f2w, preferred_element_type=jnp.float32) + f2b
    return x + h


# ----------------------------- BlockSpec helpers --------------------------------------
def _stacked_spec(shape):
    """Per-layer weight array with leading depth axis: select layer `d` per grid step."""
    nd = len(shape)
    blk = (1,) + tuple(shape[1:])
    return pl.BlockSpec(blk, lambda b, d: (d,) + (0,) * (nd - 1))


def _const_spec(shape):
    """Full-array input, same block on every grid step."""
    nd = len(shape)
    return pl.BlockSpec(tuple(shape), lambda b, d: (0,) * nd)


# ----------------------------- Kernel A: patch embed + pos ----------------------------
def pallas_patch_embed(xp, w, b, pos):
    """xp: [B, L, PATCH_DIM]; pos: [1, L, E] -> tokens [B, L, E]."""
    B, L, _ = xp.shape
    E = w.shape[1]

    def kernel(x_ref, w_ref, b_ref, pos_ref, o_ref):
        wv = w_ref[...]
        bias = b_ref[...] + pos_ref[0]                      # [L, E]
        for bb in range(B):                                  # B is tiny; unrolled
            o_ref[bb] = (jnp.dot(x_ref[bb], wv, preferred_element_type=jnp.float32)
                         + bias).astype(o_ref.dtype)

    return pl.pallas_call(
        kernel,
        out_shape=jax.ShapeDtypeStruct((B, L, E), xp.dtype),
        in_specs=[VMEM_SPEC, VMEM_SPEC, VMEM_SPEC, VMEM_SPEC],
        out_specs=VMEM_SPEC,
    )(xp, w, b, pos)


# ------------------ Kernel B: fused encoder (blocks + norm + decoder_embed) -----------
def pallas_encoder(x, blocks, norm_w, norm_b, dew, deb, num_heads):
    """x: [B, T, E] -> decoder-embedded latent [B, T, Ed]. All DEPTH blocks + final LN
    + decoder_embed in ONE pallas_call; activation stays resident in VMEM across depth."""
    B, T, E = x.shape
    depth = blocks[0].shape[0]
    Ed = dew.shape[1]

    def kernel(x_ref, l1w, l1b, qkw, qkb, pjw, pjb, l2w, l2b,
               f1w, f1b, f2w, f2b, nw, nb, dw, db, o_ref, acc_ref):
        d = pl.program_id(1)

        @pl.when(d == 0)
        def _():
            acc_ref[...] = x_ref[...]

        x_new = _block(acc_ref[0], l1w[0], l1b[0], qkw[0], qkb[0], pjw[0], pjb[0],
                       l2w[0], l2b[0], f1w[0], f1b[0], f2w[0], f2b[0], num_heads)
        acc_ref[0] = x_new

        @pl.when(d == depth - 1)
        def _():
            h = _layernorm(x_new, nw[...], nb[...])
            o_ref[0] = (jnp.dot(h, dw[...], preferred_element_type=jnp.float32)
                        + db[...]).astype(o_ref.dtype)

    in_specs = [pl.BlockSpec((1, T, E), lambda b, d: (b, 0, 0))]
    in_specs += [_stacked_spec(a.shape) for a in blocks]
    in_specs += [_const_spec(a.shape) for a in (norm_w, norm_b, dew, deb)]

    return pl.pallas_call(
        kernel,
        grid=(B, depth),
        out_shape=jax.ShapeDtypeStruct((B, T, Ed), x.dtype),
        in_specs=in_specs,
        out_specs=pl.BlockSpec((1, T, Ed), lambda b, d: (b, 0, 0)),
        scratch_shapes=[pltpu.VMEM((1, T, E), jnp.float32)],
        compiler_params=pltpu.CompilerParams(
            dimension_semantics=("parallel", "arbitrary")),
    )(x, *blocks, norm_w, norm_b, dew, deb)


# ------ Kernel C: fused decoder (pos + blocks + norm + pred + masked-MSE partials) -----
def pallas_decoder(x, pos, blocks, norm_w, norm_b, predw, predb, target, mask_col,
                   num_heads, norm_pix_loss):
    """x: [B, L+1, Ed]; returns (pred [B, L, P], num [B,1,1], den [B,1,1])."""
    B, T, Ed = x.shape
    depth = blocks[0].shape[0]
    L, P = target.shape[1], target.shape[2]

    def kernel(x_ref, pos_ref, l1w, l1b, qkw, qkb, pjw, pjb, l2w, l2b,
               f1w, f1b, f2w, f2b, nw, nb, pw, pb, tgt_ref, msk_ref,
               pred_ref, num_ref, den_ref, acc_ref):
        d = pl.program_id(1)

        @pl.when(d == 0)
        def _():
            acc_ref[...] = x_ref[...] + pos_ref[...]

        x_new = _block(acc_ref[0], l1w[0], l1b[0], qkw[0], qkb[0], pjw[0], pjb[0],
                       l2w[0], l2b[0], f1w[0], f1b[0], f2w[0], f2b[0], num_heads)
        acc_ref[0] = x_new

        @pl.when(d == depth - 1)
        def _():
            toks = x_new[1:, :]                               # drop cls token -> [L, Ed]
            h = _layernorm(toks, nw[...], nb[...])
            pr = jnp.dot(h, pw[...], preferred_element_type=jnp.float32) + pb[...]  # [L, P]
            pred_ref[0] = pr.astype(pred_ref.dtype)

            tgt = tgt_ref[0]                                  # [L, P]
            if norm_pix_loss:
                mean = jnp.mean(tgt, axis=-1, keepdims=True)
                var = jnp.sum((tgt - mean) ** 2, axis=-1, keepdims=True) / (P - 1)
                tgt = (tgt - mean) * jax.lax.rsqrt(var + 1e-6)
            diff = pr - tgt
            per = jnp.mean(diff * diff, axis=-1, keepdims=True)   # [L, 1]
            m = msk_ref[0]                                        # [L, 1]
            num_ref[0] = jnp.sum(per * m, axis=(0, 1), keepdims=True)
            den_ref[0] = jnp.sum(m, axis=(0, 1), keepdims=True)

    in_specs = [pl.BlockSpec((1, T, Ed), lambda b, d: (b, 0, 0)),
                _const_spec(pos.shape)]
    in_specs += [_stacked_spec(a.shape) for a in blocks]
    in_specs += [_const_spec(a.shape) for a in (norm_w, norm_b, predw, predb)]
    in_specs += [pl.BlockSpec((1, L, P), lambda b, d: (b, 0, 0)),
                 pl.BlockSpec((1, L, 1), lambda b, d: (b, 0, 0))]

    out_shape = (jax.ShapeDtypeStruct((B, L, P), x.dtype),
                 jax.ShapeDtypeStruct((B, 1, 1), jnp.float32),
                 jax.ShapeDtypeStruct((B, 1, 1), jnp.float32))
    out_specs = (pl.BlockSpec((1, L, P), lambda b, d: (b, 0, 0)),
                 pl.BlockSpec((1, 1, 1), lambda b, d: (b, 0, 0)),
                 pl.BlockSpec((1, 1, 1), lambda b, d: (b, 0, 0)))

    return pl.pallas_call(
        kernel,
        grid=(B, depth),
        out_shape=out_shape,
        in_specs=in_specs,
        out_specs=out_specs,
        scratch_shapes=[pltpu.VMEM((1, T, Ed), jnp.float32)],
        compiler_params=pltpu.CompilerParams(
            dimension_semantics=("parallel", "arbitrary")),
    )(x, pos, *blocks, norm_w, norm_b, predw, predb, target, mask_col)


# ----------------------------- parameter init ----------------------------------------
def _xavier(key, fan_in, fan_out):
    limit = math.sqrt(6.0 / (fan_in + fan_out))
    return jax.random.uniform(key, (fan_in, fan_out), jnp.float32, -limit, limit)


def _init_blocks(key, depth, dim, num_heads, mlp_ratio):
    """Init `depth` transformer blocks, stacked on a leading depth axis (kernel layout)."""
    hidden = int(dim * mlp_ratio)
    head_dim = dim // num_heads
    scale = head_dim ** -0.5
    keys = jax.random.split(key, depth * 4)

    qkvw = jnp.stack([_xavier(keys[4 * i + 0], dim, 3 * dim) for i in range(depth)])
    projw = jnp.stack([_xavier(keys[4 * i + 1], dim, dim) for i in range(depth)])
    fc1w = jnp.stack([_xavier(keys[4 * i + 2], dim, hidden) for i in range(depth)])
    fc2w = jnp.stack([_xavier(keys[4 * i + 3], hidden, dim) for i in range(depth)])

    # Pre-bake the attention scale (head_dim**-0.5) into the Q columns of qkv weight/bias.
    col_scale = jnp.where(jnp.arange(3 * dim) < dim, scale, 1.0).astype(jnp.float32)
    qkvw = qkvw * col_scale[None, None, :]
    qkvb = jnp.zeros((depth, 1, 3 * dim), jnp.float32) * col_scale[None, None, :]

    # Proj weight reshaped [depth, H, hd, dim] so the output projection folds per head.
    projw_h = projw.reshape(depth, num_heads, head_dim, dim)

    return (
        jnp.ones((depth, 1, dim), jnp.float32),    # ln1 weight
        jnp.zeros((depth, 1, dim), jnp.float32),   # ln1 bias
        qkvw,                                      # qkv weight (q-cols pre-scaled)
        qkvb,                                      # qkv bias
        projw_h,                                   # proj weight per head
        jnp.zeros((depth, 1, dim), jnp.float32),   # proj bias
        jnp.ones((depth, 1, dim), jnp.float32),    # ln2 weight
        jnp.zeros((depth, 1, dim), jnp.float32),   # ln2 bias
        fc1w,
        jnp.zeros((depth, 1, hidden), jnp.float32),
        fc2w,
        jnp.zeros((depth, 1, dim), jnp.float32),
    )


def init_params(key):
    keys = jax.random.split(key, 7)
    k_patch, k_cls, k_mask, k_enc, k_dec, k_de, k_dp = keys
    params = {}
    params["patch_w"] = _xavier(k_patch, PATCH_DIM, EMBED_DIM)    # conv weight flattened (c,i,j)->E
    params["patch_b"] = jnp.zeros((1, EMBED_DIM), jnp.float32)
    params["cls_token"] = 0.02 * jax.random.normal(k_cls, (1, 1, EMBED_DIM), jnp.float32)
    params["mask_token"] = 0.02 * jax.random.normal(k_mask, (1, 1, DEC_EMBED_DIM), jnp.float32)
    params["pos_embed"] = jnp.asarray(
        get_2d_sincos_pos_embed(EMBED_DIM, GRID, cls_token=True))[None]        # (1, L+1, E)
    params["dec_pos_embed"] = jnp.asarray(
        get_2d_sincos_pos_embed(DEC_EMBED_DIM, GRID, cls_token=True))[None]     # (1, L+1, Ed)

    params["enc_blocks"] = _init_blocks(k_enc, DEPTH, EMBED_DIM, NUM_HEADS, MLP_RATIO)
    params["enc_norm_w"] = jnp.ones((1, EMBED_DIM), jnp.float32)
    params["enc_norm_b"] = jnp.zeros((1, EMBED_DIM), jnp.float32)

    params["dec_embed_w"] = _xavier(k_de, EMBED_DIM, DEC_EMBED_DIM)
    params["dec_embed_b"] = jnp.zeros((1, DEC_EMBED_DIM), jnp.float32)
    params["dec_blocks"] = _init_blocks(k_dec, DEC_DEPTH, DEC_EMBED_DIM, DEC_NUM_HEADS, MLP_RATIO)
    params["dec_norm_w"] = jnp.ones((1, DEC_EMBED_DIM), jnp.float32)
    params["dec_norm_b"] = jnp.zeros((1, DEC_EMBED_DIM), jnp.float32)
    params["dec_pred_w"] = _xavier(k_dp, DEC_EMBED_DIM, PATCH_DIM)
    params["dec_pred_b"] = jnp.zeros((1, PATCH_DIM), jnp.float32)
    return params


# ----------------------------- MAE forward pass ---------------------------------------
def mae_forward(params, imgs, noise_key, mask_ratio=MASK_RATIO):
    B = imgs.shape[0]
    p = PATCH
    gh = gw = GRID
    L = NUM_PATCHES

    # ---------------- encoder ----------------
    # patch extraction in conv-weight order (c, i, j), then fused embed + pos (Kernel A)
    xp = imgs.reshape(B, IN_CHANS, gh, p, gw, p)
    xp = jnp.transpose(xp, (0, 2, 4, 1, 3, 5)).reshape(B, L, PATCH_DIM)
    tokens = pallas_patch_embed(xp, params["patch_w"], params["patch_b"],
                                params["pos_embed"][:, 1:, :])          # [B, L, E]

    # random masking — data-dependent argsort / gathers stay in plain JAX
    # TODO(synk): per-sample argsort + gather (random masking) has no clean Pallas
    #             equivalent at these shapes; kept in XLA.
    len_keep = int(L * (1 - mask_ratio))
    noise = jax.random.uniform(noise_key, (B, L))
    ids_shuffle = jnp.argsort(noise, axis=1)
    ids_restore = jnp.argsort(ids_shuffle, axis=1)
    ids_keep = ids_shuffle[:, :len_keep]
    x_masked = jnp.take_along_axis(tokens, ids_keep[:, :, None], axis=1)
    mask = jnp.ones((B, L), jnp.float32).at[:, :len_keep].set(0.0)
    mask = jnp.take_along_axis(mask, ids_restore, axis=1)

    cls_tok = params["cls_token"] + params["pos_embed"][:, :1, :]
    x = jnp.concatenate([jnp.broadcast_to(cls_tok, (B, 1, EMBED_DIM)), x_masked], axis=1)

    # fused encoder blocks + final LN + decoder_embed (Kernel B)
    d_small = pallas_encoder(x, params["enc_blocks"],
                             params["enc_norm_w"], params["enc_norm_b"],
                             params["dec_embed_w"], params["dec_embed_b"],
                             NUM_HEADS)                                  # [B, 1+keep, Ed]

    # ---------------- decoder token assembly (JAX glue) ----------------
    mask_tokens = jnp.broadcast_to(params["mask_token"], (B, L - len_keep, DEC_EMBED_DIM))
    x_ = jnp.concatenate([d_small[:, 1:, :], mask_tokens], axis=1)       # [B, L, Ed]
    x_ = jnp.take_along_axis(x_, ids_restore[:, :, None], axis=1)
    d_in = jnp.concatenate([d_small[:, :1, :], x_], axis=1)              # [B, L+1, Ed]

    # patchify target in (p, q, c) order, matching torch's 'nchpwq->nhwpqc'
    target = imgs.reshape(B, IN_CHANS, gh, p, gw, p)
    target = jnp.transpose(target, (0, 2, 4, 3, 5, 1)).reshape(B, L, PATCH_DIM)

    # fused decoder + dec_pred + masked-MSE partials (Kernel C)
    pred, num, den = pallas_decoder(d_in, params["dec_pos_embed"], params["dec_blocks"],
                                    params["dec_norm_w"], params["dec_norm_b"],
                                    params["dec_pred_w"], params["dec_pred_b"],
                                    target, mask[:, :, None],
                                    DEC_NUM_HEADS, NORM_PIX_LOSS)
    loss = jnp.sum(num) / jnp.sum(den)
    return loss, pred, mask


# ----------------------------- main ----------------------------------------------------
if __name__ == "__main__":
    key = jax.random.PRNGKey(0)
    pkey, ikey, nkey = jax.random.split(key, 3)
    params = init_params(pkey)
    imgs = jax.random.normal(ikey, (BATCH, IN_CHANS, IMG_SIZE, IMG_SIZE), jnp.float32)

    fwd = jax.jit(mae_forward)
    loss, pred, mask = fwd(params, imgs, nkey)
    jax.block_until_ready((loss, pred, mask))

    assert pred.shape == (BATCH, NUM_PATCHES, PATCH_DIM)
    assert mask.shape == (BATCH, NUM_PATCHES)
    assert loss.shape == ()
    assert bool(jnp.isfinite(loss))
    print("KERNEL_OK")
</pallas_src>

<mosaic_0001>
module attributes {stable_mosaic.version = 11 : i64} {
  func.func @kernel(%arg0: memref<2x16x48xf32, #tpu.memory_space<vmem>>, %arg1: memref<48x32xf32, #tpu.memory_space<vmem>>, %arg2: memref<1x32xf32, #tpu.memory_space<vmem>>, %arg3: memref<1x16x32xf32, #tpu.memory_space<vmem>>, %arg4: memref<2x16x32xf32, #tpu.memory_space<vmem>>) attributes {dimension_semantics = [], scalar_prefetch = 0 : i64, scratch_operands = 0 : i64, tpu.core_type = #tpu.core_type<tc>} {
    %c0 = arith.constant 0 : index
    %c0_0 = arith.constant 0 : index
    %0 = vector.load %arg1[%c0, %c0_0] : memref<48x32xf32, #tpu.memory_space<vmem>>, vector<48x32xf32>
    %c0_1 = arith.constant 0 : index
    %c0_2 = arith.constant 0 : index
    %1 = vector.load %arg2[%c0_1, %c0_2] : memref<1x32xf32, #tpu.memory_space<vmem>>, vector<1x32xf32>
    %c0_3 = arith.constant 0 : index
    %c0_4 = arith.constant 0 : index
    %c0_5 = arith.constant 0 : index
    %2 = vector.load %arg3[%c0_3, %c0_4, %c0_5] : memref<1x16x32xf32, #tpu.memory_space<vmem>>, vector<1x16x32xf32>
    %3 = vector.shape_cast %2 : vector<1x16x32xf32> to vector<16x32xf32>
    %4 = vector.broadcast %1 : vector<1x32xf32> to vector<16x32xf32>
    %5 = arith.addf %4, %3 : vector<16x32xf32>
    %c0_6 = arith.constant 0 : index
    %c0_7 = arith.constant 0 : index
    %c0_8 = arith.constant 0 : index
    %6 = vector.load %arg0[%c0_6, %c0_7, %c0_8] : memref<2x16x48xf32, #tpu.memory_space<vmem>>, vector<1x16x48xf32>
    %7 = vector.shape_cast %6 : vector<1x16x48xf32> to vector<16x48xf32>
    %cst = arith.constant dense<0.000000e+00> : vector<16x32xf32>
    %8 = tpu.matmul %7, %0, %cst {dimension_numbers = #tpu.dot_dimension_numbers<[1], [0], [0], [1], [0, 0, 1, 1], [], []>} : vector<16x48xf32>, vector<48x32xf32>, vector<16x32xf32> -> vector<16x32xf32>
    %9 = arith.addf %8, %5 : vector<16x32xf32>
    %c0_9 = arith.constant 0 : index
    %c0_10 = arith.constant 0 : index
    %c0_11 = arith.constant 0 : index
    %10 = vector.load %arg4[%c0_9, %c0_10, %c0_11] : memref<2x16x32xf32, #tpu.memory_space<vmem>>, vector<1x16x32xf32>
    %11 = vector.shape_cast %10 : vector<1x16x32xf32> to vector<16x32xf32>
    %12 = vector.shape_cast %9 : vector<16x32xf32> to vector<1x16x32xf32>
    tpu.vector_store %arg4[%c0_9, %c0_10, %c0_11], %12 {strides = array<i32>} : memref<2x16x32xf32, #tpu.memory_space<vmem>>, vector<1x16x32xf32>,
    %c1 = arith.constant 1 : index
    %c0_12 = arith.constant 0 : index
    %c0_13 = arith.constant 0 : index
    %13 = vector.load %arg0[%c1, %c0_12, %c0_13] : memref<2x16x48xf32, #tpu.memory_space<vmem>>, vector<1x16x48xf32>
    %14 = vector.shape_cast %13 : vector<1x16x48xf32> to vector<16x48xf32>
    %cst_14 = arith.constant dense<0.000000e+00> : vector<16x32xf32>
    %15 = tpu.matmul %14, %0, %cst_14 {dimension_numbers = #tpu.dot_dimension_numbers<[1], [0], [0], [1], [0, 0, 1, 1], [], []>} : vector<16x48xf32>, vector<48x32xf32>, vector<16x32xf32> -> vector<16x32xf32>
    %16 = arith.addf %15, %5 : vector<16x32xf32>
    %c1_15 = arith.constant 1 : index
    %c0_16 = arith.constant 0 : index
    %c0_17 = arith.constant 0 : index
    %17 = vector.load %arg4[%c1_15, %c0_16, %c0_17] : memref<2x16x32xf32, #tpu.memory_space<vmem>>, vector<1x16x32xf32>
    %18 = vector.shape_cast %17 : vector<1x16x32xf32> to vector<16x32xf32>
    %19 = vector.shape_cast %16 : vector<16x32xf32> to vector<1x16x32xf32>
    tpu.vector_store %arg4[%c1_15, %c0_16, %c0_17], %19 {strides = array<i32>} : memref<2x16x32xf32, #tpu.memory_space<vmem>>, vector<1x16x32xf32>,
    return
  }
}

module attributes {stable_mosaic.version = 11 : i64} {
  func.func @kernel(%arg0: i32, %arg1: i32, %arg2: memref<1x5x32xf32, #tpu.memory_space<vmem>>, %arg3: memref<1x1x32xf32, #tpu.memory_space<vmem>>, %arg4: memref<1x1x32xf32, #tpu.memory_space<vmem>>, %arg5: memref<1x32x96xf32, #tpu.memory_space<vmem>>, %arg6: memref<1x1x96xf32, #tpu.memory_space<vmem>>, %arg7: memref<1x4x8x32xf32, #tpu.memory_space<vmem>>, %arg8: memref<1x1x32xf32, #tpu.memory_space<vmem>>, %arg9: memref<1x1x32xf32, #tpu.memory_space<vmem>>, %arg10: memref<1x1x32xf32, #tpu.memory_space<vmem>>, %arg11: memref<1x32x128xf32, #tpu.memory_space<vmem>>, %arg12: memref<1x1x128xf32, #tpu.memory_space<vmem>>, %arg13: memref<1x128x32xf32, #tpu.memory_space<vmem>>, %arg14: memref<1x1x32xf32, #tpu.memory_space<vmem>>, %arg15: memref<1x32xf32, #tpu.memory_space<vmem>>, %arg16: memref<1x32xf32, #tpu.memory_space<vmem>>, %arg17: memref<32x16xf32, #tpu.memory_space<vmem>>, %arg18: memref<1x16xf32, #tpu.memory_space<vmem>>, %arg19: memref<1x5x16xf32, #tpu.memory_space<vmem>>, %arg20: memref<1x5x32xf32, #tpu.memory_space<vmem>>) attributes {dimension_semantics = [#tpu.dimension_semantics<parallel>, #tpu.dimension_semantics<arbitrary>], iteration_bounds = array<i64: 2, 2>, scalar_prefetch = 0 : i64, scratch_operands = 1 : i64, tpu.core_type = #tpu.core_type<tc>, window_params = [{transform_indices = @transform_0, window_bounds = array<i64: 1, 5, 32>}, {transform_indices = @transform_1, window_bounds = array<i64: 1, 1, 32>}, {transform_indices = @transform_2, window_bounds = array<i64: 1, 1, 32>}, {transform_indices = @transform_3, window_bounds = array<i64: 1, 32, 96>}, {transform_indices = @transform_4, window_bounds = array<i64: 1, 1, 96>}, {transform_indices = @transform_5, window_bounds = array<i64: 1, 4, 8, 32>}, {transform_indices = @transform_6, window_bounds = array<i64: 1, 1, 32>}, {transform_indices = @transform_7, window_bounds = array<i64: 1, 1, 32>}, {transform_indices = @transform_8, window_bounds = array<i64: 1, 1, 32>}, {transform_indices = @transform_9, window_bounds = array<i64: 1, 32, 128>}, {transform_indices = @transform_10, window_bounds = array<i64: 1, 1, 128>}, {transform_indices = @transform_11, window_bounds = array<i64: 1, 128, 32>}, {transform_indices = @transform_12, window_bounds = array<i64: 1, 1, 32>}, {pipeline_mode = #tpu.pipeline_mode<synchronous>, transform_indices = @transform_13, window_bounds = array<i64: 1, 32>}, {pipeline_mode = #tpu.pipeline_mode<synchronous>, transform_indices = @transform_14, window_bounds = array<i64: 1, 32>}, {pipeline_mode = #tpu.pipeline_mode<synchronous>, transform_indices = @transform_15, window_bounds = array<i64: 32, 16>}, {pipeline_mode = #tpu.pipeline_mode<synchronous>, transform_indices = @transform_16, window_bounds = array<i64: 1, 16>}, {transform_indices = @transform_17, window_bounds = array<i64: 1, 5, 16>}]} {
    %c0_i32 = arith.constant 0 : i32
    %0 = arith.cmpi eq, %arg1, %c0_i32 : i32
    %1 = arith.extui %0 : i1 to i32
    %c0_i32_0 = arith.constant 0 : i32
    %2 = arith.cmpi ne, %1, %c0_i32_0 : i32
    scf.if %2 {
      %c0_80 = arith.constant 0 : index
      %c0_81 = arith.constant 0 : index
      %c0_82 = arith.constant 0 : index
      %177 = vector.load %arg2[%c0_80, %c0_81, %c0_82] : memref<1x5x32xf32, #tpu.memory_space<vmem>>, vector<1x5x32xf32>
      %c0_83 = arith.constant 0 : index
      %c0_84 = arith.constant 0 : index
      %c0_85 = arith.constant 0 : index
      %178 = vector.load %arg20[%c0_83, %c0_84, %c0_85] : memref<1x5x32xf32, #tpu.memory_space<vmem>>, vector<1x5x32xf32>
      tpu.vector_store %arg20[%c0_83, %c0_84, %c0_85], %177 {strides = array<i32>} : memref<1x5x32xf32, #tpu.memory_space<vmem>>, vector<1x5x32xf32>,
    } else {
    }
    %c0 = arith.constant 0 : index
    %c0_1 = arith.constant 0 : index
    %c0_2 = arith.constant 0 : index
    %3 = vector.load %arg20[%c0, %c0_1, %c0_2] : memref<1x5x32xf32, #tpu.memory_space<vmem>>, vector<1x5x32xf32>
    %4 = vector.shape_cast %3 : vector<1x5x32xf32> to vector<5x32xf32>
    %c0_3 = arith.constant 0 : index
    %c0_4 = arith.constant 0 : index
    %c0_5 = arith.constant 0 : index
    %5 = vector.load %arg3[%c0_3, %c0_4, %c0_5] : memref<1x1x32xf32, #tpu.memory_space<vmem>>, vector<1x1x32xf32>
    %6 = vector.shape_cast %5 : vector<1x1x32xf32> to vector<1x32xf32>
    %c0_6 = arith.constant 0 : index
    %c0_7 = arith.constant 0 : index
    %c0_8 = arith.constant 0 : index
    %7 = vector.load %arg4[%c0_6, %c0_7, %c0_8] : memref<1x1x32xf32, #tpu.memory_space<vmem>>, vector<1x1x32xf32>
    %8 = vector.shape_cast %7 : vector<1x1x32xf32> to vector<1x32xf32>
    %c0_9 = arith.constant 0 : index
    %c0_10 = arith.constant 0 : index
    %c0_11 = arith.constant 0 : index
    %9 = vector.load %arg5[%c0_9, %c0_10, %c0_11] : memref<1x32x96xf32, #tpu.memory_space<vmem>>, vector<1x32x96xf32>
    %10 = vector.shape_cast %9 : vector<1x32x96xf32> to vector<32x96xf32>
    %c0_12 = arith.constant 0 : index
    %c0_13 = arith.constant 0 : index
    %c0_14 = arith.constant 0 : index
    %11 = vector.load %arg6[%c0_12, %c0_13, %c0_14] : memref<1x1x96xf32, #tpu.memory_space<vmem>>, vector<1x1x96xf32>
    %12 = vector.shape_cast %11 : vector<1x1x96xf32> to vector<1x96xf32>
    %c0_15 = arith.constant 0 : index
    %c0_16 = arith.constant 0 : index
    %c0_17 = arith.constant 0 : index
    %c0_18 = arith.constant 0 : index
    %13 = vector.load %arg7[%c0_15, %c0_16, %c0_17, %c0_18] : memref<1x4x8x32xf32, #tpu.memory_space<vmem>>, vector<1x4x8x32xf32>
    %14 = vector.shape_cast %13 : vector<1x4x8x32xf32> to vector<4x8x32xf32>
    %c0_19 = arith.constant 0 : index
    %c0_20 = arith.constant 0 : index
    %c0_21 = arith.constant 0 : index
    %15 = vector.load %arg8[%c0_19, %c0_20, %c0_21] : memref<1x1x32xf32, #tpu.memory_space<vmem>>, vector<1x1x32xf32>
    %16 = vector.shape_cast %15 : vector<1x1x32xf32> to vector<1x32xf32>
    %c0_22 = arith.constant 0 : index
    %c0_23 = arith.constant 0 : index
    %c0_24 = arith.constant 0 : index
    %17 = vector.load %arg9[%c0_22, %c0_23, %c0_24] : memref<1x1x32xf32, #tpu.memory_space<vmem>>, vector<1x1x32xf32>
    %18 = vector.shape_cast %17 : vector<1x1x32xf32> to vector<1x32xf32>
    %c0_25 = arith.constant 0 : index
    %c0_26 = arith.constant 0 : index
    %c0_27 = arith.constant 0 : index
    %19 = vector.load %arg10[%c0_25, %c0_26, %c0_27] : memref<1x1x32xf32, #tpu.memory_space<vmem>>, vector<1x1x32xf32>
    %20 = vector.shape_cast %19 : vector<1x1x32xf32> to vector<1x32xf32>
    %c0_28 = arith.constant 0 : index
    %c0_29 = arith.constant 0 : index
    %c0_30 = arith.constant 0 : index
    %21 = vector.load %arg11[%c0_28, %c0_29, %c0_30] : memref<1x32x128xf32, #tpu.memory_space<vmem>>, vector<1x32x128xf32>
    %22 = vector.shape_cast %21 : vector<1x32x128xf32> to vector<32x128xf32>
    %c0_31 = arith.constant 0 : index
    %c0_32 = arith.constant 0 : index
    %c0_33 = arith.constant 0 : index
    %23 = vector.load %arg12[%c0_31, %c0_32, %c0_33] : memref<1x1x128xf32, #tpu.memory_space<vmem>>, vector<1x1x128xf32>
    %24 = vector.shape_cast %23 : vector<1x1x128xf32> to vector<1x128xf32>
    %c0_34 = arith.constant 0 : index
    %c0_35 = arith.constant 0 : index
    %c0_36 = arith.constant 0 : index
    %25 = vector.load %arg13[%c0_34, %c0_35, %c0_36] : memref<1x128x32xf32, #tpu.memory_space<vmem>>, vector<1x128x32xf32>
    %26 = vector.shape_cast %25 : vector<1x128x32xf32> to vector<128x32xf32>
    %c0_37 = arith.constant 0 : index
    %c0_38 = arith.constant 0 : index
    %c0_39 = arith.constant 0 : index
    %27 = vector.load %arg14[%c0_37, %c0_38, %c0_39] : memref<1x1x32xf32, #tpu.memory_space<vmem>>, vector<1x1x32xf32>
    %28 = vector.shape_cast %27 : vector<1x1x32xf32> to vector<1x32xf32>
    %cst = arith.constant dense<0.000000e+00> : vector<5xf32>
    %29 = vector.multi_reduction <add>, %4, %cst [1] : vector<5x32xf32> to vector<5xf32>
    %30 = vector.shape_cast %29 : vector<5xf32> to vector<5x1xf32>
    %cst_40 = arith.constant 3.200000e+01 : f32
    %31 = vector.broadcast %cst_40 : f32 to vector<5x1xf32>
    %32 = arith.divf %30, %31 : vector<5x1xf32>
    %33 = vector.broadcast %32 : vector<5x1xf32> to vector<5x32xf32>
    %34 = arith.subf %4, %33 : vector<5x32xf32>
    %35 = arith.mulf %34, %34 : vector<5x32xf32>
    %cst_41 = arith.constant dense<0.000000e+00> : vector<5xf32>
    %36 = vector.multi_reduction <add>, %35, %cst_41 [1] : vector<5x32xf32> to vector<5xf32>
    %37 = vector.shape_cast %36 : vector<5xf32> to vector<5x1xf32>
    %cst_42 = arith.constant 3.200000e+01 : f32
    %38 = vector.broadcast %cst_42 : f32 to vector<5x1xf32>
    %39 = arith.divf %37, %38 : vector<5x1xf32>
    %cst_43 = arith.constant 9.99999997E-7 : f32
    %40 = vector.broadcast %cst_43 : f32 to vector<5x1xf32>
    %41 = arith.addf %39, %40 : vector<5x1xf32>
    %42 = math.rsqrt %41 : vector<5x1xf32>
    %43 = vector.broadcast %42 : vector<5x1xf32> to vector<5x32xf32>
    %44 = arith.mulf %34, %43 : vector<5x32xf32>
    %45 = vector.broadcast %6 : vector<1x32xf32> to vector<5x32xf32>
    %46 = arith.mulf %44, %45 : vector<5x32xf32>
    %47 = vector.broadcast %8 : vector<1x32xf32> to vector<5x32xf32>
    %48 = arith.addf %46, %47 : vector<5x32xf32>
    %cst_44 = arith.constant dense<0.000000e+00> : vector<5x96xf32>
    %49 = tpu.matmul %48, %10, %cst_44 {dimension_numbers = #tpu.dot_dimension_numbers<[1], [0], [0], [1], [0, 0, 1, 1], [], []>} : vector<5x32xf32>, vector<32x96xf32>, vector<5x96xf32> -> vector<5x96xf32>
    %50 = vector.broadcast %12 : vector<1x96xf32> to vector<5x96xf32>
    %51 = arith.addf %49, %50 : vector<5x96xf32>
    %cst_45 = arith.constant 0.000000e+00 : f32
    %52 = vector.broadcast %cst_45 : f32 to vector<5x32xf32>
    %53 = vector.extract_strided_slice %51 {offsets = [0, 0], sizes = [5, 8], strides = [1, 1]} : vector<5x96xf32> to vector<5x8xf32>
    %54 = vector.extract_strided_slice %51 {offsets = [0, 32], sizes = [5, 8], strides = [1, 1]} : vector<5x96xf32> to vector<5x8xf32>
    %55 = vector.extract_strided_slice %51 {offsets = [0, 64], sizes = [5, 8], strides = [1, 1]} : vector<5x96xf32> to vector<5x8xf32>
    %56 = tpu.transpose %54, [1, 0] : vector<5x8xf32> -> vector<8x5xf32>
    %cst_46 = arith.constant dense<0.000000e+00> : vector<5x5xf32>
    %57 = tpu.matmul %53, %56, %cst_46 {dimension_numbers = #tpu.dot_dimension_numbers<[1], [0], [0], [1], [0, 0, 1, 1], [], []>} : vector<5x8xf32>, vector<8x5xf32>, vector<5x5xf32> -> vector<5x5xf32>
    %cst_47 = arith.constant dense<0xFF800000> : vector<5xf32>
    %58 = vector.multi_reduction <maximumf>, %57, %cst_47 [1] : vector<5x5xf32> to vector<5xf32>
    %59 = vector.shape_cast %58 : vector<5xf32> to vector<5x1xf32>
    %60 = vector.broadcast %59 : vector<5x1xf32> to vector<5x5xf32>
    %61 = arith.subf %57, %60 : vector<5x5xf32>
    %62 = math.exp %61 : vector<5x5xf32>
    %cst_48 = arith.constant dense<0.000000e+00> : vector<5xf32>
    %63 = vector.multi_reduction <add>, %62, %cst_48 [1] : vector<5x5xf32> to vector<5xf32>
    %64 = vector.shape_cast %63 : vector<5xf32> to vector<5x1xf32>
    %65 = tpu.reciprocal %64 {approx = true} : vector<5x1xf32> -> vector<5x1xf32>
    %66 = vector.broadcast %65 : vector<5x1xf32> to vector<5x5xf32>
    %67 = arith.mulf %62, %66 : vector<5x5xf32>
    %cst_49 = arith.constant dense<0.000000e+00> : vector<5x8xf32>
    %68 = tpu.matmul %67, %55, %cst_49 {dimension_numbers = #tpu.dot_dimension_numbers<[1], [0], [0], [1], [0, 0, 1, 1], [], []>} : vector<5x5xf32>, vector<5x8xf32>, vector<5x8xf32> -> vector<5x8xf32>
    %69 = vector.extract_strided_slice %14 {offsets = [0, 0, 0], sizes = [1, 8, 32], strides = [1, 1, 1]} : vector<4x8x32xf32> to vector<1x8x32xf32>
    %70 = vector.shape_cast %69 : vector<1x8x32xf32> to vector<8x32xf32>
    %cst_50 = arith.constant dense<0.000000e+00> : vector<5x32xf32>
    %71 = tpu.matmul %68, %70, %cst_50 {dimension_numbers = #tpu.dot_dimension_numbers<[1], [0], [0], [1], [0, 0, 1, 1], [], []>} : vector<5x8xf32>, vector<8x32xf32>, vector<5x32xf32> -> vector<5x32xf32>
    %72 = arith.addf %52, %71 : vector<5x32xf32>
    %73 = vector.extract_strided_slice %51 {offsets = [0, 8], sizes = [5, 8], strides = [1, 1]} : vector<5x96xf32> to vector<5x8xf32>
    %74 = vector.extract_strided_slice %51 {offsets = [0, 40], sizes = [5, 8], strides = [1, 1]} : vector<5x96xf32> to vector<5x8xf32>
    %75 = vector.extract_strided_slice %51 {offsets = [0, 72], sizes = [5, 8], strides = [1, 1]} : vector<5x96xf32> to vector<5x8xf32>
    %76 = tpu.transpose %74, [1, 0] : vector<5x8xf32> -> vector<8x5xf32>
    %cst_51 = arith.constant dense<0.000000e+00> : vector<5x5xf32>
    %77 = tpu.matmul %73, %76, %cst_51 {dimension_numbers = #tpu.dot_dimension_numbers<[1], [0], [0], [1], [0, 0, 1, 1], [], []>} : vector<5x8xf32>, vector<8x5xf32>, vector<5x5xf32> -> vector<5x5xf32>
    %cst_52 = arith.constant dense<0xFF800000> : vector<5xf32>
    %78 = vector.multi_reduction <maximumf>, %77, %cst_52 [1] : vector<5x5xf32> to vector<5xf32>
    %79 = vector.shape_cast %78 : vector<5xf32> to vector<5x1xf32>
    %80 = vector.broadcast %79 : vector<5x1xf32> to vector<5x5xf32>
    %81 = arith.subf %77, %80 : vector<5x5xf32>
    %82 = math.exp %81 : vector<5x5xf32>
    %cst_53 = arith.constant dense<0.000000e+00> : vector<5xf32>
    %83 = vector.multi_reduction <add>, %82, %cst_53 [1] : vector<5x5xf32> to vector<5xf32>
    %84 = vector.shape_cast %83 : vector<5xf32> to vector<5x1xf32>
    %85 = tpu.reciprocal %84 {approx = true} : vector<5x1xf32> -> vector<5x1xf32>
    %86 = vector.broadcast %85 : vector<5x1xf32> to vector<5x5xf32>
    %87 = arith.mulf %82, %86 : vector<5x5xf32>
    %cst_54 = arith.constant dense<0.000000e+00> : vector<5x8xf32>
    %88 = tpu.matmul %87, %75, %cst_54 {dimension_numbers = #tpu.dot_dimension_numbers<[1], [0], [0], [1], [0, 0, 1, 1], [], []>} : vector<5x5xf32>, vector<5x8xf32>, vector<5x8xf32> -> vector<5x8xf32>
    %89 = vector.extract_strided_slice %14 {offsets = [1, 0, 0], sizes = [1, 8, 32], strides = [1, 1, 1]} : vector<4x8x32xf32> to vector<1x8x32xf32>
    %90 = vector.shape_cast %89 : vector<1x8x32xf32> to vector<8x32xf32>
    %cst_55 = arith.constant dense<0.000000e+00> : vector<5x32xf32>
    %91 = tpu.matmul %88, %90, %cst_55 {dimension_numbers = #tpu.dot_dimension_numbers<[1], [0], [0], [1], [0, 0, 1, 1], [], []>} : vector<5x8xf32>, vector<8x32xf32>, vector<5x32xf32> -> vector<5x32xf32>
    %92 = arith.addf %72, %91 : vector<5x32xf32>
    %93 = vector.extract_strided_slice %51 {offsets = [0, 16], sizes = [5, 8], strides = [1, 1]} : vector<5x96xf32> to vector<5x8xf32>
    %94 = vector.extract_strided_slice %51 {offsets = [0, 48], sizes = [5, 8], strides = [1, 1]} : vector<5x96xf32> to vector<5x8xf32>
    %95 = vector.extract_strided_slice %51 {offsets = [0, 80], sizes = [5, 8], strides = [1, 1]} : vector<5x96xf32> to vector<5x8xf32>
    %96 = tpu.transpose %94, [1, 0] : vector<5x8xf32> -> vector<8x5xf32>
    %cst_56 = arith.constant dense<0.000000e+00> : vector<5x5xf32>
    %97 = tpu.matmul %93, %96, %cst_56 {dimension_numbers = #tpu.dot_dimension_numbers<[1], [0], [0], [1], [0, 0, 1, 1], [], []>} : vector<5x8xf32>, vector<8x5xf32>, vector<5x5xf32> -> vector<5x5xf32>
    %cst_57 = arith.constant dense<0xFF800000> : vector<5xf32>
    %98 = vector.multi_reduction <maximumf>, %97, %cst_57 [1] : vector<5x5xf32> to vector<5xf32>
    %99 = vector.shape_cast %98 : vector<5xf32> to vector<5x1xf32>
    %100 = vector.broadcast %99 : vector<5x1xf32> to vector<5x5xf32>
    %101 = arith.subf %97, %100 : vector<5x5xf32>
    %102 = math.exp %101 : vector<5x5xf32>
    %cst_58 = arith.constant dense<0.000000e+00> : vector<5xf32>
    %103 = vector.multi_reduction <add>, %102, %cst_58 [1] : vector<5x5xf32> to vector<5xf32>
    %104 = vector.shape_cast %103 : vector<5xf32> to vector<5x1xf32>
    %105 = tpu.reciprocal %104 {approx = true} : vector<5x1xf32> -> vector<5x1xf32>
    %106 = vector.broadcast %105 : vector<5x1xf32> to vector<5x5xf32>
    %107 = arith.mulf %102, %106 : vector<5x5xf32>
    %cst_59 = arith.constant dense<0.000000e+00> : vector<5x8xf32>
    %108 = tpu.matmul %107, %95, %cst_59 {dimension_numbers = #tpu.dot_dimension_numbers<[1], [0], [0], [1], [0, 0, 1, 1], [], []>} : vector<5x5xf32>, vector<5x8xf32>, vector<5x8xf32> -> vector<5x8xf32>
    %109 = vector.extract_strided_slice %14 {offsets = [2, 0, 0], sizes = [1, 8, 32], strides = [1, 1, 1]} : vector<4x8x32xf32> to vector<1x8x32xf32>
    %110 = vector.shape_cast %109 : vector<1x8x32xf32> to vector<8x32xf32>
    %cst_60 = arith.constant dense<0.000000e+00> : vector<5x32xf32>
    %111 = tpu.matmul %108, %110, %cst_60 {dimension_numbers = #tpu.dot_dimension_numbers<[1], [0], [0], [1], [0, 0, 1, 1], [], []>} : vector<5x8xf32>, vector<8x32xf32>, vector<5x32xf32> -> vector<5x32xf32>
    %112 = arith.addf %92, %111 : vector<5x32xf32>
    %113 = vector.extract_strided_slice %51 {offsets = [0, 24], sizes = [5, 8], strides = [1, 1]} : vector<5x96xf32> to vector<5x8xf32>
    %114 = vector.extract_strided_slice %51 {offsets = [0, 56], sizes = [5, 8], strides = [1, 1]} : vector<5x96xf32> to vector<5x8xf32>
    %115 = vector.extract_strided_slice %51 {offsets = [0, 88], sizes = [5, 8], strides = [1, 1]} : vector<5x96xf32> to vector<5x8xf32>
    %116 = tpu.transpose %114, [1, 0] : vector<5x8xf32> -> vector<8x5xf32>
    %cst_61 = arith.constant dense<0.000000e+00> : vector<5x5xf32>
    %117 = tpu.matmul %113, %116, %cst_61 {dimension_numbers = #tpu.dot_dimension_numbers<[1], [0], [0], [1], [0, 0, 1, 1], [], []>} : vector<5x8xf32>, vector<8x5xf32>, vector<5x5xf32> -> vector<5x5xf32>
    %cst_62 = arith.constant dense<0xFF800000> : vector<5xf32>
    %118 = vector.multi_reduction <maximumf>, %117, %cst_62 [1] : vector<5x5xf32> to vector<5xf32>
    %119 = vector.shape_cast %118 : vector<5xf32> to vector<5x1xf32>
    %120 = vector.broadcast %119 : vector<5x1xf32> to vector<5x5xf32>
    %121 = arith.subf %117, %120 : vector<5x5xf32>
    %122 = math.exp %121 : vector<5x5xf32>
    %cst_63 = arith.constant dense<0.000000e+00> : vector<5xf32>
    %123 = vector.multi_reduction <add>, %122, %cst_63 [1] : vector<5x5xf32> to vector<5xf32>
    %124 = vector.shape_cast %123 : vector<5xf32> to vector<5x1xf32>
    %125 = tpu.reciprocal %124 {approx = true} : vector<5x1xf32> -> vector<5x1xf32>
    %126 = vector.broadcast %125 : vector<5x1xf32> to vector<5x5xf32>
    %127 = arith.mulf %122, %126 : vector<5x5xf32>
    %cst_64 = arith.constant dense<0.000000e+00> : vector<5x8xf32>
    %128 = tpu.matmul %127, %115, %cst_64 {dimension_numbers = #tpu.dot_dimension_numbers<[1], [0], [0], [1], [0, 0, 1, 1], [], []>} : vector<5x5xf32>, vector<5x8xf32>, vector<5x8xf32> -> vector<5x8xf32>
    %129 = vector.extract_strided_slice %14 {offsets = [3, 0, 0], sizes = [1, 8, 32], strides = [1, 1, 1]} : vector<4x8x32xf32> to vector<1x8x32xf32>
    %130 = vector.shape_cast %129 : vector<1x8x32xf32> to vector<8x32xf32>
    %cst_65 = arith.constant dense<0.000000e+00> : vector<5x32xf32>
    %131 = tpu.matmul %128, %130, %cst_65 {dimension_numbers = #tpu.dot_dimension_numbers<[1], [0], [0], [1], [0, 0, 1, 1], [], []>} : vector<5x8xf32>, vector<8x32xf32>, vector<5x32xf32> -> vector<5x32xf32>
    %132 = arith.addf %112, %131 : vector<5x32xf32>
    %133 = arith.addf %4, %132 : vector<5x32xf32>
    %134 = vector.broadcast %16 : vector<1x32xf32> to vector<5x32xf32>
    %135 = arith.addf %133, %134 : vector<5x32xf32>
    %cst_66 = arith.constant dense<0.000000e+00> : vector<5xf32>
    %136 = vector.multi_reduction <add>, %135, %cst_66 [1] : vector<5x32xf32> to vector<5xf32>
    %137 = vector.shape_cast %136 : vector<5xf32> to vector<5x1xf32>
    %cst_67 = arith.constant 3.200000e+01 : f32
    %138 = vector.broadcast %cst_67 : f32 to vector<5x1xf32>
    %139 = arith.divf %137, %138 : vector<5x1xf32>
    %140 = vector.broadcast %139 : vector<5x1xf32> to vector<5x32xf32>
    %141 = arith.subf %135, %140 : vector<5x32xf32>
    %142 = arith.mulf %141, %141 : vector<5x32xf32>
    %cst_68 = arith.constant dense<0.000000e+00> : vector<5xf32>
    %143 = vector.multi_reduction <add>, %142, %cst_68 [1] : vector<5x32xf32> to vector<5xf32>
    %144 = vector.shape_cast %143 : vector<5xf32> to vector<5x1xf32>
    %cst_69 = arith.constant 3.200000e+01 : f32
    %145 = vector.broadcast %cst_69 : f32 to vector<5x1xf32>
    %146 = arith.divf %144, %145 : vector<5x1xf32>
    %cst_70 = arith.constant 9.99999997E-7 : f32
    %147 = vector.broadcast %cst_70 : f32 to vector<5x1xf32>
    %148 = arith.addf %146, %147 : vector<5x1xf32>
    %149 = math.rsqrt %148 : vector<5x1xf32>
    %150 = vector.broadcast %149 : vector<5x1xf32> to vector<5x32xf32>
    %151 = arith.mulf %141, %150 : vector<5x32xf32>
    %152 = vector.broadcast %18 : vector<1x32xf32> to vector<5x32xf32>
    %153 = arith.mulf %151, %152 : vector<5x32xf32>
    %154 = vector.broadcast %20 : vector<1x32xf32> to vector<5x32xf32>
    %155 = arith.addf %153, %154 : vector<5x32xf32>
    %cst_71 = arith.constant dense<0.000000e+00> : vector<5x128xf32>
    %156 = tpu.matmul %155, %22, %cst_71 {dimension_numbers = #tpu.dot_dimension_numbers<[1], [0], [0], [1], [0, 0, 1, 1], [], []>} : vector<5x32xf32>, vector<32x128xf32>, vector<5x128xf32> -> vector<5x128xf32>
    %157 = vector.broadcast %24 : vector<1x128xf32> to vector<5x128xf32>
    %158 = arith.addf %156, %157 : vector<5x128xf32>
    %cst_72 = arith.constant 5.000000e-01 : f32
    %159 = vector.broadcast %cst_72 : f32 to vector<5x128xf32>
    %160 = arith.mulf %159, %158 : vector<5x128xf32>
    %cst_73 = arith.constant 0.707106769 : f32
    %161 = vector.broadcast %cst_73 : f32 to vector<5x128xf32>
    %162 = arith.mulf %158, %161 : vector<5x128xf32>
    %163 = math.erf %162 : vector<5x128xf32>
    %cst_74 = arith.constant 1.000000e+00 : f32
    %164 = vector.broadcast %cst_74 : f32 to vector<5x128xf32>
    %165 = arith.addf %164, %163 : vector<5x128xf32>
    %166 = arith.mulf %160, %165 : vector<5x128xf32>
    %cst_75 = arith.constant dense<0.000000e+00> : vector<5x32xf32>
    %167 = tpu.matmul %166, %26, %cst_75 {dimension_numbers = #tpu.dot_dimension_numbers<[1], [0], [0], [1], [0, 0, 1, 1], [], []>} : vector<5x128xf32>, vector<128x32xf32>, vector<5x32xf32> -> vector<5x32xf32>
    %168 = vector.broadcast %28 : vector<1x32xf32> to vector<5x32xf32>
    %169 = arith.addf %167, %168 : vector<5x32xf32>
    %170 = arith.addf %135, %169 : vector<5x32xf32>
    %c0_76 = arith.constant 0 : index
    %c0_77 = arith.constant 0 : index
    %c0_78 = arith.constant 0 : index
    %171 = vector.load %arg20[%c0_76, %c0_77, %c0_78] : memref<1x5x32xf32, #tpu.memory_space<vmem>>, vector<1x5x32xf32>
    %172 = vector.shape_cast %171 : vector<1x5x32xf32> to vector<5x32xf32>
    %173 = vector.shape_cast %170 : vector<5x32xf32> to vector<1x5x32xf32>
    tpu.vector_store %arg20[%c0_76, %c0_77, %c0_78], %173 {strides = array<i32>} : memref<1x5x32xf32, #tpu.memory_space<vmem>>, vector<1x5x32xf32>,
    %c1_i32 = arith.constant 1 : i32
    %174 = arith.cmpi eq, %arg1, %c1_i32 : i32
    %175 = arith.extui %174 : i1 to i32
    %c0_i32_79 = arith.constant 0 : i32
    %176 = arith.cmpi ne, %175, %c0_i32_79 : i32
    scf.if %176 {
      %c0_80 = arith.constant 0 : index
      %c0_81 = arith.constant 0 : index
      %177 = vector.load %arg15[%c0_80, %c0_81] : memref<1x32xf32, #tpu.memory_space<vmem>>, vector<1x32xf32>
      %c0_82 = arith.constant 0 : index
      %c0_83 = arith.constant 0 : index
      %178 = vector.load %arg16[%c0_82, %c0_83] : memref<1x32xf32, #tpu.memory_space<vmem>>, vector<1x32xf32>
      %cst_84 = arith.constant dense<0.000000e+00> : vector<5xf32>
      %179 = vector.multi_reduction <add>, %170, %cst_84 [1] : vector<5x32xf32> to vector<5xf32>
      %180 = vector.shape_cast %179 : vector<5xf32> to vector<5x1xf32>
      %cst_85 = arith.constant 3.200000e+01 : f32
      %181 = vector.broadcast %cst_85 : f32 to vector<5x1xf32>
      %182 = arith.divf %180, %181 : vector<5x1xf32>
      %183 = vector.broadcast %182 : vector<5x1xf32> to vector<5x32xf32>
      %184 = arith.subf %170, %183 : vector<5x32xf32>
      %185 = arith.mulf %184, %184 : vector<5x32xf32>
      %cst_86 = arith.constant dense<0.000000e+00> : vector<5xf32>
      %186 = vector.multi_reduction <add>, %185, %cst_86 [1] : vector<5x32xf32> to vector<5xf32>
      %187 = vector.shape_cast %186 : vector<5xf32> to vector<5x1xf32>
      %cst_87 = arith.constant 3.200000e+01 : f32
      %188 = vector.broadcast %cst_87 : f32 to vector<5x1xf32>
      %189 = arith.divf %187, %188 : vector<5x1xf32>
      %cst_88 = arith.constant 9.99999997E-7 : f32
      %190 = vector.broadcast %cst_88 : f32 to vector<5x1xf32>
      %191 = arith.addf %189, %190 : vector<5x1xf32>
      %192 = math.rsqrt %191 : vector<5x1xf32>
      %193 = vector.broadcast %192 : vector<5x1xf32> to vector<5x32xf32>
      %194 = arith.mulf %184, %193 : vector<5x32xf32>
      %195 = vector.broadcast %177 : vector<1x32xf32> to vector<5x32xf32>
      %196 = arith.mulf %194, %195 : vector<5x32xf32>
      %197 = vector.broadcast %178 : vector<1x32xf32> to vector<5x32xf32>
      %198 = arith.addf %196, %197 : vector<5x32xf32>
      %c0_89 = arith.constant 0 : index
      %c0_90 = arith.constant 0 : index
      %199 = vector.load %arg17[%c0_89, %c0_90] : memref<32x16xf32, #tpu.memory_space<vmem>>, vector<32x16xf32>
      %cst_91 = arith.constant dense<0.000000e+00> : vector<5x16xf32>
      %200 = tpu.matmul %198, %199, %cst_91 {dimension_numbers = #tpu.dot_dimension_numbers<[1], [0], [0], [1], [0, 0, 1, 1], [], []>} : vector<5x32xf32>, vector<32x16xf32>, vector<5x16xf32> -> vector<5x16xf32>
      %c0_92 = arith.constant 0 : index
      %c0_93 = arith.constant 0 : index
      %201 = vector.load %arg18[%c0_92, %c0_93] : memref<1x16xf32, #tpu.memory_space<vmem>>, vector<1x16xf32>
      %202 = vector.broadcast %201 : vector<1x16xf32> to vector<5x16xf32>
      %203 = arith.addf %200, %202 : vector<5x16xf32>
      %c0_94 = arith.constant 0 : index
      %c0_95 = arith.constant 0 : index
      %c0_96 = arith.constant 0 : index
      %204 = vector.load %arg19[%c0_94, %c0_95, %c0_96] : memref<1x5x16xf32, #tpu.memory_space<vmem>>, vector<1x5x16xf32>
      %205 = vector.shape_cast %204 : vector<1x5x16xf32> to vector<5x16xf32>
      %206 = vector.shape_cast %203 : vector<5x16xf32> to vector<1x5x16xf32>
      tpu.vector_store %arg19[%c0_94, %c0_95, %c0_96], %206 {strides = array<i32>} : memref<1x5x16xf32, #tpu.memory_space<vmem>>, vector<1x5x16xf32>,
    } else {
    }
    return
  }
  func.func @transform_0(%arg0: i32, %arg1: i32) -> (i32, i32, i32) {
    %c0_i32 = arith.constant 0 : i32
    %c0_i32_0 = arith.constant 0 : i32
    %c0_i32_1 = arith.constant 0 : i32
    return %arg0, %c0_i32, %c0_i32_0 : i32, i32, i32
  }
  func.func @transform_1(%arg0: i32, %arg1: i32) -> (i32, i32, i32) {
    %c0_i32 = arith.constant 0 : i32
    %c0_i32_0 = arith.constant 0 : i32
    %c0_i32_1 = arith.constant 0 : i32
    return %arg1, %c0_i32, %c0_i32_0 : i32, i32, i32
  }
  func.func @transform_2(%arg0: i32, %arg1: i32) -> (i32, i32, i32) {
    %c0_i32 = arith.constant 0 : i32
    %c0_i32_0 = arith.constant 0 : i32
    %c0_i32_1 = arith.constant 0 : i32
    return %arg1, %c0_i32, %c0_i32_0 : i32, i32, i32
  }
  func.func @transform_3(%arg0: i32, %arg1: i32) -> (i32, i32, i32) {
    %c0_i32 = arith.constant 0 : i32
    %c0_i32_0 = arith.constant 0 : i32
    %c0_i32_1 = arith.constant 0 : i32
    return %arg1, %c0_i32, %c0_i32_0 : i32, i32, i32
  }
  func.func @transform_4(%arg0: i32, %arg1: i32) -> (i32, i32, i32) {
    %c0_i32 = arith.constant 0 : i32
    %c0_i32_0 = arith.constant 0 : i32
    %c0_i32_1 = arith.constant 0 : i32
    return %arg1, %c0_i32, %c0_i32_0 : i32, i32, i32
  }
  func.func @transform_5(%arg0: i32, %arg1: i32) -> (i32, i32, i32, i32) {
    %c0_i32 = arith.constant 0 : i32
    %c0_i32_0 = arith.constant 0 : i32
    %c0_i32_1 = arith.constant 0 : i32
    %c0_i32_2 = arith.constant 0 : i32
    return %arg1, %c0_i32, %c0_i32_0, %c0_i32_1 : i32, i32, i32, i32
  }
  func.func @transform_6(%arg0: i32, %arg1: i32) -> (i32, i32, i32) {
    %c0_i32 = arith.constant 0 : i32
    %c0_i32_0 = arith.constant 0 : i32
    %c0_i32_1 = arith.constant 0 : i32
    return %arg1, %c0_i32, %c0_i32_0 : i32, i32, i32
  }
  func.func @transform_7(%arg0: i32, %arg1: i32) -> (i32, i32, i32) {
    %c0_i32 = arith.constant 0 : i32
    %c0_i32_0 = arith.constant 0 : i32
    %c0_i32_1 = arith.constant 0 : i32
    return %arg1, %c0_i32, %c0_i32_0 : i32, i32, i32
  }
  func.func @transform_8(%arg0: i32, %arg1: i32) -> (i32, i32, i32) {
    %c0_i32 = arith.constant 0 : i32
    %c0_i32_0 = arith.constant 0 : i32
    %c0_i32_1 = arith.constant 0 : i32
    return %arg1, %c0_i32, %c0_i32_0 : i32, i32, i32
  }
  func.func @transform_9(%arg0: i32, %arg1: i32) -> (i32, i32, i32) {
    %c0_i32 = arith.constant 0 : i32
    %c0_i32_0 = arith.constant 0 : i32
    %c0_i32_1 = arith.constant 0 : i32
    return %arg1, %c0_i32, %c0_i32_0 : i32, i32, i32
  }
  func.func @transform_10(%arg0: i32, %arg1: i32) -> (i32, i32, i32) {
    %c0_i32 = arith.constant 0 : i32
    %c0_i32_0 = arith.constant 0 : i32
    %c0_i32_1 = arith.constant 0 : i32
    return %arg1, %c0_i32, %c0_i32_0 : i32, i32, i32
  }
  func.func @transform_11(%arg0: i32, %arg1: i32) -> (i32, i32, i32) {
    %c0_i32 = arith.constant 0 : i32
    %c0_i32_0 = arith.constant 0 : i32
    %c0_i32_1 = arith.constant 0 : i32
    return %arg1, %c0_i32, %c0_i32_0 : i32, i32, i32
  }
  func.func @transform_12(%arg0: i32, %arg1: i32) -> (i32, i32, i32) {
    %c0_i32 = arith.constant 0 : i32
    %c0_i32_0 = arith.constant 0 : i32
    %c0_i32_1 = arith.constant 0 : i32
    return %arg1, %c0_i32, %c0_i32_0 : i32, i32, i32
  }
  func.func @transform_13(%arg0: i32, %arg1: i32) -> (i32, i32) {
    %c0_i32 = arith.constant 0 : i32
    %c0_i32_0 = arith.constant 0 : i32
    %c0_i32_1 = arith.constant 0 : i32
    return %c0_i32, %c0_i32_0 : i32, i32
  }
  func.func @transform_14(%arg0: i32, %arg1: i32) -> (i32, i32) {
    %c0_i32 = arith.constant 0 : i32
    %c0_i32_0 = arith.constant 0 : i32
    %c0_i32_1 = arith.constant 0 : i32
    return %c0_i32, %c0_i32_0 : i32, i32
  }
  func.func @transform_15(%arg0: i32, %arg1: i32) -> (i32, i32) {
    %c0_i32 = arith.constant 0 : i32
    %c0_i32_0 = arith.constant 0 : i32
    %c0_i32_1 = arith.constant 0 : i32
    return %c0_i32, %c0_i32_0 : i32, i32
  }
  func.func @transform_16(%arg0: i32, %arg1: i32) -> (i32, i32) {
    %c0_i32 = arith.constant 0 : i32
    %c0_i32_0 = arith.constant 0 : i32
    %c0_i32_1 = arith.constant 0 : i32
    return %c0_i32, %c0_i32_0 : i32, i32
  }
  func.func @transform_17(%arg0: i32, %arg1: i32) -> (i32, i32, i32) {
    %c0_i32 = arith.constant 0 : i32
    %c0_i32_0 = arith.constant 0 : i32
    %c0_i32_1 = arith.constant 0 : i32
    return %arg0, %c0_i32, %c0_i32_0 : i32, i32, i32
  }
}

module attributes {stable_mosaic.version = 11 : i64} {
  func.func @kernel(%arg0: i32, %arg1: i32, %arg2: memref<1x17x16xf32, #tpu.memory_space<vmem>>, %arg3: memref<1x17x16xf32, #tpu.memory_space<vmem>>, %arg4: memref<1x1x16xf32, #tpu.memory_space<vmem>>, %arg5: memref<1x1x16xf32, #tpu.memory_space<vmem>>, %arg6: memref<1x16x48xf32, #tpu.memory_space<vmem>>, %arg7: memref<1x1x48xf32, #tpu.memory_space<vmem>>, %arg8: memref<1x4x4x16xf32, #tpu.memory_space<vmem>>, %arg9: memref<1x1x16xf32, #tpu.memory_space<vmem>>, %arg10: memref<1x1x16xf32, #tpu.memory_space<vmem>>, %arg11: memref<1x1x16xf32, #tpu.memory_space<vmem>>, %arg12: memref<1x16x64xf32, #tpu.memory_space<vmem>>, %arg13: memref<1x1x64xf32, #tpu.memory_space<vmem>>, %arg14: memref<1x64x16xf32, #tpu.memory_space<vmem>>, %arg15: memref<1x1x16xf32, #tpu.memory_space<vmem>>, %arg16: memref<1x16xf32, #tpu.memory_space<vmem>>, %arg17: memref<1x16xf32, #tpu.memory_space<vmem>>, %arg18: memref<16x48xf32, #tpu.memory_space<vmem>>, %arg19: memref<1x48xf32, #tpu.memory_space<vmem>>, %arg20: memref<1x16x48xf32, #tpu.memory_space<vmem>>, %arg21: memref<1x16x1xf32, #tpu.memory_space<vmem>>, %arg22: memref<1x16x48xf32, #tpu.memory_space<vmem>>, %arg23: memref<1x1x1xf32, #tpu.memory_space<vmem>>, %arg24: memref<1x1x1xf32, #tpu.memory_space<vmem>>, %arg25: memref<1x17x16xf32, #tpu.memory_space<vmem>>) attributes {dimension_semantics = [#tpu.dimension_semantics<parallel>, #tpu.dimension_semantics<arbitrary>], iteration_bounds = array<i64: 2, 1>, scalar_prefetch = 0 : i64, scratch_operands = 1 : i64, tpu.core_type = #tpu.core_type<tc>, window_params = [{transform_indices = @transform_0, window_bounds = array<i64: 1, 17, 16>}, {pipeline_mode = #tpu.pipeline_mode<synchronous>, transform_indices = @transform_1, window_bounds = array<i64: 1, 17, 16>}, {transform_indices = @transform_2, window_bounds = array<i64: 1, 1, 16>}, {transform_indices = @transform_3, window_bounds = array<i64: 1, 1, 16>}, {transform_indices = @transform_4, window_bounds = array<i64: 1, 16, 48>}, {transform_indices = @transform_5, window_bounds = array<i64: 1, 1, 48>}, {transform_indices = @transform_6, window_bounds = array<i64: 1, 4, 4, 16>}, {transform_indices = @transform_7, window_bounds = array<i64: 1, 1, 16>}, {transform_indices = @transform_8, window_bounds = array<i64: 1, 1, 16>}, {transform_indices = @transform_9, window_bounds = array<i64: 1, 1, 16>}, {transform_indices = @transform_10, window_bounds = array<i64: 1, 16, 64>}, {transform_indices = @transform_11, window_bounds = array<i64: 1, 1, 64>}, {transform_indices = @transform_12, window_bounds = array<i64: 1, 64, 16>}, {transform_indices = @transform_13, window_bounds = array<i64: 1, 1, 16>}, {pipeline_mode = #tpu.pipeline_mode<synchronous>, transform_indices = @transform_14, window_bounds = array<i64: 1, 16>}, {pipeline_mode = #tpu.pipeline_mode<synchronous>, transform_indices = @transform_15, window_bounds = array<i64: 1, 16>}, {pipeline_mode = #tpu.pipeline_mode<synchronous>, transform_indices = @transform_16, window_bounds = array<i64: 16, 48>}, {pipeline_mode = #tpu.pipeline_mode<synchronous>, transform_indices = @transform_17, window_bounds = array<i64: 1, 48>}, {transform_indices = @transform_18, window_bounds = array<i64: 1, 16, 48>}, {transform_indices = @transform_19, window_bounds = array<i64: 1, 16, 1>}, {transform_indices = @transform_20, window_bounds = array<i64: 1, 16, 48>}, {transform_indices = @transform_21, window_bounds = array<i64: 1, 1, 1>}, {transform_indices = @transform_22, window_bounds = array<i64: 1, 1, 1>}]} {
    %c0_i32 = arith.constant 0 : i32
    %0 = arith.cmpi eq, %arg1, %c0_i32 : i32
    %1 = arith.extui %0 : i1 to i32
    %c0_i32_0 = arith.constant 0 : i32
    %2 = arith.cmpi ne, %1, %c0_i32_0 : i32
    scf.if %2 {
      %c0_81 = arith.constant 0 : index
      %c0_82 = arith.constant 0 : index
      %c0_83 = arith.constant 0 : index
      %177 = vector.load %arg2[%c0_81, %c0_82, %c0_83] : memref<1x17x16xf32, #tpu.memory_space<vmem>>, vector<1x17x16xf32>
      %c0_84 = arith.constant 0 : index
      %c0_85 = arith.constant 0 : index
      %c0_86 = arith.constant 0 : index
      %178 = vector.load %arg3[%c0_84, %c0_85, %c0_86] : memref<1x17x16xf32, #tpu.memory_space<vmem>>, vector<1x17x16xf32>
      %179 = arith.addf %177, %178 : vector<1x17x16xf32>
      %c0_87 = arith.constant 0 : index
      %c0_88 = arith.constant 0 : index
      %c0_89 = arith.constant 0 : index
      %180 = vector.load %arg25[%c0_87, %c0_88, %c0_89] : memref<1x17x16xf32, #tpu.memory_space<vmem>>, vector<1x17x16xf32>
      tpu.vector_store %arg25[%c0_87, %c0_88, %c0_89], %179 {strides = array<i32>} : memref<1x17x16xf32, #tpu.memory_space<vmem>>, vector<1x17x16xf32>,
    } else {
    }
    %c0 = arith.constant 0 : index
    %c0_1 = arith.constant 0 : index
    %c0_2 = arith.constant 0 : index
    %3 = vector.load %arg25[%c0, %c0_1, %c0_2] : memref<1x17x16xf32, #tpu.memory_space<vmem>>, vector<1x17x16xf32>
    %4 = vector.shape_cast %3 : vector<1x17x16xf32> to vector<17x16xf32>
    %c0_3 = arith.constant 0 : index
    %c0_4 = arith.constant 0 : index
    %c0_5 = arith.constant 0 : index
    %5 = vector.load %arg4[%c0_3, %c0_4, %c0_5] : memref<1x1x16xf32, #tpu.memory_space<vmem>>, vector<1x1x16xf32>
    %6 = vector.shape_cast %5 : vector<1x1x16xf32> to vector<1x16xf32>
    %c0_6 = arith.constant 0 : index
    %c0_7 = arith.constant 0 : index
    %c0_8 = arith.constant 0 : index
    %7 = vector.load %arg5[%c0_6, %c0_7, %c0_8] : memref<1x1x16xf32, #tpu.memory_space<vmem>>, vector<1x1x16xf32>
    %8 = vector.shape_cast %7 : vector<1x1x16xf32> to vector<1x16xf32>
    %c0_9 = arith.constant 0 : index
    %c0_10 = arith.constant 0 : index
    %c0_11 = arith.constant 0 : index
    %9 = vector.load %arg6[%c0_9, %c0_10, %c0_11] : memref<1x16x48xf32, #tpu.memory_space<vmem>>, vector<1x16x48xf32>
    %10 = vector.shape_cast %9 : vector<1x16x48xf32> to vector<16x48xf32>
    %c0_12 = arith.constant 0 : index
    %c0_13 = arith.constant 0 : index
    %c0_14 = arith.constant 0 : index
    %11 = vector.load %arg7[%c0_12, %c0_13, %c0_14] : memref<1x1x48xf32, #tpu.memory_space<vmem>>, vector<1x1x48xf32>
    %12 = vector.shape_cast %11 : vector<1x1x48xf32> to vector<1x48xf32>
    %c0_15 = arith.constant 0 : index
    %c0_16 = arith.constant 0 : index
    %c0_17 = arith.constant 0 : index
    %c0_18 = arith.constant 0 : index
    %13 = vector.load %arg8[%c0_15, %c0_16, %c0_17, %c0_18] : memref<1x4x4x16xf32, #tpu.memory_space<vmem>>, vector<1x4x4x16xf32>
    %14 = vector.shape_cast %13 : vector<1x4x4x16xf32> to vector<4x4x16xf32>
    %c0_19 = arith.constant 0 : index
    %c0_20 = arith.constant 0 : index
    %c0_21 = arith.constant 0 : index
    %15 = vector.load %arg9[%c0_19, %c0_20, %c0_21] : memref<1x1x16xf32, #tpu.memory_space<vmem>>, vector<1x1x16xf32>
    %16 = vector.shape_cast %15 : vector<1x1x16xf32> to vector<1x16xf32>
    %c0_22 = arith.constant 0 : index
    %c0_23 = arith.constant 0 : index
    %c0_24 = arith.constant 0 : index
    %17 = vector.load %arg10[%c0_22, %c0_23, %c0_24] : memref<1x1x16xf32, #tpu.memory_space<vmem>>, vector<1x1x16xf32>
    %18 = vector.shape_cast %17 : vector<1x1x16xf32> to vector<1x16xf32>
    %c0_25 = arith.constant 0 : index
    %c0_26 = arith.constant 0 : index
    %c0_27 = arith.constant 0 : index
    %19 = vector.load %arg11[%c0_25, %c0_26, %c0_27] : memref<1x1x16xf32, #tpu.memory_space<vmem>>, vector<1x1x16xf32>
    %20 = vector.shape_cast %19 : vector<1x1x16xf32> to vector<1x16xf32>
    %c0_28 = arith.constant 0 : index
    %c0_29 = arith.constant 0 : index
    %c0_30 = arith.constant 0 : index
    %21 = vector.load %arg12[%c0_28, %c0_29, %c0_30] : memref<1x16x64xf32, #tpu.memory_space<vmem>>, vector<1x16x64xf32>
    %22 = vector.shape_cast %21 : vector<1x16x64xf32> to vector<16x64xf32>
    %c0_31 = arith.constant 0 : index
    %c0_32 = arith.constant 0 : index
    %c0_33 = arith.constant 0 : index
    %23 = vector.load %arg13[%c0_31, %c0_32, %c0_33] : memref<1x1x64xf32, #tpu.memory_space<vmem>>, vector<1x1x64xf32>
    %24 = vector.shape_cast %23 : vector<1x1x64xf32> to vector<1x64xf32>
    %c0_34 = arith.constant 0 : index
    %c0_35 = arith.constant 0 : index
    %c0_36 = arith.constant 0 : index
    %25 = vector.load %arg14[%c0_34, %c0_35, %c0_36] : memref<1x64x16xf32, #tpu.memory_space<vmem>>, vector<1x64x16xf32>
    %26 = vector.shape_cast %25 : vector<1x64x16xf32> to vector<64x16xf32>
    %c0_37 = arith.constant 0 : index
    %c0_38 = arith.constant 0 : index
    %c0_39 = arith.constant 0 : index
    %27 = vector.load %arg15[%c0_37, %c0_38, %c0_39] : memref<1x1x16xf32, #tpu.memory_space<vmem>>, vector<1x1x16xf32>
    %28 = vector.shape_cast %27 : vector<1x1x16xf32> to vector<1x16xf32>
    %cst = arith.constant dense<0.000000e+00> : vector<17xf32>
    %29 = vector.multi_reduction <add>, %4, %cst [1] : vector<17x16xf32> to vector<17xf32>
    %30 = vector.shape_cast %29 : vector<17xf32> to vector<17x1xf32>
    %cst_40 = arith.constant 1.600000e+01 : f32
    %31 = vector.broadcast %cst_40 : f32 to vector<17x1xf32>
    %32 = arith.divf %30, %31 : vector<17x1xf32>
    %33 = vector.broadcast %32 : vector<17x1xf32> to vector<17x16xf32>
    %34 = arith.subf %4, %33 : vector<17x16xf32>
    %35 = arith.mulf %34, %34 : vector<17x16xf32>
    %cst_41 = arith.constant dense<0.000000e+00> : vector<17xf32>
    %36 = vector.multi_reduction <add>, %35, %cst_41 [1] : vector<17x16xf32> to vector<17xf32>
    %37 = vector.shape_cast %36 : vector<17xf32> to vector<17x1xf32>
    %cst_42 = arith.constant 1.600000e+01 : f32
    %38 = vector.broadcast %cst_42 : f32 to vector<17x1xf32>
    %39 = arith.divf %37, %38 : vector<17x1xf32>
    %cst_43 = arith.constant 9.99999997E-7 : f32
    %40 = vector.broadcast %cst_43 : f32 to vector<17x1xf32>
    %41 = arith.addf %39, %40 : vector<17x1xf32>
    %42 = math.rsqrt %41 : vector<17x1xf32>
    %43 = vector.broadcast %42 : vector<17x1xf32> to vector<17x16xf32>
    %44 = arith.mulf %34, %43 : vector<17x16xf32>
    %45 = vector.broadcast %6 : vector<1x16xf32> to vector<17x16xf32>
    %46 = arith.mulf %44, %45 : vector<17x16xf32>
    %47 = vector.broadcast %8 : vector<1x16xf32> to vector<17x16xf32>
    %48 = arith.addf %46, %47 : vector<17x16xf32>
    %cst_44 = arith.constant dense<0.000000e+00> : vector<17x48xf32>
    %49 = tpu.matmul %48, %10, %cst_44 {dimension_numbers = #tpu.dot_dimension_numbers<[1], [0], [0], [1], [0, 0, 1, 1], [], []>} : vector<17x16xf32>, vector<16x48xf32>, vector<17x48xf32> -> vector<17x48xf32>
    %50 = vector.broadcast %12 : vector<1x48xf32> to vector<17x48xf32>
    %51 = arith.addf %49, %50 : vector<17x48xf32>
    %cst_45 = arith.constant 0.000000e+00 : f32
    %52 = vector.broadcast %cst_45 : f32 to vector<17x16xf32>
    %53 = vector.extract_strided_slice %51 {offsets = [0, 0], sizes = [17, 4], strides = [1, 1]} : vector<17x48xf32> to vector<17x4xf32>
    %54 = vector.extract_strided_slice %51 {offsets = [0, 16], sizes = [17, 4], strides = [1, 1]} : vector<17x48xf32> to vector<17x4xf32>
    %55 = vector.extract_strided_slice %51 {offsets = [0, 32], sizes = [17, 4], strides = [1, 1]} : vector<17x48xf32> to vector<17x4xf32>
    %56 = tpu.transpose %54, [1, 0] : vector<17x4xf32> -> vector<4x17xf32>
    %cst_46 = arith.constant dense<0.000000e+00> : vector<17x17xf32>
    %57 = tpu.matmul %53, %56, %cst_46 {dimension_numbers = #tpu.dot_dimension_numbers<[1], [0], [0], [1], [0, 0, 1, 1], [], []>} : vector<17x4xf32>, vector<4x17xf32>, vector<17x17xf32> -> vector<17x17xf32>
    %cst_47 = arith.constant dense<0xFF800000> : vector<17xf32>
    %58 = vector.multi_reduction <maximumf>, %57, %cst_47 [1] : vector<17x17xf32> to vector<17xf32>
    %59 = vector.shape_cast %58 : vector<17xf32> to vector<17x1xf32>
    %60 = vector.broadcast %59 : vector<17x1xf32> to vector<17x17xf32>
    %61 = arith.subf %57, %60 : vector<17x17xf32>
    %62 = math.exp %61 : vector<17x17xf32>
    %cst_48 = arith.constant dense<0.000000e+00> : vector<17xf32>
    %63 = vector.multi_reduction <add>, %62, %cst_48 [1] : vector<17x17xf32> to vector<17xf32>
    %64 = vector.shape_cast %63 : vector<17xf32> to vector<17x1xf32>
    %65 = tpu.reciprocal %64 {approx = true} : vector<17x1xf32> -> vector<17x1xf32>
    %66 = vector.broadcast %65 : vector<17x1xf32> to vector<17x17xf32>
    %67 = arith.mulf %62, %66 : vector<17x17xf32>
    %cst_49 = arith.constant dense<0.000000e+00> : vector<17x4xf32>
    %68 = tpu.matmul %67, %55, %cst_49 {dimension_numbers = #tpu.dot_dimension_numbers<[1], [0], [0], [1], [0, 0, 1, 1], [], []>} : vector<17x17xf32>, vector<17x4xf32>, vector<17x4xf32> -> vector<17x4xf32>
    %69 = vector.extract_strided_slice %14 {offsets = [0, 0, 0], sizes = [1, 4, 16], strides = [1, 1, 1]} : vector<4x4x16xf32> to vector<1x4x16xf32>
    %70 = vector.shape_cast %69 : vector<1x4x16xf32> to vector<4x16xf32>
    %cst_50 = arith.constant dense<0.000000e+00> : vector<17x16xf32>
    %71 = tpu.matmul %68, %70, %cst_50 {dimension_numbers = #tpu.dot_dimension_numbers<[1], [0], [0], [1], [0, 0, 1, 1], [], []>} : vector<17x4xf32>, vector<4x16xf32>, vector<17x16xf32> -> vector<17x16xf32>
    %72 = arith.addf %52, %71 : vector<17x16xf32>
    %73 = vector.extract_strided_slice %51 {offsets = [0, 4], sizes = [17, 4], strides = [1, 1]} : vector<17x48xf32> to vector<17x4xf32>
    %74 = vector.extract_strided_slice %51 {offsets = [0, 20], sizes = [17, 4], strides = [1, 1]} : vector<17x48xf32> to vector<17x4xf32>
    %75 = vector.extract_strided_slice %51 {offsets = [0, 36], sizes = [17, 4], strides = [1, 1]} : vector<17x48xf32> to vector<17x4xf32>
    %76 = tpu.transpose %74, [1, 0] : vector<17x4xf32> -> vector<4x17xf32>
    %cst_51 = arith.constant dense<0.000000e+00> : vector<17x17xf32>
    %77 = tpu.matmul %73, %76, %cst_51 {dimension_numbers = #tpu.dot_dimension_numbers<[1], [0], [0], [1], [0, 0, 1, 1], [], []>} : vector<17x4xf32>, vector<4x17xf32>, vector<17x17xf32> -> vector<17x17xf32>
    %cst_52 = arith.constant dense<0xFF800000> : vector<17xf32>
    %78 = vector.multi_reduction <maximumf>, %77, %cst_52 [1] : vector<17x17xf32> to vector<17xf32>
    %79 = vector.shape_cast %78 : vector<17xf32> to vector<17x1xf32>
    %80 = vector.broadcast %79 : vector<17x1xf32> to vector<17x17xf32>
    %81 = arith.subf %77, %80 : vector<17x17xf32>
    %82 = math.exp %81 : vector<17x17xf32>
    %cst_53 = arith.constant dense<0.000000e+00> : vector<17xf32>
    %83 = vector.multi_reduction <add>, %82, %cst_53 [1] : vector<17x17xf32> to vector<17xf32>
    %84 = vector.shape_cast %83 : vector<17xf32> to vector<17x1xf32>
    %85 = tpu.reciprocal %84 {approx = true} : vector<17x1xf32> -> vector<17x1xf32>
    %86 = vector.broadcast %85 : vector<17x1xf32> to vector<17x17xf32>
    %87 = arith.mulf %82, %86 : vector<17x17xf32>
    %cst_54 = arith.constant dense<0.000000e+00> : vector<17x4xf32>
    %88 = tpu.matmul %87, %75, %cst_54 {dimension_numbers = #tpu.dot_dimension_numbers<[1], [0], [0], [1], [0, 0, 1, 1], [], []>} : vector<17x17xf32>, vector<17x4xf32>, vector<17x4xf32> -> vector<17x4xf32>
    %89 = vector.extract_strided_slice %14 {offsets = [1, 0, 0], sizes = [1, 4, 16], strides = [1, 1, 1]} : vector<4x4x16xf32> to vector<1x4x16xf32>
    %90 = vector.shape_cast %89 : vector<1x4x16xf32> to vector<4x16xf32>
    %cst_55 = arith.constant dense<0.000000e+00> : vector<17x16xf32>
    %91 = tpu.matmul %88, %90, %cst_55 {dimension_numbers = #tpu.dot_dimension_numbers<[1], [0], [0], [1], [0, 0, 1, 1], [], []>} : vector<17x4xf32>, vector<4x16xf32>, vector<17x16xf32> -> vector<17x16xf32>
    %92 = arith.addf %72, %91 : vector<17x16xf32>
    %93 = vector.extract_strided_slice %51 {offsets = [0, 8], sizes = [17, 4], strides = [1, 1]} : vector<17x48xf32> to vector<17x4xf32>
    %94 = vector.extract_strided_slice %51 {offsets = [0, 24], sizes = [17, 4], strides = [1, 1]} : vector<17x48xf32> to vector<17x4xf32>
    %95 = vector.extract_strided_slice %51 {offsets = [0, 40], sizes = [17, 4], strides = [1, 1]} : vector<17x48xf32> to vector<17x4xf32>
    %96 = tpu.transpose %94, [1, 0] : vector<17x4xf32> -> vector<4x17xf32>
    %cst_56 = arith.constant dense<0.000000e+00> : vector<17x17xf32>
    %97 = tpu.matmul %93, %96, %cst_56 {dimension_numbers = #tpu.dot_dimension_numbers<[1], [0], [0], [1], [0, 0, 1, 1], [], []>} : vector<17x4xf32>, vector<4x17xf32>, vector<17x17xf32> -> vector<17x17xf32>
    %cst_57 = arith.constant dense<0xFF800000> : vector<17xf32>
    %98 = vector.multi_reduction <maximumf>, %97, %cst_57 [1] : vector<17x17xf32> to vector<17xf32>
    %99 = vector.shape_cast %98 : vector<17xf32> to vector<17x1xf32>
    %100 = vector.broadcast %99 : vector<17x1xf32> to vector<17x17xf32>
    %101 = arith.subf %97, %100 : vector<17x17xf32>
    %102 = math.exp %101 : vector<17x17xf32>
    %cst_58 = arith.constant dense<0.000000e+00> : vector<17xf32>
    %103 = vector.multi_reduction <add>, %102, %cst_58 [1] : vector<17x17xf32> to vector<17xf32>
    %104 = vector.shape_cast %103 : vector<17xf32> to vector<17x1xf32>
    %105 = tpu.reciprocal %104 {approx = true} : vector<17x1xf32> -> vector<17x1xf32>
    %106 = vector.broadcast %105 : vector<17x1xf32> to vector<17x17xf32>
    %107 = arith.mulf %102, %106 : vector<17x17xf32>
    %cst_59 = arith.constant dense<0.000000e+00> : vector<17x4xf32>
    %108 = tpu.matmul %107, %95, %cst_59 {dimension_numbers = #tpu.dot_dimension_numbers<[1], [0], [0], [1], [0, 0, 1, 1], [], []>} : vector<17x17xf32>, vector<17x4xf32>, vector<17x4xf32> -> vector<17x4xf32>
    %109 = vector.extract_strided_slice %14 {offsets = [2, 0, 0], sizes = [1, 4, 16], strides = [1, 1, 1]} : vector<4x4x16xf32> to vector<1x4x16xf32>
    %110 = vector.shape_cast %109 : vector<1x4x16xf32> to vector<4x16xf32>
    %cst_60 = arith.constant dense<0.000000e+00> : vector<17x16xf32>
    %111 = tpu.matmul %108, %110, %cst_60 {dimension_numbers = #tpu.dot_dimension_numbers<[1], [0], [0], [1], [0, 0, 1, 1], [], []>} : vector<17x4xf32>, vector<4x16xf32>, vector<17x16xf32> -> vector<17x16xf32>
    %112 = arith.addf %92, %111 : vector<17x16xf32>
    %113 = vector.extract_strided_slice %51 {offsets = [0, 12], sizes = [17, 4], strides = [1, 1]} : vector<17x48xf32> to vector<17x4xf32>
    %114 = vector.extract_strided_slice %51 {offsets = [0, 28], sizes = [17, 4], strides = [1, 1]} : vector<17x48xf32> to vector<17x4xf32>
    %115 = vector.extract_strided_slice %51 {offsets = [0, 44], sizes = [17, 4], strides = [1, 1]} : vector<17x48xf32> to vector<17x4xf32>
    %116 = tpu.transpose %114, [1, 0] : vector<17x4xf32> -> vector<4x17xf32>
    %cst_61 = arith.constant dense<0.000000e+00> : vector<17x17xf32>
    %117 = tpu.matmul %113, %116, %cst_61 {dimension_numbers = #tpu.dot_dimension_numbers<[1], [0], [0], [1], [0, 0, 1, 1], [], []>} : vector<17x4xf32>, vector<4x17xf32>, vector<17x17xf32> -> vector<17x17xf32>
    %cst_62 = arith.constant dense<0xFF800000> : vector<17xf32>
    %118 = vector.multi_reduction <maximumf>, %117, %cst_62 [1] : vector<17x17xf32> to vector<17xf32>
    %119 = vector.shape_cast %118 : vector<17xf32> to vector<17x1xf32>
    %120 = vector.broadcast %119 : vector<17x1xf32> to vector<17x17xf32>
    %121 = arith.subf %117, %120 : vector<17x17xf32>
    %122 = math.exp %121 : vector<17x17xf32>
    %cst_63 = arith.constant dense<0.000000e+00> : vector<17xf32>
    %123 = vector.multi_reduction <add>, %122, %cst_63 [1] : vector<17x17xf32> to vector<17xf32>
    %124 = vector.shape_cast %123 : vector<17xf32> to vector<17x1xf32>
    %125 = tpu.reciprocal %124 {approx = true} : vector<17x1xf32> -> vector<17x1xf32>
    %126 = vector.broadcast %125 : vector<17x1xf32> to vector<17x17xf32>
    %127 = arith.mulf %122, %126 : vector<17x17xf32>
    %cst_64 = arith.constant dense<0.000000e+00> : vector<17x4xf32>
    %128 = tpu.matmul %127, %115, %cst_64 {dimension_numbers = #tpu.dot_dimension_numbers<[1], [0], [0], [1], [0, 0, 1, 1], [], []>} : vector<17x17xf32>, vector<17x4xf32>, vector<17x4xf32> -> vector<17x4xf32>
    %129 = vector.extract_strided_slice %14 {offsets = [3, 0, 0], sizes = [1, 4, 16], strides = [1, 1, 1]} : vector<4x4x16xf32> to vector<1x4x16xf32>
    %130 = vector.shape_cast %129 : vector<1x4x16xf32> to vector<4x16xf32>
    %cst_65 = arith.constant dense<0.000000e+00> : vector<17x16xf32>
    %131 = tpu.matmul %128, %130, %cst_65 {dimension_numbers = #tpu.dot_dimension_numbers<[1], [0], [0], [1], [0, 0, 1, 1], [], []>} : vector<17x4xf32>, vector<4x16xf32>, vector<17x16xf32> -> vector<17x16xf32>
    %132 = arith.addf %112, %131 : vector<17x16xf32>
    %133 = arith.addf %4, %132 : vector<17x16xf32>
    %134 = vector.broadcast %16 : vector<1x16xf32> to vector<17x16xf32>
    %135 = arith.addf %133, %134 : vector<17x16xf32>
    %cst_66 = arith.constant dense<0.000000e+00> : vector<17xf32>
    %136 = vector.multi_reduction <add>, %135, %cst_66 [1] : vector<17x16xf32> to vector<17xf32>
    %137 = vector.shape_cast %136 : vector<17xf32> to vector<17x1xf32>
    %cst_67 = arith.constant 1.600000e+01 : f32
    %138 = vector.broadcast %cst_67 : f32 to vector<17x1xf32>
    %139 = arith.divf %137, %138 : vector<17x1xf32>
    %140 = vector.broadcast %139 : vector<17x1xf32> to vector<17x16xf32>
    %141 = arith.subf %135, %140 : vector<17x16xf32>
    %142 = arith.mulf %141, %141 : vector<17x16xf32>
    %cst_68 = arith.constant dense<0.000000e+00> : vector<17xf32>
    %143 = vector.multi_reduction <add>, %142, %cst_68 [1] : vector<17x16xf32> to vector<17xf32>
    %144 = vector.shape_cast %143 : vector<17xf32> to vector<17x1xf32>
    %cst_69 = arith.constant 1.600000e+01 : f32
    %145 = vector.broadcast %cst_69 : f32 to vector<17x1xf32>
    %146 = arith.divf %144, %145 : vector<17x1xf32>
    %cst_70 = arith.constant 9.99999997E-7 : f32
    %147 = vector.broadcast %cst_70 : f32 to vector<17x1xf32>
    %148 = arith.addf %146, %147 : vector<17x1xf32>
    %149 = math.rsqrt %148 : vector<17x1xf32>
    %150 = vector.broadcast %149 : vector<17x1xf32> to vector<17x16xf32>
    %151 = arith.mulf %141, %150 : vector<17x16xf32>
    %152 = vector.broadcast %18 : vector<1x16xf32> to vector<17x16xf32>
    %153 = arith.mulf %151, %152 : vector<17x16xf32>
    %154 = vector.broadcast %20 : vector<1x16xf32> to vector<17x16xf32>
    %155 = arith.addf %153, %154 : vector<17x16xf32>
    %cst_71 = arith.constant dense<0.000000e+00> : vector<17x64xf32>
    %156 = tpu.matmul %155, %22, %cst_71 {dimension_numbers = #tpu.dot_dimension_numbers<[1], [0], [0], [1], [0, 0, 1, 1], [], []>} : vector<17x16xf32>, vector<16x64xf32>, vector<17x64xf32> -> vector<17x64xf32>
    %157 = vector.broadcast %24 : vector<1x64xf32> to vector<17x64xf32>
    %158 = arith.addf %156, %157 : vector<17x64xf32>
    %cst_72 = arith.constant 5.000000e-01 : f32
    %159 = vector.broadcast %cst_72 : f32 to vector<17x64xf32>
    %160 = arith.mulf %159, %158 : vector<17x64xf32>
    %cst_73 = arith.constant 0.707106769 : f32
    %161 = vector.broadcast %cst_73 : f32 to vector<17x64xf32>
    %162 = arith.mulf %158, %161 : vector<17x64xf32>
    %163 = math.erf %162 : vector<17x64xf32>
    %cst_74 = arith.constant 1.000000e+00 : f32
    %164 = vector.broadcast %cst_74 : f32 to vector<17x64xf32>
    %165 = arith.addf %164, %163 : vector<17x64xf32>
    %166 = arith.mulf %160, %165 : vector<17x64xf32>
    %cst_75 = arith.constant dense<0.000000e+00> : vector<17x16xf32>
    %167 = tpu.matmul %166, %26, %cst_75 {dimension_numbers = #tpu.dot_dimension_numbers<[1], [0], [0], [1], [0, 0, 1, 1], [], []>} : vector<17x64xf32>, vector<64x16xf32>, vector<17x16xf32> -> vector<17x16xf32>
    %168 = vector.broadcast %28 : vector<1x16xf32> to vector<17x16xf32>
    %169 = arith.addf %167, %168 : vector<17x16xf32>
    %170 = arith.addf %135, %169 : vector<17x16xf32>
    %c0_76 = arith.constant 0 : index
    %c0_77 = arith.constant 0 : index
    %c0_78 = arith.constant 0 : index
    %171 = vector.load %arg25[%c0_76, %c0_77, %c0_78] : memref<1x17x16xf32, #tpu.memory_space<vmem>>, vector<1x17x16xf32>
    %172 = vector.shape_cast %171 : vector<1x17x16xf32> to vector<17x16xf32>
    %173 = vector.shape_cast %170 : vector<17x16xf32> to vector<1x17x16xf32>
    tpu.vector_store %arg25[%c0_76, %c0_77, %c0_78], %173 {strides = array<i32>} : memref<1x17x16xf32, #tpu.memory_space<vmem>>, vector<1x17x16xf32>,
    %c0_i32_79 = arith.constant 0 : i32
    %174 = arith.cmpi eq, %arg1, %c0_i32_79 : i32
    %175 = arith.extui %174 : i1 to i32
    %c0_i32_80 = arith.constant 0 : i32
    %176 = arith.cmpi ne, %175, %c0_i32_80 : i32
    scf.if %176 {
      %177 = vector.extract_strided_slice %170 {offsets = [1, 0], sizes = [16, 16], strides = [1, 1]} : vector<17x16xf32> to vector<16x16xf32>
      %c0_81 = arith.constant 0 : index
      %c0_82 = arith.constant 0 : index
      %178 = vector.load %arg16[%c0_81, %c0_82] : memref<1x16xf32, #tpu.memory_space<vmem>>, vector<1x16xf32>
      %c0_83 = arith.constant 0 : index
      %c0_84 = arith.constant 0 : index
      %179 = vector.load %arg17[%c0_83, %c0_84] : memref<1x16xf32, #tpu.memory_space<vmem>>, vector<1x16xf32>
      %cst_85 = arith.constant dense<0.000000e+00> : vector<16xf32>
      %180 = vector.multi_reduction <add>, %177, %cst_85 [1] : vector<16x16xf32> to vector<16xf32>
      %181 = vector.shape_cast %180 : vector<16xf32> to vector<16x1xf32>
      %cst_86 = arith.constant 1.600000e+01 : f32
      %182 = vector.broadcast %cst_86 : f32 to vector<16x1xf32>
      %183 = arith.divf %181, %182 : vector<16x1xf32>
      %184 = vector.broadcast %183 : vector<16x1xf32> to vector<16x16xf32>
      %185 = arith.subf %177, %184 : vector<16x16xf32>
      %186 = arith.mulf %185, %185 : vector<16x16xf32>
      %cst_87 = arith.constant dense<0.000000e+00> : vector<16xf32>
      %187 = vector.multi_reduction <add>, %186, %cst_87 [1] : vector<16x16xf32> to vector<16xf32>
      %188 = vector.shape_cast %187 : vector<16xf32> to vector<16x1xf32>
      %cst_88 = arith.constant 1.600000e+01 : f32
      %189 = vector.broadcast %cst_88 : f32 to vector<16x1xf32>
      %190 = arith.divf %188, %189 : vector<16x1xf32>
      %cst_89 = arith.constant 9.99999997E-7 : f32
      %191 = vector.broadcast %cst_89 : f32 to vector<16x1xf32>
      %192 = arith.addf %190, %191 : vector<16x1xf32>
      %193 = math.rsqrt %192 : vector<16x1xf32>
      %194 = vector.broadcast %193 : vector<16x1xf32> to vector<16x16xf32>
      %195 = arith.mulf %185, %194 : vector<16x16xf32>
      %196 = vector.broadcast %178 : vector<1x16xf32> to vector<16x16xf32>
      %197 = arith.mulf %195, %196 : vector<16x16xf32>
      %198 = vector.broadcast %179 : vector<1x16xf32> to vector<16x16xf32>
      %199 = arith.addf %197, %198 : vector<16x16xf32>
      %c0_90 = arith.constant 0 : index
      %c0_91 = arith.constant 0 : index
      %200 = vector.load %arg18[%c0_90, %c0_91] : memref<16x48xf32, #tpu.memory_space<vmem>>, vector<16x48xf32>
      %cst_92 = arith.constant dense<0.000000e+00> : vector<16x48xf32>
      %201 = tpu.matmul %199, %200, %cst_92 {dimension_numbers = #tpu.dot_dimension_numbers<[1], [0], [0], [1], [0, 0, 1, 1], [], []>} : vector<16x16xf32>, vector<16x48xf32>, vector<16x48xf32> -> vector<16x48xf32>
      %c0_93 = arith.constant 0 : index
      %c0_94 = arith.constant 0 : index
      %202 = vector.load %arg19[%c0_93, %c0_94] : memref<1x48xf32, #tpu.memory_space<vmem>>, vector<1x48xf32>
      %203 = vector.broadcast %202 : vector<1x48xf32> to vector<16x48xf32>
      %204 = arith.addf %201, %203 : vector<16x48xf32>
      %c0_95 = arith.constant 0 : index
      %c0_96 = arith.constant 0 : index
      %c0_97 = arith.constant 0 : index
      %205 = vector.load %arg22[%c0_95, %c0_96, %c0_97] : memref<1x16x48xf32, #tpu.memory_space<vmem>>, vector<1x16x48xf32>
      %206 = vector.shape_cast %205 : vector<1x16x48xf32> to vector<16x48xf32>
      %207 = vector.shape_cast %204 : vector<16x48xf32> to vector<1x16x48xf32>
      tpu.vector_store %arg22[%c0_95, %c0_96, %c0_97], %207 {strides = array<i32>} : memref<1x16x48xf32, #tpu.memory_space<vmem>>, vector<1x16x48xf32>,
      %c0_98 = arith.constant 0 : index
      %c0_99 = arith.constant 0 : index
      %c0_100 = arith.constant 0 : index
      %208 = vector.load %arg20[%c0_98, %c0_99, %c0_100] : memref<1x16x48xf32, #tpu.memory_space<vmem>>, vector<1x16x48xf32>
      %209 = vector.shape_cast %208 : vector<1x16x48xf32> to vector<16x48xf32>
      %210 = arith.subf %204, %209 : vector<16x48xf32>
      %211 = arith.mulf %210, %210 : vector<16x48xf32>
      %cst_101 = arith.constant dense<0.000000e+00> : vector<16xf32>
      %212 = vector.multi_reduction <add>, %211, %cst_101 [1] : vector<16x48xf32> to vector<16xf32>
      %213 = vector.shape_cast %212 : vector<16xf32> to vector<16x1xf32>
      %cst_102 = arith.constant 4.800000e+01 : f32
      %214 = vector.broadcast %cst_102 : f32 to vector<16x1xf32>
      %215 = arith.divf %213, %214 : vector<16x1xf32>
      %c0_103 = arith.constant 0 : index
      %c0_104 = arith.constant 0 : index
      %c0_105 = arith.constant 0 : index
      %216 = vector.load %arg21[%c0_103, %c0_104, %c0_105] : memref<1x16x1xf32, #tpu.memory_space<vmem>>, vector<1x16x1xf32>
      %217 = vector.shape_cast %216 : vector<1x16x1xf32> to vector<16x1xf32>
      %218 = arith.mulf %215, %217 : vector<16x1xf32>
      %219 = vector.shape_cast %218 : vector<16x1xf32> to vector<1x16x1xf32>
      %cst_106 = arith.constant dense<0.000000e+00> : vector<1xf32>
      %220 = vector.multi_reduction <add>, %219, %cst_106 [1, 2] : vector<1x16x1xf32> to vector<1xf32>
      %221 = vector.shape_cast %220 : vector<1xf32> to vector<1x1x1xf32>
      %222 = vector.extract %221[0, 0, 0] : f32 from vector<1x1x1xf32>
      %223 = vector.broadcast %222 : f32 to vector<1x1xf32>
      %c0_107 = arith.constant 0 : index
      %c0_108 = arith.constant 0 : index
      %c0_109 = arith.constant 0 : index
      %224 = vector.load %arg23[%c0_107, %c0_108, %c0_109] : memref<1x1x1xf32, #tpu.memory_space<vmem>>, vector<1x1x1xf32>
      %225 = vector.shape_cast %224 : vector<1x1x1xf32> to vector<1x1xf32>
      %226 = vector.shape_cast %223 : vector<1x1xf32> to vector<1x1x1xf32>
      tpu.vector_store %arg23[%c0_107, %c0_108, %c0_109], %226 {strides = array<i32>} : memref<1x1x1xf32, #tpu.memory_space<vmem>>, vector<1x1x1xf32>,
      %227 = vector.shape_cast %217 : vector<16x1xf32> to vector<1x16x1xf32>
      %cst_110 = arith.constant dense<0.000000e+00> : vector<1xf32>
      %228 = vector.multi_reduction <add>, %227, %cst_110 [1, 2] : vector<1x16x1xf32> to vector<1xf32>
      %229 = vector.shape_cast %228 : vector<1xf32> to vector<1x1x1xf32>
      %230 = vector.extract %229[0, 0, 0] : f32 from vector<1x1x1xf32>
      %231 = vector.broadcast %230 : f32 to vector<1x1xf32>
      %c0_111 = arith.constant 0 : index
      %c0_112 = arith.constant 0 : index
      %c0_113 = arith.constant 0 : index
      %232 = vector.load %arg24[%c0_111, %c0_112, %c0_113] : memref<1x1x1xf32, #tpu.memory_space<vmem>>, vector<1x1x1xf32>
      %233 = vector.shape_cast %232 : vector<1x1x1xf32> to vector<1x1xf32>
      %234 = vector.shape_cast %231 : vector<1x1xf32> to vector<1x1x1xf32>
      tpu.vector_store %arg24[%c0_111, %c0_112, %c0_113], %234 {strides = array<i32>} : memref<1x1x1xf32, #tpu.memory_space<vmem>>, vector<1x1x1xf32>,
    } else {
    }
    return
  }
  func.func @transform_0(%arg0: i32, %arg1: i32) -> (i32, i32, i32) {
    %c0_i32 = arith.constant 0 : i32
    %c0_i32_0 = arith.constant 0 : i32
    %c0_i32_1 = arith.constant 0 : i32
    return %arg0, %c0_i32, %c0_i32_0 : i32, i32, i32
  }
  func.func @transform_1(%arg0: i32, %arg1: i32) -> (i32, i32, i32) {
    %c0_i32 = arith.constant 0 : i32
    %c0_i32_0 = arith.constant 0 : i32
    %c0_i32_1 = arith.constant 0 : i32
    %c0_i32_2 = arith.constant 0 : i32
    return %c0_i32, %c0_i32_0, %c0_i32_1 : i32, i32, i32
  }
  func.func @transform_2(%arg0: i32, %arg1: i32) -> (i32, i32, i32) {
    %c0_i32 = arith.constant 0 : i32
    %c0_i32_0 = arith.constant 0 : i32
    %c0_i32_1 = arith.constant 0 : i32
    return %arg1, %c0_i32, %c0_i32_0 : i32, i32, i32
  }
  func.func @transform_3(%arg0: i32, %arg1: i32) -> (i32, i32, i32) {
    %c0_i32 = arith.constant 0 : i32
    %c0_i32_0 = arith.constant 0 : i32
    %c0_i32_1 = arith.constant 0 : i32
    return %arg1, %c0_i32, %c0_i32_0 : i32, i32, i32
  }
  func.func @transform_4(%arg0: i32, %arg1: i32) -> (i32, i32, i32) {
    %c0_i32 = arith.constant 0 : i32
    %c0_i32_0 = arith.constant 0 : i32
    %c0_i32_1 = arith.constant 0 : i32
    return %arg1, %c0_i32, %c0_i32_0 : i32, i32, i32
  }
  func.func @transform_5(%arg0: i32, %arg1: i32) -> (i32, i32, i32) {
    %c0_i32 = arith.constant 0 : i32
    %c0_i32_0 = arith.constant 0 : i32
    %c0_i32_1 = arith.constant 0 : i32
    return %arg1, %c0_i32, %c0_i32_0 : i32, i32, i32
  }
  func.func @transform_6(%arg0: i32, %arg1: i32) -> (i32, i32, i32, i32) {
    %c0_i32 = arith.constant 0 : i32
    %c0_i32_0 = arith.constant 0 : i32
    %c0_i32_1 = arith.constant 0 : i32
    %c0_i32_2 = arith.constant 0 : i32
    return %arg1, %c0_i32, %c0_i32_0, %c0_i32_1 : i32, i32, i32, i32
  }
  func.func @transform_7(%arg0: i32, %arg1: i32) -> (i32, i32, i32) {
    %c0_i32 = arith.constant 0 : i32
    %c0_i32_0 = arith.constant 0 : i32
    %c0_i32_1 = arith.constant 0 : i32
    return %arg1, %c0_i32, %c0_i32_0 : i32, i32, i32
  }
  func.func @transform_8(%arg0: i32, %arg1: i32) -> (i32, i32, i32) {
    %c0_i32 = arith.constant 0 : i32
    %c0_i32_0 = arith.constant 0 : i32
    %c0_i32_1 = arith.constant 0 : i32
    return %arg1, %c0_i32, %c0_i32_0 : i32, i32, i32
  }
  func.func @transform_9(%arg0: i32, %arg1: i32) -> (i32, i32, i32) {
    %c0_i32 = arith.constant 0 : i32
    %c0_i32_0 = arith.constant 0 : i32
    %c0_i32_1 = arith.constant 0 : i32
    return %arg1, %c0_i32, %c0_i32_0 : i32, i32, i32
  }
  func.func @transform_10(%arg0: i32, %arg1: i32) -> (i32, i32, i32) {
    %c0_i32 = arith.constant 0 : i32
    %c0_i32_0 = arith.constant 0 : i32
    %c0_i32_1 = arith.constant 0 : i32
    return %arg1, %c0_i32, %c0_i32_0 : i32, i32, i32
  }
  func.func @transform_11(%arg0: i32, %arg1: i32) -> (i32, i32, i32) {
    %c0_i32 = arith.constant 0 : i32
    %c0_i32_0 = arith.constant 0 : i32
    %c0_i32_1 = arith.constant 0 : i32
    return %arg1, %c0_i32, %c0_i32_0 : i32, i32, i32
  }
  func.func @transform_12(%arg0: i32, %arg1: i32) -> (i32, i32, i32) {
    %c0_i32 = arith.constant 0 : i32
    %c0_i32_0 = arith.constant 0 : i32
    %c0_i32_1 = arith.constant 0 : i32
    return %arg1, %c0_i32, %c0_i32_0 : i32, i32, i32
  }
  func.func @transform_13(%arg0: i32, %arg1: i32) -> (i32, i32, i32) {
    %c0_i32 = arith.constant 0 : i32
    %c0_i32_0 = arith.constant 0 : i32
    %c0_i32_1 = arith.constant 0 : i32
    return %arg1, %c0_i32, %c0_i32_0 : i32, i32, i32
  }
  func.func @transform_14(%arg0: i32, %arg1: i32) -> (i32, i32) {
    %c0_i32 = arith.constant 0 : i32
    %c0_i32_0 = arith.constant 0 : i32
    %c0_i32_1 = arith.constant 0 : i32
    return %c0_i32, %c0_i32_0 : i32, i32
  }
  func.func @transform_15(%arg0: i32, %arg1: i32) -> (i32, i32) {
    %c0_i32 = arith.constant 0 : i32
    %c0_i32_0 = arith.constant 0 : i32
    %c0_i32_1 = arith.constant 0 : i32
    return %c0_i32, %c0_i32_0 : i32, i32
  }
  func.func @transform_16(%arg0: i32, %arg1: i32) -> (i32, i32) {
    %c0_i32 = arith.constant 0 : i32
    %c0_i32_0 = arith.constant 0 : i32
    %c0_i32_1 = arith.constant 0 : i32
    return %c0_i32, %c0_i32_0 : i32, i32
  }
  func.func @transform_17(%arg0: i32, %arg1: i32) -> (i32, i32) {
    %c0_i32 = arith.constant 0 : i32
    %c0_i32_0 = arith.constant 0 : i32
    %c0_i32_1 = arith.constant 0 : i32
    return %c0_i32, %c0_i32_0 : i32, i32
  }
  func.func @transform_18(%arg0: i32, %arg1: i32) -> (i32, i32, i32) {
    %c0_i32 = arith.constant 0 : i32
    %c0_i32_0 = arith.constant 0 : i32
    %c0_i32_1 = arith.constant 0 : i32
    return %arg0, %c0_i32, %c0_i32_0 : i32, i32, i32
  }
  func.func @transform_19(%arg0: i32, %arg1: i32) -> (i32, i32, i32) {
    %c0_i32 = arith.constant 0 : i32
    %c0_i32_0 = arith.constant 0 : i32
    %c0_i32_1 = arith.constant 0 : i32
    return %arg0, %c0_i32, %c0_i32_0 : i32, i32, i32
  }
  func.func @transform_20(%arg0: i32, %arg1: i32) -> (i32, i32, i32) {
    %c0_i32 = arith.constant 0 : i32
    %c0_i32_0 = arith.constant 0 : i32
    %c0_i32_1 = arith.constant 0 : i32
    return %arg0, %c0_i32, %c0_i32_0 : i32, i32, i32
  }
  func.func @transform_21(%arg0: i32, %arg1: i32) -> (i32, i32, i32) {
    %c0_i32 = arith.constant 0 : i32
    %c0_i32_0 = arith.constant 0 : i32
    %c0_i32_1 = arith.constant 0 : i32
    return %arg0, %c0_i32, %c0_i32_0 : i32, i32, i32
  }
  func.func @transform_22(%arg0: i32, %arg1: i32) -> (i32, i32, i32) {
    %c0_i32 = arith.constant 0 : i32
    %c0_i32_0 = arith.constant 0 : i32
    %c0_i32_1 = arith.constant 0 : i32
    return %arg0, %c0_i32, %c0_i32_0 : i32, i32, i32
  }
}

</mosaic_0001>

<llo_original>
// kernel: mae_forward.3
$region0: #{mae_forward.3}
  #allocation0 [shape = 'u32[]', space=smem, size = 0x4, offset = 0x4, fixed_abs, tag = 'smem constant byte address 0x4 - core index']
  #allocation1 [shape = 'u32[144,128]{1,0:T(1,128)}', space=vmem, size = 0x12000, scoped, tag = 'internal scratch']
  %s0 = inlined_call_operand.vmem [shape: f32[2,16,48], index: 0, kind: input, shape index: {}]
  %s1 = inlined_call_operand.vmem [shape: f32[48,32], index: 1, kind: input, shape index: {}]
  %s2 = inlined_call_operand.vmem [shape: f32[1,32], index: 2, kind: input, shape index: {}]
  %s3 = inlined_call_operand.vmem [shape: f32[1,16,32], index: 3, kind: input, shape index: {}]
  %s4 = inlined_call_operand.vmem [shape: f32[2,16,32], index: 4, kind: output, shape index: {}]
  %s5 = sld [smem:[#allocation0]]
  $region26: #{mae_forward.3} parent=0
    _
  %s7 = ssub.s32 1, %s5
  %s8 = scalar_select 0, %s7, %s5
  // Predicated region
  $region2: #{mae_forward.3} parent=0 // pred_check
    _
  $region3: #{mae_forward.3} parent=0 // pred_check_branch
    %10 = sbr.rel (0) target = $region5
  $region4: #{mae_forward.3} parent=0 // pred_region
    _
  $region5: #{mae_forward.3} parent=0 // pred_fallthru
    _
  // Predicated region
  $region6: #{mae_forward.3} parent=0 // pred_check
    _
  $region7: #{mae_forward.3} parent=0 // pred_check_branch
    %12 = sbr.rel (0) target = $region9
  $region8: #{mae_forward.3} parent=0 // pred_region
    _
  $region9: #{mae_forward.3} parent=0 // pred_fallthru
    _
  // Predicated region
  $region10: #{mae_forward.3} parent=0 // pred_check
    _
  $region11: #{mae_forward.3} parent=0 // pred_check_branch
    %14 = sbr.rel (0) target = $region13
  $region12: #{mae_forward.3} parent=0 // pred_region
    _
  $region13: #{mae_forward.3} parent=0 // pred_fallthru
    _
  // Predicated region
  $region14: #{mae_forward.3} parent=0 // pred_check
    _
  $region15: #{mae_forward.3} parent=0 // pred_check_branch
    %16 = sbr.rel (0) target = $region17
  $region16: #{mae_forward.3} parent=0 // pred_region
    _
  $region17: #{mae_forward.3} parent=0 // pred_fallthru
    _
  %v17 = vld [vmem:[%s1] sm:$0xff]
  %v18 = vld [vmem:[%s1 + $0x8] sm:$0xff]
  %v19 = vld [vmem:[%s1 + $0x10] sm:$0xff]
  %v20 = vld [vmem:[%s1 + $0x18] sm:$0xff]
  %v21 = vld [vmem:[%s1 + $0x20] sm:$0xff]
  %v22 = vld [vmem:[%s1 + $0x28] sm:$0xff]
  %v23 = vld [vmem:[%s2] sm:$0x1]
  %v24 = vld [vmem:[%s3] sm:$0xff]
  %v25 = vld [vmem:[%s3 + $0x8] sm:$0xff]
  %v27 = vlaneseq
  %v28 = vshrl.u32 %v27, 7
  %v29 = vsub.s32 0, %v28
  %v30 = vrot.slane %v23, %v29
  %v32 = vadd.f32 %v30, %v24
  %v33 = vadd.f32 %v30, %v25
  %v34 = vld [vmem:[%s0] sm:$0xff]
  %v35 = vld [vmem:[%s0 + $0x8] sm:$0xff]
  %vm36 = vcmask 392192
  %v38 = vsel %vm36, %v34, 0
  %v41 = vsel %vm36, %v35, 0
  %43 = vmatprep.subr.mxu0 0.0
  %44 = vmatpush1.msra.mxu0 %v17
  %45 = vmatprep.subr.mxu0 0.0
  %46 = vmatpush1.msra.mxu0 %v18
  %47 = vmatprep.subr.mxu0 0.0
  %48 = vmatpush1.msra.mxu0 %v19
  %49 = vmatprep.subr.mxu0 0.0
  %50 = vmatpush1.msra.mxu0 %v20
  %51 = vmatprep.subr.mxu0 0.0
  %52 = vmatpush1.msra.mxu0 %v21
  %53 = vmatprep.subr.mxu0 0.0
  %54 = vmatpush1.msra.mxu0 %v22
  %55 = vmatprep.subr.mxu0 0.0
  %56 = vmatpush1.msra.mxu0 0.0
  %57 = vmatprep.subr.mxu0 0.0
  %58 = vmatpush1.msra.mxu0 0.0
  %59 = vmatprep.subr.mxu0 0.0
  %60 = vmatpush1.msra.mxu0 0.0
  %61 = vmatprep.subr.mxu0 0.0
  %62 = vmatpush1.msra.mxu0 0.0
  %63 = vmatprep.subr.mxu0 0.0
  %64 = vmatpush1.msra.mxu0 0.0
  %65 = vmatprep.subr.mxu0 0.0
  %66 = vmatpush1.msra.mxu0 0.0
  %67 = vmatprep.subr.mxu0 0.0
  %68 = vmatpush1.msra.mxu0 0.0
  %69 = vmatprep.subr.mxu0 0.0
  %70 = vmatpush1.msra.mxu0 0.0
  %71 = vmatprep.subr.mxu0 0.0
  %72 = vmatpush1.msra.mxu0 0.0
  %73 = vmatprep.subr.mxu0 0.0
  %74 = vmatpush1.msra.mxu0 0.0
  %75 = vmatprep.subr.mxu0 0.0
  %76 = vmatpush1.msra.mxu0 0.0
  %77 = vmatprep.subr.mxu0 0.0
  %78 = vmatpush1.msra.mxu0 0.0
  %79 = vmatprep.subr.mxu0 0.0
  %80 = vmatpush1.msra.mxu0 0.0
  %81 = vmatprep.subr.mxu0 0.0
  %82 = vmatpush1.msra.mxu0 0.0
  %83 = vmatprep.subr.mxu0 0.0
  %84 = vmatpush1.msra.mxu0 0.0
  %85 = vmatprep.subr.mxu0 0.0
  %86 = vmatpush1.msra.mxu0 0.0
  %87 = vmatprep.subr.mxu0 0.0
  %88 = vmatpush1.msra.mxu0 0.0
  %89 = vmatprep.subr.mxu0 0.0
  %90 = vmatpush1.msra.mxu0 0.0
  %91 = vmatprep.subr.mxu0 0.0
  %92 = vmatpush1.msra.mxu0 0.0
  %93 = vmatprep.subr.mxu0 0.0
  %94 = vmatpush1.msra.mxu0 0.0
  %95 = vmatprep.subr.mxu0 0.0
  %96 = vmatpush1.msra.mxu0 0.0
  %97 = vmatprep.subr.mxu0 0.0
  %98 = vmatpush1.msra.mxu0 0.0
  %99 = vmatprep.subr.mxu0 0.0
  %100 = vmatpush1.msra.mxu0 0.0
  %101 = vmatprep.subr.mxu0 0.0
  %102 = vmatpush1.msra.mxu0 0.0
  %103 = vmatprep.subr.mxu0 0.0
  %104 = vmatpush1.msra.mxu0 0.0
  %105 = vmatprep.subr.mxu0 0.0
  %106 = vmatpush1.msra.mxu0 0.0
  %107 = vmatprep.mubr.f32.mxu0 0.0
  %108 = vmatmul.mubr.f32.gmra.mrb[0].mxu0 %v38
  %v109 = vpop.f32.mrb[0].mxu0
  %v110 = vadd.f32 %v32, %v109
  %v111 = vpop.f32.mrb[0].mxu0
  %112 = vmatprep.mubr.f32.mxu0 0.0
  %113 = vmatmul.mubr.f32.gmra.mrb[0].mxu0 %v41
  %v114 = vpop.f32.mrb[0].mxu0
  %v115 = vadd.f32 %v33, %v114
  %v116 = vpop.f32.mrb[0].mxu0
  %117 = vdwg.mxu0
  %vm118 = vcmask 261120
  %119 = vst.msk [vmem:[%s4] sm:$0xff] %vm118, %v110
  %120 = vst.msk [vmem:[%s4 + $0x8] sm:$0xff] %vm118, %v115
  %s121 = scalar_lea.vmem %s0, 16
  %v122 = vld [vmem:[%s121] sm:$0xff]
  %v123 = vld [vmem:[%s121 + $0x8] sm:$0xff]
  %v125 = vsel %vm36, %v122, 0
  %v128 = vsel %vm36, %v123, 0
  %130 = vmatprep.subr.mxu0 0.0
  %131 = vmatpush1.msra.mxu0 %v17
  %132 = vmatprep.subr.mxu0 0.0
  %133 = vmatpush1.msra.mxu0 %v18
  %134 = vmatprep.subr.mxu0 0.0
  %135 = vmatpush1.msra.mxu0 %v19
  %136 = vmatprep.subr.mxu0 0.0
  %137 = vmatpush1.msra.mxu0 %v20
  %138 = vmatprep.subr.mxu0 0.0
  %139 = vmatpush1.msra.mxu0 %v21
  %140 = vmatprep.subr.mxu0 0.0
  %141 = vmatpush1.msra.mxu0 %v22
  %142 = vmatprep.subr.mxu0 0.0
  %143 = vmatpush1.msra.mxu0 0.0
  %144 = vmatprep.subr.mxu0 0.0
  %145 = vmatpush1.msra.mxu0 0.0
  %146 = vmatprep.subr.mxu0 0.0
  %147 = vmatpush1.msra.mxu0 0.0
  %148 = vmatprep.subr.mxu0 0.0
  %149 = vmatpush1.msra.mxu0 0.0
  %150 = vmatprep.subr.mxu0 0.0
  %151 = vmatpush1.msra.mxu0 0.0
  %152 = vmatprep.subr.mxu0 0.0
  %153 = vmatpush1.msra.mxu0 0.0
  %154 = vmatprep.subr.mxu0 0.0
  %155 = vmatpush1.msra.mxu0 0.0
  %156 = vmatprep.subr.mxu0 0.0
  %157 = vmatpush1.msra.mxu0 0.0
  %158 = vmatprep.subr.mxu0 0.0
  %159 = vmatpush1.msra.mxu0 0.0
  %160 = vmatprep.subr.mxu0 0.0
  %161 = vmatpush1.msra.mxu0 0.0
  %162 = vmatprep.subr.mxu0 0.0
  %163 = vmatpush1.msra.mxu0 0.0
  %164 = vmatprep.subr.mxu0 0.0
  %165 = vmatpush1.msra.mxu0 0.0
  %166 = vmatprep.subr.mxu0 0.0
  %167 = vmatpush1.msra.mxu0 0.0
  %168 = vmatprep.subr.mxu0 0.0
  %169 = vmatpush1.msra.mxu0 0.0
  %170 = vmatprep.subr.mxu0 0.0
  %171 = vmatpush1.msra.mxu0 0.0
  %172 = vmatprep.subr.mxu0 0.0
  %173 = vmatpush1.msra.mxu0 0.0
  %174 = vmatprep.subr.mxu0 0.0
  %175 = vmatpush1.msra.mxu0 0.0
  %176 = vmatprep.subr.mxu0 0.0
  %177 = vmatpush1.msra.mxu0 0.0
  %178 = vmatprep.subr.mxu0 0.0
  %179 = vmatpush1.msra.mxu0 0.0
  %180 = vmatprep.subr.mxu0 0.0
  %181 = vmatpush1.msra.mxu0 0.0
  %182 = vmatprep.subr.mxu0 0.0
  %183 = vmatpush1.msra.mxu0 0.0
  %184 = vmatprep.subr.mxu0 0.0
  %185 = vmatpush1.msra.mxu0 0.0
  %186 = vmatprep.subr.mxu0 0.0
  %187 = vmatpush1.msra.mxu0 0.0
  %188 = vmatprep.subr.mxu0 0.0
  %189 = vmatpush1.msra.mxu0 0.0
  %190 = vmatprep.subr.mxu0 0.0
  %191 = vmatpush1.msra.mxu0 0.0
  %192 = vmatprep.subr.mxu0 0.0
  %193 = vmatpush1.msra.mxu0 0.0
  %194 = vmatprep.mubr.f32.mxu0 0.0
  %195 = vmatmul.mubr.f32.gmra.mrb[0].mxu0 %v125
  %v196 = vpop.f32.mrb[0].mxu0
  %v197 = vadd.f32 %v32, %v196
  %v198 = vpop.f32.mrb[0].mxu0
  %199 = vmatprep.mubr.f32.mxu0 0.0
  %200 = vmatmul.mubr.f32.gmra.mrb[0].mxu0 %v128
  %v201 = vpop.f32.mrb[0].mxu0
  %v202 = vadd.f32 %v33, %v201
  %v203 = vpop.f32.mrb[0].mxu0
  %204 = vdwg.mxu0
  %s205 = scalar_lea.vmem %s4, 16
  %206 = vst.msk [vmem:[%s205] sm:$0xff] %vm118, %v197
  %207 = vst.msk [vmem:[%s205 + $0x8] sm:$0xff] %vm118, %v202
  // Predicated region
  $region18: #{mae_forward.3} parent=0 // pred_check
    _
  $region19: #{mae_forward.3} parent=0 // pred_check_branch
    %209 = sbr.rel (0) target = $region21
  $region20: #{mae_forward.3} parent=0 // pred_region
    _
  $region21: #{mae_forward.3} parent=0 // pred_fallthru
    _
  // Predicated region
  $region22: #{mae_forward.3} parent=0 // pred_check
    _
  $region23: #{mae_forward.3} parent=0 // pred_check_branch
    %211 = sbr.rel (0) target = $region25
  $region24: #{mae_forward.3} parent=0 // pred_region
    _
  $region25: #{mae_forward.3} parent=0 // pred_fallthru
    _

// kernel: mae_forward.4
$region0: #{mae_forward.4}
  #allocation0 [shape = 'u32[]', space=smem, size = 0x4, offset = 0x4, fixed_abs, tag = 'smem constant byte address 0x4 - core index']
  #allocation1 [shape = 'u32[144,128]{1,0:T(1,128)}', space=vmem, size = 0x12000, scoped, tag = 'internal scratch']
  #allocation2 [shape = 'f32[1,5,32]{2,1,0:T(8,128)}', space=vmem, size = 0x1000, scoped, tag = 'scratch operand']
  %s0 = inlined_call_operand.vmem [shape: f32[2,5,32], index: 0, kind: input, shape index: {}]
  %s1 = inlined_call_operand.vmem [shape: f32[2,1,32], index: 1, kind: input, shape index: {}]
  %s2 = inlined_call_operand.vmem [shape: f32[2,1,32], index: 2, kind: input, shape index: {}]
  %s3 = inlined_call_operand.vmem [shape: f32[2,32,96], index: 3, kind: input, shape index: {}]
  %s4 = inlined_call_operand.vmem [shape: f32[2,1,96], index: 4, kind: input, shape index: {}]
  %s5 = inlined_call_operand.vmem [shape: f32[2,4,8,32], index: 5, kind: input, shape index: {}]
  %s6 = inlined_call_operand.vmem [shape: f32[2,1,32], index: 6, kind: input, shape index: {}]
  %s7 = inlined_call_operand.vmem [shape: f32[2,1,32], index: 7, kind: input, shape index: {}]
  %s8 = inlined_call_operand.vmem [shape: f32[2,1,32], index: 8, kind: input, shape index: {}]
  %s9 = inlined_call_operand.vmem [shape: f32[2,32,128], index: 9, kind: input, shape index: {}]
  %s10 = inlined_call_operand.vmem [shape: f32[2,1,128], index: 10, kind: input, shape index: {}]
  %s11 = inlined_call_operand.vmem [shape: f32[2,128,32], index: 11, kind: input, shape index: {}]
  %s12 = inlined_call_operand.vmem [shape: f32[2,1,32], index: 12, kind: input, shape index: {}]
  %s13 = inlined_call_operand.vmem [shape: f32[1,32], index: 13, kind: input, shape index: {}]
  %s14 = inlined_call_operand.vmem [shape: f32[1,32], index: 14, kind: input, shape index: {}]
  %s15 = inlined_call_operand.vmem [shape: f32[32,16], index: 15, kind: input, shape index: {}]
  %s16 = inlined_call_operand.vmem [shape: f32[1,16], index: 16, kind: input, shape index: {}]
  %s17 = inlined_call_operand.vmem [shape: f32[2,5,16], index: 17, kind: output, shape index: {}]
  %s18 = sld [smem:[#allocation0]]
  $region109: #{mae_forward.4} parent=0
    _
  %s20 = ssub.s32 1, %s18
  %s21 = scalar_select 0, %s20, %s18
  loop: start=0, step=1, limit=6
  $region2: #{mae_forward.4} parent=0 // loop_pre_header
    _
  $region3: #{mae_forward.4} parent=0 // loop_header
    %s23 = sphi 0, %s27
    %p24 = scmp.ge.s32.totalorder %s23, 6
    %s30 = sphi 0, %s42
    %s31 = sphi 0, %s38
    %s32 = sphi 0, %s30
    %s33 = sphi 0, %s31
    %s34 = sphi 0, %s32
    %s35 = sphi 0, %s33
    %s45 = sphi 0, %s47
    %s48 = sphi 0, %s45
    %s49 = sphi 0, %s48
    %s65 = sphi 0, %s49
    %s71 = sphi 0, %s73
    %s74 = sphi 0, %s71
    %s75 = sphi 0, %s74
    %s91 = sphi 0, %s75
    %s97 = sphi 0, %s99
    %s100 = sphi 0, %s97
    %s101 = sphi 0, %s100
    %s117 = sphi 0, %s101
    %s123 = sphi 0, %s125
    %s126 = sphi 0, %s123
    %s127 = sphi 0, %s126
    %s143 = sphi 0, %s127
    %s149 = sphi 0, %s151
    %s152 = sphi 0, %s149
    %s153 = sphi 0, %s152
    %s169 = sphi 0, %s153
    %s175 = sphi 0, %s177
    %s178 = sphi 0, %s175
    %s179 = sphi 0, %s178
    %s195 = sphi 0, %s179
    %s201 = sphi 0, %s203
    %s204 = sphi 0, %s201
    %s205 = sphi 0, %s204
    %s221 = sphi 0, %s205
    %s227 = sphi 0, %s229
    %s230 = sphi 0, %s227
    %s231 = sphi 0, %s230
    %s247 = sphi 0, %s231
    %s253 = sphi 0, %s255
    %s256 = sphi 0, %s253
    %s257 = sphi 0, %s256
    %s273 = sphi 0, %s257
    %s279 = sphi 0, %s281
    %s282 = sphi 0, %s279
    %s283 = sphi 0, %s282
    %s299 = sphi 0, %s283
    %s305 = sphi 0, %s307
    %s308 = sphi 0, %s305
    %s309 = sphi 0, %s308
    %s325 = sphi 0, %s309
    %s331 = sphi 0, %s333
    %s334 = sphi 0, %s331
    %s335 = sphi 0, %s334
    %s351 = sphi 0, %s335
    %s357 = sphi 0, %s359
    %s360 = sphi 0, %s357
    %s361 = sphi 0, %s360
    %s377 = sphi 0, %s361
    %s381 = sphi 0, %s381
    %s383 = sphi 0, %s381
    %s384 = sphi 0, %s383
    %s398 = sphi 0, %s384
    %s402 = sphi 0, %s402
    %s404 = sphi 0, %s402
    %s405 = sphi 0, %s404
    %s419 = sphi 0, %s405
    %s423 = sphi 0, %s423
    %s425 = sphi 0, %s423
    %s426 = sphi 0, %s425
    %s440 = sphi 0, %s426
    %s444 = sphi 0, %s444
    %s446 = sphi 0, %s444
    %s447 = sphi 0, %s446
    %s461 = sphi 0, %s447
    %s467 = sphi 0, %s469
    %s470 = sphi 0, %s467
    %s471 = sphi 0, %s470
    %s487 = sphi 0, %s471
  $region4: #{mae_forward.4} parent=0 // loop_header_branch
    %26 = sbr.rel (%p24) target = $region8
  $region5: #{mae_forward.4} parent=0 // loop_body
    %s28 = ssub.s32 %s23, 1
    %s29 = ssub.s32 %s23, 2
    %s36 = sadd.s32 1, %s31
    %p37 = scmp.ge.s32.totalorder %s36, 2
    %s38 = scalar_select %p37, 0, %s36
    %s39 = sadd.s32 1, %s30
    %s40 = scalar_select %p37, %s39, %s30
    %p41 = scmp.ge.s32.totalorder %s40, 2
    %s42 = scalar_select %p41, 0, %s40
    %s43 = ssub.s32 %s30, %s42
    %p44 = scmp.eq.s32.totalorder %s43, 0
    %s46 = sadd.s32 %s45, 1
    %s47 = scalar_select %p44, %s45, %s46
    %p50 = pneg %p44
    %p51 = scmp.eq.s32.totalorder %s23, 3
    %p52 = por %p50, %p51
    %p53 = scmp.ne.s32.totalorder %s45, %s48
    %p54 = scmp.eq.s32.totalorder %s23, 0
    %p55 = por %p53, %p54
    %p56 = scmp.ne.s32.totalorder %s45, %s48
    %p57 = scmp.eq.s32.totalorder %s28, 3
    %p58 = por %p56, %p57
    %p59 = scmp.ne.s32.totalorder %s48, %s49
    %p60 = scmp.eq.s32.totalorder %s28, 0
    %p61 = por %p59, %p60
    %p62 = scmp.ne.s32.totalorder %s48, %s49
    %p63 = scmp.eq.s32.totalorder %s29, 3
    %p64 = por %p62, %p63
    %p66 = scmp.ne.s32.totalorder %s49, %s65
    %p67 = scmp.eq.s32.totalorder %s29, 0
    %p68 = por %p66, %p67
    %s69 = ssub.s32 %s31, %s38
    %p70 = scmp.eq.s32.totalorder %s69, 0
    %s72 = sadd.s32 %s71, 1
    %s73 = scalar_select %p70, %s71, %s72
    %p76 = pneg %p70
    %p77 = scmp.eq.s32.totalorder %s23, 3
    %p78 = por %p76, %p77
    %p79 = scmp.ne.s32.totalorder %s71, %s74
    %p80 = scmp.eq.s32.totalorder %s23, 0
    %p81 = por %p79, %p80
    %p82 = scmp.ne.s32.totalorder %s71, %s74
    %p83 = scmp.eq.s32.totalorder %s28, 3
    %p84 = por %p82, %p83
    %p85 = scmp.ne.s32.totalorder %s74, %s75
    %p86 = scmp.eq.s32.totalorder %s28, 0
    %p87 = por %p85, %p86
    %p88 = scmp.ne.s32.totalorder %s74, %s75
    %p89 = scmp.eq.s32.totalorder %s29, 3
    %p90 = por %p88, %p89
    %p92 = scmp.ne.s32.totalorder %s75, %s91
    %p93 = scmp.eq.s32.totalorder %s29, 0
    %p94 = por %p92, %p93
    %s95 = ssub.s32 %s31, %s38
    %p96 = scmp.eq.s32.totalorder %s95, 0
    %s98 = sadd.s32 %s97, 1
    %s99 = scalar_select %p96, %s97, %s98
    %p102 = pneg %p96
    %p103 = scmp.eq.s32.totalorder %s23, 3
    %p104 = por %p102, %p103
    %p105 = scmp.ne.s32.totalorder %s97, %s100
    %p106 = scmp.eq.s32.totalorder %s23, 0
    %p107 = por %p105, %p106
    %p108 = scmp.ne.s32.totalorder %s97, %s100
    %p109 = scmp.eq.s32.totalorder %s28, 3
    %p110 = por %p108, %p109
    %p111 = scmp.ne.s32.totalorder %s100, %s101
    %p112 = scmp.eq.s32.totalorder %s28, 0
    %p113 = por %p111, %p112
    %p114 = scmp.ne.s32.totalorder %s100, %s101
    %p115 = scmp.eq.s32.totalorder %s29, 3
    %p116 = por %p114, %p115
    %p118 = scmp.ne.s32.totalorder %s101, %s117
    %p119 = scmp.eq.s32.totalorder %s29, 0
    %p120 = por %p118, %p119
    %s121 = ssub.s32 %s31, %s38
    %p122 = scmp.eq.s32.totalorder %s121, 0
    %s124 = sadd.s32 %s123, 1
    %s125 = scalar_select %p122, %s123, %s124
    %p128 = pneg %p122
    %p129 = scmp.eq.s32.totalorder %s23, 3
    %p130 = por %p128, %p129
    %p131 = scmp.ne.s32.totalorder %s123, %s126
    %p132 = scmp.eq.s32.totalorder %s23, 0
    %p133 = por %p131, %p132
    %p134 = scmp.ne.s32.totalorder %s123, %s126
    %p135 = scmp.eq.s32.totalorder %s28, 3
    %p136 = por %p134, %p135
    %p137 = scmp.ne.s32.totalorder %s126, %s127
    %p138 = scmp.eq.s32.totalorder %s28, 0
    %p139 = por %p137, %p138
    %p140 = scmp.ne.s32.totalorder %s126, %s127
    %p141 = scmp.eq.s32.totalorder %s29, 3
    %p142 = por %p140, %p141
    %p144 = scmp.ne.s32.totalorder %s127, %s143
    %p145 = scmp.eq.s32.totalorder %s29, 0
    %p146 = por %p144, %p145
    %s147 = ssub.s32 %s31, %s38
    %p148 = scmp.eq.s32.totalorder %s147, 0
    %s150 = sadd.s32 %s149, 1
    %s151 = scalar_select %p148, %s149, %s150
    %p154 = pneg %p148
    %p155 = scmp.eq.s32.totalorder %s23, 3
    %p156 = por %p154, %p155
    %p157 = scmp.ne.s32.totalorder %s149, %s152
    %p158 = scmp.eq.s32.totalorder %s23, 0
    %p159 = por %p157, %p158
    %p160 = scmp.ne.s32.totalorder %s149, %s152
    %p161 = scmp.eq.s32.totalorder %s28, 3
    %p162 = por %p160, %p161
    %p163 = scmp.ne.s32.totalorder %s152, %s153
    %p164 = scmp.eq.s32.totalorder %s28, 0
    %p165 = por %p163, %p164
    %p166 = scmp.ne.s32.totalorder %s152, %s153
    %p167 = scmp.eq.s32.totalorder %s29, 3
    %p168 = por %p166, %p167
    %p170 = scmp.ne.s32.totalorder %s153, %s169
    %p171 = scmp.eq.s32.totalorder %s29, 0
    %p172 = por %p170, %p171
    %s173 = ssub.s32 %s31, %s38
    %p174 = scmp.eq.s32.totalorder %s173, 0
    %s176 = sadd.s32 %s175, 1
    %s177 = scalar_select %p174, %s175, %s176
    %p180 = pneg %p174
    %p181 = scmp.eq.s32.totalorder %s23, 3
    %p182 = por %p180, %p181
    %p183 = scmp.ne.s32.totalorder %s175, %s178
    %p184 = scmp.eq.s32.totalorder %s23, 0
    %p185 = por %p183, %p184
    %p186 = scmp.ne.s32.totalorder %s175, %s178
    %p187 = scmp.eq.s32.totalorder %s28, 3
    %p188 = por %p186, %p187
    %p189 = scmp.ne.s32.totalorder %s178, %s179
    %p190 = scmp.eq.s32.totalorder %s28, 0
    %p191 = por %p189, %p190
    %p192 = scmp.ne.s32.totalorder %s178, %s179
    %p193 = scmp.eq.s32.totalorder %s29, 3
    %p194 = por %p192, %p193
    %p196 = scmp.ne.s32.totalorder %s179, %s195
    %p197 = scmp.eq.s32.totalorder %s29, 0
    %p198 = por %p196, %p197
    %s199 = ssub.s32 %s31, %s38
    %p200 = scmp.eq.s32.totalorder %s199, 0
    %s202 = sadd.s32 %s201, 1
    %s203 = scalar_select %p200, %s201, %s202
    %p206 = pneg %p200
    %p207 = scmp.eq.s32.totalorder %s23, 3
    %p208 = por %p206, %p207
    %p209 = scmp.ne.s32.totalorder %s201, %s204
    %p210 = scmp.eq.s32.totalorder %s23, 0
    %p211 = por %p209, %p210
    %p212 = scmp.ne.s32.totalorder %s201, %s204
    %p213 = scmp.eq.s32.totalorder %s28, 3
    %p214 = por %p212, %p213
    %p215 = scmp.ne.s32.totalorder %s204, %s205
    %p216 = scmp.eq.s32.totalorder %s28, 0
    %p217 = por %p215, %p216
    %p218 = scmp.ne.s32.totalorder %s204, %s205
    %p219 = scmp.eq.s32.totalorder %s29, 3
    %p220 = por %p218, %p219
    %p222 = scmp.ne.s32.totalorder %s205, %s221
    %p223 = scmp.eq.s32.totalorder %s29, 0
    %p224 = por %p222, %p223
    %s225 = ssub.s32 %s31, %s38
    %p226 = scmp.eq.s32.totalorder %s225, 0
    %s228 = sadd.s32 %s227, 1
    %s229 = scalar_select %p226, %s227, %s228
    %p232 = pneg %p226
    %p233 = scmp.eq.s32.totalorder %s23, 3
    %p234 = por %p232, %p233
    %p235 = scmp.ne.s32.totalorder %s227, %s230
    %p236 = scmp.eq.s32.totalorder %s23, 0
    %p237 = por %p235, %p236
    %p238 = scmp.ne.s32.totalorder %s227, %s230
    %p239 = scmp.eq.s32.totalorder %s28, 3
    %p240 = por %p238, %p239
    %p241 = scmp.ne.s32.totalorder %s230, %s231
    %p242 = scmp.eq.s32.totalorder %s28, 0
    %p243 = por %p241, %p242
    %p244 = scmp.ne.s32.totalorder %s230, %s231
    %p245 = scmp.eq.s32.totalorder %s29, 3
    %p246 = por %p244, %p245
    %p248 = scmp.ne.s32.totalorder %s231, %s247
    %p249 = scmp.eq.s32.totalorder %s29, 0
    %p250 = por %p248, %p249
    %s251 = ssub.s32 %s31, %s38
    %p252 = scmp.eq.s32.totalorder %s251, 0
    %s254 = sadd.s32 %s253, 1
    %s255 = scalar_select %p252, %s253, %s254
    %p258 = pneg %p252
    %p259 = scmp.eq.s32.totalorder %s23, 3
    %p260 = por %p258, %p259
    %p261 = scmp.ne.s32.totalorder %s253, %s256
    %p262 = scmp.eq.s32.totalorder %s23, 0
    %p263 = por %p261, %p262
    %p264 = scmp.ne.s32.totalorder %s253, %s256
    %p265 = scmp.eq.s32.totalorder %s28, 3
    %p266 = por %p264, %p265
    %p267 = scmp.ne.s32.totalorder %s256, %s257
    %p268 = scmp.eq.s32.totalorder %s28, 0
    %p269 = por %p267, %p268
    %p270 = scmp.ne.s32.totalorder %s256, %s257
    %p271 = scmp.eq.s32.totalorder %s29, 3
    %p272 = por %p270, %p271
    %p274 = scmp.ne.s32.totalorder %s257, %s273
    %p275 = scmp.eq.s32.totalorder %s29, 0
    %p276 = por %p274, %p275
    %s277 = ssub.s32 %s31, %s38
    %p278 = scmp.eq.s32.totalorder %s277, 0
    %s280 = sadd.s32 %s279, 1
    %s281 = scalar_select %p278, %s279, %s280
    %p284 = pneg %p278
    %p285 = scmp.eq.s32.totalorder %s23, 3
    %p286 = por %p284, %p285
    %p287 = scmp.ne.s32.totalorder %s279, %s282
    %p288 = scmp.eq.s32.totalorder %s23, 0
    %p289 = por %p287, %p288
    %p290 = scmp.ne.s32.totalorder %s279, %s282
    %p291 = scmp.eq.s32.totalorder %s28, 3
    %p292 = por %p290, %p291
    %p293 = scmp.ne.s32.totalorder %s282, %s283
    %p294 = scmp.eq.s32.totalorder %s28, 0
    %p295 = por %p293, %p294
    %p296 = scmp.ne.s32.totalorder %s282, %s283
    %p297 = scmp.eq.s32.totalorder %s29, 3
    %p298 = por %p296, %p297
    %p300 = scmp.ne.s32.totalorder %s283, %s299
    %p301 = scmp.eq.s32.totalorder %s29, 0
    %p302 = por %p300, %p301
    %s303 = ssub.s32 %s31, %s38
    %p304 = scmp.eq.s32.totalorder %s303, 0
    %s306 = sadd.s32 %s305, 1
    %s307 = scalar_select %p304, %s305, %s306
    %p310 = pneg %p304
    %p311 = scmp.eq.s32.totalorder %s23, 3
    %p312 = por %p310, %p311
    %p313 = scmp.ne.s32.totalorder %s305, %s308
    %p314 = scmp.eq.s32.totalorder %s23, 0
    %p315 = por %p313, %p314
    %p316 = scmp.ne.s32.totalorder %s305, %s308
    %p317 = scmp.eq.s32.totalorder %s28, 3
    %p318 = por %p316, %p317
    %p319 = scmp.ne.s32.totalorder %s308, %s309
    %p320 = scmp.eq.s32.totalorder %s28, 0
    %p321 = por %p319, %p320
    %p322 = scmp.ne.s32.totalorder %s308, %s309
    %p323 = scmp.eq.s32.totalorder %s29, 3
    %p324 = por %p322, %p323
    %p326 = scmp.ne.s32.totalorder %s309, %s325
    %p327 = scmp.eq.s32.totalorder %s29, 0
    %p328 = por %p326, %p327
    %s329 = ssub.s32 %s31, %s38
    %p330 = scmp.eq.s32.totalorder %s329, 0
    %s332 = sadd.s32 %s331, 1
    %s333 = scalar_select %p330, %s331, %s332
    %p336 = pneg %p330
    %p337 = scmp.eq.s32.totalorder %s23, 3
    %p338 = por %p336, %p337
    %p339 = scmp.ne.s32.totalorder %s331, %s334
    %p340 = scmp.eq.s32.totalorder %s23, 0
    %p341 = por %p339, %p340
    %p342 = scmp.ne.s32.totalorder %s331, %s334
    %p343 = scmp.eq.s32.totalorder %s28, 3
    %p344 = por %p342, %p343
    %p345 = scmp.ne.s32.totalorder %s334, %s335
    %p346 = scmp.eq.s32.totalorder %s28, 0
    %p347 = por %p345, %p346
    %p348 = scmp.ne.s32.totalorder %s334, %s335
    %p349 = scmp.eq.s32.totalorder %s29, 3
    %p350 = por %p348, %p349
    %p352 = scmp.ne.s32.totalorder %s335, %s351
    %p353 = scmp.eq.s32.totalorder %s29, 0
    %p354 = por %p352, %p353
    %s355 = ssub.s32 %s31, %s38
    %p356 = scmp.eq.s32.totalorder %s355, 0
    %s358 = sadd.s32 %s357, 1
    %s359 = scalar_select %p356, %s357, %s358
    %p362 = pneg %p356
    %p363 = scmp.eq.s32.totalorder %s23, 3
    %p364 = por %p362, %p363
    %p365 = scmp.ne.s32.totalorder %s357, %s360
    %p366 = scmp.eq.s32.totalorder %s23, 0
    %p367 = por %p365, %p366
    %p368 = scmp.ne.s32.totalorder %s357, %s360
    %p369 = scmp.eq.s32.totalorder %s28, 3
    %p370 = por %p368, %p369
    %p371 = scmp.ne.s32.totalorder %s360, %s361
    %p372 = scmp.eq.s32.totalorder %s28, 0
    %p373 = por %p371, %p372
    %p374 = scmp.ne.s32.totalorder %s360, %s361
    %p375 = scmp.eq.s32.totalorder %s29, 3
    %p376 = por %p374, %p375
    %p378 = scmp.ne.s32.totalorder %s361, %s377
    %p379 = scmp.eq.s32.totalorder %s29, 0
    %p380 = por %p378, %p379
    %s382 = sadd.s32 %s381, 1
    %p385 = scmp.eq.s32.totalorder %s23, 3
    %p386 = scmp.ne.s32.totalorder %s381, %s383
    %p387 = scmp.eq.s32.totalorder %s23, 0
    %p388 = por %p386, %p387
    %p389 = scmp.ne.s32.totalorder %s381, %s383
    %p390 = scmp.eq.s32.totalorder %s28, 3
    %p391 = por %p389, %p390
    %p392 = scmp.ne.s32.totalorder %s383, %s384
    %p393 = scmp.eq.s32.totalorder %s28, 0
    %p394 = por %p392, %p393
    %p395 = scmp.ne.s32.totalorder %s383, %s384
    %p396 = scmp.eq.s32.totalorder %s29, 3
    %p397 = por %p395, %p396
    %p399 = scmp.ne.s32.totalorder %s384, %s398
    %p400 = scmp.eq.s32.totalorder %s29, 0
    %p401 = por %p399, %p400
    %s403 = sadd.s32 %s402, 1
    %p406 = scmp.eq.s32.totalorder %s23, 3
    %p407 = scmp.ne.s32.totalorder %s402, %s404
    %p408 = scmp.eq.s32.totalorder %s23, 0
    %p409 = por %p407, %p408
    %p410 = scmp.ne.s32.totalorder %s402, %s404
    %p411 = scmp.eq.s32.totalorder %s28, 3
    %p412 = por %p410, %p411
    %p413 = scmp.ne.s32.totalorder %s404, %s405
    %p414 = scmp.eq.s32.totalorder %s28, 0
    %p415 = por %p413, %p414
    %p416 = scmp.ne.s32.totalorder %s404, %s405
    %p417 = scmp.eq.s32.totalorder %s29, 3
    %p418 = por %p416, %p417
    %p420 = scmp.ne.s32.totalorder %s405, %s419
    %p421 = scmp.eq.s32.totalorder %s29, 0
    %p422 = por %p420, %p421
    %s424 = sadd.s32 %s423, 1
    %p427 = scmp.eq.s32.totalorder %s23, 3
    %p428 = scmp.ne.s32.totalorder %s423, %s425
    %p429 = scmp.eq.s32.totalorder %s23, 0
    %p430 = por %p428, %p429
    %p431 = scmp.ne.s32.totalorder %s423, %s425
    %p432 = scmp.eq.s32.totalorder %s28, 3
    %p433 = por %p431, %p432
    %p434 = scmp.ne.s32.totalorder %s425, %s426
    %p435 = scmp.eq.s32.totalorder %s28, 0
    %p436 = por %p434, %p435
    %p437 = scmp.ne.s32.totalorder %s425, %s426
    %p438 = scmp.eq.s32.totalorder %s29, 3
    %p439 = por %p437, %p438
    %p441 = scmp.ne.s32.totalorder %s426, %s440
    %p442 = scmp.eq.s32.totalorder %s29, 0
    %p443 = por %p441, %p442
    %s445 = sadd.s32 %s444, 1
    %p448 = scmp.eq.s32.totalorder %s23, 3
    %p449 = scmp.ne.s32.totalorder %s444, %s446
    %p450 = scmp.eq.s32.totalorder %s23, 0
    %p451 = por %p449, %p450
    %p452 = scmp.ne.s32.totalorder %s444, %s446
    %p453 = scmp.eq.s32.totalorder %s28, 3
    %p454 = por %p452, %p453
    %p455 = scmp.ne.s32.totalorder %s446, %s447
    %p456 = scmp.eq.s32.totalorder %s28, 0
    %p457 = por %p455, %p456
    %p458 = scmp.ne.s32.totalorder %s446, %s447
    %p459 = scmp.eq.s32.totalorder %s29, 3
    %p460 = por %p458, %p459
    %p462 = scmp.ne.s32.totalorder %s447, %s461
    %p463 = scmp.eq.s32.totalorder %s29, 0
    %p464 = por %p462, %p463
    %s465 = ssub.s32 %s30, %s42
    %p466 = scmp.eq.s32.totalorder %s465, 0
    %s468 = sadd.s32 %s467, 1
    %s469 = scalar_select %p466, %s467, %s468
    %p472 = pneg %p466
    %p473 = scmp.eq.s32.totalorder %s23, 3
    %p474 = por %p472, %p473
    %p475 = scmp.ne.s32.totalorder %s467, %s470
    %p476 = scmp.eq.s32.totalorder %s23, 0
    %p477 = por %p475, %p476
    %p478 = scmp.ne.s32.totalorder %s467, %s470
    %p479 = scmp.eq.s32.totalorder %s28, 3
    %p480 = por %p478, %p479
    %p481 = scmp.ne.s32.totalorder %s470, %s471
    %p482 = scmp.eq.s32.totalorder %s28, 0
    %p483 = por %p481, %p482
    %p484 = scmp.ne.s32.totalorder %s470, %s471
    %p485 = scmp.eq.s32.totalorder %s29, 3
    %p486 = por %p484, %p485
    %p488 = scmp.ne.s32.totalorder %s471, %s487
    %p489 = scmp.eq.s32.totalorder %s29, 0
    %p490 = por %p488, %p489
    %p491 = scmp.le.s32.totalorder 1, %s23
    %p492 = scmp.lt.s32.totalorder %s23, 5
    %p493 = pnand %p491, %p492
    %p494 = pneg %p493
    // Predicated region
    $region9: #{mae_forward.4} parent=5 // pred_check
      _
    $region10: #{mae_forward.4} parent=5 // pred_check_branch
      %496 = sbr.rel (%p493) target = $region12
    $region11: #{mae_forward.4} parent=5 // pred_region
      %s497 = ssub.s32 %s23, 1
      // Predicated region
      $region13: #{mae_forward.4} parent=11 // pred_check
        %p498 = pneg %p394
      $region14: #{mae_forward.4} parent=11 // pred_check_branch
        %500 = sbr.rel (%p498) target = $region16
      $region15: #{mae_forward.4} parent=11 // pred_region
        _
      $region16: #{mae_forward.4} parent=11 // pred_fallthru
        _
      // Predicated region
      $region17: #{mae_forward.4} parent=11 // pred_check
        %p501 = pneg %p415
      $region18: #{mae_forward.4} parent=11 // pred_check_branch
        %503 = sbr.rel (%p501) target = $region20
      $region19: #{mae_forward.4} parent=11 // pred_region
        _
      $region20: #{mae_forward.4} parent=11 // pred_fallthru
        _
      // Predicated region
      $region21: #{mae_forward.4} parent=11 // pred_check
        %p504 = pneg %p436
      $region22: #{mae_forward.4} parent=11 // pred_check_branch
        %506 = sbr.rel (%p504) target = $region24
      $region23: #{mae_forward.4} parent=11 // pred_region
        _
      $region24: #{mae_forward.4} parent=11 // pred_fallthru
        _
      // Predicated region
      $region25: #{mae_forward.4} parent=11 // pred_check
        %p507 = pneg %p457
      $region26: #{mae_forward.4} parent=11 // pred_check_branch
        %509 = sbr.rel (%p507) target = $region28
      $region27: #{mae_forward.4} parent=11 // pred_region
        _
      $region28: #{mae_forward.4} parent=11 // pred_fallthru
        _
    $region12: #{mae_forward.4} parent=5 // pred_fallthru
      _
    %p510 = scmp.lt.s32.totalorder %s23, 4
    // Predicated region
    $region29: #{mae_forward.4} parent=5 // pred_check
      %p511 = pneg %p510
    $region30: #{mae_forward.4} parent=5 // pred_check_branch
      %513 = sbr.rel (%p511) target = $region32
    $region31: #{mae_forward.4} parent=5 // pred_region
      // Predicated region
      $region33: #{mae_forward.4} parent=31 // pred_check
        %p514 = pneg %p55
      $region34: #{mae_forward.4} parent=31 // pred_check_branch
        %516 = sbr.rel (%p514) target = $region36
      $region35: #{mae_forward.4} parent=31 // pred_region
        %p517 = scmp.lt.s32.totalorder %s30, 1
        %s518 = scalar_select %p517, %s30, 1
        %s519 = smul.addr %s518, 8
        %s520 = scalar_lea.vmem %s0, %s519
      $region36: #{mae_forward.4} parent=31 // pred_fallthru
        _
      // Predicated region
      $region37: #{mae_forward.4} parent=31 // pred_check
        %p521 = pneg %p81
      $region38: #{mae_forward.4} parent=31 // pred_check_branch
        %523 = sbr.rel (%p521) target = $region40
      $region39: #{mae_forward.4} parent=31 // pred_region
        %p524 = scmp.lt.s32.totalorder %s31, 1
        %s525 = scalar_select %p524, %s31, 1
        %s526 = scalar_lea.vmem %s1, %s525
      $region40: #{mae_forward.4} parent=31 // pred_fallthru
        _
      // Predicated region
      $region41: #{mae_forward.4} parent=31 // pred_check
        %p527 = pneg %p107
      $region42: #{mae_forward.4} parent=31 // pred_check_branch
        %529 = sbr.rel (%p527) target = $region44
      $region43: #{mae_forward.4} parent=31 // pred_region
        %p530 = scmp.lt.s32.totalorder %s31, 1
        %s531 = scalar_select %p530, %s31, 1
        %s532 = scalar_lea.vmem %s2, %s531
      $region44: #{mae_forward.4} parent=31 // pred_fallthru
        _
      // Predicated region
      $region45: #{mae_forward.4} parent=31 // pred_check
        %p533 = pneg %p133
      $region46: #{mae_forward.4} parent=31 // pred_check_branch
        %535 = sbr.rel (%p533) target = $region48
      $region47: #{mae_forward.4} parent=31 // pred_region
        %p536 = scmp.lt.s32.totalorder %s31, 1
        %s537 = scalar_select %p536, %s31, 1
        %s538 = smul.addr %s537, 4
        %s539 = smul.addr %s538, 8
        %s540 = scalar_lea.vmem %s3, %s539
      $region48: #{mae_forward.4} parent=31 // pred_fallthru
        _
      // Predicated region
      $region49: #{mae_forward.4} parent=31 // pred_check
        %p541 = pneg %p159
      $region50: #{mae_forward.4} parent=31 // pred_check_branch
        %543 = sbr.rel (%p541) target = $region52
      $region51: #{mae_forward.4} parent=31 // pred_region
        %p544 = scmp.lt.s32.totalorder %s31, 1
        %s545 = scalar_select %p544, %s31, 1
        %s546 = scalar_lea.vmem %s4, %s545
      $region52: #{mae_forward.4} parent=31 // pred_fallthru
        _
      // Predicated region
      $region53: #{mae_forward.4} parent=31 // pred_check
        %p547 = pneg %p185
      $region54: #{mae_forward.4} parent=31 // pred_check_branch
        %549 = sbr.rel (%p547) target = $region56
      $region55: #{mae_forward.4} parent=31 // pred_region
        %p550 = scmp.lt.s32.totalorder %s31, 1
        %s551 = scalar_select %p550, %s31, 1
        %s552 = smul.addr %s551, 4
        %s553 = smul.addr %s552, 8
        %s554 = scalar_lea.vmem %s5, %s553
      $region56: #{mae_forward.4} parent=31 // pred_fallthru
        _
      // Predicated region
      $region57: #{mae_forward.4} parent=31 // pred_check
        %p555 = pneg %p211
      $region58: #{mae_forward.4} parent=31 // pred_check_branch
        %557 = sbr.rel (%p555) target = $region60
      $region59: #{mae_forward.4} parent=31 // pred_region
        %p558 = scmp.lt.s32.totalorder %s31, 1
        %s559 = scalar_select %p558, %s31, 1
        %s560 = scalar_lea.vmem %s6, %s559
      $region60: #{mae_forward.4} parent=31 // pred_fallthru
        _
      // Predicated region
      $region61: #{mae_forward.4} parent=31 // pred_check
        %p561 = pneg %p237
      $region62: #{mae_forward.4} parent=31 // pred_check_branch
        %563 = sbr.rel (%p561) target = $region64
      $region63: #{mae_forward.4} parent=31 // pred_region
        %p564 = scmp.lt.s32.totalorder %s31, 1
        %s565 = scalar_select %p564, %s31, 1
        %s566 = scalar_lea.vmem %s7, %s565
      $region64: #{mae_forward.4} parent=31 // pred_fallthru
        _
      // Predicated region
      $region65: #{mae_forward.4} parent=31 // pred_check
        %p567 = pneg %p263
      $region66: #{mae_forward.4} parent=31 // pred_check_branch
        %569 = sbr.rel (%p567) target = $region68
      $region67: #{mae_forward.4} parent=31 // pred_region
        %p570 = scmp.lt.s32.totalorder %s31, 1
        %s571 = scalar_select %p570, %s31, 1
        %s572 = scalar_lea.vmem %s8, %s571
      $region68: #{mae_forward.4} parent=31 // pred_fallthru
        _
      // Predicated region
      $region69: #{mae_forward.4} parent=31 // pred_check
        %p573 = pneg %p289
      $region70: #{mae_forward.4} parent=31 // pred_check_branch
        %575 = sbr.rel (%p573) target = $region72
      $region71: #{mae_forward.4} parent=31 // pred_region
        %p576 = scmp.lt.s32.totalorder %s31, 1
        %s577 = scalar_select %p576, %s31, 1
        %s578 = smul.addr %s577, 4
        %s579 = smul.addr %s578, 8
        %s580 = scalar_lea.vmem %s9, %s579
      $region72: #{mae_forward.4} parent=31 // pred_fallthru
        _
      // Predicated region
      $region73: #{mae_forward.4} parent=31 // pred_check
        %p581 = pneg %p315
      $region74: #{mae_forward.4} parent=31 // pred_check_branch
        %583 = sbr.rel (%p581) target = $region76
      $region75: #{mae_forward.4} parent=31 // pred_region
        %p584 = scmp.lt.s32.totalorder %s31, 1
        %s585 = scalar_select %p584, %s31, 1
        %s586 = scalar_lea.vmem %s10, %s585
      $region76: #{mae_forward.4} parent=31 // pred_fallthru
        _
      // Predicated region
      $region77: #{mae_forward.4} parent=31 // pred_check
        %p587 = pneg %p341
      $region78: #{mae_forward.4} parent=31 // pred_check_branch
        %589 = sbr.rel (%p587) target = $region80
      $region79: #{mae_forward.4} parent=31 // pred_region
        %p590 = scmp.lt.s32.totalorder %s31, 1
        %s591 = scalar_select %p590, %s31, 1
        %s592 = smul.addr %s591, 16
        %s593 = smul.addr %s592, 8
        %s594 = scalar_lea.vmem %s11, %s593
      $region80: #{mae_forward.4} parent=31 // pred_fallthru
        _
      // Predicated region
      $region81: #{mae_forward.4} parent=31 // pred_check
        %p595 = pneg %p367
      $region82: #{mae_forward.4} parent=31 // pred_check_branch
        %597 = sbr.rel (%p595) target = $region84
      $region83: #{mae_forward.4} parent=31 // pred_region
        %p598 = scmp.lt.s32.totalorder %s31, 1
        %s599 = scalar_select %p598, %s31, 1
        %s600 = scalar_lea.vmem %s12, %s599
      $region84: #{mae_forward.4} parent=31 // pred_fallthru
        _
    $region32: #{mae_forward.4} parent=5 // pred_fallthru
      _
    %p601 = scmp.le.s32.totalorder 1, %s23
    %p602 = scmp.lt.s32.totalorder %s23, 5
    %p603 = pnand %p601, %p602
    %p604 = pneg %p603
    // Predicated region
    $region85: #{mae_forward.4} parent=5 // pred_check
      _
    $region86: #{mae_forward.4} parent=5 // pred_check_branch
      %606 = sbr.rel (%p603) target = $region88
    $region87: #{mae_forward.4} parent=5 // pred_region
      %s607 = ssub.s32 %s23, 1
      %p608 = scmp.lt.s32.totalorder %s32, 1
      %s609 = scalar_select %p608, %s32, 1
      %s610 = smul.addr %s609, 8
      %s611 = scalar_lea.vmem %s0, %s610
      %p612 = pneg %p61
      %p613 = pneg %p58
      %p614 = scmp.lt.s32.totalorder %s33, 1
      %s615 = scalar_select %p614, %s33, 1
      %s616 = scalar_lea.vmem %s1, %s615
      %p617 = pneg %p87
      %p618 = pneg %p84
      %p619 = scmp.lt.s32.totalorder %s33, 1
      %s620 = scalar_select %p619, %s33, 1
      %s621 = scalar_lea.vmem %s2, %s620
      %p622 = pneg %p113
      %p623 = pneg %p110
      %p624 = scmp.lt.s32.totalorder %s33, 1
      %s625 = scalar_select %p624, %s33, 1
      %s626 = smul.addr %s625, 4
      %s627 = smul.addr %s626, 8
      %s628 = scalar_lea.vmem %s3, %s627
      %p629 = pneg %p139
      %p630 = pneg %p136
      %p631 = scmp.lt.s32.totalorder %s33, 1
      %s632 = scalar_select %p631, %s33, 1
      %s633 = scalar_lea.vmem %s4, %s632
      %p634 = pneg %p165
      %p635 = pneg %p162
      %p636 = scmp.lt.s32.totalorder %s33, 1
      %s637 = scalar_select %p636, %s33, 1
      %s638 = smul.addr %s637, 4
      %s639 = smul.addr %s638, 8
      %s640 = scalar_lea.vmem %s5, %s639
      %p641 = pneg %p191
      %p642 = pneg %p188
      %p643 = scmp.lt.s32.totalorder %s33, 1
      %s644 = scalar_select %p643, %s33, 1
      %s645 = scalar_lea.vmem %s6, %s644
      %p646 = pneg %p217
      %p647 = pneg %p214
      %p648 = scmp.lt.s32.totalorder %s33, 1
      %s649 = scalar_select %p648, %s33, 1
      %s650 = scalar_lea.vmem %s7, %s649
      %p651 = pneg %p243
      %p652 = pneg %p240
      %p653 = scmp.lt.s32.totalorder %s33, 1
      %s654 = scalar_select %p653, %s33, 1
      %s655 = scalar_lea.vmem %s8, %s654
      %p656 = pneg %p269
      %p657 = pneg %p266
      %p658 = scmp.lt.s32.totalorder %s33, 1
      %s659 = scalar_select %p658, %s33, 1
      %s660 = smul.addr %s659, 4
      %s661 = smul.addr %s660, 8
      %s662 = scalar_lea.vmem %s9, %s661
      %p663 = pneg %p295
      %p664 = pneg %p292
      %p665 = scmp.lt.s32.totalorder %s33, 1
      %s666 = scalar_select %p665, %s33, 1
      %s667 = scalar_lea.vmem %s10, %s666
      %p668 = pneg %p321
      %p669 = pneg %p318
      %p670 = scmp.lt.s32.totalorder %s33, 1
      %s671 = scalar_select %p670, %s33, 1
      %s672 = smul.addr %s671, 16
      %s673 = smul.addr %s672, 8
      %s674 = scalar_lea.vmem %s11, %s673
      %p675 = pneg %p347
      %p676 = pneg %p344
      %p677 = scmp.lt.s32.totalorder %s33, 1
      %s678 = scalar_select %p677, %s33, 1
      %s679 = scalar_lea.vmem %s12, %s678
      %p680 = pneg %p373
      %p681 = pneg %p370
      %p682 = pneg %p394
      %p683 = pneg %p391
      %p684 = pneg %p415
      %p685 = pneg %p412
      %p686 = pneg %p436
      %p687 = pneg %p433
      %p688 = pneg %p457
      %p689 = pneg %p454
      %p690 = pneg %p483
      %p691 = pneg %p480
      %p692 = scmp.lt.s32.totalorder %s32, 1
      %s693 = scalar_select %p692, %s32, 1
      %s694 = smul.addr %s693, 8
      %s695 = scalar_lea.vmem %s17, %s694
      %p696 = scmp.lt.s32.totalorder %s32, 1
      %s697 = scalar_select %p696, %s32, 1
      %s698 = smul.addr %s697, 8
      %s699 = scalar_lea.vmem %s0, %s698
      %p700 = scmp.lt.s32.totalorder %s33, 1
      %s701 = scalar_select %p700, %s33, 1
      %s702 = scalar_lea.vmem %s1, %s701
      %p703 = scmp.lt.s32.totalorder %s33, 1
      %s704 = scalar_select %p703, %s33, 1
      %s705 = scalar_lea.vmem %s2, %s704
      %p706 = scmp.lt.s32.totalorder %s33, 1
      %s707 = scalar_select %p706, %s33, 1
      %s708 = smul.addr %s707, 4
      %s709 = smul.addr %s708, 8
      %s710 = scalar_lea.vmem %s3, %s709
      %p711 = scmp.lt.s32.totalorder %s33, 1
      %s712 = scalar_select %p711, %s33, 1
      %s713 = scalar_lea.vmem %s4, %s712
      %p714 = scmp.lt.s32.totalorder %s33, 1
      %s715 = scalar_select %p714, %s33, 1
      %s716 = smul.addr %s715, 4
      %s717 = smul.addr %s716, 8
      %s718 = scalar_lea.vmem %s5, %s717
      %p719 = scmp.lt.s32.totalorder %s33, 1
      %s720 = scalar_select %p719, %s33, 1
      %s721 = scalar_lea.vmem %s6, %s720
      %p722 = scmp.lt.s32.totalorder %s33, 1
      %s723 = scalar_select %p722, %s33, 1
      %s724 = scalar_lea.vmem %s7, %s723
      %p725 = scmp.lt.s32.totalorder %s33, 1
      %s726 = scalar_select %p725, %s33, 1
      %s727 = scalar_lea.vmem %s8, %s726
      %p728 = scmp.lt.s32.totalorder %s33, 1
      %s729 = scalar_select %p728, %s33, 1
      %s730 = smul.addr %s729, 4
      %s731 = smul.addr %s730, 8
      %s732 = scalar_lea.vmem %s9, %s731
      %p733 = scmp.lt.s32.totalorder %s33, 1
      %s734 = scalar_select %p733, %s33, 1
      %s735 = scalar_lea.vmem %s10, %s734
      %p736 = scmp.lt.s32.totalorder %s33, 1
      %s737 = scalar_select %p736, %s33, 1
      %s738 = smul.addr %s737, 16
      %s739 = smul.addr %s738, 8
      %s740 = scalar_lea.vmem %s11, %s739
      %p741 = scmp.lt.s32.totalorder %s33, 1
      %s742 = scalar_select %p741, %s33, 1
      %s743 = scalar_lea.vmem %s12, %s742
      %p744 = scmp.lt.s32.totalorder %s32, 1
      %s745 = scalar_select %p744, %s32, 1
      %s746 = smul.addr %s745, 8
      %s747 = scalar_lea.vmem %s17, %s746
      %p748 = scmp.eq.s32.totalorder %s33, 0
      // Predicated region
      $region89: #{mae_forward.4} parent=87 // pred_check
        %p749 = pneg %p748
      $region90: #{mae_forward.4} parent=87 // pred_check_branch
        %751 = sbr.rel (%p749) target = $region92
      $region91: #{mae_forward.4} parent=87 // pred_region
        %v752 = vld [vmem:[%s699] sm:$0x1f]
        %vm753 = vcmask 258048
        %754 = vst.msk [vmem:[#allocation2] sm:$0x1f] %vm753, %v752
      $region92: #{mae_forward.4} parent=87 // pred_fallthru
        _
      %v755 = vld [vmem:[#allocation2] sm:$0x1f]
      %v756 = vld [vmem:[%s702] sm:$0x1]
      %v757 = vld [vmem:[%s705] sm:$0x1]
      %v758 = vld [vmem:[%s710] sm:$0xff]
      %v759 = vld [vmem:[%s710 + $0x8] sm:$0xff]
      %v760 = vld [vmem:[%s710 + $0x10] sm:$0xff]
      %v761 = vld [vmem:[%s710 + $0x18] sm:$0xff]
      %v762 = vld [vmem:[%s713] sm:$0x1]
      %v763 = vld [vmem:[%s718] sm:$0xff]
      %v764 = vld [vmem:[%s718 + $0x8] sm:$0xff]
      %v765 = vld [vmem:[%s718 + $0x10] sm:$0xff]
      %v766 = vld [vmem:[%s718 + $0x18] sm:$0xff]
      %v767 = vld [vmem:[%s721] sm:$0x1]
      %v768 = vld [vmem:[%s724] sm:$0x1]
      %v769 = vld [vmem:[%s727] sm:$0x1]
      %v770 = vld [vmem:[%s732] sm:$0xff]
      %v771 = vld [vmem:[%s732 + $0x8] sm:$0xff]
      %v772 = vld [vmem:[%s732 + $0x10] sm:$0xff]
      %v773 = vld [vmem:[%s732 + $0x18] sm:$0xff]
      %v774 = vld [vmem:[%s735] sm:$0x1]
      %v775 = vld [vmem:[%s740] sm:$0xff]
      %v776 = vld [vmem:[%s740 + $0x8] sm:$0xff]
      %v777 = vld [vmem:[%s740 + $0x10] sm:$0xff]
      %v778 = vld [vmem:[%s740 + $0x18] sm:$0xff]
      %v779 = vld [vmem:[%s740 + $0x20] sm:$0xff]
      %v780 = vld [vmem:[%s740 + $0x28] sm:$0xff]
      %v781 = vld [vmem:[%s740 + $0x30] sm:$0xff]
      %v782 = vld [vmem:[%s740 + $0x38] sm:$0xff]
      %v783 = vld [vmem:[%s740 + $0x40] sm:$0xff]
      %v784 = vld [vmem:[%s740 + $0x48] sm:$0xff]
      %v785 = vld [vmem:[%s740 + $0x50] sm:$0xff]
      %v786 = vld [vmem:[%s740 + $0x58] sm:$0xff]
      %v787 = vld [vmem:[%s740 + $0x60] sm:$0xff]
      %v788 = vld [vmem:[%s740 + $0x68] sm:$0xff]
      %v789 = vld [vmem:[%s740 + $0x70] sm:$0xff]
      %v790 = vld [vmem:[%s740 + $0x78] sm:$0xff]
      %v791 = vld [vmem:[%s743] sm:$0x1]
      %vm792 = vcmask 258048
      %v793 = vsel %vm792, %v755, 0.0
      %794 = vadd.xlane.f32.xlu0 %v793
      %v795 = vpop.xlane.xlu0 %794
      %v796 = vrcp.pop 32.0
      %v797 = vmul.f32 %v795, %v796
      %v798 = vsub.f32 %v755, %v797
      %v799 = vmul.f32 %v798, %v798
      %v800 = vsel %vm792, %v799, 0.0
      %801 = vadd.xlane.f32.xlu0 %v800
      %v802 = vpop.xlane.xlu0 %801
      %v803 = vmul.f32 %v802, %v796
      %v804 = vadd.f32 %v803, 1e-06
      %v805 = vrsqrt.pop %v804
      %v806 = vmul.f32 %v798, %v805
      %v808 = vlaneseq
      %v809 = vshrl.u32 %v808, 7
      %v810 = vsub.s32 0, %v809
      %v811 = vrot.slane %v756, %v810
      %v813 = vmul.f32 %v806, %v811
      %v815 = vlaneseq
      %v816 = vshrl.u32 %v815, 7
      %v817 = vsub.s32 0, %v816
      %v818 = vrot.slane %v757, %v817
      %v820 = vadd.f32 %v813, %v818
      %v822 = vlaneseq
      %v823 = vshrl.u32 %v822, 7
      %v824 = vsub.s32 0, %v823
      %v825 = vrot.slane %v762, %v824
      %vm827 = vcmask 261120
      %v829 = vsel %vm827, %v820, 0
      %831 = vmatprep.subr.mxu0 0.0
      %832 = vmatpush1.msra.mxu0 %v758
      %833 = vmatprep.subr.mxu0 0.0
      %834 = vmatpush1.msra.mxu0 %v759
      %835 = vmatprep.subr.mxu0 0.0
      %836 = vmatpush1.msra.mxu0 %v760
      %837 = vmatprep.subr.mxu0 0.0
      %838 = vmatpush1.msra.mxu0 %v761
      %839 = vmatprep.subr.mxu0 0.0
      %840 = vmatpush1.msra.mxu0 0.0
      %841 = vmatprep.subr.mxu0 0.0
      %842 = vmatpush1.msra.mxu0 0.0
      %843 = vmatprep.subr.mxu0 0.0
      %844 = vmatpush1.msra.mxu0 0.0
      %845 = vmatprep.subr.mxu0 0.0
      %846 = vmatpush1.msra.mxu0 0.0
      %847 = vmatprep.subr.mxu0 0.0
      %848 = vmatpush1.msra.mxu0 0.0
      %849 = vmatprep.subr.mxu0 0.0
      %850 = vmatpush1.msra.mxu0 0.0
      %851 = vmatprep.subr.mxu0 0.0
      %852 = vmatpush1.msra.mxu0 0.0
      %853 = vmatprep.subr.mxu0 0.0
      %854 = vmatpush1.msra.mxu0 0.0
      %855 = vmatprep.subr.mxu0 0.0
      %856 = vmatpush1.msra.mxu0 0.0
      %857 = vmatprep.subr.mxu0 0.0
      %858 = vmatpush1.msra.mxu0 0.0
      %859 = vmatprep.subr.mxu0 0.0
      %860 = vmatpush1.msra.mxu0 0.0
      %861 = vmatprep.subr.mxu0 0.0
      %862 = vmatpush1.msra.mxu0 0.0
      %863 = vmatprep.subr.mxu0 0.0
      %864 = vmatpush1.msra.mxu0 0.0
      %865 = vmatprep.subr.mxu0 0.0
      %866 = vmatpush1.msra.mxu0 0.0
      %867 = vmatprep.subr.mxu0 0.0
      %868 = vmatpush1.msra.mxu0 0.0
      %869 = vmatprep.subr.mxu0 0.0
      %870 = vmatpush1.msra.mxu0 0.0
      %871 = vmatprep.subr.mxu0 0.0
      %872 = vmatpush1.msra.mxu0 0.0
      %873 = vmatprep.subr.mxu0 0.0
      %874 = vmatpush1.msra.mxu0 0.0
      %875 = vmatprep.subr.mxu0 0.0
      %876 = vmatpush1.msra.mxu0 0.0
      %877 = vmatprep.subr.mxu0 0.0
      %878 = vmatpush1.msra.mxu0 0.0
      %879 = vmatprep.subr.mxu0 0.0
      %880 = vmatpush1.msra.mxu0 0.0
      %881 = vmatprep.subr.mxu0 0.0
      %882 = vmatpush1.msra.mxu0 0.0
      %883 = vmatprep.subr.mxu0 0.0
      %884 = vmatpush1.msra.mxu0 0.0
      %885 = vmatprep.subr.mxu0 0.0
      %886 = vmatpush1.msra.mxu0 0.0
      %887 = vmatprep.subr.mxu0 0.0
      %888 = vmatpush1.msra.mxu0 0.0
      %889 = vmatprep.subr.mxu0 0.0
      %890 = vmatpush1.msra.mxu0 0.0
      %891 = vmatprep.subr.mxu0 0.0
      %892 = vmatpush1.msra.mxu0 0.0
      %893 = vmatprep.subr.mxu0 0.0
      %894 = vmatpush1.msra.mxu0 0.0
      %895 = vmatprep.mubr.f32.mxu0 0.0
      %896 = vmatmul.mubr.f32.gmra.mrb[0].mxu0 %v829
      %v897 = vpop.f32.mrb[0].mxu0
      %v898 = vadd.f32 %v825, %v897
      %v899 = vpop.f32.mrb[0].mxu0
      %900 = vdwg.mxu0
      %902 = vrot.lane.b32.xlu0 %v898, 96
      %v903 = vpop.permute.xlu0 %902
      %vm904 = vcmask 64512
      %v905 = vsel %vm904, %v898, 0
      %v907 = vsel %vm904, %v903, 0
      %909 = vmatprep.subr.mxu0 0.0
      %910 = vmatpush1.xpose.msra.mxu0 %v907
      %911 = vmatprep.subr.mxu0 0.0
      %912 = vmatpush1.xpose.msra.mxu0 0.0
      %913 = vmatprep.subr.mxu0 0.0
      %914 = vmatpush1.xpose.msra.mxu0 0.0
      %915 = vmatprep.subr.mxu0 0.0
      %916 = vmatpush1.xpose.msra.mxu0 0.0
      %917 = vmatprep.subr.mxu0 0.0
      %918 = vmatpush1.xpose.msra.mxu0 0.0
      %919 = vmatprep.subr.mxu0 0.0
      %920 = vmatpush1.xpose.msra.mxu0 0.0
      %921 = vmatprep.subr.mxu0 0.0
      %922 = vmatpush1.xpose.msra.mxu0 0.0
      %923 = vmatprep.subr.mxu0 0.0
      %924 = vmatpush1.xpose.msra.mxu0 0.0
      %925 = vmatprep.subr.mxu0 0.0
      %926 = vmatpush1.xpose.msra.mxu0 0.0
      %927 = vmatprep.subr.mxu0 0.0
      %928 = vmatpush1.xpose.msra.mxu0 0.0
      %929 = vmatprep.subr.mxu0 0.0
      %930 = vmatpush1.xpose.msra.mxu0 0.0
      %931 = vmatprep.subr.mxu0 0.0
      %932 = vmatpush1.xpose.msra.mxu0 0.0
      %933 = vmatprep.subr.mxu0 0.0
      %934 = vmatpush1.xpose.msra.mxu0 0.0
      %935 = vmatprep.subr.mxu0 0.0
      %936 = vmatpush1.xpose.msra.mxu0 0.0
      %937 = vmatprep.subr.mxu0 0.0
      %938 = vmatpush1.xpose.msra.mxu0 0.0
      %939 = vmatprep.subr.mxu0 0.0
      %940 = vmatpush1.xpose.msra.mxu0 0.0
      %941 = vmatprep.subr.mxu0 0.0
      %942 = vmatpush1.xpose.msra.mxu0 0.0
      %943 = vmatprep.subr.mxu0 0.0
      %944 = vmatpush1.xpose.msra.mxu0 0.0
      %945 = vmatprep.subr.mxu0 0.0
      %946 = vmatpush1.xpose.msra.mxu0 0.0
      %947 = vmatprep.subr.mxu0 0.0
      %948 = vmatpush1.xpose.msra.mxu0 0.0
      %949 = vmatprep.subr.mxu0 0.0
      %950 = vmatpush1.xpose.msra.mxu0 0.0
      %951 = vmatprep.subr.mxu0 0.0
      %952 = vmatpush1.xpose.msra.mxu0 0.0
      %953 = vmatprep.subr.mxu0 0.0
      %954 = vmatpush1.xpose.msra.mxu0 0.0
      %955 = vmatprep.subr.mxu0 0.0
      %956 = vmatpush1.xpose.msra.mxu0 0.0
      %957 = vmatprep.subr.mxu0 0.0
      %958 = vmatpush1.xpose.msra.mxu0 0.0
      %959 = vmatprep.subr.mxu0 0.0
      %960 = vmatpush1.xpose.msra.mxu0 0.0
      %961 = vmatprep.subr.mxu0 0.0
      %962 = vmatpush1.xpose.msra.mxu0 0.0
      %963 = vmatprep.subr.mxu0 0.0
      %964 = vmatpush1.xpose.msra.mxu0 0.0
      %965 = vmatprep.subr.mxu0 0.0
      %966 = vmatpush1.xpose.msra.mxu0 0.0
      %967 = vmatprep.subr.mxu0 0.0
      %968 = vmatpush1.xpose.msra.mxu0 0.0
      %969 = vmatprep.subr.mxu0 0.0
      %970 = vmatpush1.xpose.msra.mxu0 0.0
      %971 = vmatprep.subr.mxu0 0.0
      %972 = vmatpush1.xpose.msra.mxu0 0.0
      %973 = vmatprep.mubr.f32.mxu0 0.0
      %974 = vmatmul.mubr.f32.gmra.mrb[0].mxu0 %v905
      %v975 = vpop.f32.mrb[0].mxu0
      %v976 = vadd.f32 0.0, %v975
      %v977 = vpop.f32.mrb[0].mxu0
      %978 = vdwg.mxu0
      %vm979 = vcmask 36864
      %v980 = vsel %vm979, %v976, -inf
      %981 = vmax.xlane.f32.xlu0 %v980
      %v982 = vpop.xlane.xlu0 %981
      %v983 = vsub.f32 %v976, %v982
      %v984 = vmul.f32 %v983, 1.442695
      %v985 = vpow.pop %v984
      %v986 = vsel %vm979, %v985, 0.0
      %987 = vadd.xlane.f32.xlu0 %v986
      %v988 = vpop.xlane.xlu0 %987
      %v989 = vrcp.pop %v988
      %v990 = vmul.f32 %v985, %v989
      %991 = vrot.lane.b32.xlu0 %v898, 64
      %v992 = vpop.permute.xlu0 %991
      %vm993 = vcmask 39936
      %v995 = vsel %vm993, %v990, 0
      %vm997 = vcmask 1044480
      %v998 = vsel %vm997, %v992, 0
      %1000 = vmatprep.subr.mxu0 0.0
      %1001 = vmatpush1.msra.mxu0 %v998
      %1002 = vmatprep.subr.mxu0 0.0
      %1003 = vmatpush1.msra.mxu0 0.0
      %1004 = vmatprep.subr.mxu0 0.0
      %1005 = vmatpush1.msra.mxu0 0.0
      %1006 = vmatprep.subr.mxu0 0.0
      %1007 = vmatpush1.msra.mxu0 0.0
      %1008 = vmatprep.subr.mxu0 0.0
      %1009 = vmatpush1.msra.mxu0 0.0
      %1010 = vmatprep.subr.mxu0 0.0
      %1011 = vmatpush1.msra.mxu0 0.0
      %1012 = vmatprep.subr.mxu0 0.0
      %1013 = vmatpush1.msra.mxu0 0.0
      %1014 = vmatprep.subr.mxu0 0.0
      %1015 = vmatpush1.msra.mxu0 0.0
      %1016 = vmatprep.subr.mxu0 0.0
      %1017 = vmatpush1.msra.mxu0 0.0
      %1018 = vmatprep.subr.mxu0 0.0
      %1019 = vmatpush1.msra.mxu0 0.0
      %1020 = vmatprep.subr.mxu0 0.0
      %1021 = vmatpush1.msra.mxu0 0.0
      %1022 = vmatprep.subr.mxu0 0.0
      %1023 = vmatpush1.msra.mxu0 0.0
      %1024 = vmatprep.subr.mxu0 0.0
      %1025 = vmatpush1.msra.mxu0 0.0
      %1026 = vmatprep.subr.mxu0 0.0
      %1027 = vmatpush1.msra.mxu0 0.0
      %1028 = vmatprep.subr.mxu0 0.0
      %1029 = vmatpush1.msra.mxu0 0.0
      %1030 = vmatprep.subr.mxu0 0.0
      %1031 = vmatpush1.msra.mxu0 0.0
      %1032 = vmatprep.subr.mxu0 0.0
      %1033 = vmatpush1.msra.mxu0 0.0
      %1034 = vmatprep.subr.mxu0 0.0
      %1035 = vmatpush1.msra.mxu0 0.0
      %1036 = vmatprep.subr.mxu0 0.0
      %1037 = vmatpush1.msra.mxu0 0.0
      %1038 = vmatprep.subr.mxu0 0.0
      %1039 = vmatpush1.msra.mxu0 0.0
      %1040 = vmatprep.subr.mxu0 0.0
      %1041 = vmatpush1.msra.mxu0 0.0
      %1042 = vmatprep.subr.mxu0 0.0
      %1043 = vmatpush1.msra.mxu0 0.0
      %1044 = vmatprep.subr.mxu0 0.0
      %1045 = vmatpush1.msra.mxu0 0.0
      %1046 = vmatprep.subr.mxu0 0.0
      %1047 = vmatpush1.msra.mxu0 0.0
      %1048 = vmatprep.subr.mxu0 0.0
      %1049 = vmatpush1.msra.mxu0 0.0
      %1050 = vmatprep.subr.mxu0 0.0
      %1051 = vmatpush1.msra.mxu0 0.0
      %1052 = vmatprep.subr.mxu0 0.0
      %1053 = vmatpush1.msra.mxu0 0.0
      %1054 = vmatprep.subr.mxu0 0.0
      %1055 = vmatpush1.msra.mxu0 0.0
      %1056 = vmatprep.subr.mxu0 0.0
      %1057 = vmatpush1.msra.mxu0 0.0
      %1058 = vmatprep.subr.mxu0 0.0
      %1059 = vmatpush1.msra.mxu0 0.0
      %1060 = vmatprep.subr.mxu0 0.0
      %1061 = vmatpush1.msra.mxu0 0.0
      %1062 = vmatprep.subr.mxu0 0.0
      %1063 = vmatpush1.msra.mxu0 0.0
      %1064 = vmatprep.mubr.f32.mxu0 0.0
      %1065 = vmatmul.mubr.f32.gmra.mrb[0].mxu0 %v995
      %v1066 = vpop.f32.mrb[0].mxu0
      %v1067 = vadd.f32 0.0, %v1066
      %v1068 = vpop.f32.mrb[0].mxu0
      %1069 = vdwg.mxu0
      %1070 = vrot.lane.b32.xlu0 %v898, 120
      %v1071 = vpop.permute.xlu0 %1070
      %1072 = vrot.lane.b32.xlu0 %v898, 88
      %v1073 = vpop.permute.xlu0 %1072
      %v1074 = vsel %vm904, %v1071, 0
      %v1076 = vsel %vm904, %v1073, 0
      %1078 = vmatprep.subr.mxu0 0.0
      %1079 = vmatpush1.xpose.msra.mxu0 %v1076
      %1080 = vmatprep.subr.mxu0 0.0
      %1081 = vmatpush1.xpose.msra.mxu0 0.0
      %1082 = vmatprep.subr.mxu0 0.0
      %1083 = vmatpush1.xpose.msra.mxu0 0.0
      %1084 = vmatprep.subr.mxu0 0.0
      %1085 = vmatpush1.xpose.msra.mxu0 0.0
      %1086 = vmatprep.subr.mxu0 0.0
      %1087 = vmatpush1.xpose.msra.mxu0 0.0
      %1088 = vmatprep.subr.mxu0 0.0
      %1089 = vmatpush1.xpose.msra.mxu0 0.0
      %1090 = vmatprep.subr.mxu0 0.0
      %1091 = vmatpush1.xpose.msra.mxu0 0.0
      %1092 = vmatprep.subr.mxu0 0.0
      %1093 = vmatpush1.xpose.msra.mxu0 0.0
      %1094 = vmatprep.subr.mxu0 0.0
      %1095 = vmatpush1.xpose.msra.mxu0 0.0
      %1096 = vmatprep.subr.mxu0 0.0
      %1097 = vmatpush1.xpose.msra.mxu0 0.0
      %1098 = vmatprep.subr.mxu0 0.0
      %1099 = vmatpush1.xpose.msra.mxu0 0.0
      %1100 = vmatprep.subr.mxu0 0.0
      %1101 = vmatpush1.xpose.msra.mxu0 0.0
      %1102 = vmatprep.subr.mxu0 0.0
      %1103 = vmatpush1.xpose.msra.mxu0 0.0
      %1104 = vmatprep.subr.mxu0 0.0
      %1105 = vmatpush1.xpose.msra.mxu0 0.0
      %1106 = vmatprep.subr.mxu0 0.0
      %1107 = vmatpush1.xpose.msra.mxu0 0.0
      %1108 = vmatprep.subr.mxu0 0.0
      %1109 = vmatpush1.xpose.msra.mxu0 0.0
      %1110 = vmatprep.subr.mxu0 0.0
      %1111 = vmatpush1.xpose.msra.mxu0 0.0
      %1112 = vmatprep.subr.mxu0 0.0
      %1113 = vmatpush1.xpose.msra.mxu0 0.0
      %1114 = vmatprep.subr.mxu0 0.0
      %1115 = vmatpush1.xpose.msra.mxu0 0.0
      %1116 = vmatprep.subr.mxu0 0.0
      %1117 = vmatpush1.xpose.msra.mxu0 0.0
      %1118 = vmatprep.subr.mxu0 0.0
      %1119 = vmatpush1.xpose.msra.mxu0 0.0
      %1120 = vmatprep.subr.mxu0 0.0
      %1121 = vmatpush1.xpose.msra.mxu0 0.0
      %1122 = vmatprep.subr.mxu0 0.0
      %1123 = vmatpush1.xpose.msra.mxu0 0.0
      %1124 = vmatprep.subr.mxu0 0.0
      %1125 = vmatpush1.xpose.msra.mxu0 0.0
      %1126 = vmatprep.subr.mxu0 0.0
      %1127 = vmatpush1.xpose.msra.mxu0 0.0
      %1128 = vmatprep.subr.mxu0 0.0
      %1129 = vmatpush1.xpose.msra.mxu0 0.0
      %1130 = vmatprep.subr.mxu0 0.0
      %1131 = vmatpush1.xpose.msra.mxu0 0.0
      %1132 = vmatprep.subr.mxu0 0.0
      %1133 = vmatpush1.xpose.msra.mxu0 0.0
      %1134 = vmatprep.subr.mxu0 0.0
      %1135 = vmatpush1.xpose.msra.mxu0 0.0
      %1136 = vmatprep.subr.mxu0 0.0
      %1137 = vmatpush1.xpose.msra.mxu0 0.0
      %1138 = vmatprep.subr.mxu0 0.0
      %1139 = vmatpush1.xpose.msra.mxu0 0.0
      %1140 = vmatprep.subr.mxu0 0.0
      %1141 = vmatpush1.xpose.msra.mxu0 0.0
      %1142 = vmatprep.mubr.f32.mxu0 0.0
      %1143 = vmatmul.mubr.f32.gmra.mrb[0].mxu0 %v1074
      %v1144 = vpop.f32.mrb[0].mxu0
      %v1145 = vadd.f32 0.0, %v1144
      %v1146 = vpop.f32.mrb[0].mxu0
      %1147 = vdwg.mxu0
      %v1148 = vsel %vm979, %v1145, -inf
      %1149 = vmax.xlane.f32.xlu0 %v1148
      %v1150 = vpop.xlane.xlu0 %1149
      %v1151 = vsub.f32 %v1145, %v1150
      %v1152 = vmul.f32 %v1151, 1.442695
      %v1153 = vpow.pop %v1152
      %v1154 = vsel %vm979, %v1153, 0.0
      %1155 = vadd.xlane.f32.xlu0 %v1154
      %v1156 = vpop.xlane.xlu0 %1155
      %v1157 = vrcp.pop %v1156
      %v1158 = vmul.f32 %v1153, %v1157
      %1159 = vrot.lane.b32.xlu0 %v898, 56
      %v1160 = vpop.permute.xlu0 %1159
      %v1162 = vsel %vm993, %v1158, 0
      %v1164 = vsel %vm997, %v1160, 0
      %1166 = vmatprep.subr.mxu0 0.0
      %1167 = vmatpush1.msra.mxu0 %v1164
      %1168 = vmatprep.subr.mxu0 0.0
      %1169 = vmatpush1.msra.mxu0 0.0
      %1170 = vmatprep.subr.mxu0 0.0
      %1171 = vmatpush1.msra.mxu0 0.0
      %1172 = vmatprep.subr.mxu0 0.0
      %1173 = vmatpush1.msra.mxu0 0.0
      %1174 = vmatprep.subr.mxu0 0.0
      %1175 = vmatpush1.msra.mxu0 0.0
      %1176 = vmatprep.subr.mxu0 0.0
      %1177 = vmatpush1.msra.mxu0 0.0
      %1178 = vmatprep.subr.mxu0 0.0
      %1179 = vmatpush1.msra.mxu0 0.0
      %1180 = vmatprep.subr.mxu0 0.0
      %1181 = vmatpush1.msra.mxu0 0.0
      %1182 = vmatprep.subr.mxu0 0.0
      %1183 = vmatpush1.msra.mxu0 0.0
      %1184 = vmatprep.subr.mxu0 0.0
      %1185 = vmatpush1.msra.mxu0 0.0
      %1186 = vmatprep.subr.mxu0 0.0
      %1187 = vmatpush1.msra.mxu0 0.0
      %1188 = vmatprep.subr.mxu0 0.0
      %1189 = vmatpush1.msra.mxu0 0.0
      %1190 = vmatprep.subr.mxu0 0.0
      %1191 = vmatpush1.msra.mxu0 0.0
      %1192 = vmatprep.subr.mxu0 0.0
      %1193 = vmatpush1.msra.mxu0 0.0
      %1194 = vmatprep.subr.mxu0 0.0
      %1195 = vmatpush1.msra.mxu0 0.0
      %1196 = vmatprep.subr.mxu0 0.0
      %1197 = vmatpush1.msra.mxu0 0.0
      %1198 = vmatprep.subr.mxu0 0.0
      %1199 = vmatpush1.msra.mxu0 0.0
      %1200 = vmatprep.subr.mxu0 0.0
      %1201 = vmatpush1.msra.mxu0 0.0
      %1202 = vmatprep.subr.mxu0 0.0
      %1203 = vmatpush1.msra.mxu0 0.0
      %1204 = vmatprep.subr.mxu0 0.0
      %1205 = vmatpush1.msra.mxu0 0.0
      %1206 = vmatprep.subr.mxu0 0.0
      %1207 = vmatpush1.msra.mxu0 0.0
      %1208 = vmatprep.subr.mxu0 0.0
      %1209 = vmatpush1.msra.mxu0 0.0
      %1210 = vmatprep.subr.mxu0 0.0
      %1211 = vmatpush1.msra.mxu0 0.0
      %1212 = vmatprep.subr.mxu0 0.0
      %1213 = vmatpush1.msra.mxu0 0.0
      %1214 = vmatprep.subr.mxu0 0.0
      %1215 = vmatpush1.msra.mxu0 0.0
      %1216 = vmatprep.subr.mxu0 0.0
      %1217 = vmatpush1.msra.mxu0 0.0
      %1218 = vmatprep.subr.mxu0 0.0
      %1219 = vmatpush1.msra.mxu0 0.0
      %1220 = vmatprep.subr.mxu0 0.0
      %1221 = vmatpush1.msra.mxu0 0.0
      %1222 = vmatprep.subr.mxu0 0.0
      %1223 = vmatpush1.msra.mxu0 0.0
      %1224 = vmatprep.subr.mxu0 0.0
      %1225 = vmatpush1.msra.mxu0 0.0
      %1226 = vmatprep.subr.mxu0 0.0
      %1227 = vmatpush1.msra.mxu0 0.0
      %1228 = vmatprep.subr.mxu0 0.0
      %1229 = vmatpush1.msra.mxu0 0.0
      %1230 = vmatprep.mubr.f32.mxu0 0.0
      %1231 = vmatmul.mubr.f32.gmra.mrb[0].mxu0 %v1162
      %v1232 = vpop.f32.mrb[0].mxu0
      %v1233 = vadd.f32 0.0, %v1232
      %v1234 = vpop.f32.mrb[0].mxu0
      %1235 = vdwg.mxu0
      %v1237 = vsel %vm904, %v1233, 0
      %1239 = vmatprep.subr.mxu0 0.0
      %1240 = vmatpush1.msra.mxu0 %v764
      %1241 = vmatprep.subr.mxu0 0.0
      %1242 = vmatpush1.msra.mxu0 0.0
      %1243 = vmatprep.subr.mxu0 0.0
      %1244 = vmatpush1.msra.mxu0 0.0
      %1245 = vmatprep.subr.mxu0 0.0
      %1246 = vmatpush1.msra.mxu0 0.0
      %1247 = vmatprep.subr.mxu0 0.0
      %1248 = vmatpush1.msra.mxu0 0.0
      %1249 = vmatprep.subr.mxu0 0.0
      %1250 = vmatpush1.msra.mxu0 0.0
      %1251 = vmatprep.subr.mxu0 0.0
      %1252 = vmatpush1.msra.mxu0 0.0
      %1253 = vmatprep.subr.mxu0 0.0
      %1254 = vmatpush1.msra.mxu0 0.0
      %1255 = vmatprep.subr.mxu0 0.0
      %1256 = vmatpush1.msra.mxu0 0.0
      %1257 = vmatprep.subr.mxu0 0.0
      %1258 = vmatpush1.msra.mxu0 0.0
      %1259 = vmatprep.subr.mxu0 0.0
      %1260 = vmatpush1.msra.mxu0 0.0
      %1261 = vmatprep.subr.mxu0 0.0
      %1262 = vmatpush1.msra.mxu0 0.0
      %1263 = vmatprep.subr.mxu0 0.0
      %1264 = vmatpush1.msra.mxu0 0.0
      %1265 = vmatprep.subr.mxu0 0.0
      %1266 = vmatpush1.msra.mxu0 0.0
      %1267 = vmatprep.subr.mxu0 0.0
      %1268 = vmatpush1.msra.mxu0 0.0
      %1269 = vmatprep.subr.mxu0 0.0
      %1270 = vmatpush1.msra.mxu0 0.0
      %1271 = vmatprep.subr.mxu0 0.0
      %1272 = vmatpush1.msra.mxu0 0.0
      %1273 = vmatprep.subr.mxu0 0.0
      %1274 = vmatpush1.msra.mxu0 0.0
      %1275 = vmatprep.subr.mxu0 0.0
      %1276 = vmatpush1.msra.mxu0 0.0
      %1277 = vmatprep.subr.mxu0 0.0
      %1278 = vmatpush1.msra.mxu0 0.0
      %1279 = vmatprep.subr.mxu0 0.0
      %1280 = vmatpush1.msra.mxu0 0.0
      %1281 = vmatprep.subr.mxu0 0.0
      %1282 = vmatpush1.msra.mxu0 0.0
      %1283 = vmatprep.subr.mxu0 0.0
      %1284 = vmatpush1.msra.mxu0 0.0
      %1285 = vmatprep.subr.mxu0 0.0
      %1286 = vmatpush1.msra.mxu0 0.0
      %1287 = vmatprep.subr.mxu0 0.0
      %1288 = vmatpush1.msra.mxu0 0.0
      %1289 = vmatprep.subr.mxu0 0.0
      %1290 = vmatpush1.msra.mxu0 0.0
      %1291 = vmatprep.subr.mxu0 0.0
      %1292 = vmatpush1.msra.mxu0 0.0
      %1293 = vmatprep.subr.mxu0 0.0
      %1294 = vmatpush1.msra.mxu0 0.0
      %1295 = vmatprep.subr.mxu0 0.0
      %1296 = vmatpush1.msra.mxu0 0.0
      %1297 = vmatprep.subr.mxu0 0.0
      %1298 = vmatpush1.msra.mxu0 0.0
      %1299 = vmatprep.subr.mxu0 0.0
      %1300 = vmatpush1.msra.mxu0 0.0
      %1301 = vmatprep.subr.mxu0 0.0
      %1302 = vmatpush1.msra.mxu0 0.0
      %1303 = vmatprep.mubr.f32.mxu0 0.0
      %1304 = vmatmul.mubr.f32.gmra.mrb[0].mxu0 %v1237
      %v1305 = vpop.f32.mrb[0].mxu0
      %v1306 = vadd.f32 0.0, %v1305
      %v1307 = vpop.f32.mrb[0].mxu0
      %1308 = vdwg.mxu0
      %v1310 = vsel %vm904, %v1067, 0
      %1312 = vmatprep.subr.mxu0 0.0
      %1313 = vmatpush1.msra.mxu0 %v763
      %1314 = vmatprep.subr.mxu0 0.0
      %1315 = vmatpush1.msra.mxu0 0.0
      %1316 = vmatprep.subr.mxu0 0.0
      %1317 = vmatpush1.msra.mxu0 0.0
      %1318 = vmatprep.subr.mxu0 0.0
      %1319 = vmatpush1.msra.mxu0 0.0
      %1320 = vmatprep.subr.mxu0 0.0
      %1321 = vmatpush1.msra.mxu0 0.0
      %1322 = vmatprep.subr.mxu0 0.0
      %1323 = vmatpush1.msra.mxu0 0.0
      %1324 = vmatprep.subr.mxu0 0.0
      %1325 = vmatpush1.msra.mxu0 0.0
      %1326 = vmatprep.subr.mxu0 0.0
      %1327 = vmatpush1.msra.mxu0 0.0
      %1328 = vmatprep.subr.mxu0 0.0
      %1329 = vmatpush1.msra.mxu0 0.0
      %1330 = vmatprep.subr.mxu0 0.0
      %1331 = vmatpush1.msra.mxu0 0.0
      %1332 = vmatprep.subr.mxu0 0.0
      %1333 = vmatpush1.msra.mxu0 0.0
      %1334 = vmatprep.subr.mxu0 0.0
      %1335 = vmatpush1.msra.mxu0 0.0
      %1336 = vmatprep.subr.mxu0 0.0
      %1337 = vmatpush1.msra.mxu0 0.0
      %1338 = vmatprep.subr.mxu0 0.0
      %1339 = vmatpush1.msra.mxu0 0.0
      %1340 = vmatprep.subr.mxu0 0.0
      %1341 = vmatpush1.msra.mxu0 0.0
      %1342 = vmatprep.subr.mxu0 0.0
      %1343 = vmatpush1.msra.mxu0 0.0
      %1344 = vmatprep.subr.mxu0 0.0
      %1345 = vmatpush1.msra.mxu0 0.0
      %1346 = vmatprep.subr.mxu0 0.0
      %1347 = vmatpush1.msra.mxu0 0.0
      %1348 = vmatprep.subr.mxu0 0.0
      %1349 = vmatpush1.msra.mxu0 0.0
      %1350 = vmatprep.subr.mxu0 0.0
      %1351 = vmatpush1.msra.mxu0 0.0
      %1352 = vmatprep.subr.mxu0 0.0
      %1353 = vmatpush1.msra.mxu0 0.0
      %1354 = vmatprep.subr.mxu0 0.0
      %1355 = vmatpush1.msra.mxu0 0.0
      %1356 = vmatprep.subr.mxu0 0.0
      %1357 = vmatpush1.msra.mxu0 0.0
      %1358 = vmatprep.subr.mxu0 0.0
      %1359 = vmatpush1.msra.mxu0 0.0
      %1360 = vmatprep.subr.mxu0 0.0
      %1361 = vmatpush1.msra.mxu0 0.0
      %1362 = vmatprep.subr.mxu0 0.0
      %1363 = vmatpush1.msra.mxu0 0.0
      %1364 = vmatprep.subr.mxu0 0.0
      %1365 = vmatpush1.msra.mxu0 0.0
      %1366 = vmatprep.subr.mxu0 0.0
      %1367 = vmatpush1.msra.mxu0 0.0
      %1368 = vmatprep.subr.mxu0 0.0
      %1369 = vmatpush1.msra.mxu0 0.0
      %1370 = vmatprep.subr.mxu0 0.0
      %1371 = vmatpush1.msra.mxu0 0.0
      %1372 = vmatprep.subr.mxu0 0.0
      %1373 = vmatpush1.msra.mxu0 0.0
      %1374 = vmatprep.subr.mxu0 0.0
      %1375 = vmatpush1.msra.mxu0 0.0
      %1376 = vmatprep.mubr.f32.mxu0 0.0
      %1377 = vmatmul.mubr.f32.gmra.mrb[0].mxu0 %v1310
      %v1378 = vpop.f32.mrb[0].mxu0
      %v1379 = vadd.f32 %v1306, %v1378
      %v1380 = vpop.f32.mrb[0].mxu0
      %1381 = vdwg.mxu0
      %1382 = vrot.lane.b32.xlu0 %v898, 112
      %v1383 = vpop.permute.xlu0 %1382
      %1384 = vrot.lane.b32.xlu0 %v898, 80
      %v1385 = vpop.permute.xlu0 %1384
      %v1386 = vsel %vm904, %v1383, 0
      %v1388 = vsel %vm904, %v1385, 0
      %1390 = vmatprep.subr.mxu0 0.0
      %1391 = vmatpush1.xpose.msra.mxu0 %v1388
      %1392 = vmatprep.subr.mxu0 0.0
      %1393 = vmatpush1.xpose.msra.mxu0 0.0
      %1394 = vmatprep.subr.mxu0 0.0
      %1395 = vmatpush1.xpose.msra.mxu0 0.0
      %1396 = vmatprep.subr.mxu0 0.0
      %1397 = vmatpush1.xpose.msra.mxu0 0.0
      %1398 = vmatprep.subr.mxu0 0.0
      %1399 = vmatpush1.xpose.msra.mxu0 0.0
      %1400 = vmatprep.subr.mxu0 0.0
      %1401 = vmatpush1.xpose.msra.mxu0 0.0
      %1402 = vmatprep.subr.mxu0 0.0
      %1403 = vmatpush1.xpose.msra.mxu0 0.0
      %1404 = vmatprep.subr.mxu0 0.0
      %1405 = vmatpush1.xpose.msra.mxu0 0.0
      %1406 = vmatprep.subr.mxu0 0.0
      %1407 = vmatpush1.xpose.msra.mxu0 0.0
      %1408 = vmatprep.subr.mxu0 0.0
      %1409 = vmatpush1.xpose.msra.mxu0 0.0
      %1410 = vmatprep.subr.mxu0 0.0
      %1411 = vmatpush1.xpose.msra.mxu0 0.0
      %1412 = vmatprep.subr.mxu0 0.0
      %1413 = vmatpush1.xpose.msra.mxu0 0.0
      %1414 = vmatprep.subr.mxu0 0.0
      %1415 = vmatpush1.xpose.msra.mxu0 0.0
      %1416 = vmatprep.subr.mxu0 0.0
      %1417 = vmatpush1.xpose.msra.mxu0 0.0
      %1418 = vmatprep.subr.mxu0 0.0
      %1419 = vmatpush1.xpose.msra.mxu0 0.0
      %1420 = vmatprep.subr.mxu0 0.0
      %1421 = vmatpush1.xpose.msra.mxu0 0.0
      %1422 = vmatprep.subr.mxu0 0.0
      %1423 = vmatpush1.xpose.msra.mxu0 0.0
      %1424 = vmatprep.subr.mxu0 0.0
      %1425 = vmatpush1.xpose.msra.mxu0 0.0
      %1426 = vmatprep.subr.mxu0 0.0
      %1427 = vmatpush1.xpose.msra.mxu0 0.0
      %1428 = vmatprep.subr.mxu0 0.0
      %1429 = vmatpush1.xpose.msra.mxu0 0.0
      %1430 = vmatprep.subr.mxu0 0.0
      %1431 = vmatpush1.xpose.msra.mxu0 0.0
      %1432 = vmatprep.subr.mxu0 0.0
      %1433 = vmatpush1.xpose.msra.mxu0 0.0
      %1434 = vmatprep.subr.mxu0 0.0
      %1435 = vmatpush1.xpose.msra.mxu0 0.0
      %1436 = vmatprep.subr.mxu0 0.0
      %1437 = vmatpush1.xpose.msra.mxu0 0.0
      %1438 = vmatprep.subr.mxu0 0.0
      %1439 = vmatpush1.xpose.msra.mxu0 0.0
      %1440 = vmatprep.subr.mxu0 0.0
      %1441 = vmatpush1.xpose.msra.mxu0 0.0
      %1442 = vmatprep.subr.mxu0 0.0
      %1443 = vmatpush1.xpose.msra.mxu0 0.0
      %1444 = vmatprep.subr.mxu0 0.0
      %1445 = vmatpush1.xpose.msra.mxu0 0.0
      %1446 = vmatprep.subr.mxu0 0.0
      %1447 = vmatpush1.xpose.msra.mxu0 0.0
      %1448 = vmatprep.subr.mxu0 0.0
      %1449 = vmatpush1.xpose.msra.mxu0 0.0
      %1450 = vmatprep.subr.mxu0 0.0
      %1451 = vmatpush1.xpose.msra.mxu0 0.0
      %1452 = vmatprep.subr.mxu0 0.0
      %1453 = vmatpush1.xpose.msra.mxu0 0.0
      %1454 = vmatprep.mubr.f32.mxu0 0.0
      %1455 = vmatmul.mubr.f32.gmra.mrb[0].mxu0 %v1386
      %v1456 = vpop.f32.mrb[0].mxu0
      %v1457 = vadd.f32 0.0, %v1456
      %v1458 = vpop.f32.mrb[0].mxu0
      %1459 = vdwg.mxu0
      %v1460 = vsel %vm979, %v1457, -inf
      %1461 = vmax.xlane.f32.xlu0 %v1460
      %v1462 = vpop.xlane.xlu0 %1461
      %v1463 = vsub.f32 %v1457, %v1462
      %v1464 = vmul.f32 %v1463, 1.442695
      %v1465 = vpow.pop %v1464
      %v1466 = vsel %vm979, %v1465, 0.0
      %1467 = vadd.xlane.f32.xlu0 %v1466
      %v1468 = vpop.xlane.xlu0 %1467
      %v1469 = vrcp.pop %v1468
      %v1470 = vmul.f32 %v1465, %v1469
      %1471 = vrot.lane.b32.xlu0 %v898, 48
      %v1472 = vpop.permute.xlu0 %1471
      %v1474 = vsel %vm993, %v1470, 0
      %v1476 = vsel %vm997, %v1472, 0
      %1478 = vmatprep.subr.mxu0 0.0
      %1479 = vmatpush1.msra.mxu0 %v1476
      %1480 = vmatprep.subr.mxu0 0.0
      %1481 = vmatpush1.msra.mxu0 0.0
      %1482 = vmatprep.subr.mxu0 0.0
      %1483 = vmatpush1.msra.mxu0 0.0
      %1484 = vmatprep.subr.mxu0 0.0
      %1485 = vmatpush1.msra.mxu0 0.0
      %1486 = vmatprep.subr.mxu0 0.0
      %1487 = vmatpush1.msra.mxu0 0.0
      %1488 = vmatprep.subr.mxu0 0.0
      %1489 = vmatpush1.msra.mxu0 0.0
      %1490 = vmatprep.subr.mxu0 0.0
      %1491 = vmatpush1.msra.mxu0 0.0
      %1492 = vmatprep.subr.mxu0 0.0
      %1493 = vmatpush1.msra.mxu0 0.0
      %1494 = vmatprep.subr.mxu0 0.0
      %1495 = vmatpush1.msra.mxu0 0.0
      %1496 = vmatprep.subr.mxu0 0.0
      %1497 = vmatpush1.msra.mxu0 0.0
      %1498 = vmatprep.subr.mxu0 0.0
      %1499 = vmatpush1.msra.mxu0 0.0
      %1500 = vmatprep.subr.mxu0 0.0
      %1501 = vmatpush1.msra.mxu0 0.0
      %1502 = vmatprep.subr.mxu0 0.0
      %1503 = vmatpush1.msra.mxu0 0.0
      %1504 = vmatprep.subr.mxu0 0.0
      %1505 = vmatpush1.msra.mxu0 0.0
      %1506 = vmatprep.subr.mxu0 0.0
      %1507 = vmatpush1.msra.mxu0 0.0
      %1508 = vmatprep.subr.mxu0 0.0
      %1509 = vmatpush1.msra.mxu0 0.0
      %1510 = vmatprep.subr.mxu0 0.0
      %1511 = vmatpush1.msra.mxu0 0.0
      %1512 = vmatprep.subr.mxu0 0.0
      %1513 = vmatpush1.msra.mxu0 0.0
      %1514 = vmatprep.subr.mxu0 0.0
      %1515 = vmatpush1.msra.mxu0 0.0
      %1516 = vmatprep.subr.mxu0 0.0
      %1517 = vmatpush1.msra.mxu0 0.0
      %1518 = vmatprep.subr.mxu0 0.0
      %1519 = vmatpush1.msra.mxu0 0.0
      %1520 = vmatprep.subr.mxu0 0.0
      %1521 = vmatpush1.msra.mxu0 0.0
      %1522 = vmatprep.subr.mxu0 0.0
      %1523 = vmatpush1.msra.mxu0 0.0
      %1524 = vmatprep.subr.mxu0 0.0
      %1525 = vmatpush1.msra.mxu0 0.0
      %1526 = vmatprep.subr.mxu0 0.0
      %1527 = vmatpush1.msra.mxu0 0.0
      %1528 = vmatprep.subr.mxu0 0.0
      %1529 = vmatpush1.msra.mxu0 0.0
      %1530 = vmatprep.subr.mxu0 0.0
      %1531 = vmatpush1.msra.mxu0 0.0
      %1532 = vmatprep.subr.mxu0 0.0
      %1533 = vmatpush1.msra.mxu0 0.0
      %1534 = vmatprep.subr.mxu0 0.0
      %1535 = vmatpush1.msra.mxu0 0.0
      %1536 = vmatprep.subr.mxu0 0.0
      %1537 = vmatpush1.msra.mxu0 0.0
      %1538 = vmatprep.subr.mxu0 0.0
      %1539 = vmatpush1.msra.mxu0 0.0
      %1540 = vmatprep.subr.mxu0 0.0
      %1541 = vmatpush1.msra.mxu0 0.0
      %1542 = vmatprep.mubr.f32.mxu0 0.0
      %1543 = vmatmul.mubr.f32.gmra.mrb[0].mxu0 %v1474
      %v1544 = vpop.f32.mrb[0].mxu0
      %v1545 = vadd.f32 0.0, %v1544
      %v1546 = vpop.f32.mrb[0].mxu0
      %1547 = vdwg.mxu0
      %v1549 = vsel %vm904, %v1545, 0
      %1551 = vmatprep.subr.mxu0 0.0
      %1552 = vmatpush1.msra.mxu0 %v765
      %1553 = vmatprep.subr.mxu0 0.0
      %1554 = vmatpush1.msra.mxu0 0.0
      %1555 = vmatprep.subr.mxu0 0.0
      %1556 = vmatpush1.msra.mxu0 0.0
      %1557 = vmatprep.subr.mxu0 0.0
      %1558 = vmatpush1.msra.mxu0 0.0
      %1559 = vmatprep.subr.mxu0 0.0
      %1560 = vmatpush1.msra.mxu0 0.0
      %1561 = vmatprep.subr.mxu0 0.0
      %1562 = vmatpush1.msra.mxu0 0.0
      %1563 = vmatprep.subr.mxu0 0.0
      %1564 = vmatpush1.msra.mxu0 0.0
      %1565 = vmatprep.subr.mxu0 0.0
      %1566 = vmatpush1.msra.mxu0 0.0
      %1567 = vmatprep.subr.mxu0 0.0
      %1568 = vmatpush1.msra.mxu0 0.0
      %1569 = vmatprep.subr.mxu0 0.0
      %1570 = vmatpush1.msra.mxu0 0.0
      %1571 = vmatprep.subr.mxu0 0.0
      %1572 = vmatpush1.msra.mxu0 0.0
      %1573 = vmatprep.subr.mxu0 0.0
      %1574 = vmatpush1.msra.mxu0 0.0
      %1575 = vmatprep.subr.mxu0 0.0
      %1576 = vmatpush1.msra.mxu0 0.0
      %1577 = vmatprep.subr.mxu0 0.0
      %1578 = vmatpush1.msra.mxu0 0.0
      %1579 = vmatprep.subr.mxu0 0.0
      %1580 = vmatpush1.msra.mxu0 0.0
      %1581 = vmatprep.subr.mxu0 0.0
      %1582 = vmatpush1.msra.mxu0 0.0
      %1583 = vmatprep.subr.mxu0 0.0
      %1584 = vmatpush1.msra.mxu0 0.0
      %1585 = vmatprep.subr.mxu0 0.0
      %1586 = vmatpush1.msra.mxu0 0.0
      %1587 = vmatprep.subr.mxu0 0.0
      %1588 = vmatpush1.msra.mxu0 0.0
      %1589 = vmatprep.subr.mxu0 0.0
      %1590 = vmatpush1.msra.mxu0 0.0
      %1591 = vmatprep.subr.mxu0 0.0
      %1592 = vmatpush1.msra.mxu0 0.0
      %1593 = vmatprep.subr.mxu0 0.0
      %1594 = vmatpush1.msra.mxu0 0.0
      %1595 = vmatprep.subr.mxu0 0.0
      %1596 = vmatpush1.msra.mxu0 0.0
      %1597 = vmatprep.subr.mxu0 0.0
      %1598 = vmatpush1.msra.mxu0 0.0
      %1599 = vmatprep.subr.mxu0 0.0
      %1600 = vmatpush1.msra.mxu0 0.0
      %1601 = vmatprep.subr.mxu0 0.0
      %1602 = vmatpush1.msra.mxu0 0.0
      %1603 = vmatprep.subr.mxu0 0.0
      %1604 = vmatpush1.msra.mxu0 0.0
      %1605 = vmatprep.subr.mxu0 0.0
      %1606 = vmatpush1.msra.mxu0 0.0
      %1607 = vmatprep.subr.mxu0 0.0
      %1608 = vmatpush1.msra.mxu0 0.0
      %1609 = vmatprep.subr.mxu0 0.0
      %1610 = vmatpush1.msra.mxu0 0.0
      %1611 = vmatprep.subr.mxu0 0.0
      %1612 = vmatpush1.msra.mxu0 0.0
      %1613 = vmatprep.subr.mxu0 0.0
      %1614 = vmatpush1.msra.mxu0 0.0
      %1615 = vmatprep.mubr.f32.mxu0 0.0
      %1616 = vmatmul.mubr.f32.gmra.mrb[0].mxu0 %v1549
      %v1617 = vpop.f32.mrb[0].mxu0
      %v1618 = vadd.f32 0.0, %v1617
      %v1619 = vpop.f32.mrb[0].mxu0
      %1620 = vdwg.mxu0
      %v1621 = vadd.f32 %v1379, %v1618
      %1622 = vrot.lane.b32.xlu0 %v898, 104
      %v1623 = vpop.permute.xlu0 %1622
      %1624 = vrot.lane.b32.xlu0 %v898, 72
      %v1625 = vpop.permute.xlu0 %1624
      %v1626 = vsel %vm904, %v1623, 0
      %v1628 = vsel %vm904, %v1625, 0
      %1630 = vmatprep.subr.mxu0 0.0
      %1631 = vmatpush1.xpose.msra.mxu0 %v1628
      %1632 = vmatprep.subr.mxu0 0.0
      %1633 = vmatpush1.xpose.msra.mxu0 0.0
      %1634 = vmatprep.subr.mxu0 0.0
      %1635 = vmatpush1.xpose.msra.mxu0 0.0
      %1636 = vmatprep.subr.mxu0 0.0
      %1637 = vmatpush1.xpose.msra.mxu0 0.0
      %1638 = vmatprep.subr.mxu0 0.0
      %1639 = vmatpush1.xpose.msra.mxu0 0.0
      %1640 = vmatprep.subr.mxu0 0.0
      %1641 = vmatpush1.xpose.msra.mxu0 0.0
      %1642 = vmatprep.subr.mxu0 0.0
      %1643 = vmatpush1.xpose.msra.mxu0 0.0
      %1644 = vmatprep.subr.mxu0 0.0
      %1645 = vmatpush1.xpose.msra.mxu0 0.0
      %1646 = vmatprep.subr.mxu0 0.0
      %1647 = vmatpush1.xpose.msra.mxu0 0.0
      %1648 = vmatprep.subr.mxu0 0.0
      %1649 = vmatpush1.xpose.msra.mxu0 0.0
      %1650 = vmatprep.subr.mxu0 0.0
      %1651 = vmatpush1.xpose.msra.mxu0 0.0
      %1652 = vmatprep.subr.mxu0 0.0
      %1653 = vmatpush1.xpose.msra.mxu0 0.0
      %1654 = vmatprep.subr.mxu0 0.0
      %1655 = vmatpush1.xpose.msra.mxu0 0.0
      %1656 = vmatprep.subr.mxu0 0.0
      %1657 = vmatpush1.xpose.msra.mxu0 0.0
      %1658 = vmatprep.subr.mxu0 0.0
      %1659 = vmatpush1.xpose.msra.mxu0 0.0
      %1660 = vmatprep.subr.mxu0 0.0
      %1661 = vmatpush1.xpose.msra.mxu0 0.0
      %1662 = vmatprep.subr.mxu0 0.0
      %1663 = vmatpush1.xpose.msra.mxu0 0.0
      %1664 = vmatprep.subr.mxu0 0.0
      %1665 = vmatpush1.xpose.msra.mxu0 0.0
      %1666 = vmatprep.subr.mxu0 0.0
      %1667 = vmatpush1.xpose.msra.mxu0 0.0
      %1668 = vmatprep.subr.mxu0 0.0
      %1669 = vmatpush1.xpose.msra.mxu0 0.0
      %1670 = vmatprep.subr.mxu0 0.0
      %1671 = vmatpush1.xpose.msra.mxu0 0.0
      %1672 = vmatprep.subr.mxu0 0.0
      %1673 = vmatpush1.xpose.msra.mxu0 0.0
      %1674 = vmatprep.subr.mxu0 0.0
      %1675 = vmatpush1.xpose.msra.mxu0 0.0
      %1676 = vmatprep.subr.mxu0 0.0
      %1677 = vmatpush1.xpose.msra.mxu0 0.0
      %1678 = vmatprep.subr.mxu0 0.0
      %1679 = vmatpush1.xpose.msra.mxu0 0.0
      %1680 = vmatprep.subr.mxu0 0.0
      %1681 = vmatpush1.xpose.msra.mxu0 0.0
      %1682 = vmatprep.subr.mxu0 0.0
      %1683 = vmatpush1.xpose.msra.mxu0 0.0
      %1684 = vmatprep.subr.mxu0 0.0
      %1685 = vmatpush1.xpose.msra.mxu0 0.0
      %1686 = vmatprep.subr.mxu0 0.0
      %1687 = vmatpush1.xpose.msra.mxu0 0.0
      %1688 = vmatprep.subr.mxu0 0.0
      %1689 = vmatpush1.xpose.msra.mxu0 0.0
      %1690 = vmatprep.subr.mxu0 0.0
      %1691 = vmatpush1.xpose.msra.mxu0 0.0
      %1692 = vmatprep.subr.mxu0 0.0
      %1693 = vmatpush1.xpose.msra.mxu0 0.0
      %1694 = vmatprep.mubr.f32.mxu0 0.0
      %1695 = vmatmul.mubr.f32.gmra.mrb[0].mxu0 %v1626
      %v1696 = vpop.f32.mrb[0].mxu0
      %v1697 = vadd.f32 0.0, %v1696
      %v1698 = vpop.f32.mrb[0].mxu0
      %1699 = vdwg.mxu0
      %v1700 = vsel %vm979, %v1697, -inf
      %1701 = vmax.xlane.f32.xlu0 %v1700
      %v1702 = vpop.xlane.xlu0 %1701
      %v1703 = vsub.f32 %v1697, %v1702
      %v1704 = vmul.f32 %v1703, 1.442695
      %v1705 = vpow.pop %v1704
      %v1706 = vsel %vm979, %v1705, 0.0
      %1707 = vadd.xlane.f32.xlu0 %v1706
      %v1708 = vpop.xlane.xlu0 %1707
      %v1709 = vrcp.pop %v1708
      %v1710 = vmul.f32 %v1705, %v1709
      %1711 = vrot.lane.b32.xlu0 %v898, 40
      %v1712 = vpop.permute.xlu0 %1711
      %v1714 = vsel %vm993, %v1710, 0
      %v1716 = vsel %vm997, %v1712, 0
      %1718 = vmatprep.subr.mxu0 0.0
      %1719 = vmatpush1.msra.mxu0 %v1716
      %1720 = vmatprep.subr.mxu0 0.0
      %1721 = vmatpush1.msra.mxu0 0.0
      %1722 = vmatprep.subr.mxu0 0.0
      %1723 = vmatpush1.msra.mxu0 0.0
      %1724 = vmatprep.subr.mxu0 0.0
      %1725 = vmatpush1.msra.mxu0 0.0
      %1726 = vmatprep.subr.mxu0 0.0
      %1727 = vmatpush1.msra.mxu0 0.0
      %1728 = vmatprep.subr.mxu0 0.0
      %1729 = vmatpush1.msra.mxu0 0.0
      %1730 = vmatprep.subr.mxu0 0.0
      %1731 = vmatpush1.msra.mxu0 0.0
      %1732 = vmatprep.subr.mxu0 0.0
      %1733 = vmatpush1.msra.mxu0 0.0
      %1734 = vmatprep.subr.mxu0 0.0
      %1735 = vmatpush1.msra.mxu0 0.0
      %1736 = vmatprep.subr.mxu0 0.0
      %1737 = vmatpush1.msra.mxu0 0.0
      %1738 = vmatprep.subr.mxu0 0.0
      %1739 = vmatpush1.msra.mxu0 0.0
      %1740 = vmatprep.subr.mxu0 0.0
      %1741 = vmatpush1.msra.mxu0 0.0
      %1742 = vmatprep.subr.mxu0 0.0
      %1743 = vmatpush1.msra.mxu0 0.0
      %1744 = vmatprep.subr.mxu0 0.0
      %1745 = vmatpush1.msra.mxu0 0.0
      %1746 = vmatprep.subr.mxu0 0.0
      %1747 = vmatpush1.msra.mxu0 0.0
      %1748 = vmatprep.subr.mxu0 0.0
      %1749 = vmatpush1.msra.mxu0 0.0
      %1750 = vmatprep.subr.mxu0 0.0
      %1751 = vmatpush1.msra.mxu0 0.0
      %1752 = vmatprep.subr.mxu0 0.0
      %1753 = vmatpush1.msra.mxu0 0.0
      %1754 = vmatprep.subr.mxu0 0.0
      %1755 = vmatpush1.msra.mxu0 0.0
      %1756 = vmatprep.subr.mxu0 0.0
      %1757 = vmatpush1.msra.mxu0 0.0
      %1758 = vmatprep.subr.mxu0 0.0
      %1759 = vmatpush1.msra.mxu0 0.0
      %1760 = vmatprep.subr.mxu0 0.0
      %1761 = vmatpush1.msra.mxu0 0.0
      %1762 = vmatprep.subr.mxu0 0.0
      %1763 = vmatpush1.msra.mxu0 0.0
      %1764 = vmatprep.subr.mxu0 0.0
      %1765 = vmatpush1.msra.mxu0 0.0
      %1766 = vmatprep.subr.mxu0 0.0
      %1767 = vmatpush1.msra.mxu0 0.0
      %1768 = vmatprep.subr.mxu0 0.0
      %1769 = vmatpush1.msra.mxu0 0.0
      %1770 = vmatprep.subr.mxu0 0.0
      %1771 = vmatpush1.msra.mxu0 0.0
      %1772 = vmatprep.subr.mxu0 0.0
      %1773 = vmatpush1.msra.mxu0 0.0
      %1774 = vmatprep.subr.mxu0 0.0
      %1775 = vmatpush1.msra.mxu0 0.0
      %1776 = vmatprep.subr.mxu0 0.0
      %1777 = vmatpush1.msra.mxu0 0.0
      %1778 = vmatprep.subr.mxu0 0.0
      %1779 = vmatpush1.msra.mxu0 0.0
      %1780 = vmatprep.subr.mxu0 0.0
      %1781 = vmatpush1.msra.mxu0 0.0
      %1782 = vmatprep.mubr.f32.mxu0 0.0
      %1783 = vmatmul.mubr.f32.gmra.mrb[0].mxu0 %v1714
      %v1784 = vpop.f32.mrb[0].mxu0
      %v1785 = vadd.f32 0.0, %v1784
      %v1786 = vpop.f32.mrb[0].mxu0
      %1787 = vdwg.mxu0
      %v1789 = vsel %vm904, %v1785, 0
      %1791 = vmatprep.subr.mxu0 0.0
      %1792 = vmatpush1.msra.mxu0 %v766
      %1793 = vmatprep.subr.mxu0 0.0
      %1794 = vmatpush1.msra.mxu0 0.0
      %1795 = vmatprep.subr.mxu0 0.0
      %1796 = vmatpush1.msra.mxu0 0.0
      %1797 = vmatprep.subr.mxu0 0.0
      %1798 = vmatpush1.msra.mxu0 0.0
      %1799 = vmatprep.subr.mxu0 0.0
      %1800 = vmatpush1.msra.mxu0 0.0
      %1801 = vmatprep.subr.mxu0 0.0
      %1802 = vmatpush1.msra.mxu0 0.0
      %1803 = vmatprep.subr.mxu0 0.0
      %1804 = vmatpush1.msra.mxu0 0.0
      %1805 = vmatprep.subr.mxu0 0.0
      %1806 = vmatpush1.msra.mxu0 0.0
      %1807 = vmatprep.subr.mxu0 0.0
      %1808 = vmatpush1.msra.mxu0 0.0
      %1809 = vmatprep.subr.mxu0 0.0
      %1810 = vmatpush1.msra.mxu0 0.0
      %1811 = vmatprep.subr.mxu0 0.0
      %1812 = vmatpush1.msra.mxu0 0.0
      %1813 = vmatprep.subr.mxu0 0.0
      %1814 = vmatpush1.msra.mxu0 0.0
      %1815 = vmatprep.subr.mxu0 0.0
      %1816 = vmatpush1.msra.mxu0 0.0
      %1817 = vmatprep.subr.mxu0 0.0
      %1818 = vmatpush1.msra.mxu0 0.0
      %1819 = vmatprep.subr.mxu0 0.0
      %1820 = vmatpush1.msra.mxu0 0.0
      %1821 = vmatprep.subr.mxu0 0.0
      %1822 = vmatpush1.msra.mxu0 0.0
      %1823 = vmatprep.subr.mxu0 0.0
      %1824 = vmatpush1.msra.mxu0 0.0
      %1825 = vmatprep.subr.mxu0 0.0
      %1826 = vmatpush1.msra.mxu0 0.0
      %1827 = vmatprep.subr.mxu0 0.0
      %1828 = vmatpush1.msra.mxu0 0.0
      %1829 = vmatprep.subr.mxu0 0.0
      %1830 = vmatpush1.msra.mxu0 0.0
      %1831 = vmatprep.subr.mxu0 0.0
      %1832 = vmatpush1.msra.mxu0 0.0
      %1833 = vmatprep.subr.mxu0 0.0
      %1834 = vmatpush1.msra.mxu0 0.0
      %1835 = vmatprep.subr.mxu0 0.0
      %1836 = vmatpush1.msra.mxu0 0.0
      %1837 = vmatprep.subr.mxu0 0.0
      %1838 = vmatpush1.msra.mxu0 0.0
      %1839 = vmatprep.subr.mxu0 0.0
      %1840 = vmatpush1.msra.mxu0 0.0
      %1841 = vmatprep.subr.mxu0 0.0
      %1842 = vmatpush1.msra.mxu0 0.0
      %1843 = vmatprep.subr.mxu0 0.0
      %1844 = vmatpush1.msra.mxu0 0.0
      %1845 = vmatprep.subr.mxu0 0.0
      %1846 = vmatpush1.msra.mxu0 0.0
      %1847 = vmatprep.subr.mxu0 0.0
      %1848 = vmatpush1.msra.mxu0 0.0
      %1849 = vmatprep.subr.mxu0 0.0
      %1850 = vmatpush1.msra.mxu0 0.0
      %1851 = vmatprep.subr.mxu0 0.0
      %1852 = vmatpush1.msra.mxu0 0.0
      %1853 = vmatprep.subr.mxu0 0.0
      %1854 = vmatpush1.msra.mxu0 0.0
      %1855 = vmatprep.mubr.f32.mxu0 0.0
      %1856 = vmatmul.mubr.f32.gmra.mrb[0].mxu0 %v1789
      %v1857 = vpop.f32.mrb[0].mxu0
      %v1858 = vadd.f32 0.0, %v1857
      %v1859 = vpop.f32.mrb[0].mxu0
      %1860 = vdwg.mxu0
      %v1861 = vadd.f32 %v1621, %v1858
      %v1862 = vadd.f32 %v755, %v1861
      %v1864 = vlaneseq
      %v1865 = vshrl.u32 %v1864, 7
      %v1866 = vsub.s32 0, %v1865
      %v1867 = vrot.slane %v767, %v1866
      %v1869 = vadd.f32 %v1862, %v1867
      %v1870 = vsel %vm792, %v1869, 0.0
      %1871 = vadd.xlane.f32.xlu0 %v1870
      %v1872 = vpop.xlane.xlu0 %1871
      %v1873 = vmul.f32 %v1872, %v796
      %v1874 = vsub.f32 %v1869, %v1873
      %v1875 = vmul.f32 %v1874, %v1874
      %v1876 = vsel %vm792, %v1875, 0.0
      %1877 = vadd.xlane.f32.xlu0 %v1876
      %v1878 = vpop.xlane.xlu0 %1877
      %v1879 = vmul.f32 %v1878, %v796
      %v1880 = vadd.f32 %v1879, 1e-06
      %v1881 = vrsqrt.pop %v1880
      %v1882 = vmul.f32 %v1874, %v1881
      %v1884 = vlaneseq
      %v1885 = vshrl.u32 %v1884, 7
      %v1886 = vsub.s32 0, %v1885
      %v1887 = vrot.slane %v768, %v1886
      %v1889 = vmul.f32 %v1882, %v1887
      %v1891 = vlaneseq
      %v1892 = vshrl.u32 %v1891, 7
      %v1893 = vsub.s32 0, %v1892
      %v1894 = vrot.slane %v769, %v1893
      %v1896 = vadd.f32 %v1889, %v1894
      %v1898 = vlaneseq
      %v1899 = vshrl.u32 %v1898, 7
      %v1900 = vsub.s32 0, %v1899
      %v1901 = vrot.slane %v774, %v1900
      %v1904 = vsel %vm827, %v1896, 0
      %1906 = vmatprep.subr.mxu0 0.0
      %1907 = vmatpush1.msra.mxu0 %v770
      %1908 = vmatprep.subr.mxu0 0.0
      %1909 = vmatpush1.msra.mxu0 %v771
      %1910 = vmatprep.subr.mxu0 0.0
      %1911 = vmatpush1.msra.mxu0 %v772
      %1912 = vmatprep.subr.mxu0 0.0
      %1913 = vmatpush1.msra.mxu0 %v773
      %1914 = vmatprep.subr.mxu0 0.0
      %1915 = vmatpush1.msra.mxu0 0.0
      %1916 = vmatprep.subr.mxu0 0.0
      %1917 = vmatpush1.msra.mxu0 0.0
      %1918 = vmatprep.subr.mxu0 0.0
      %1919 = vmatpush1.msra.mxu0 0.0
      %1920 = vmatprep.subr.mxu0 0.0
      %1921 = vmatpush1.msra.mxu0 0.0
      %1922 = vmatprep.subr.mxu0 0.0
      %1923 = vmatpush1.msra.mxu0 0.0
      %1924 = vmatprep.subr.mxu0 0.0
      %1925 = vmatpush1.msra.mxu0 0.0
      %1926 = vmatprep.subr.mxu0 0.0
      %1927 = vmatpush1.msra.mxu0 0.0
      %1928 = vmatprep.subr.mxu0 0.0
      %1929 = vmatpush1.msra.mxu0 0.0
      %1930 = vmatprep.subr.mxu0 0.0
      %1931 = vmatpush1.msra.mxu0 0.0
      %1932 = vmatprep.subr.mxu0 0.0
      %1933 = vmatpush1.msra.mxu0 0.0
      %1934 = vmatprep.subr.mxu0 0.0
      %1935 = vmatpush1.msra.mxu0 0.0
      %1936 = vmatprep.subr.mxu0 0.0
      %1937 = vmatpush1.msra.mxu0 0.0
      %1938 = vmatprep.subr.mxu0 0.0
      %1939 = vmatpush1.msra.mxu0 0.0
      %1940 = vmatprep.subr.mxu0 0.0
      %1941 = vmatpush1.msra.mxu0 0.0
      %1942 = vmatprep.subr.mxu0 0.0
      %1943 = vmatpush1.msra.mxu0 0.0
      %1944 = vmatprep.subr.mxu0 0.0
      %1945 = vmatpush1.msra.mxu0 0.0
      %1946 = vmatprep.subr.mxu0 0.0
      %1947 = vmatpush1.msra.mxu0 0.0
      %1948 = vmatprep.subr.mxu0 0.0
      %1949 = vmatpush1.msra.mxu0 0.0
      %1950 = vmatprep.subr.mxu0 0.0
      %1951 = vmatpush1.msra.mxu0 0.0
      %1952 = vmatprep.subr.mxu0 0.0
      %1953 = vmatpush1.msra.mxu0 0.0
      %1954 = vmatprep.subr.mxu0 0.0
      %1955 = vmatpush1.msra.mxu0 0.0
      %1956 = vmatprep.subr.mxu0 0.0
      %1957 = vmatpush1.msra.mxu0 0.0
      %1958 = vmatprep.subr.mxu0 0.0
      %1959 = vmatpush1.msra.mxu0 0.0
      %1960 = vmatprep.subr.mxu0 0.0
      %1961 = vmatpush1.msra.mxu0 0.0
      %1962 = vmatprep.subr.mxu0 0.0
      %1963 = vmatpush1.msra.mxu0 0.0
      %1964 = vmatprep.subr.mxu0 0.0
      %1965 = vmatpush1.msra.mxu0 0.0
      %1966 = vmatprep.subr.mxu0 0.0
      %1967 = vmatpush1.msra.mxu0 0.0
      %1968 = vmatprep.subr.mxu0 0.0
      %1969 = vmatpush1.msra.mxu0 0.0
      %1970 = vmatprep.mubr.f32.mxu0 0.0
      %1971 = vmatmul.mubr.f32.gmra.mrb[0].mxu0 %v1904
      %v1972 = vpop.f32.mrb[0].mxu0
      %v1973 = vadd.f32 %v1901, %v1972
      %v1974 = vpop.f32.mrb[0].mxu0
      %1975 = vdwg.mxu0
      %v1976 = vmul.f32 %v1973, 0.5
      %v1977 = vmul.f32 %v1973, 0.70710677
      %v1978 = verf.f32.pop %v1977
      %v1979 = vadd.f32 %v1978, 1.0
      %v1980 = vmul.f32 %v1976, %v1979
      %v1982 = vlaneseq
      %v1983 = vshrl.u32 %v1982, 7
      %v1984 = vsub.s32 0, %v1983
      %v1985 = vrot.slane %v791, %v1984
      %1987 = vmatprep.subr.mxu0 0.0
      %1988 = vmatpush1.msra.mxu0 %v775
      %1989 = vmatprep.subr.mxu0 0.0
      %1990 = vmatpush1.msra.mxu0 %v776
      %1991 = vmatprep.subr.mxu0 0.0
      %1992 = vmatpush1.msra.mxu0 %v777
      %1993 = vmatprep.subr.mxu0 0.0
      %1994 = vmatpush1.msra.mxu0 %v778
      %1995 = vmatprep.subr.mxu0 0.0
      %1996 = vmatpush1.msra.mxu0 %v779
      %1997 = vmatprep.subr.mxu0 0.0
      %1998 = vmatpush1.msra.mxu0 %v780
      %1999 = vmatprep.subr.mxu0 0.0
      %2000 = vmatpush1.msra.mxu0 %v781
      %2001 = vmatprep.subr.mxu0 0.0
      %2002 = vmatpush1.msra.mxu0 %v782
      %2003 = vmatprep.subr.mxu0 0.0
      %2004 = vmatpush1.msra.mxu0 %v783
      %2005 = vmatprep.subr.mxu0 0.0
      %2006 = vmatpush1.msra.mxu0 %v784
      %2007 = vmatprep.subr.mxu0 0.0
      %2008 = vmatpush1.msra.mxu0 %v785
      %2009 = vmatprep.subr.mxu0 0.0
      %2010 = vmatpush1.msra.mxu0 %v786
      %2011 = vmatprep.subr.mxu0 0.0
      %2012 = vmatpush1.msra.mxu0 %v787
      %2013 = vmatprep.subr.mxu0 0.0
      %2014 = vmatpush1.msra.mxu0 %v788
      %2015 = vmatprep.subr.mxu0 0.0
      %2016 = vmatpush1.msra.mxu0 %v789
      %2017 = vmatprep.subr.mxu0 0.0
      %2018 = vmatpush1.msra.mxu0 %v790
      %2019 = vmatprep.subr.mxu0 0.0
      %2020 = vmatpush1.msra.mxu0 0.0
      %2021 = vmatprep.subr.mxu0 0.0
      %2022 = vmatpush1.msra.mxu0 0.0
      %2023 = vmatprep.subr.mxu0 0.0
      %2024 = vmatpush1.msra.mxu0 0.0
      %2025 = vmatprep.subr.mxu0 0.0
      %2026 = vmatpush1.msra.mxu0 0.0
      %2027 = vmatprep.subr.mxu0 0.0
      %2028 = vmatpush1.msra.mxu0 0.0
      %2029 = vmatprep.subr.mxu0 0.0
      %2030 = vmatpush1.msra.mxu0 0.0
      %2031 = vmatprep.subr.mxu0 0.0
      %2032 = vmatpush1.msra.mxu0 0.0
      %2033 = vmatprep.subr.mxu0 0.0
      %2034 = vmatpush1.msra.mxu0 0.0
      %2035 = vmatprep.subr.mxu0 0.0
      %2036 = vmatpush1.msra.mxu0 0.0
      %2037 = vmatprep.subr.mxu0 0.0
      %2038 = vmatpush1.msra.mxu0 0.0
      %2039 = vmatprep.subr.mxu0 0.0
      %2040 = vmatpush1.msra.mxu0 0.0
      %2041 = vmatprep.subr.mxu0 0.0
      %2042 = vmatpush1.msra.mxu0 0.0
      %2043 = vmatprep.subr.mxu0 0.0
      %2044 = vmatpush1.msra.mxu0 0.0
      %2045 = vmatprep.subr.mxu0 0.0
      %2046 = vmatpush1.msra.mxu0 0.0
      %2047 = vmatprep.subr.mxu0 0.0
      %2048 = vmatpush1.msra.mxu0 0.0
      %2049 = vmatprep.subr.mxu0 0.0
      %2050 = vmatpush1.msra.mxu0 0.0
      %2051 = vmatprep.mubr.f32.mxu0 0.0
      %2052 = vmatmul.mubr.f32.gmra.mrb[0].mxu0 %v1980
      %v2053 = vpop.f32.mrb[0].mxu0
      %v2054 = vadd.f32 %v1985, %v2053
      %v2055 = vpop.f32.mrb[0].mxu0
      %2056 = vdwg.mxu0
      %v2057 = vadd.f32 %v1869, %v2054
      %2058 = vst.msk [vmem:[#allocation2] sm:$0x1f] %vm792, %v2057
      %p2059 = scmp.eq.s32.totalorder %s33, 1
      // Predicated region
      $region93: #{mae_forward.4} parent=87 // pred_check
        %p2060 = pneg %p2059
      $region94: #{mae_forward.4} parent=87 // pred_check_branch
        %2062 = sbr.rel (%p2060) target = $region96
      $region95: #{mae_forward.4} parent=87 // pred_region
        %v2063 = vld [vmem:[%s13] sm:$0x1]
        %v2064 = vld [vmem:[%s14] sm:$0x1]
        %v2065 = vsel %vm792, %v2057, 0.0
        %2066 = vadd.xlane.f32.xlu0 %v2065
        %v2067 = vpop.xlane.xlu0 %2066
        %v2068 = vmul.f32 %v2067, %v796
        %v2069 = vsub.f32 %v2057, %v2068
        %v2070 = vmul.f32 %v2069, %v2069
        %v2071 = vsel %vm792, %v2070, 0.0
        %2072 = vadd.xlane.f32.xlu0 %v2071
        %v2073 = vpop.xlane.xlu0 %2072
        %v2074 = vmul.f32 %v2073, %v796
        %v2075 = vadd.f32 %v2074, 1e-06
        %v2076 = vrsqrt.pop %v2075
        %v2077 = vmul.f32 %v2069, %v2076
        %v2079 = vlaneseq
        %v2080 = vshrl.u32 %v2079, 7
        %v2081 = vsub.s32 0, %v2080
        %v2082 = vrot.slane %v2063, %v2081
        %v2084 = vmul.f32 %v2077, %v2082
        %v2086 = vlaneseq
        %v2087 = vshrl.u32 %v2086, 7
        %v2088 = vsub.s32 0, %v2087
        %v2089 = vrot.slane %v2064, %v2088
        %v2091 = vadd.f32 %v2084, %v2089
        %v2092 = vld [vmem:[%s15] sm:$0xff]
        %v2093 = vld [vmem:[%s15 + $0x8] sm:$0xff]
        %v2094 = vld [vmem:[%s15 + $0x10] sm:$0xff]
        %v2095 = vld [vmem:[%s15 + $0x18] sm:$0xff]
        %v2096 = vld [vmem:[%s16] sm:$0x1]
        %v2098 = vlaneseq
        %v2099 = vshrl.u32 %v2098, 7
        %v2100 = vsub.s32 0, %v2099
        %v2101 = vrot.slane %v2096, %v2100
        %v2104 = vsel %vm827, %v2091, 0
        %2106 = vmatprep.subr.mxu0 0.0
        %2107 = vmatpush1.msra.mxu0 %v2092
        %2108 = vmatprep.subr.mxu0 0.0
        %2109 = vmatpush1.msra.mxu0 %v2093
        %2110 = vmatprep.subr.mxu0 0.0
        %2111 = vmatpush1.msra.mxu0 %v2094
        %2112 = vmatprep.subr.mxu0 0.0
        %2113 = vmatpush1.msra.mxu0 %v2095
        %2114 = vmatprep.subr.mxu0 0.0
        %2115 = vmatpush1.msra.mxu0 0.0
        %2116 = vmatprep.subr.mxu0 0.0
        %2117 = vmatpush1.msra.mxu0 0.0
        %2118 = vmatprep.subr.mxu0 0.0
        %2119 = vmatpush1.msra.mxu0 0.0
        %2120 = vmatprep.subr.mxu0 0.0
        %2121 = vmatpush1.msra.mxu0 0.0
        %2122 = vmatprep.subr.mxu0 0.0
        %2123 = vmatpush1.msra.mxu0 0.0
        %2124 = vmatprep.subr.mxu0 0.0
        %2125 = vmatpush1.msra.mxu0 0.0
        %2126 = vmatprep.subr.mxu0 0.0
        %2127 = vmatpush1.msra.mxu0 0.0
        %2128 = vmatprep.subr.mxu0 0.0
        %2129 = vmatpush1.msra.mxu0 0.0
        %2130 = vmatprep.subr.mxu0 0.0
        %2131 = vmatpush1.msra.mxu0 0.0
        %2132 = vmatprep.subr.mxu0 0.0
        %2133 = vmatpush1.msra.mxu0 0.0
        %2134 = vmatprep.subr.mxu0 0.0
        %2135 = vmatpush1.msra.mxu0 0.0
        %2136 = vmatprep.subr.mxu0 0.0
        %2137 = vmatpush1.msra.mxu0 0.0
        %2138 = vmatprep.subr.mxu0 0.0
        %2139 = vmatpush1.msra.mxu0 0.0
        %2140 = vmatprep.subr.mxu0 0.0
        %2141 = vmatpush1.msra.mxu0 0.0
        %2142 = vmatprep.subr.mxu0 0.0
        %2143 = vmatpush1.msra.mxu0 0.0
        %2144 = vmatprep.subr.mxu0 0.0
        %2145 = vmatpush1.msra.mxu0 0.0
        %2146 = vmatprep.subr.mxu0 0.0
        %2147 = vmatpush1.msra.mxu0 0.0
        %2148 = vmatprep.subr.mxu0 0.0
        %2149 = vmatpush1.msra.mxu0 0.0
        %2150 = vmatprep.subr.mxu0 0.0
        %2151 = vmatpush1.msra.mxu0 0.0
        %2152 = vmatprep.subr.mxu0 0.0
        %2153 = vmatpush1.msra.mxu0 0.0
        %2154 = vmatprep.subr.mxu0 0.0
        %2155 = vmatpush1.msra.mxu0 0.0
        %2156 = vmatprep.subr.mxu0 0.0
        %2157 = vmatpush1.msra.mxu0 0.0
        %2158 = vmatprep.subr.mxu0 0.0
        %2159 = vmatpush1.msra.mxu0 0.0
        %2160 = vmatprep.subr.mxu0 0.0
        %2161 = vmatpush1.msra.mxu0 0.0
        %2162 = vmatprep.subr.mxu0 0.0
        %2163 = vmatpush1.msra.mxu0 0.0
        %2164 = vmatprep.subr.mxu0 0.0
        %2165 = vmatpush1.msra.mxu0 0.0
        %2166 = vmatprep.subr.mxu0 0.0
        %2167 = vmatpush1.msra.mxu0 0.0
        %2168 = vmatprep.subr.mxu0 0.0
        %2169 = vmatpush1.msra.mxu0 0.0
        %2170 = vmatprep.mubr.f32.mxu0 0.0
        %2171 = vmatmul.mubr.f32.gmra.mrb[0].mxu0 %v2104
        %v2172 = vpop.f32.mrb[0].mxu0
        %v2173 = vadd.f32 %v2101, %v2172
        %v2174 = vpop.f32.mrb[0].mxu0
        %2175 = vdwg.mxu0
        %vm2176 = vcmask 126976
        %2177 = vst.msk [vmem:[%s747] sm:$0x1f] %vm2176, %v2173
      $region96: #{mae_forward.4} parent=87 // pred_fallthru
        _
      %p2178 = scmp.lt.s32.totalorder %s32, 1
      %s2179 = scalar_select %p2178, %s32, 1
      %s2180 = smul.addr %s2179, 8
      %s2181 = scalar_lea.vmem %s17, %s2180
      // Predicated region
      $region97: #{mae_forward.4} parent=87 // pred_check
        %p2182 = pneg %p480
      $region98: #{mae_forward.4} parent=87 // pred_check_branch
        %2184 = sbr.rel (%p2182) target = $region100
      $region99: #{mae_forward.4} parent=87 // pred_region
        _
      $region100: #{mae_forward.4} parent=87 // pred_fallthru
        _
    $region88: #{mae_forward.4} parent=5 // pred_fallthru
      _
    %p2185 = scmp.le.s32.totalorder 2, %s23
    // Predicated region
    $region101: #{mae_forward.4} parent=5 // pred_check
      %p2186 = pneg %p2185
    $region102: #{mae_forward.4} parent=5 // pred_check_branch
      %2188 = sbr.rel (%p2186) target = $region104
    $region103: #{mae_forward.4} parent=5 // pred_region
      %s2189 = ssub.s32 %s23, 2
      // Predicated region
      $region105: #{mae_forward.4} parent=103 // pred_check
        %p2190 = pneg %p486
      $region106: #{mae_forward.4} parent=103 // pred_check_branch
        %2192 = sbr.rel (%p2190) target = $region108
      $region107: #{mae_forward.4} parent=103 // pred_region
        %p2193 = scmp.lt.s32.totalorder %s34, 1
        %s2194 = scalar_select %p2193, %s34, 1
        %s2195 = smul.addr %s2194, 8
        %s2196 = scalar_lea.vmem %s17, %s2195
      $region108: #{mae_forward.4} parent=103 // pred_fallthru
        _
    $region104: #{mae_forward.4} parent=5 // pred_fallthru
      _
  $region6: #{mae_forward.4} parent=0 // loop_footer
    %s27 = sadd.s32 1, %s23
  $region7: #{mae_forward.4} parent=0 // loop_footer_branch
    %22 = sbr.rel target = $region3
  $region8: #{mae_forward.4} parent=0 // loop_exit
    _

// kernel: mae_forward.5
$region0: #{mae_forward.5}
  #allocation0 [shape = 'u32[]', space=smem, size = 0x4, offset = 0x4, fixed_abs, tag = 'smem constant byte address 0x4 - core index']
  #allocation1 [shape = 'u32[144,128]{1,0:T(1,128)}', space=vmem, size = 0x12000, scoped, tag = 'internal scratch']
  #allocation2 [shape = 'f32[1,17,16]{2,1,0:T(8,128)}', space=vmem, size = 0x3000, scoped, tag = 'scratch operand']
  %s0 = inlined_call_operand.vmem [shape: f32[2,17,16], index: 0, kind: input, shape index: {}]
  %s1 = inlined_call_operand.vmem [shape: f32[1,17,16], index: 1, kind: input, shape index: {}]
  %s2 = inlined_call_operand.vmem [shape: f32[1,1,16], index: 2, kind: input, shape index: {}]
  %s3 = inlined_call_operand.vmem [shape: f32[1,1,16], index: 3, kind: input, shape index: {}]
  %s4 = inlined_call_operand.vmem [shape: f32[1,16,48], index: 4, kind: input, shape index: {}]
  %s5 = inlined_call_operand.vmem [shape: f32[1,1,48], index: 5, kind: input, shape index: {}]
  %s6 = inlined_call_operand.vmem [shape: f32[1,4,4,16], index: 6, kind: input, shape index: {}]
  %s7 = inlined_call_operand.vmem [shape: f32[1,1,16], index: 7, kind: input, shape index: {}]
  %s8 = inlined_call_operand.vmem [shape: f32[1,1,16], index: 8, kind: input, shape index: {}]
  %s9 = inlined_call_operand.vmem [shape: f32[1,1,16], index: 9, kind: input, shape index: {}]
  %s10 = inlined_call_operand.vmem [shape: f32[1,16,64], index: 10, kind: input, shape index: {}]
  %s11 = inlined_call_operand.vmem [shape: f32[1,1,64], index: 11, kind: input, shape index: {}]
  %s12 = inlined_call_operand.vmem [shape: f32[1,64,16], index: 12, kind: input, shape index: {}]
  %s13 = inlined_call_operand.vmem [shape: f32[1,1,16], index: 13, kind: input, shape index: {}]
  %s14 = inlined_call_operand.vmem [shape: f32[1,16], index: 14, kind: input, shape index: {}]
  %s15 = inlined_call_operand.vmem [shape: f32[1,16], index: 15, kind: input, shape index: {}]
  %s16 = inlined_call_operand.vmem [shape: f32[16,48], index: 16, kind: input, shape index: {}]
  %s17 = inlined_call_operand.vmem [shape: f32[1,48], index: 17, kind: input, shape index: {}]
  %s18 = inlined_call_operand.vmem [shape: f32[2,16,48], index: 18, kind: input, shape index: {}]
  %s19 = inlined_call_operand.vmem [shape: f32[2,16,1], index: 19, kind: input, shape index: {}]
  %s20 = inlined_call_operand.hbm [shape: f32[2,16,48], index: 20, kind: output, shape index: {0}]
  %s21 = inlined_call_operand.vmem [shape: f32[2,1,1], index: 21, kind: output, shape index: {1}]
  %s22 = inlined_call_operand.vmem [shape: f32[2,1,1], index: 22, kind: output, shape index: {2}]
  %23 = xla_tuple %s20, %s21, %s22
  %s24 = sld [smem:[#allocation0]]
  $region137: #{mae_forward.5} parent=0
    _
  %s26 = ssub.s32 1, %s24
  %s27 = scalar_select 0, %s26, %s24
  $region1: #{mae_forward.5} parent=0
    #allocation3 [shape = 'u8[16384]{0}', space=vmem, size = 0x4000, scoped, tag = 'output window, operand 0']
    #allocation4 [shape = 's32[2]{0}', space=sflag, size = 0x8, scoped, tag = 'scoped memory for mae_forward.5']
    %28 = vsyncpa [#allocation4], 0
    %s29 = scalar_lea.sflag [#allocation4], 1
    %30 = vsyncpa %s29, 0
    loop: start=0, step=1, limit=4
    $region2: #{mae_forward.5} parent=1 // loop_pre_header
      _
    $region3: #{mae_forward.5} parent=1 // loop_header
      %s32 = sphi 0, %s36
      %p33 = scmp.ge.s32.totalorder %s32, 4
      %s39 = sphi 0, %s51
      %s40 = sphi 0, %s47
      %s41 = sphi 0, %s39
      %s42 = sphi 0, %s40
      %s43 = sphi 0, %s41
      %s44 = sphi 0, %s42
      %s54 = sphi 0, %s56
      %s57 = sphi 0, %s54
      %s58 = sphi 0, %s57
      %s74 = sphi 0, %s58
      %s78 = sphi 0, %s78
      %s80 = sphi 0, %s78
      %s81 = sphi 0, %s80
      %s95 = sphi 0, %s81
      %s101 = sphi 0, %s103
      %s104 = sphi 0, %s101
      %s105 = sphi 0, %s104
      %s121 = sphi 0, %s105
      %s127 = sphi 0, %s129
      %s130 = sphi 0, %s127
      %s131 = sphi 0, %s130
      %s147 = sphi 0, %s131
      %s153 = sphi 0, %s155
      %s156 = sphi 0, %s153
      %s157 = sphi 0, %s156
      %s173 = sphi 0, %s157
      %s179 = sphi 0, %s181
      %s182 = sphi 0, %s179
      %s183 = sphi 0, %s182
      %s199 = sphi 0, %s183
      %s205 = sphi 0, %s207
      %s208 = sphi 0, %s205
      %s209 = sphi 0, %s208
      %s225 = sphi 0, %s209
      %s231 = sphi 0, %s233
      %s234 = sphi 0, %s231
      %s235 = sphi 0, %s234
      %s251 = sphi 0, %s235
      %s257 = sphi 0, %s259
      %s260 = sphi 0, %s257
      %s261 = sphi 0, %s260
      %s277 = sphi 0, %s261
      %s283 = sphi 0, %s285
      %s286 = sphi 0, %s283
      %s287 = sphi 0, %s286
      %s303 = sphi 0, %s287
      %s309 = sphi 0, %s311
      %s312 = sphi 0, %s309
      %s313 = sphi 0, %s312
      %s329 = sphi 0, %s313
      %s335 = sphi 0, %s337
      %s338 = sphi 0, %s335
      %s339 = sphi 0, %s338
      %s355 = sphi 0, %s339
      %s361 = sphi 0, %s363
      %s364 = sphi 0, %s361
      %s365 = sphi 0, %s364
      %s381 = sphi 0, %s365
      %s387 = sphi 0, %s389
      %s390 = sphi 0, %s387
      %s391 = sphi 0, %s390
      %s407 = sphi 0, %s391
      %s411 = sphi 0, %s411
      %s413 = sphi 0, %s411
      %s414 = sphi 0, %s413
      %s428 = sphi 0, %s414
      %s432 = sphi 0, %s432
      %s434 = sphi 0, %s432
      %s435 = sphi 0, %s434
      %s449 = sphi 0, %s435
      %s453 = sphi 0, %s453
      %s455 = sphi 0, %s453
      %s456 = sphi 0, %s455
      %s470 = sphi 0, %s456
      %s474 = sphi 0, %s474
      %s476 = sphi 0, %s474
      %s477 = sphi 0, %s476
      %s491 = sphi 0, %s477
      %s497 = sphi 0, %s499
      %s500 = sphi 0, %s497
      %s501 = sphi 0, %s500
      %s517 = sphi 0, %s501
      %s523 = sphi 0, %s525
      %s526 = sphi 0, %s523
      %s527 = sphi 0, %s526
      %s543 = sphi 0, %s527
      %s549 = sphi 0, %s551
      %s552 = sphi 0, %s549
      %s553 = sphi 0, %s552
      %s569 = sphi 0, %s553
      %s575 = sphi 0, %s577
      %s578 = sphi 0, %s575
      %s579 = sphi 0, %s578
      %s595 = sphi 0, %s579
      %s601 = sphi 0, %s603
      %s604 = sphi 0, %s601
      %s605 = sphi 0, %s604
      %s621 = sphi 0, %s605
    $region4: #{mae_forward.5} parent=1 // loop_header_branch
      %35 = sbr.rel (%p33) target = $region8
    $region5: #{mae_forward.5} parent=1 // loop_body
      %s37 = ssub.s32 %s32, 1
      %s38 = ssub.s32 %s32, 2
      %s45 = sadd.s32 1, %s40
      %p46 = scmp.ge.s32.totalorder %s45, 1
      %s47 = scalar_select %p46, 0, %s45
      %s48 = sadd.s32 1, %s39
      %s49 = scalar_select %p46, %s48, %s39
      %p50 = scmp.ge.s32.totalorder %s49, 2
      %s51 = scalar_select %p50, 0, %s49
      %s52 = ssub.s32 %s39, %s51
      %p53 = scmp.eq.s32.totalorder %s52, 0
      %s55 = sadd.s32 %s54, 1
      %s56 = scalar_select %p53, %s54, %s55
      %p59 = pneg %p53
      %p60 = scmp.eq.s32.totalorder %s32, 1
      %p61 = por %p59, %p60
      %p62 = scmp.ne.s32.totalorder %s54, %s57
      %p63 = scmp.eq.s32.totalorder %s32, 0
      %p64 = por %p62, %p63
      %p65 = scmp.ne.s32.totalorder %s54, %s57
      %p66 = scmp.eq.s32.totalorder %s37, 1
      %p67 = por %p65, %p66
      %p68 = scmp.ne.s32.totalorder %s57, %s58
      %p69 = scmp.eq.s32.totalorder %s37, 0
      %p70 = por %p68, %p69
      %p71 = scmp.ne.s32.totalorder %s57, %s58
      %p72 = scmp.eq.s32.totalorder %s38, 1
      %p73 = por %p71, %p72
      %p75 = scmp.ne.s32.totalorder %s58, %s74
      %p76 = scmp.eq.s32.totalorder %s38, 0
      %p77 = por %p75, %p76
      %s79 = sadd.s32 %s78, 1
      %p82 = scmp.eq.s32.totalorder %s32, 1
      %p83 = scmp.ne.s32.totalorder %s78, %s80
      %p84 = scmp.eq.s32.totalorder %s32, 0
      %p85 = por %p83, %p84
      %p86 = scmp.ne.s32.totalorder %s78, %s80
      %p87 = scmp.eq.s32.totalorder %s37, 1
      %p88 = por %p86, %p87
      %p89 = scmp.ne.s32.totalorder %s80, %s81
      %p90 = scmp.eq.s32.totalorder %s37, 0
      %p91 = por %p89, %p90
      %p92 = scmp.ne.s32.totalorder %s80, %s81
      %p93 = scmp.eq.s32.totalorder %s38, 1
      %p94 = por %p92, %p93
      %p96 = scmp.ne.s32.totalorder %s81, %s95
      %p97 = scmp.eq.s32.totalorder %s38, 0
      %p98 = por %p96, %p97
      %s99 = ssub.s32 %s40, %s47
      %p100 = scmp.eq.s32.totalorder %s99, 0
      %s102 = sadd.s32 %s101, 1
      %s103 = scalar_select %p100, %s101, %s102
      %p106 = pneg %p100
      %p107 = scmp.eq.s32.totalorder %s32, 1
      %p108 = por %p106, %p107
      %p109 = scmp.ne.s32.totalorder %s101, %s104
      %p110 = scmp.eq.s32.totalorder %s32, 0
      %p111 = por %p109, %p110
      %p112 = scmp.ne.s32.totalorder %s101, %s104
      %p113 = scmp.eq.s32.totalorder %s37, 1
      %p114 = por %p112, %p113
      %p115 = scmp.ne.s32.totalorder %s104, %s105
      %p116 = scmp.eq.s32.totalorder %s37, 0
      %p117 = por %p115, %p116
      %p118 = scmp.ne.s32.totalorder %s104, %s105
      %p119 = scmp.eq.s32.totalorder %s38, 1
      %p120 = por %p118, %p119
      %p122 = scmp.ne.s32.totalorder %s105, %s121
      %p123 = scmp.eq.s32.totalorder %s38, 0
      %p124 = por %p122, %p123
      %s125 = ssub.s32 %s40, %s47
      %p126 = scmp.eq.s32.totalorder %s125, 0
      %s128 = sadd.s32 %s127, 1
      %s129 = scalar_select %p126, %s127, %s128
      %p132 = pneg %p126
      %p133 = scmp.eq.s32.totalorder %s32, 1
      %p134 = por %p132, %p133
      %p135 = scmp.ne.s32.totalorder %s127, %s130
      %p136 = scmp.eq.s32.totalorder %s32, 0
      %p137 = por %p135, %p136
      %p138 = scmp.ne.s32.totalorder %s127, %s130
      %p139 = scmp.eq.s32.totalorder %s37, 1
      %p140 = por %p138, %p139
      %p141 = scmp.ne.s32.totalorder %s130, %s131
      %p142 = scmp.eq.s32.totalorder %s37, 0
      %p143 = por %p141, %p142
      %p144 = scmp.ne.s32.totalorder %s130, %s131
      %p145 = scmp.eq.s32.totalorder %s38, 1
      %p146 = por %p144, %p145
      %p148 = scmp.ne.s32.totalorder %s131, %s147
      %p149 = scmp.eq.s32.totalorder %s38, 0
      %p150 = por %p148, %p149
      %s151 = ssub.s32 %s40, %s47
      %p152 = scmp.eq.s32.totalorder %s151, 0
      %s154 = sadd.s32 %s153, 1
      %s155 = scalar_select %p152, %s153, %s154
      %p158 = pneg %p152
      %p159 = scmp.eq.s32.totalorder %s32, 1
      %p160 = por %p158, %p159
      %p161 = scmp.ne.s32.totalorder %s153, %s156
      %p162 = scmp.eq.s32.totalorder %s32, 0
      %p163 = por %p161, %p162
      %p164 = scmp.ne.s32.totalorder %s153, %s156
      %p165 = scmp.eq.s32.totalorder %s37, 1
      %p166 = por %p164, %p165
      %p167 = scmp.ne.s32.totalorder %s156, %s157
      %p168 = scmp.eq.s32.totalorder %s37, 0
      %p169 = por %p167, %p168
      %p170 = scmp.ne.s32.totalorder %s156, %s157
      %p171 = scmp.eq.s32.totalorder %s38, 1
      %p172 = por %p170, %p171
      %p174 = scmp.ne.s32.totalorder %s157, %s173
      %p175 = scmp.eq.s32.totalorder %s38, 0
      %p176 = por %p174, %p175
      %s177 = ssub.s32 %s40, %s47
      %p178 = scmp.eq.s32.totalorder %s177, 0
      %s180 = sadd.s32 %s179, 1
      %s181 = scalar_select %p178, %s179, %s180
      %p184 = pneg %p178
      %p185 = scmp.eq.s32.totalorder %s32, 1
      %p186 = por %p184, %p185
      %p187 = scmp.ne.s32.totalorder %s179, %s182
      %p188 = scmp.eq.s32.totalorder %s32, 0
      %p189 = por %p187, %p188
      %p190 = scmp.ne.s32.totalorder %s179, %s182
      %p191 = scmp.eq.s32.totalorder %s37, 1
      %p192 = por %p190, %p191
      %p193 = scmp.ne.s32.totalorder %s182, %s183
      %p194 = scmp.eq.s32.totalorder %s37, 0
      %p195 = por %p193, %p194
      %p196 = scmp.ne.s32.totalorder %s182, %s183
      %p197 = scmp.eq.s32.totalorder %s38, 1
      %p198 = por %p196, %p197
      %p200 = scmp.ne.s32.totalorder %s183, %s199
      %p201 = scmp.eq.s32.totalorder %s38, 0
      %p202 = por %p200, %p201
      %s203 = ssub.s32 %s40, %s47
      %p204 = scmp.eq.s32.totalorder %s203, 0
      %s206 = sadd.s32 %s205, 1
      %s207 = scalar_select %p204, %s205, %s206
      %p210 = pneg %p204
      %p211 = scmp.eq.s32.totalorder %s32, 1
      %p212 = por %p210, %p211
      %p213 = scmp.ne.s32.totalorder %s205, %s208
      %p214 = scmp.eq.s32.totalorder %s32, 0
      %p215 = por %p213, %p214
      %p216 = scmp.ne.s32.totalorder %s205, %s208
      %p217 = scmp.eq.s32.totalorder %s37, 1
      %p218 = por %p216, %p217
      %p219 = scmp.ne.s32.totalorder %s208, %s209
      %p220 = scmp.eq.s32.totalorder %s37, 0
      %p221 = por %p219, %p220
      %p222 = scmp.ne.s32.totalorder %s208, %s209
      %p223 = scmp.eq.s32.totalorder %s38, 1
      %p224 = por %p222, %p223
      %p226 = scmp.ne.s32.totalorder %s209, %s225
      %p227 = scmp.eq.s32.totalorder %s38, 0
      %p228 = por %p226, %p227
      %s229 = ssub.s32 %s40, %s47
      %p230 = scmp.eq.s32.totalorder %s229, 0
      %s232 = sadd.s32 %s231, 1
      %s233 = scalar_select %p230, %s231, %s232
      %p236 = pneg %p230
      %p237 = scmp.eq.s32.totalorder %s32, 1
      %p238 = por %p236, %p237
      %p239 = scmp.ne.s32.totalorder %s231, %s234
      %p240 = scmp.eq.s32.totalorder %s32, 0
      %p241 = por %p239, %p240
      %p242 = scmp.ne.s32.totalorder %s231, %s234
      %p243 = scmp.eq.s32.totalorder %s37, 1
      %p244 = por %p242, %p243
      %p245 = scmp.ne.s32.totalorder %s234, %s235
      %p246 = scmp.eq.s32.totalorder %s37, 0
      %p247 = por %p245, %p246
      %p248 = scmp.ne.s32.totalorder %s234, %s235
      %p249 = scmp.eq.s32.totalorder %s38, 1
      %p250 = por %p248, %p249
      %p252 = scmp.ne.s32.totalorder %s235, %s251
      %p253 = scmp.eq.s32.totalorder %s38, 0
      %p254 = por %p252, %p253
      %s255 = ssub.s32 %s40, %s47
      %p256 = scmp.eq.s32.totalorder %s255, 0
      %s258 = sadd.s32 %s257, 1
      %s259 = scalar_select %p256, %s257, %s258
      %p262 = pneg %p256
      %p263 = scmp.eq.s32.totalorder %s32, 1
      %p264 = por %p262, %p263
      %p265 = scmp.ne.s32.totalorder %s257, %s260
      %p266 = scmp.eq.s32.totalorder %s32, 0
      %p267 = por %p265, %p266
      %p268 = scmp.ne.s32.totalorder %s257, %s260
      %p269 = scmp.eq.s32.totalorder %s37, 1
      %p270 = por %p268, %p269
      %p271 = scmp.ne.s32.totalorder %s260, %s261
      %p272 = scmp.eq.s32.totalorder %s37, 0
      %p273 = por %p271, %p272
      %p274 = scmp.ne.s32.totalorder %s260, %s261
      %p275 = scmp.eq.s32.totalorder %s38, 1
      %p276 = por %p274, %p275
      %p278 = scmp.ne.s32.totalorder %s261, %s277
      %p279 = scmp.eq.s32.totalorder %s38, 0
      %p280 = por %p278, %p279
      %s281 = ssub.s32 %s40, %s47
      %p282 = scmp.eq.s32.totalorder %s281, 0
      %s284 = sadd.s32 %s283, 1
      %s285 = scalar_select %p282, %s283, %s284
      %p288 = pneg %p282
      %p289 = scmp.eq.s32.totalorder %s32, 1
      %p290 = por %p288, %p289
      %p291 = scmp.ne.s32.totalorder %s283, %s286
      %p292 = scmp.eq.s32.totalorder %s32, 0
      %p293 = por %p291, %p292
      %p294 = scmp.ne.s32.totalorder %s283, %s286
      %p295 = scmp.eq.s32.totalorder %s37, 1
      %p296 = por %p294, %p295
      %p297 = scmp.ne.s32.totalorder %s286, %s287
      %p298 = scmp.eq.s32.totalorder %s37, 0
      %p299 = por %p297, %p298
      %p300 = scmp.ne.s32.totalorder %s286, %s287
      %p301 = scmp.eq.s32.totalorder %s38, 1
      %p302 = por %p300, %p301
      %p304 = scmp.ne.s32.totalorder %s287, %s303
      %p305 = scmp.eq.s32.totalorder %s38, 0
      %p306 = por %p304, %p305
      %s307 = ssub.s32 %s40, %s47
      %p308 = scmp.eq.s32.totalorder %s307, 0
      %s310 = sadd.s32 %s309, 1
      %s311 = scalar_select %p308, %s309, %s310
      %p314 = pneg %p308
      %p315 = scmp.eq.s32.totalorder %s32, 1
      %p316 = por %p314, %p315
      %p317 = scmp.ne.s32.totalorder %s309, %s312
      %p318 = scmp.eq.s32.totalorder %s32, 0
      %p319 = por %p317, %p318
      %p320 = scmp.ne.s32.totalorder %s309, %s312
      %p321 = scmp.eq.s32.totalorder %s37, 1
      %p322 = por %p320, %p321
      %p323 = scmp.ne.s32.totalorder %s312, %s313
      %p324 = scmp.eq.s32.totalorder %s37, 0
      %p325 = por %p323, %p324
      %p326 = scmp.ne.s32.totalorder %s312, %s313
      %p327 = scmp.eq.s32.totalorder %s38, 1
      %p328 = por %p326, %p327
      %p330 = scmp.ne.s32.totalorder %s313, %s329
      %p331 = scmp.eq.s32.totalorder %s38, 0
      %p332 = por %p330, %p331
      %s333 = ssub.s32 %s40, %s47
      %p334 = scmp.eq.s32.totalorder %s333, 0
      %s336 = sadd.s32 %s335, 1
      %s337 = scalar_select %p334, %s335, %s336
      %p340 = pneg %p334
      %p341 = scmp.eq.s32.totalorder %s32, 1
      %p342 = por %p340, %p341
      %p343 = scmp.ne.s32.totalorder %s335, %s338
      %p344 = scmp.eq.s32.totalorder %s32, 0
      %p345 = por %p343, %p344
      %p346 = scmp.ne.s32.totalorder %s335, %s338
      %p347 = scmp.eq.s32.totalorder %s37, 1
      %p348 = por %p346, %p347
      %p349 = scmp.ne.s32.totalorder %s338, %s339
      %p350 = scmp.eq.s32.totalorder %s37, 0
      %p351 = por %p349, %p350
      %p352 = scmp.ne.s32.totalorder %s338, %s339
      %p353 = scmp.eq.s32.totalorder %s38, 1
      %p354 = por %p352, %p353
      %p356 = scmp.ne.s32.totalorder %s339, %s355
      %p357 = scmp.eq.s32.totalorder %s38, 0
      %p358 = por %p356, %p357
      %s359 = ssub.s32 %s40, %s47
      %p360 = scmp.eq.s32.totalorder %s359, 0
      %s362 = sadd.s32 %s361, 1
      %s363 = scalar_select %p360, %s361, %s362
      %p366 = pneg %p360
      %p367 = scmp.eq.s32.totalorder %s32, 1
      %p368 = por %p366, %p367
      %p369 = scmp.ne.s32.totalorder %s361, %s364
      %p370 = scmp.eq.s32.totalorder %s32, 0
      %p371 = por %p369, %p370
      %p372 = scmp.ne.s32.totalorder %s361, %s364
      %p373 = scmp.eq.s32.totalorder %s37, 1
      %p374 = por %p372, %p373
      %p375 = scmp.ne.s32.totalorder %s364, %s365
      %p376 = scmp.eq.s32.totalorder %s37, 0
      %p377 = por %p375, %p376
      %p378 = scmp.ne.s32.totalorder %s364, %s365
      %p379 = scmp.eq.s32.totalorder %s38, 1
      %p380 = por %p378, %p379
      %p382 = scmp.ne.s32.totalorder %s365, %s381
      %p383 = scmp.eq.s32.totalorder %s38, 0
      %p384 = por %p382, %p383
      %s385 = ssub.s32 %s40, %s47
      %p386 = scmp.eq.s32.totalorder %s385, 0
      %s388 = sadd.s32 %s387, 1
      %s389 = scalar_select %p386, %s387, %s388
      %p392 = pneg %p386
      %p393 = scmp.eq.s32.totalorder %s32, 1
      %p394 = por %p392, %p393
      %p395 = scmp.ne.s32.totalorder %s387, %s390
      %p396 = scmp.eq.s32.totalorder %s32, 0
      %p397 = por %p395, %p396
      %p398 = scmp.ne.s32.totalorder %s387, %s390
      %p399 = scmp.eq.s32.totalorder %s37, 1
      %p400 = por %p398, %p399
      %p401 = scmp.ne.s32.totalorder %s390, %s391
      %p402 = scmp.eq.s32.totalorder %s37, 0
      %p403 = por %p401, %p402
      %p404 = scmp.ne.s32.totalorder %s390, %s391
      %p405 = scmp.eq.s32.totalorder %s38, 1
      %p406 = por %p404, %p405
      %p408 = scmp.ne.s32.totalorder %s391, %s407
      %p409 = scmp.eq.s32.totalorder %s38, 0
      %p410 = por %p408, %p409
      %s412 = sadd.s32 %s411, 1
      %p415 = scmp.eq.s32.totalorder %s32, 1
      %p416 = scmp.ne.s32.totalorder %s411, %s413
      %p417 = scmp.eq.s32.totalorder %s32, 0
      %p418 = por %p416, %p417
      %p419 = scmp.ne.s32.totalorder %s411, %s413
      %p420 = scmp.eq.s32.totalorder %s37, 1
      %p421 = por %p419, %p420
      %p422 = scmp.ne.s32.totalorder %s413, %s414
      %p423 = scmp.eq.s32.totalorder %s37, 0
      %p424 = por %p422, %p423
      %p425 = scmp.ne.s32.totalorder %s413, %s414
      %p426 = scmp.eq.s32.totalorder %s38, 1
      %p427 = por %p425, %p426
      %p429 = scmp.ne.s32.totalorder %s414, %s428
      %p430 = scmp.eq.s32.totalorder %s38, 0
      %p431 = por %p429, %p430
      %s433 = sadd.s32 %s432, 1
      %p436 = scmp.eq.s32.totalorder %s32, 1
      %p437 = scmp.ne.s32.totalorder %s432, %s434
      %p438 = scmp.eq.s32.totalorder %s32, 0
      %p439 = por %p437, %p438
      %p440 = scmp.ne.s32.totalorder %s432, %s434
      %p441 = scmp.eq.s32.totalorder %s37, 1
      %p442 = por %p440, %p441
      %p443 = scmp.ne.s32.totalorder %s434, %s435
      %p444 = scmp.eq.s32.totalorder %s37, 0
      %p445 = por %p443, %p444
      %p446 = scmp.ne.s32.totalorder %s434, %s435
      %p447 = scmp.eq.s32.totalorder %s38, 1
      %p448 = por %p446, %p447
      %p450 = scmp.ne.s32.totalorder %s435, %s449
      %p451 = scmp.eq.s32.totalorder %s38, 0
      %p452 = por %p450, %p451
      %s454 = sadd.s32 %s453, 1
      %p457 = scmp.eq.s32.totalorder %s32, 1
      %p458 = scmp.ne.s32.totalorder %s453, %s455
      %p459 = scmp.eq.s32.totalorder %s32, 0
      %p460 = por %p458, %p459
      %p461 = scmp.ne.s32.totalorder %s453, %s455
      %p462 = scmp.eq.s32.totalorder %s37, 1
      %p463 = por %p461, %p462
      %p464 = scmp.ne.s32.totalorder %s455, %s456
      %p465 = scmp.eq.s32.totalorder %s37, 0
      %p466 = por %p464, %p465
      %p467 = scmp.ne.s32.totalorder %s455, %s456
      %p468 = scmp.eq.s32.totalorder %s38, 1
      %p469 = por %p467, %p468
      %p471 = scmp.ne.s32.totalorder %s456, %s470
      %p472 = scmp.eq.s32.totalorder %s38, 0
      %p473 = por %p471, %p472
      %s475 = sadd.s32 %s474, 1
      %p478 = scmp.eq.s32.totalorder %s32, 1
      %p479 = scmp.ne.s32.totalorder %s474, %s476
      %p480 = scmp.eq.s32.totalorder %s32, 0
      %p481 = por %p479, %p480
      %p482 = scmp.ne.s32.totalorder %s474, %s476
      %p483 = scmp.eq.s32.totalorder %s37, 1
      %p484 = por %p482, %p483
      %p485 = scmp.ne.s32.totalorder %s476, %s477
      %p486 = scmp.eq.s32.totalorder %s37, 0
      %p487 = por %p485, %p486
      %p488 = scmp.ne.s32.totalorder %s476, %s477
      %p489 = scmp.eq.s32.totalorder %s38, 1
      %p490 = por %p488, %p489
      %p492 = scmp.ne.s32.totalorder %s477, %s491
      %p493 = scmp.eq.s32.totalorder %s38, 0
      %p494 = por %p492, %p493
      %s495 = ssub.s32 %s39, %s51
      %p496 = scmp.eq.s32.totalorder %s495, 0
      %s498 = sadd.s32 %s497, 1
      %s499 = scalar_select %p496, %s497, %s498
      %p502 = pneg %p496
      %p503 = scmp.eq.s32.totalorder %s32, 1
      %p504 = por %p502, %p503
      %p505 = scmp.ne.s32.totalorder %s497, %s500
      %p506 = scmp.eq.s32.totalorder %s32, 0
      %p507 = por %p505, %p506
      %p508 = scmp.ne.s32.totalorder %s497, %s500
      %p509 = scmp.eq.s32.totalorder %s37, 1
      %p510 = por %p508, %p509
      %p511 = scmp.ne.s32.totalorder %s500, %s501
      %p512 = scmp.eq.s32.totalorder %s37, 0
      %p513 = por %p511, %p512
      %p514 = scmp.ne.s32.totalorder %s500, %s501
      %p515 = scmp.eq.s32.totalorder %s38, 1
      %p516 = por %p514, %p515
      %p518 = scmp.ne.s32.totalorder %s501, %s517
      %p519 = scmp.eq.s32.totalorder %s38, 0
      %p520 = por %p518, %p519
      %s521 = ssub.s32 %s39, %s51
      %p522 = scmp.eq.s32.totalorder %s521, 0
      %s524 = sadd.s32 %s523, 1
      %s525 = scalar_select %p522, %s523, %s524
      %p528 = pneg %p522
      %p529 = scmp.eq.s32.totalorder %s32, 1
      %p530 = por %p528, %p529
      %p531 = scmp.ne.s32.totalorder %s523, %s526
      %p532 = scmp.eq.s32.totalorder %s32, 0
      %p533 = por %p531, %p532
      %p534 = scmp.ne.s32.totalorder %s523, %s526
      %p535 = scmp.eq.s32.totalorder %s37, 1
      %p536 = por %p534, %p535
      %p537 = scmp.ne.s32.totalorder %s526, %s527
      %p538 = scmp.eq.s32.totalorder %s37, 0
      %p539 = por %p537, %p538
      %p540 = scmp.ne.s32.totalorder %s526, %s527
      %p541 = scmp.eq.s32.totalorder %s38, 1
      %p542 = por %p540, %p541
      %p544 = scmp.ne.s32.totalorder %s527, %s543
      %p545 = scmp.eq.s32.totalorder %s38, 0
      %p546 = por %p544, %p545
      %s547 = ssub.s32 %s39, %s51
      %p548 = scmp.eq.s32.totalorder %s547, 0
      %s550 = sadd.s32 %s549, 1
      %s551 = scalar_select %p548, %s549, %s550
      %p554 = pneg %p548
      %p555 = scmp.eq.s32.totalorder %s32, 1
      %p556 = por %p554, %p555
      %p557 = scmp.ne.s32.totalorder %s549, %s552
      %p558 = scmp.eq.s32.totalorder %s32, 0
      %p559 = por %p557, %p558
      %p560 = scmp.ne.s32.totalorder %s549, %s552
      %p561 = scmp.eq.s32.totalorder %s37, 1
      %p562 = por %p560, %p561
      %p563 = scmp.ne.s32.totalorder %s552, %s553
      %p564 = scmp.eq.s32.totalorder %s37, 0
      %p565 = por %p563, %p564
      %p566 = scmp.ne.s32.totalorder %s552, %s553
      %p567 = scmp.eq.s32.totalorder %s38, 1
      %p568 = por %p566, %p567
      %p570 = scmp.ne.s32.totalorder %s553, %s569
      %p571 = scmp.eq.s32.totalorder %s38, 0
      %p572 = por %p570, %p571
      %s573 = ssub.s32 %s39, %s51
      %p574 = scmp.eq.s32.totalorder %s573, 0
      %s576 = sadd.s32 %s575, 1
      %s577 = scalar_select %p574, %s575, %s576
      %p580 = pneg %p574
      %p581 = scmp.eq.s32.totalorder %s32, 1
      %p582 = por %p580, %p581
      %p583 = scmp.ne.s32.totalorder %s575, %s578
      %p584 = scmp.eq.s32.totalorder %s32, 0
      %p585 = por %p583, %p584
      %p586 = scmp.ne.s32.totalorder %s575, %s578
      %p587 = scmp.eq.s32.totalorder %s37, 1
      %p588 = por %p586, %p587
      %p589 = scmp.ne.s32.totalorder %s578, %s579
      %p590 = scmp.eq.s32.totalorder %s37, 0
      %p591 = por %p589, %p590
      %p592 = scmp.ne.s32.totalorder %s578, %s579
      %p593 = scmp.eq.s32.totalorder %s38, 1
      %p594 = por %p592, %p593
      %p596 = scmp.ne.s32.totalorder %s579, %s595
      %p597 = scmp.eq.s32.totalorder %s38, 0
      %p598 = por %p596, %p597
      %s599 = ssub.s32 %s39, %s51
      %p600 = scmp.eq.s32.totalorder %s599, 0
      %s602 = sadd.s32 %s601, 1
      %s603 = scalar_select %p600, %s601, %s602
      %p606 = pneg %p600
      %p607 = scmp.eq.s32.totalorder %s32, 1
      %p608 = por %p606, %p607
      %p609 = scmp.ne.s32.totalorder %s601, %s604
      %p610 = scmp.eq.s32.totalorder %s32, 0
      %p611 = por %p609, %p610
      %p612 = scmp.ne.s32.totalorder %s601, %s604
      %p613 = scmp.eq.s32.totalorder %s37, 1
      %p614 = por %p612, %p613
      %p615 = scmp.ne.s32.totalorder %s604, %s605
      %p616 = scmp.eq.s32.totalorder %s37, 0
      %p617 = por %p615, %p616
      %p618 = scmp.ne.s32.totalorder %s604, %s605
      %p619 = scmp.eq.s32.totalorder %s38, 1
      %p620 = por %p618, %p619
      %p622 = scmp.ne.s32.totalorder %s605, %s621
      %p623 = scmp.eq.s32.totalorder %s38, 0
      %p624 = por %p622, %p623
      %p625 = scmp.le.s32.totalorder 1, %s32
      %p626 = scmp.lt.s32.totalorder %s32, 3
      %p627 = pnand %p625, %p626
      %p628 = pneg %p627
      // Predicated region
      $region9: #{mae_forward.5} parent=5 // pred_check
        _
      $region10: #{mae_forward.5} parent=5 // pred_check_branch
        %630 = sbr.rel (%p627) target = $region12
      $region11: #{mae_forward.5} parent=5 // pred_region
        %s631 = ssub.s32 %s32, 1
        // Predicated region
        $region13: #{mae_forward.5} parent=11 // pred_check
          %p632 = pneg %p91
        $region14: #{mae_forward.5} parent=11 // pred_check_branch
          %634 = sbr.rel (%p632) target = $region16
        $region15: #{mae_forward.5} parent=11 // pred_region
          _
        $region16: #{mae_forward.5} parent=11 // pred_fallthru
          _
        // Predicated region
        $region17: #{mae_forward.5} parent=11 // pred_check
          %p635 = pneg %p117
        $region18: #{mae_forward.5} parent=11 // pred_check_branch
          %637 = sbr.rel (%p635) target = $region20
        $region19: #{mae_forward.5} parent=11 // pred_region
          %p638 = scmp.lt.s32.totalorder %s42, 0
          %s639 = scalar_select %p638, %s42, 0
          %s640 = scalar_lea.vmem %s2, %s639
        $region20: #{mae_forward.5} parent=11 // pred_fallthru
          _
        // Predicated region
        $region21: #{mae_forward.5} parent=11 // pred_check
          %p641 = pneg %p143
        $region22: #{mae_forward.5} parent=11 // pred_check_branch
          %643 = sbr.rel (%p641) target = $region24
        $region23: #{mae_forward.5} parent=11 // pred_region
          %p644 = scmp.lt.s32.totalorder %s42, 0
          %s645 = scalar_select %p644, %s42, 0
          %s646 = scalar_lea.vmem %s3, %s645
        $region24: #{mae_forward.5} parent=11 // pred_fallthru
          _
        // Predicated region
        $region25: #{mae_forward.5} parent=11 // pred_check
          %p647 = pneg %p169
        $region26: #{mae_forward.5} parent=11 // pred_check_branch
          %649 = sbr.rel (%p647) target = $region28
        $region27: #{mae_forward.5} parent=11 // pred_region
          %p650 = scmp.lt.s32.totalorder %s42, 0
          %s651 = scalar_select %p650, %s42, 0
          %s652 = smul.addr %s651, 2
          %s653 = smul.addr %s652, 8
          %s654 = scalar_lea.vmem %s4, %s653
        $region28: #{mae_forward.5} parent=11 // pred_fallthru
          _
        // Predicated region
        $region29: #{mae_forward.5} parent=11 // pred_check
          %p655 = pneg %p195
        $region30: #{mae_forward.5} parent=11 // pred_check_branch
          %657 = sbr.rel (%p655) target = $region32
        $region31: #{mae_forward.5} parent=11 // pred_region
          %p658 = scmp.lt.s32.totalorder %s42, 0
          %s659 = scalar_select %p658, %s42, 0
          %s660 = scalar_lea.vmem %s5, %s659
        $region32: #{mae_forward.5} parent=11 // pred_fallthru
          _
        // Predicated region
        $region33: #{mae_forward.5} parent=11 // pred_check
          %p661 = pneg %p221
        $region34: #{mae_forward.5} parent=11 // pred_check_branch
          %663 = sbr.rel (%p661) target = $region36
        $region35: #{mae_forward.5} parent=11 // pred_region
          %p664 = scmp.lt.s32.totalorder %s42, 0
          %s665 = scalar_select %p664, %s42, 0
          %s666 = smul.addr %s665, 4
          %s667 = smul.addr %s666, 4
          %s668 = scalar_lea.vmem %s6, %s667
        $region36: #{mae_forward.5} parent=11 // pred_fallthru
          _
        // Predicated region
        $region37: #{mae_forward.5} parent=11 // pred_check
          %p669 = pneg %p247
        $region38: #{mae_forward.5} parent=11 // pred_check_branch
          %671 = sbr.rel (%p669) target = $region40
        $region39: #{mae_forward.5} parent=11 // pred_region
          %p672 = scmp.lt.s32.totalorder %s42, 0
          %s673 = scalar_select %p672, %s42, 0
          %s674 = scalar_lea.vmem %s7, %s673
        $region40: #{mae_forward.5} parent=11 // pred_fallthru
          _
        // Predicated region
        $region41: #{mae_forward.5} parent=11 // pred_check
          %p675 = pneg %p273
        $region42: #{mae_forward.5} parent=11 // pred_check_branch
          %677 = sbr.rel (%p675) target = $region44
        $region43: #{mae_forward.5} parent=11 // pred_region
          %p678 = scmp.lt.s32.totalorder %s42, 0
          %s679 = scalar_select %p678, %s42, 0
          %s680 = scalar_lea.vmem %s8, %s679
        $region44: #{mae_forward.5} parent=11 // pred_fallthru
          _
        // Predicated region
        $region45: #{mae_forward.5} parent=11 // pred_check
          %p681 = pneg %p299
        $region46: #{mae_forward.5} parent=11 // pred_check_branch
          %683 = sbr.rel (%p681) target = $region48
        $region47: #{mae_forward.5} parent=11 // pred_region
          %p684 = scmp.lt.s32.totalorder %s42, 0
          %s685 = scalar_select %p684, %s42, 0
          %s686 = scalar_lea.vmem %s9, %s685
        $region48: #{mae_forward.5} parent=11 // pred_fallthru
          _
        // Predicated region
        $region49: #{mae_forward.5} parent=11 // pred_check
          %p687 = pneg %p325
        $region50: #{mae_forward.5} parent=11 // pred_check_branch
          %689 = sbr.rel (%p687) target = $region52
        $region51: #{mae_forward.5} parent=11 // pred_region
          %p690 = scmp.lt.s32.totalorder %s42, 0
          %s691 = scalar_select %p690, %s42, 0
          %s692 = smul.addr %s691, 2
          %s693 = smul.addr %s692, 8
          %s694 = scalar_lea.vmem %s10, %s693
        $region52: #{mae_forward.5} parent=11 // pred_fallthru
          _
        // Predicated region
        $region53: #{mae_forward.5} parent=11 // pred_check
          %p695 = pneg %p351
        $region54: #{mae_forward.5} parent=11 // pred_check_branch
          %697 = sbr.rel (%p695) target = $region56
        $region55: #{mae_forward.5} parent=11 // pred_region
          %p698 = scmp.lt.s32.totalorder %s42, 0
          %s699 = scalar_select %p698, %s42, 0
          %s700 = scalar_lea.vmem %s11, %s699
        $region56: #{mae_forward.5} parent=11 // pred_fallthru
          _
        // Predicated region
        $region57: #{mae_forward.5} parent=11 // pred_check
          %p701 = pneg %p377
        $region58: #{mae_forward.5} parent=11 // pred_check_branch
          %703 = sbr.rel (%p701) target = $region60
        $region59: #{mae_forward.5} parent=11 // pred_region
          %p704 = scmp.lt.s32.totalorder %s42, 0
          %s705 = scalar_select %p704, %s42, 0
          %s706 = smul.addr %s705, 8
          %s707 = smul.addr %s706, 8
          %s708 = scalar_lea.vmem %s12, %s707
        $region60: #{mae_forward.5} parent=11 // pred_fallthru
          _
        // Predicated region
        $region61: #{mae_forward.5} parent=11 // pred_check
          %p709 = pneg %p403
        $region62: #{mae_forward.5} parent=11 // pred_check_branch
          %711 = sbr.rel (%p709) target = $region64
        $region63: #{mae_forward.5} parent=11 // pred_region
          %p712 = scmp.lt.s32.totalorder %s42, 0
          %s713 = scalar_select %p712, %s42, 0
          %s714 = scalar_lea.vmem %s13, %s713
        $region64: #{mae_forward.5} parent=11 // pred_fallthru
          _
        // Predicated region
        $region65: #{mae_forward.5} parent=11 // pred_check
          %p715 = pneg %p424
        $region66: #{mae_forward.5} parent=11 // pred_check_branch
          %717 = sbr.rel (%p715) target = $region68
        $region67: #{mae_forward.5} parent=11 // pred_region
          _
        $region68: #{mae_forward.5} parent=11 // pred_fallthru
          _
        // Predicated region
        $region69: #{mae_forward.5} parent=11 // pred_check
          %p718 = pneg %p445
        $region70: #{mae_forward.5} parent=11 // pred_check_branch
          %720 = sbr.rel (%p718) target = $region72
        $region71: #{mae_forward.5} parent=11 // pred_region
          _
        $region72: #{mae_forward.5} parent=11 // pred_fallthru
          _
        // Predicated region
        $region73: #{mae_forward.5} parent=11 // pred_check
          %p721 = pneg %p466
        $region74: #{mae_forward.5} parent=11 // pred_check_branch
          %723 = sbr.rel (%p721) target = $region76
        $region75: #{mae_forward.5} parent=11 // pred_region
          _
        $region76: #{mae_forward.5} parent=11 // pred_fallthru
          _
        // Predicated region
        $region77: #{mae_forward.5} parent=11 // pred_check
          %p724 = pneg %p487
        $region78: #{mae_forward.5} parent=11 // pred_check_branch
          %726 = sbr.rel (%p724) target = $region80
        $region79: #{mae_forward.5} parent=11 // pred_region
          _
        $region80: #{mae_forward.5} parent=11 // pred_fallthru
          _
      $region12: #{mae_forward.5} parent=5 // pred_fallthru
        _
      %p727 = scmp.lt.s32.totalorder %s32, 2
      // Predicated region
      $region81: #{mae_forward.5} parent=5 // pred_check
        %p728 = pneg %p727
      $region82: #{mae_forward.5} parent=5 // pred_check_branch
        %730 = sbr.rel (%p728) target = $region84
      $region83: #{mae_forward.5} parent=5 // pred_region
        // Predicated region
        $region85: #{mae_forward.5} parent=83 // pred_check
          %p731 = pneg %p64
        $region86: #{mae_forward.5} parent=83 // pred_check_branch
          %733 = sbr.rel (%p731) target = $region88
        $region87: #{mae_forward.5} parent=83 // pred_region
          %p734 = scmp.lt.s32.totalorder %s39, 1
          %s735 = scalar_select %p734, %s39, 1
          %s736 = smul.addr %s735, 3
          %s737 = smul.addr %s736, 8
          %s738 = scalar_lea.vmem %s0, %s737
        $region88: #{mae_forward.5} parent=83 // pred_fallthru
          _
        // Predicated region
        $region89: #{mae_forward.5} parent=83 // pred_check
          %p739 = pneg %p507
        $region90: #{mae_forward.5} parent=83 // pred_check_branch
          %741 = sbr.rel (%p739) target = $region92
        $region91: #{mae_forward.5} parent=83 // pred_region
          %p742 = scmp.lt.s32.totalorder %s39, 1
          %s743 = scalar_select %p742, %s39, 1
          %s744 = smul.addr %s743, 2
          %s745 = smul.addr %s744, 8
          %s746 = scalar_lea.vmem %s18, %s745
        $region92: #{mae_forward.5} parent=83 // pred_fallthru
          _
        // Predicated region
        $region93: #{mae_forward.5} parent=83 // pred_check
          %p747 = pneg %p533
        $region94: #{mae_forward.5} parent=83 // pred_check_branch
          %749 = sbr.rel (%p747) target = $region96
        $region95: #{mae_forward.5} parent=83 // pred_region
          %p750 = scmp.lt.s32.totalorder %s39, 1
          %s751 = scalar_select %p750, %s39, 1
          %s752 = smul.addr %s751, 2
          %s753 = smul.addr %s752, 8
          %s754 = scalar_lea.vmem %s19, %s753
        $region96: #{mae_forward.5} parent=83 // pred_fallthru
          _
      $region84: #{mae_forward.5} parent=5 // pred_fallthru
        _
      %p755 = scmp.le.s32.totalorder 1, %s32
      %p756 = scmp.lt.s32.totalorder %s32, 3
      %p757 = pnand %p755, %p756
      %p758 = pneg %p757
      // Predicated region
      $region97: #{mae_forward.5} parent=5 // pred_check
        _
      $region98: #{mae_forward.5} parent=5 // pred_check_branch
        %760 = sbr.rel (%p757) target = $region100
      $region99: #{mae_forward.5} parent=5 // pred_region
        %s761 = ssub.s32 %s32, 1
        %p762 = scmp.lt.s32.totalorder %s41, 1
        %s763 = scalar_select %p762, %s41, 1
        %s764 = smul.addr %s763, 3
        %s765 = smul.addr %s764, 8
        %s766 = scalar_lea.vmem %s0, %s765
        %p767 = pneg %p70
        %p768 = pneg %p67
        %p769 = pneg %p91
        %p770 = pneg %p88
        %p771 = scmp.lt.s32.totalorder %s42, 0
        %s772 = scalar_select %p771, %s42, 0
        %s773 = scalar_lea.vmem %s2, %s772
        %p774 = pneg %p117
        %p775 = pneg %p114
        %p776 = scmp.lt.s32.totalorder %s42, 0
        %s777 = scalar_select %p776, %s42, 0
        %s778 = scalar_lea.vmem %s3, %s777
        %p779 = pneg %p143
        %p780 = pneg %p140
        %p781 = scmp.lt.s32.totalorder %s42, 0
        %s782 = scalar_select %p781, %s42, 0
        %s783 = smul.addr %s782, 2
        %s784 = smul.addr %s783, 8
        %s785 = scalar_lea.vmem %s4, %s784
        %p786 = pneg %p169
        %p787 = pneg %p166
        %p788 = scmp.lt.s32.totalorder %s42, 0
        %s789 = scalar_select %p788, %s42, 0
        %s790 = scalar_lea.vmem %s5, %s789
        %p791 = pneg %p195
        %p792 = pneg %p192
        %p793 = scmp.lt.s32.totalorder %s42, 0
        %s794 = scalar_select %p793, %s42, 0
        %s795 = smul.addr %s794, 4
        %s796 = smul.addr %s795, 4
        %s797 = scalar_lea.vmem %s6, %s796
        %p798 = pneg %p221
        %p799 = pneg %p218
        %p800 = scmp.lt.s32.totalorder %s42, 0
        %s801 = scalar_select %p800, %s42, 0
        %s802 = scalar_lea.vmem %s7, %s801
        %p803 = pneg %p247
        %p804 = pneg %p244
        %p805 = scmp.lt.s32.totalorder %s42, 0
        %s806 = scalar_select %p805, %s42, 0
        %s807 = scalar_lea.vmem %s8, %s806
        %p808 = pneg %p273
        %p809 = pneg %p270
        %p810 = scmp.lt.s32.totalorder %s42, 0
        %s811 = scalar_select %p810, %s42, 0
        %s812 = scalar_lea.vmem %s9, %s811
        %p813 = pneg %p299
        %p814 = pneg %p296
        %p815 = scmp.lt.s32.totalorder %s42, 0
        %s816 = scalar_select %p815, %s42, 0
        %s817 = smul.addr %s816, 2
        %s818 = smul.addr %s817, 8
        %s819 = scalar_lea.vmem %s10, %s818
        %p820 = pneg %p325
        %p821 = pneg %p322
        %p822 = scmp.lt.s32.totalorder %s42, 0
        %s823 = scalar_select %p822, %s42, 0
        %s824 = scalar_lea.vmem %s11, %s823
        %p825 = pneg %p351
        %p826 = pneg %p348
        %p827 = scmp.lt.s32.totalorder %s42, 0
        %s828 = scalar_select %p827, %s42, 0
        %s829 = smul.addr %s828, 8
        %s830 = smul.addr %s829, 8
        %s831 = scalar_lea.vmem %s12, %s830
        %p832 = pneg %p377
        %p833 = pneg %p374
        %p834 = scmp.lt.s32.totalorder %s42, 0
        %s835 = scalar_select %p834, %s42, 0
        %s836 = scalar_lea.vmem %s13, %s835
        %p837 = pneg %p403
        %p838 = pneg %p400
        %p839 = pneg %p424
        %p840 = pneg %p421
        %p841 = pneg %p445
        %p842 = pneg %p442
        %p843 = pneg %p466
        %p844 = pneg %p463
        %p845 = pneg %p487
        %p846 = pneg %p484
        %p847 = scmp.lt.s32.totalorder %s41, 1
        %s848 = scalar_select %p847, %s41, 1
        %s849 = smul.addr %s848, 2
        %s850 = smul.addr %s849, 8
        %s851 = scalar_lea.vmem %s18, %s850
        %p852 = pneg %p513
        %p853 = pneg %p510
        %p854 = scmp.lt.s32.totalorder %s41, 1
        %s855 = scalar_select %p854, %s41, 1
        %s856 = smul.addr %s855, 2
        %s857 = smul.addr %s856, 8
        %s858 = scalar_lea.vmem %s19, %s857
        %p859 = pneg %p539
        %p860 = pneg %p536
        %p861 = pneg %p565
        %p862 = pneg %p562
        %s863 = sand.u32 %s552, 1
        %s864 = scalar_lea.sflag [#allocation4], %s863
        %s865 = sand.u32 %s552, 1
        %s866 = smul.addr %s865, 16
        %s867 = scalar_lea.vmem [#allocation3], %s866
        %p868 = pneg %p591
        %p869 = pneg %p588
        %p870 = scmp.lt.s32.totalorder %s41, 1
        %s871 = scalar_select %p870, %s41, 1
        %s872 = scalar_lea.vmem %s21, %s871
        %p873 = pneg %p617
        %p874 = pneg %p614
        %p875 = scmp.lt.s32.totalorder %s41, 1
        %s876 = scalar_select %p875, %s41, 1
        %s877 = scalar_lea.vmem %s22, %s876
        %p878 = scmp.lt.s32.totalorder %s41, 1
        %s879 = scalar_select %p878, %s41, 1
        %s880 = smul.addr %s879, 3
        %s881 = smul.addr %s880, 8
        %s882 = scalar_lea.vmem %s0, %s881
        %p883 = scmp.lt.s32.totalorder %s42, 0
        %s884 = scalar_select %p883, %s42, 0
        %s885 = scalar_lea.vmem %s2, %s884
        %p886 = scmp.lt.s32.totalorder %s42, 0
        %s887 = scalar_select %p886, %s42, 0
        %s888 = scalar_lea.vmem %s3, %s887
        %p889 = scmp.lt.s32.totalorder %s42, 0
        %s890 = scalar_select %p889, %s42, 0
        %s891 = smul.addr %s890, 2
        %s892 = smul.addr %s891, 8
        %s893 = scalar_lea.vmem %s4, %s892
        %p894 = scmp.lt.s32.totalorder %s42, 0
        %s895 = scalar_select %p894, %s42, 0
        %s896 = scalar_lea.vmem %s5, %s895
        %p897 = scmp.lt.s32.totalorder %s42, 0
        %s898 = scalar_select %p897, %s42, 0
        %s899 = smul.addr %s898, 4
        %s900 = smul.addr %s899, 4
        %s901 = scalar_lea.vmem %s6, %s900
        %p902 = scmp.lt.s32.totalorder %s42, 0
        %s903 = scalar_select %p902, %s42, 0
        %s904 = scalar_lea.vmem %s7, %s903
        %p905 = scmp.lt.s32.totalorder %s42, 0
        %s906 = scalar_select %p905, %s42, 0
        %s907 = scalar_lea.vmem %s8, %s906
        %p908 = scmp.lt.s32.totalorder %s42, 0
        %s909 = scalar_select %p908, %s42, 0
        %s910 = scalar_lea.vmem %s9, %s909
        %p911 = scmp.lt.s32.totalorder %s42, 0
        %s912 = scalar_select %p911, %s42, 0
        %s913 = smul.addr %s912, 2
        %s914 = smul.addr %s913, 8
        %s915 = scalar_lea.vmem %s10, %s914
        %p916 = scmp.lt.s32.totalorder %s42, 0
        %s917 = scalar_select %p916, %s42, 0
        %s918 = scalar_lea.vmem %s11, %s917
        %p919 = scmp.lt.s32.totalorder %s42, 0
        %s920 = scalar_select %p919, %s42, 0
        %s921 = smul.addr %s920, 8
        %s922 = smul.addr %s921, 8
        %s923 = scalar_lea.vmem %s12, %s922
        %p924 = scmp.lt.s32.totalorder %s42, 0
        %s925 = scalar_select %p924, %s42, 0
        %s926 = scalar_lea.vmem %s13, %s925
        %p927 = scmp.lt.s32.totalorder %s41, 1
        %s928 = scalar_select %p927, %s41, 1
        %s929 = smul.addr %s928, 2
        %s930 = smul.addr %s929, 8
        %s931 = scalar_lea.vmem %s18, %s930
        %p932 = scmp.lt.s32.totalorder %s41, 1
        %s933 = scalar_select %p932, %s41, 1
        %s934 = smul.addr %s933, 2
        %s935 = smul.addr %s934, 8
        %s936 = scalar_lea.vmem %s19, %s935
        %p937 = scmp.lt.s32.totalorder %s41, 1
        %s938 = scalar_select %p937, %s41, 1
        %s939 = scalar_lea.vmem %s21, %s938
        %p940 = scmp.lt.s32.totalorder %s41, 1
        %s941 = scalar_select %p940, %s41, 1
        %s942 = scalar_lea.vmem %s22, %s941
        %p943 = scmp.eq.s32.totalorder %s42, 0
        // Predicated region
        $region101: #{mae_forward.5} parent=99 // pred_check
          %p944 = pneg %p943
        $region102: #{mae_forward.5} parent=99 // pred_check_branch
          %946 = sbr.rel (%p944) target = $region104
        $region103: #{mae_forward.5} parent=99 // pred_region
          %v947 = vld [vmem:[%s882] sm:$0xff]
          %v948 = vld [vmem:[%s882 + $0x8] sm:$0xff]
          %v949 = vld [vmem:[%s882 + $0x10] sm:$0x1]
          %v950 = vld [vmem:[%s1] sm:$0xff]
          %v951 = vld [vmem:[%s1 + $0x8] sm:$0xff]
          %v952 = vld [vmem:[%s1 + $0x10] sm:$0x1]
          %v953 = vadd.f32 %v947, %v950
          %v954 = vadd.f32 %v948, %v951
          %v955 = vadd.f32 %v949, %v952
          %vm956 = vcmask 130048
          %957 = vst.msk [vmem:[#allocation2] sm:$0xff] %vm956, %v953
          %958 = vst.msk [vmem:[#allocation2 + $0x8] sm:$0xff] %vm956, %v954
          %vm959 = vcmask 122880
          %960 = vst.msk [vmem:[#allocation2 + $0x10] sm:$0x1] %vm959, %v955
        $region104: #{mae_forward.5} parent=99 // pred_fallthru
          _
        %v961 = vld [vmem:[#allocation2] sm:$0xff]
        %v962 = vld [vmem:[#allocation2 + $0x8] sm:$0xff]
        %v963 = vld [vmem:[#allocation2 + $0x10] sm:$0x1]
        %v964 = vld [vmem:[%s885] sm:$0x1]
        %v965 = vld [vmem:[%s888] sm:$0x1]
        %v966 = vld [vmem:[%s893] sm:$0xff]
        %v967 = vld [vmem:[%s893 + $0x8] sm:$0xff]
        %v968 = vld [vmem:[%s896] sm:$0x1]
        %v969 = vld [vmem:[%s901] sm:$0xf]
        %v970 = vld [vmem:[%s901 + $0x4] sm:$0xf]
        %v971 = vld [vmem:[%s901 + $0x8] sm:$0xf]
        %v972 = vld [vmem:[%s901 + $0xc] sm:$0xf]
        %v973 = vld [vmem:[%s904] sm:$0x1]
        %v974 = vld [vmem:[%s907] sm:$0x1]
        %v975 = vld [vmem:[%s910] sm:$0x1]
        %v976 = vld [vmem:[%s915] sm:$0xff]
        %v977 = vld [vmem:[%s915 + $0x8] sm:$0xff]
        %v978 = vld [vmem:[%s918] sm:$0x1]
        %v979 = vld [vmem:[%s923] sm:$0xff]
        %v980 = vld [vmem:[%s923 + $0x8] sm:$0xff]
        %v981 = vld [vmem:[%s923 + $0x10] sm:$0xff]
        %v982 = vld [vmem:[%s923 + $0x18] sm:$0xff]
        %v983 = vld [vmem:[%s923 + $0x20] sm:$0xff]
        %v984 = vld [vmem:[%s923 + $0x28] sm:$0xff]
        %v985 = vld [vmem:[%s923 + $0x30] sm:$0xff]
        %v986 = vld [vmem:[%s923 + $0x38] sm:$0xff]
        %v987 = vld [vmem:[%s926] sm:$0x1]
        %vm988 = vcmask 130048
        %v989 = vsel %vm988, %v961, 0.0
        %990 = vadd.xlane.f32.xlu0 %v989
        %v991 = vpop.xlane.xlu0 %990
        %v992 = vsel %vm988, %v962, 0.0
        %993 = vadd.xlane.f32.xlu0 %v992
        %v994 = vpop.xlane.xlu0 %993
        %vm995 = vcmask 122880
        %v996 = vsel %vm995, %v963, 0.0
        %997 = vadd.xlane.f32.xlu0 %v996
        %v998 = vpop.xlane.xlu0 %997
        %v999 = vrcp.pop 16.0
        %v1000 = vmul.f32 %v991, %v999
        %v1001 = vmul.f32 %v994, %v999
        %v1002 = vmul.f32 %v998, %v999
        %v1003 = vsub.f32 %v961, %v1000
        %v1004 = vsub.f32 %v962, %v1001
        %v1005 = vsub.f32 %v963, %v1002
        %v1006 = vmul.f32 %v1003, %v1003
        %v1007 = vmul.f32 %v1004, %v1004
        %v1008 = vmul.f32 %v1005, %v1005
        %v1009 = vsel %vm988, %v1006, 0.0
        %1010 = vadd.xlane.f32.xlu0 %v1009
        %v1011 = vpop.xlane.xlu0 %1010
        %v1012 = vsel %vm988, %v1007, 0.0
        %1013 = vadd.xlane.f32.xlu0 %v1012
        %v1014 = vpop.xlane.xlu0 %1013
        %v1015 = vsel %vm995, %v1008, 0.0
        %1016 = vadd.xlane.f32.xlu0 %v1015
        %v1017 = vpop.xlane.xlu0 %1016
        %v1018 = vmul.f32 %v1011, %v999
        %v1019 = vmul.f32 %v1014, %v999
        %v1020 = vmul.f32 %v1017, %v999
        %v1021 = vadd.f32 %v1018, 1e-06
        %v1022 = vadd.f32 %v1019, 1e-06
        %v1023 = vadd.f32 %v1020, 1e-06
        %v1024 = vrsqrt.pop %v1021
        %v1025 = vrsqrt.pop %v1022
        %v1026 = vrsqrt.pop %v1023
        %v1027 = vmul.f32 %v1003, %v1024
        %v1028 = vmul.f32 %v1004, %v1025
        %v1029 = vmul.f32 %v1005, %v1026
        %v1031 = vlaneseq
        %v1032 = vshrl.u32 %v1031, 7
        %v1033 = vsub.s32 0, %v1032
        %v1034 = vrot.slane %v964, %v1033
        %v1036 = vmul.f32 %v1027, %v1034
        %v1037 = vmul.f32 %v1028, %v1034
        %v1038 = vmul.f32 %v1029, %v1034
        %v1040 = vlaneseq
        %v1041 = vshrl.u32 %v1040, 7
        %v1042 = vsub.s32 0, %v1041
        %v1043 = vrot.slane %v965, %v1042
        %v1045 = vadd.f32 %v1036, %v1043
        %v1046 = vadd.f32 %v1037, %v1043
        %v1047 = vadd.f32 %v1038, %v1043
        %v1049 = vlaneseq
        %v1050 = vshrl.u32 %v1049, 7
        %v1051 = vsub.s32 0, %v1050
        %v1052 = vrot.slane %v968, %v1051
        %v1055 = vsel %vm988, %v1045, 0
        %v1058 = vsel %vm988, %v1046, 0
        %v1061 = vsel %vm988, %v1047, 0
        %1063 = vmatprep.subr.mxu0 0.0
        %1064 = vmatpush1.msra.mxu0 %v966
        %1065 = vmatprep.subr.mxu0 0.0
        %1066 = vmatpush1.msra.mxu0 %v967
        %1067 = vmatprep.subr.mxu0 0.0
        %1068 = vmatpush1.msra.mxu0 0.0
        %1069 = vmatprep.subr.mxu0 0.0
        %1070 = vmatpush1.msra.mxu0 0.0
        %1071 = vmatprep.subr.mxu0 0.0
        %1072 = vmatpush1.msra.mxu0 0.0
        %1073 = vmatprep.subr.mxu0 0.0
        %1074 = vmatpush1.msra.mxu0 0.0
        %1075 = vmatprep.subr.mxu0 0.0
        %1076 = vmatpush1.msra.mxu0 0.0
        %1077 = vmatprep.subr.mxu0 0.0
        %1078 = vmatpush1.msra.mxu0 0.0
        %1079 = vmatprep.subr.mxu0 0.0
        %1080 = vmatpush1.msra.mxu0 0.0
        %1081 = vmatprep.subr.mxu0 0.0
        %1082 = vmatpush1.msra.mxu0 0.0
        %1083 = vmatprep.subr.mxu0 0.0
        %1084 = vmatpush1.msra.mxu0 0.0
        %1085 = vmatprep.subr.mxu0 0.0
        %1086 = vmatpush1.msra.mxu0 0.0
        %1087 = vmatprep.subr.mxu0 0.0
        %1088 = vmatpush1.msra.mxu0 0.0
        %1089 = vmatprep.subr.mxu0 0.0
        %1090 = vmatpush1.msra.mxu0 0.0
        %1091 = vmatprep.subr.mxu0 0.0
        %1092 = vmatpush1.msra.mxu0 0.0
        %1093 = vmatprep.subr.mxu0 0.0
        %1094 = vmatpush1.msra.mxu0 0.0
        %1095 = vmatprep.subr.mxu0 0.0
        %1096 = vmatpush1.msra.mxu0 0.0
        %1097 = vmatprep.subr.mxu0 0.0
        %1098 = vmatpush1.msra.mxu0 0.0
        %1099 = vmatprep.subr.mxu0 0.0
        %1100 = vmatpush1.msra.mxu0 0.0
        %1101 = vmatprep.subr.mxu0 0.0
        %1102 = vmatpush1.msra.mxu0 0.0
        %1103 = vmatprep.subr.mxu0 0.0
        %1104 = vmatpush1.msra.mxu0 0.0
        %1105 = vmatprep.subr.mxu0 0.0
        %1106 = vmatpush1.msra.mxu0 0.0
        %1107 = vmatprep.subr.mxu0 0.0
        %1108 = vmatpush1.msra.mxu0 0.0
        %1109 = vmatprep.subr.mxu0 0.0
        %1110 = vmatpush1.msra.mxu0 0.0
        %1111 = vmatprep.subr.mxu0 0.0
        %1112 = vmatpush1.msra.mxu0 0.0
        %1113 = vmatprep.subr.mxu0 0.0
        %1114 = vmatpush1.msra.mxu0 0.0
        %1115 = vmatprep.subr.mxu0 0.0
        %1116 = vmatpush1.msra.mxu0 0.0
        %1117 = vmatprep.subr.mxu0 0.0
        %1118 = vmatpush1.msra.mxu0 0.0
        %1119 = vmatprep.subr.mxu0 0.0
        %1120 = vmatpush1.msra.mxu0 0.0
        %1121 = vmatprep.subr.mxu0 0.0
        %1122 = vmatpush1.msra.mxu0 0.0
        %1123 = vmatprep.subr.mxu0 0.0
        %1124 = vmatpush1.msra.mxu0 0.0
        %1125 = vmatprep.subr.mxu0 0.0
        %1126 = vmatpush1.msra.mxu0 0.0
        %1127 = vmatprep.mubr.f32.mxu0 0.0
        %1128 = vmatmul.mubr.f32.gmra.mrb[0].mxu0 %v1055
        %v1129 = vpop.f32.mrb[0].mxu0
        %v1130 = vadd.f32 %v1052, %v1129
        %v1131 = vpop.f32.mrb[0].mxu0
        %1132 = vmatprep.mubr.f32.mxu0 0.0
        %1133 = vmatmul.mubr.f32.gmra.mrb[0].mxu0 %v1058
        %v1134 = vpop.f32.mrb[0].mxu0
        %v1135 = vadd.f32 %v1052, %v1134
        %v1136 = vpop.f32.mrb[0].mxu0
        %1137 = vmatprep.mubr.f32.mxu0 0.0
        %1138 = vmatmul.mubr.f32.gmra.mrb[0].mxu0 %v1061
        %v1139 = vpop.f32.mrb[0].mxu0
        %v1140 = vadd.f32 %v1052, %v1139
        %v1141 = vpop.f32.mrb[0].mxu0
        %1142 = vdwg.mxu0
        %1146 = vrot.lane.b32.xlu0 %v1130, 112
        %v1147 = vpop.permute.xlu0 %1146
        %1148 = vrot.lane.b32.xlu0 %v1135, 112
        %v1149 = vpop.permute.xlu0 %1148
        %1150 = vrot.lane.b32.xlu0 %v1140, 112
        %v1151 = vpop.permute.xlu0 %1150
        %vm1152 = vcmask 31744
        %v1153 = vsel %vm1152, %v1130, 0
        %v1155 = vsel %vm1152, %v1135, 0
        %v1157 = vsel %vm1152, %v1140, 0
        %v1159 = vsel %vm1152, %v1147, 0
        %v1161 = vsel %vm1152, %v1149, 0
        %v1163 = vsel %vm1152, %v1151, 0
        %1165 = vmatprep.subr.mxu0 0.0
        %1166 = vmatpush1.xpose.msra.mxu0 %v1159
        %1167 = vmatprep.subr.mxu0 0.0
        %1168 = vmatpush1.xpose.msra.mxu0 %v1161
        %1169 = vmatprep.subr.mxu0 0.0
        %1170 = vmatpush1.xpose.msra.mxu0 %v1163
        %1171 = vmatprep.subr.mxu0 0.0
        %1172 = vmatpush1.xpose.msra.mxu0 0.0
        %1173 = vmatprep.subr.mxu0 0.0
        %1174 = vmatpush1.xpose.msra.mxu0 0.0
        %1175 = vmatprep.subr.mxu0 0.0
        %1176 = vmatpush1.xpose.msra.mxu0 0.0
        %1177 = vmatprep.subr.mxu0 0.0
        %1178 = vmatpush1.xpose.msra.mxu0 0.0
        %1179 = vmatprep.subr.mxu0 0.0
        %1180 = vmatpush1.xpose.msra.mxu0 0.0
        %1181 = vmatprep.subr.mxu0 0.0
        %1182 = vmatpush1.xpose.msra.mxu0 0.0
        %1183 = vmatprep.subr.mxu0 0.0
        %1184 = vmatpush1.xpose.msra.mxu0 0.0
        %1185 = vmatprep.subr.mxu0 0.0
        %1186 = vmatpush1.xpose.msra.mxu0 0.0
        %1187 = vmatprep.subr.mxu0 0.0
        %1188 = vmatpush1.xpose.msra.mxu0 0.0
        %1189 = vmatprep.subr.mxu0 0.0
        %1190 = vmatpush1.xpose.msra.mxu0 0.0
        %1191 = vmatprep.subr.mxu0 0.0
        %1192 = vmatpush1.xpose.msra.mxu0 0.0
        %1193 = vmatprep.subr.mxu0 0.0
        %1194 = vmatpush1.xpose.msra.mxu0 0.0
        %1195 = vmatprep.subr.mxu0 0.0
        %1196 = vmatpush1.xpose.msra.mxu0 0.0
        %1197 = vmatprep.subr.mxu0 0.0
        %1198 = vmatpush1.xpose.msra.mxu0 0.0
        %1199 = vmatprep.subr.mxu0 0.0
        %1200 = vmatpush1.xpose.msra.mxu0 0.0
        %1201 = vmatprep.subr.mxu0 0.0
        %1202 = vmatpush1.xpose.msra.mxu0 0.0
        %1203 = vmatprep.subr.mxu0 0.0
        %1204 = vmatpush1.xpose.msra.mxu0 0.0
        %1205 = vmatprep.subr.mxu0 0.0
        %1206 = vmatpush1.xpose.msra.mxu0 0.0
        %1207 = vmatprep.subr.mxu0 0.0
        %1208 = vmatpush1.xpose.msra.mxu0 0.0
        %1209 = vmatprep.subr.mxu0 0.0
        %1210 = vmatpush1.xpose.msra.mxu0 0.0
        %1211 = vmatprep.subr.mxu0 0.0
        %1212 = vmatpush1.xpose.msra.mxu0 0.0
        %1213 = vmatprep.subr.mxu0 0.0
        %1214 = vmatpush1.xpose.msra.mxu0 0.0
        %1215 = vmatprep.subr.mxu0 0.0
        %1216 = vmatpush1.xpose.msra.mxu0 0.0
        %1217 = vmatprep.subr.mxu0 0.0
        %1218 = vmatpush1.xpose.msra.mxu0 0.0
        %1219 = vmatprep.subr.mxu0 0.0
        %1220 = vmatpush1.xpose.msra.mxu0 0.0
        %1221 = vmatprep.subr.mxu0 0.0
        %1222 = vmatpush1.xpose.msra.mxu0 0.0
        %1223 = vmatprep.subr.mxu0 0.0
        %1224 = vmatpush1.xpose.msra.mxu0 0.0
        %1225 = vmatprep.subr.mxu0 0.0
        %1226 = vmatpush1.xpose.msra.mxu0 0.0
        %1227 = vmatprep.subr.mxu0 0.0
        %1228 = vmatpush1.xpose.msra.mxu0 0.0
        %1229 = vmatprep.mubr.f32.mxu0 0.0
        %1230 = vmatmul.mubr.f32.gmra.mrb[0].mxu0 %v1153
        %v1231 = vpop.f32.mrb[0].mxu0
        %v1232 = vadd.f32 0.0, %v1231
        %v1233 = vpop.f32.mrb[0].mxu0
        %1234 = vmatprep.mubr.f32.mxu0 0.0
        %1235 = vmatmul.mubr.f32.gmra.mrb[0].mxu0 %v1155
        %v1236 = vpop.f32.mrb[0].mxu0
        %v1237 = vadd.f32 0.0, %v1236
        %v1238 = vpop.f32.mrb[0].mxu0
        %1239 = vmatprep.mubr.f32.mxu0 0.0
        %1240 = vmatmul.mubr.f32.gmra.mrb[0].mxu0 %v1157
        %v1241 = vpop.f32.mrb[0].mxu0
        %v1242 = vadd.f32 0.0, %v1241
        %v1243 = vpop.f32.mrb[0].mxu0
        %1244 = vdwg.mxu0
        %vm1245 = vcmask 138240
        %v1246 = vsel %vm1245, %v1232, -inf
        %1247 = vmax.xlane.f32.xlu0 %v1246
        %v1248 = vpop.xlane.xlu0 %1247
        %v1249 = vsel %vm1245, %v1237, -inf
        %1250 = vmax.xlane.f32.xlu0 %v1249
        %v1251 = vpop.xlane.xlu0 %1250
        %vm1252 = vcmask 131072
        %v1253 = vsel %vm1252, %v1242, -inf
        %1254 = vmax.xlane.f32.xlu0 %v1253
        %v1255 = vpop.xlane.xlu0 %1254
        %v1256 = vsub.f32 %v1232, %v1248
        %v1257 = vsub.f32 %v1237, %v1251
        %v1258 = vsub.f32 %v1242, %v1255
        %v1259 = vmul.f32 %v1256, 1.442695
        %v1260 = vpow.pop %v1259
        %v1261 = vmul.f32 %v1257, 1.442695
        %v1262 = vpow.pop %v1261
        %v1263 = vmul.f32 %v1258, 1.442695
        %v1264 = vpow.pop %v1263
        %v1265 = vsel %vm1245, %v1260, 0.0
        %1266 = vadd.xlane.f32.xlu0 %v1265
        %v1267 = vpop.xlane.xlu0 %1266
        %v1268 = vsel %vm1245, %v1262, 0.0
        %1269 = vadd.xlane.f32.xlu0 %v1268
        %v1270 = vpop.xlane.xlu0 %1269
        %v1271 = vsel %vm1252, %v1264, 0.0
        %1272 = vadd.xlane.f32.xlu0 %v1271
        %v1273 = vpop.xlane.xlu0 %1272
        %v1274 = vrcp.pop %v1267
        %v1275 = vrcp.pop %v1270
        %v1276 = vrcp.pop %v1273
        %v1277 = vmul.f32 %v1260, %v1274
        %v1278 = vmul.f32 %v1262, %v1275
        %v1279 = vmul.f32 %v1264, %v1276
        %1280 = vrot.lane.b32.xlu0 %v1130, 96
        %v1281 = vpop.permute.xlu0 %1280
        %1282 = vrot.lane.b32.xlu0 %v1135, 96
        %v1283 = vpop.permute.xlu0 %1282
        %1284 = vrot.lane.b32.xlu0 %v1140, 96
        %v1285 = vpop.permute.xlu0 %1284
        %v1289 = vsel %vm1245, %v1277, 0
        %v1292 = vsel %vm1245, %v1278, 0
        %v1295 = vsel %vm1245, %v1279, 0
        %vm1297 = vcmask 1040384
        %v1298 = vsel %vm1297, %v1285, 0
        %1300 = vmatprep.subr.mxu0 0.0
        %1301 = vmatpush1.msra.mxu0 %v1281
        %1302 = vmatprep.subr.mxu0 0.0
        %1303 = vmatpush1.msra.mxu0 %v1283
        %1304 = vmatprep.subr.mxu0 0.0
        %1305 = vmatpush1.msra.mxu0 %v1298
        %1306 = vmatprep.subr.mxu0 0.0
        %1307 = vmatpush1.msra.mxu0 0.0
        %1308 = vmatprep.subr.mxu0 0.0
        %1309 = vmatpush1.msra.mxu0 0.0
        %1310 = vmatprep.subr.mxu0 0.0
        %1311 = vmatpush1.msra.mxu0 0.0
        %1312 = vmatprep.subr.mxu0 0.0
        %1313 = vmatpush1.msra.mxu0 0.0
        %1314 = vmatprep.subr.mxu0 0.0
        %1315 = vmatpush1.msra.mxu0 0.0
        %1316 = vmatprep.subr.mxu0 0.0
        %1317 = vmatpush1.msra.mxu0 0.0
        %1318 = vmatprep.subr.mxu0 0.0
        %1319 = vmatpush1.msra.mxu0 0.0
        %1320 = vmatprep.subr.mxu0 0.0
        %1321 = vmatpush1.msra.mxu0 0.0
        %1322 = vmatprep.subr.mxu0 0.0
        %1323 = vmatpush1.msra.mxu0 0.0
        %1324 = vmatprep.subr.mxu0 0.0
        %1325 = vmatpush1.msra.mxu0 0.0
        %1326 = vmatprep.subr.mxu0 0.0
        %1327 = vmatpush1.msra.mxu0 0.0
        %1328 = vmatprep.subr.mxu0 0.0
        %1329 = vmatpush1.msra.mxu0 0.0
        %1330 = vmatprep.subr.mxu0 0.0
        %1331 = vmatpush1.msra.mxu0 0.0
        %1332 = vmatprep.subr.mxu0 0.0
        %1333 = vmatpush1.msra.mxu0 0.0
        %1334 = vmatprep.subr.mxu0 0.0
        %1335 = vmatpush1.msra.mxu0 0.0
        %1336 = vmatprep.subr.mxu0 0.0
        %1337 = vmatpush1.msra.mxu0 0.0
        %1338 = vmatprep.subr.mxu0 0.0
        %1339 = vmatpush1.msra.mxu0 0.0
        %1340 = vmatprep.subr.mxu0 0.0
        %1341 = vmatpush1.msra.mxu0 0.0
        %1342 = vmatprep.subr.mxu0 0.0
        %1343 = vmatpush1.msra.mxu0 0.0
        %1344 = vmatprep.subr.mxu0 0.0
        %1345 = vmatpush1.msra.mxu0 0.0
        %1346 = vmatprep.subr.mxu0 0.0
        %1347 = vmatpush1.msra.mxu0 0.0
        %1348 = vmatprep.subr.mxu0 0.0
        %1349 = vmatpush1.msra.mxu0 0.0
        %1350 = vmatprep.subr.mxu0 0.0
        %1351 = vmatpush1.msra.mxu0 0.0
        %1352 = vmatprep.subr.mxu0 0.0
        %1353 = vmatpush1.msra.mxu0 0.0
        %1354 = vmatprep.subr.mxu0 0.0
        %1355 = vmatpush1.msra.mxu0 0.0
        %1356 = vmatprep.subr.mxu0 0.0
        %1357 = vmatpush1.msra.mxu0 0.0
        %1358 = vmatprep.subr.mxu0 0.0
        %1359 = vmatpush1.msra.mxu0 0.0
        %1360 = vmatprep.subr.mxu0 0.0
        %1361 = vmatpush1.msra.mxu0 0.0
        %1362 = vmatprep.subr.mxu0 0.0
        %1363 = vmatpush1.msra.mxu0 0.0
        %1364 = vmatprep.mubr.f32.mxu0 0.0
        %1365 = vmatmul.mubr.f32.gmra.mrb[0].mxu0 %v1289
        %v1366 = vpop.f32.mrb[0].mxu0
        %v1367 = vadd.f32 0.0, %v1366
        %v1368 = vpop.f32.mrb[0].mxu0
        %1369 = vmatprep.mubr.f32.mxu0 0.0
        %1370 = vmatmul.mubr.f32.gmra.mrb[0].mxu0 %v1292
        %v1371 = vpop.f32.mrb[0].mxu0
        %v1372 = vadd.f32 0.0, %v1371
        %v1373 = vpop.f32.mrb[0].mxu0
        %1374 = vmatprep.mubr.f32.mxu0 0.0
        %1375 = vmatmul.mubr.f32.gmra.mrb[0].mxu0 %v1295
        %v1376 = vpop.f32.mrb[0].mxu0
        %v1377 = vadd.f32 0.0, %v1376
        %v1378 = vpop.f32.mrb[0].mxu0
        %1379 = vdwg.mxu0
        %1380 = vrot.lane.b32.xlu0 %v1130, 124
        %v1381 = vpop.permute.xlu0 %1380
        %1382 = vrot.lane.b32.xlu0 %v1135, 124
        %v1383 = vpop.permute.xlu0 %1382
        %1384 = vrot.lane.b32.xlu0 %v1140, 124
        %v1385 = vpop.permute.xlu0 %1384
        %1386 = vrot.lane.b32.xlu0 %v1130, 108
        %v1387 = vpop.permute.xlu0 %1386
        %1388 = vrot.lane.b32.xlu0 %v1135, 108
        %v1389 = vpop.permute.xlu0 %1388
        %1390 = vrot.lane.b32.xlu0 %v1140, 108
        %v1391 = vpop.permute.xlu0 %1390
        %v1392 = vsel %vm1152, %v1381, 0
        %v1394 = vsel %vm1152, %v1383, 0
        %v1396 = vsel %vm1152, %v1385, 0
        %v1398 = vsel %vm1152, %v1387, 0
        %v1400 = vsel %vm1152, %v1389, 0
        %v1402 = vsel %vm1152, %v1391, 0
        %1404 = vmatprep.subr.mxu0 0.0
        %1405 = vmatpush1.xpose.msra.mxu0 %v1398
        %1406 = vmatprep.subr.mxu0 0.0
        %1407 = vmatpush1.xpose.msra.mxu0 %v1400
        %1408 = vmatprep.subr.mxu0 0.0
        %1409 = vmatpush1.xpose.msra.mxu0 %v1402
        %1410 = vmatprep.subr.mxu0 0.0
        %1411 = vmatpush1.xpose.msra.mxu0 0.0
        %1412 = vmatprep.subr.mxu0 0.0
        %1413 = vmatpush1.xpose.msra.mxu0 0.0
        %1414 = vmatprep.subr.mxu0 0.0
        %1415 = vmatpush1.xpose.msra.mxu0 0.0
        %1416 = vmatprep.subr.mxu0 0.0
        %1417 = vmatpush1.xpose.msra.mxu0 0.0
        %1418 = vmatprep.subr.mxu0 0.0
        %1419 = vmatpush1.xpose.msra.mxu0 0.0
        %1420 = vmatprep.subr.mxu0 0.0
        %1421 = vmatpush1.xpose.msra.mxu0 0.0
        %1422 = vmatprep.subr.mxu0 0.0
        %1423 = vmatpush1.xpose.msra.mxu0 0.0
        %1424 = vmatprep.subr.mxu0 0.0
        %1425 = vmatpush1.xpose.msra.mxu0 0.0
        %1426 = vmatprep.subr.mxu0 0.0
        %1427 = vmatpush1.xpose.msra.mxu0 0.0
        %1428 = vmatprep.subr.mxu0 0.0
        %1429 = vmatpush1.xpose.msra.mxu0 0.0
        %1430 = vmatprep.subr.mxu0 0.0
        %1431 = vmatpush1.xpose.msra.mxu0 0.0
        %1432 = vmatprep.subr.mxu0 0.0
        %1433 = vmatpush1.xpose.msra.mxu0 0.0
        %1434 = vmatprep.subr.mxu0 0.0
        %1435 = vmatpush1.xpose.msra.mxu0 0.0
        %1436 = vmatprep.subr.mxu0 0.0
        %1437 = vmatpush1.xpose.msra.mxu0 0.0
        %1438 = vmatprep.subr.mxu0 0.0
        %1439 = vmatpush1.xpose.msra.mxu0 0.0
        %1440 = vmatprep.subr.mxu0 0.0
        %1441 = vmatpush1.xpose.msra.mxu0 0.0
        %1442 = vmatprep.subr.mxu0 0.0
        %1443 = vmatpush1.xpose.msra.mxu0 0.0
        %1444 = vmatprep.subr.mxu0 0.0
        %1445 = vmatpush1.xpose.msra.mxu0 0.0
        %1446 = vmatprep.subr.mxu0 0.0
        %1447 = vmatpush1.xpose.msra.mxu0 0.0
        %1448 = vmatprep.subr.mxu0 0.0
        %1449 = vmatpush1.xpose.msra.mxu0 0.0
        %1450 = vmatprep.subr.mxu0 0.0
        %1451 = vmatpush1.xpose.msra.mxu0 0.0
        %1452 = vmatprep.subr.mxu0 0.0
        %1453 = vmatpush1.xpose.msra.mxu0 0.0
        %1454 = vmatprep.subr.mxu0 0.0
        %1455 = vmatpush1.xpose.msra.mxu0 0.0
        %1456 = vmatprep.subr.mxu0 0.0
        %1457 = vmatpush1.xpose.msra.mxu0 0.0
        %1458 = vmatprep.subr.mxu0 0.0
        %1459 = vmatpush1.xpose.msra.mxu0 0.0
        %1460 = vmatprep.subr.mxu0 0.0
        %1461 = vmatpush1.xpose.msra.mxu0 0.0
        %1462 = vmatprep.subr.mxu0 0.0
        %1463 = vmatpush1.xpose.msra.mxu0 0.0
        %1464 = vmatprep.subr.mxu0 0.0
        %1465 = vmatpush1.xpose.msra.mxu0 0.0
        %1466 = vmatprep.subr.mxu0 0.0
        %1467 = vmatpush1.xpose.msra.mxu0 0.0
        %1468 = vmatprep.mubr.f32.mxu0 0.0
        %1469 = vmatmul.mubr.f32.gmra.mrb[0].mxu0 %v1392
        %v1470 = vpop.f32.mrb[0].mxu0
        %v1471 = vadd.f32 0.0, %v1470
        %v1472 = vpop.f32.mrb[0].mxu0
        %1473 = vmatprep.mubr.f32.mxu0 0.0
        %1474 = vmatmul.mubr.f32.gmra.mrb[0].mxu0 %v1394
        %v1475 = vpop.f32.mrb[0].mxu0
        %v1476 = vadd.f32 0.0, %v1475
        %v1477 = vpop.f32.mrb[0].mxu0
        %1478 = vmatprep.mubr.f32.mxu0 0.0
        %1479 = vmatmul.mubr.f32.gmra.mrb[0].mxu0 %v1396
        %v1480 = vpop.f32.mrb[0].mxu0
        %v1481 = vadd.f32 0.0, %v1480
        %v1482 = vpop.f32.mrb[0].mxu0
        %1483 = vdwg.mxu0
        %v1484 = vsel %vm1245, %v1471, -inf
        %1485 = vmax.xlane.f32.xlu0 %v1484
        %v1486 = vpop.xlane.xlu0 %1485
        %v1487 = vsel %vm1245, %v1476, -inf
        %1488 = vmax.xlane.f32.xlu0 %v1487
        %v1489 = vpop.xlane.xlu0 %1488
        %v1490 = vsel %vm1252, %v1481, -inf
        %1491 = vmax.xlane.f32.xlu0 %v1490
        %v1492 = vpop.xlane.xlu0 %1491
        %v1493 = vsub.f32 %v1471, %v1486
        %v1494 = vsub.f32 %v1476, %v1489
        %v1495 = vsub.f32 %v1481, %v1492
        %v1496 = vmul.f32 %v1493, 1.442695
        %v1497 = vpow.pop %v1496
        %v1498 = vmul.f32 %v1494, 1.442695
        %v1499 = vpow.pop %v1498
        %v1500 = vmul.f32 %v1495, 1.442695
        %v1501 = vpow.pop %v1500
        %v1502 = vsel %vm1245, %v1497, 0.0
        %1503 = vadd.xlane.f32.xlu0 %v1502
        %v1504 = vpop.xlane.xlu0 %1503
        %v1505 = vsel %vm1245, %v1499, 0.0
        %1506 = vadd.xlane.f32.xlu0 %v1505
        %v1507 = vpop.xlane.xlu0 %1506
        %v1508 = vsel %vm1252, %v1501, 0.0
        %1509 = vadd.xlane.f32.xlu0 %v1508
        %v1510 = vpop.xlane.xlu0 %1509
        %v1511 = vrcp.pop %v1504
        %v1512 = vrcp.pop %v1507
        %v1513 = vrcp.pop %v1510
        %v1514 = vmul.f32 %v1497, %v1511
        %v1515 = vmul.f32 %v1499, %v1512
        %v1516 = vmul.f32 %v1501, %v1513
        %1517 = vrot.lane.b32.xlu0 %v1130, 92
        %v1518 = vpop.permute.xlu0 %1517
        %1519 = vrot.lane.b32.xlu0 %v1135, 92
        %v1520 = vpop.permute.xlu0 %1519
        %1521 = vrot.lane.b32.xlu0 %v1140, 92
        %v1522 = vpop.permute.xlu0 %1521
        %v1526 = vsel %vm1245, %v1514, 0
        %v1529 = vsel %vm1245, %v1515, 0
        %v1532 = vsel %vm1245, %v1516, 0
        %v1534 = vsel %vm1297, %v1522, 0
        %1536 = vmatprep.subr.mxu0 0.0
        %1537 = vmatpush1.msra.mxu0 %v1518
        %1538 = vmatprep.subr.mxu0 0.0
        %1539 = vmatpush1.msra.mxu0 %v1520
        %1540 = vmatprep.subr.mxu0 0.0
        %1541 = vmatpush1.msra.mxu0 %v1534
        %1542 = vmatprep.subr.mxu0 0.0
        %1543 = vmatpush1.msra.mxu0 0.0
        %1544 = vmatprep.subr.mxu0 0.0
        %1545 = vmatpush1.msra.mxu0 0.0
        %1546 = vmatprep.subr.mxu0 0.0
        %1547 = vmatpush1.msra.mxu0 0.0
        %1548 = vmatprep.subr.mxu0 0.0
        %1549 = vmatpush1.msra.mxu0 0.0
        %1550 = vmatprep.subr.mxu0 0.0
        %1551 = vmatpush1.msra.mxu0 0.0
        %1552 = vmatprep.subr.mxu0 0.0
        %1553 = vmatpush1.msra.mxu0 0.0
        %1554 = vmatprep.subr.mxu0 0.0
        %1555 = vmatpush1.msra.mxu0 0.0
        %1556 = vmatprep.subr.mxu0 0.0
        %1557 = vmatpush1.msra.mxu0 0.0
        %1558 = vmatprep.subr.mxu0 0.0
        %1559 = vmatpush1.msra.mxu0 0.0
        %1560 = vmatprep.subr.mxu0 0.0
        %1561 = vmatpush1.msra.mxu0 0.0
        %1562 = vmatprep.subr.mxu0 0.0
        %1563 = vmatpush1.msra.mxu0 0.0
        %1564 = vmatprep.subr.mxu0 0.0
        %1565 = vmatpush1.msra.mxu0 0.0
        %1566 = vmatprep.subr.mxu0 0.0
        %1567 = vmatpush1.msra.mxu0 0.0
        %1568 = vmatprep.subr.mxu0 0.0
        %1569 = vmatpush1.msra.mxu0 0.0
        %1570 = vmatprep.subr.mxu0 0.0
        %1571 = vmatpush1.msra.mxu0 0.0
        %1572 = vmatprep.subr.mxu0 0.0
        %1573 = vmatpush1.msra.mxu0 0.0
        %1574 = vmatprep.subr.mxu0 0.0
        %1575 = vmatpush1.msra.mxu0 0.0
        %1576 = vmatprep.subr.mxu0 0.0
        %1577 = vmatpush1.msra.mxu0 0.0
        %1578 = vmatprep.subr.mxu0 0.0
        %1579 = vmatpush1.msra.mxu0 0.0
        %1580 = vmatprep.subr.mxu0 0.0
        %1581 = vmatpush1.msra.mxu0 0.0
        %1582 = vmatprep.subr.mxu0 0.0
        %1583 = vmatpush1.msra.mxu0 0.0
        %1584 = vmatprep.subr.mxu0 0.0
        %1585 = vmatpush1.msra.mxu0 0.0
        %1586 = vmatprep.subr.mxu0 0.0
        %1587 = vmatpush1.msra.mxu0 0.0
        %1588 = vmatprep.subr.mxu0 0.0
        %1589 = vmatpush1.msra.mxu0 0.0
        %1590 = vmatprep.subr.mxu0 0.0
        %1591 = vmatpush1.msra.mxu0 0.0
        %1592 = vmatprep.subr.mxu0 0.0
        %1593 = vmatpush1.msra.mxu0 0.0
        %1594 = vmatprep.subr.mxu0 0.0
        %1595 = vmatpush1.msra.mxu0 0.0
        %1596 = vmatprep.subr.mxu0 0.0
        %1597 = vmatpush1.msra.mxu0 0.0
        %1598 = vmatprep.subr.mxu0 0.0
        %1599 = vmatpush1.msra.mxu0 0.0
        %1600 = vmatprep.mubr.f32.mxu0 0.0
        %1601 = vmatmul.mubr.f32.gmra.mrb[0].mxu0 %v1526
        %v1602 = vpop.f32.mrb[0].mxu0
        %v1603 = vadd.f32 0.0, %v1602
        %v1604 = vpop.f32.mrb[0].mxu0
        %1605 = vmatprep.mubr.f32.mxu0 0.0
        %1606 = vmatmul.mubr.f32.gmra.mrb[0].mxu0 %v1529
        %v1607 = vpop.f32.mrb[0].mxu0
        %v1608 = vadd.f32 0.0, %v1607
        %v1609 = vpop.f32.mrb[0].mxu0
        %1610 = vmatprep.mubr.f32.mxu0 0.0
        %1611 = vmatmul.mubr.f32.gmra.mrb[0].mxu0 %v1532
        %v1612 = vpop.f32.mrb[0].mxu0
        %v1613 = vadd.f32 0.0, %v1612
        %v1614 = vpop.f32.mrb[0].mxu0
        %1615 = vdwg.mxu0
        %v1617 = vsel %vm1152, %v1603, 0
        %v1620 = vsel %vm1152, %v1608, 0
        %v1623 = vsel %vm1152, %v1613, 0
        %vm1625 = vcmask 1043456
        %v1627 = vsel %vm1625, %v970, 0
        %1629 = vmatprep.subr.mxu0 0.0
        %1630 = vmatpush1.msra.mxu0 %v1627
        %1631 = vmatprep.subr.mxu0 0.0
        %1632 = vmatpush1.msra.mxu0 0.0
        %1633 = vmatprep.subr.mxu0 0.0
        %1634 = vmatpush1.msra.mxu0 0.0
        %1635 = vmatprep.subr.mxu0 0.0
        %1636 = vmatpush1.msra.mxu0 0.0
        %1637 = vmatprep.subr.mxu0 0.0
        %1638 = vmatpush1.msra.mxu0 0.0
        %1639 = vmatprep.subr.mxu0 0.0
        %1640 = vmatpush1.msra.mxu0 0.0
        %1641 = vmatprep.subr.mxu0 0.0
        %1642 = vmatpush1.msra.mxu0 0.0
        %1643 = vmatprep.subr.mxu0 0.0
        %1644 = vmatpush1.msra.mxu0 0.0
        %1645 = vmatprep.subr.mxu0 0.0
        %1646 = vmatpush1.msra.mxu0 0.0
        %1647 = vmatprep.subr.mxu0 0.0
        %1648 = vmatpush1.msra.mxu0 0.0
        %1649 = vmatprep.subr.mxu0 0.0
        %1650 = vmatpush1.msra.mxu0 0.0
        %1651 = vmatprep.subr.mxu0 0.0
        %1652 = vmatpush1.msra.mxu0 0.0
        %1653 = vmatprep.subr.mxu0 0.0
        %1654 = vmatpush1.msra.mxu0 0.0
        %1655 = vmatprep.subr.mxu0 0.0
        %1656 = vmatpush1.msra.mxu0 0.0
        %1657 = vmatprep.subr.mxu0 0.0
        %1658 = vmatpush1.msra.mxu0 0.0
        %1659 = vmatprep.subr.mxu0 0.0
        %1660 = vmatpush1.msra.mxu0 0.0
        %1661 = vmatprep.subr.mxu0 0.0
        %1662 = vmatpush1.msra.mxu0 0.0
        %1663 = vmatprep.subr.mxu0 0.0
        %1664 = vmatpush1.msra.mxu0 0.0
        %1665 = vmatprep.subr.mxu0 0.0
        %1666 = vmatpush1.msra.mxu0 0.0
        %1667 = vmatprep.subr.mxu0 0.0
        %1668 = vmatpush1.msra.mxu0 0.0
        %1669 = vmatprep.subr.mxu0 0.0
        %1670 = vmatpush1.msra.mxu0 0.0
        %1671 = vmatprep.subr.mxu0 0.0
        %1672 = vmatpush1.msra.mxu0 0.0
        %1673 = vmatprep.subr.mxu0 0.0
        %1674 = vmatpush1.msra.mxu0 0.0
        %1675 = vmatprep.subr.mxu0 0.0
        %1676 = vmatpush1.msra.mxu0 0.0
        %1677 = vmatprep.subr.mxu0 0.0
        %1678 = vmatpush1.msra.mxu0 0.0
        %1679 = vmatprep.subr.mxu0 0.0
        %1680 = vmatpush1.msra.mxu0 0.0
        %1681 = vmatprep.subr.mxu0 0.0
        %1682 = vmatpush1.msra.mxu0 0.0
        %1683 = vmatprep.subr.mxu0 0.0
        %1684 = vmatpush1.msra.mxu0 0.0
        %1685 = vmatprep.subr.mxu0 0.0
        %1686 = vmatpush1.msra.mxu0 0.0
        %1687 = vmatprep.subr.mxu0 0.0
        %1688 = vmatpush1.msra.mxu0 0.0
        %1689 = vmatprep.subr.mxu0 0.0
        %1690 = vmatpush1.msra.mxu0 0.0
        %1691 = vmatprep.subr.mxu0 0.0
        %1692 = vmatpush1.msra.mxu0 0.0
        %1693 = vmatprep.mubr.f32.mxu0 0.0
        %1694 = vmatmul.mubr.f32.gmra.mrb[0].mxu0 %v1617
        %v1695 = vpop.f32.mrb[0].mxu0
        %v1696 = vadd.f32 0.0, %v1695
        %v1697 = vpop.f32.mrb[0].mxu0
        %1698 = vmatprep.mubr.f32.mxu0 0.0
        %1699 = vmatmul.mubr.f32.gmra.mrb[0].mxu0 %v1620
        %v1700 = vpop.f32.mrb[0].mxu0
        %v1701 = vadd.f32 0.0, %v1700
        %v1702 = vpop.f32.mrb[0].mxu0
        %1703 = vmatprep.mubr.f32.mxu0 0.0
        %1704 = vmatmul.mubr.f32.gmra.mrb[0].mxu0 %v1623
        %v1705 = vpop.f32.mrb[0].mxu0
        %v1706 = vadd.f32 0.0, %v1705
        %v1707 = vpop.f32.mrb[0].mxu0
        %1708 = vdwg.mxu0
        %v1710 = vsel %vm1152, %v1367, 0
        %v1713 = vsel %vm1152, %v1372, 0
        %v1716 = vsel %vm1152, %v1377, 0
        %v1719 = vsel %vm1625, %v969, 0
        %1721 = vmatprep.subr.mxu0 0.0
        %1722 = vmatpush1.msra.mxu0 %v1719
        %1723 = vmatprep.subr.mxu0 0.0
        %1724 = vmatpush1.msra.mxu0 0.0
        %1725 = vmatprep.subr.mxu0 0.0
        %1726 = vmatpush1.msra.mxu0 0.0
        %1727 = vmatprep.subr.mxu0 0.0
        %1728 = vmatpush1.msra.mxu0 0.0
        %1729 = vmatprep.subr.mxu0 0.0
        %1730 = vmatpush1.msra.mxu0 0.0
        %1731 = vmatprep.subr.mxu0 0.0
        %1732 = vmatpush1.msra.mxu0 0.0
        %1733 = vmatprep.subr.mxu0 0.0
        %1734 = vmatpush1.msra.mxu0 0.0
        %1735 = vmatprep.subr.mxu0 0.0
        %1736 = vmatpush1.msra.mxu0 0.0
        %1737 = vmatprep.subr.mxu0 0.0
        %1738 = vmatpush1.msra.mxu0 0.0
        %1739 = vmatprep.subr.mxu0 0.0
        %1740 = vmatpush1.msra.mxu0 0.0
        %1741 = vmatprep.subr.mxu0 0.0
        %1742 = vmatpush1.msra.mxu0 0.0
        %1743 = vmatprep.subr.mxu0 0.0
        %1744 = vmatpush1.msra.mxu0 0.0
        %1745 = vmatprep.subr.mxu0 0.0
        %1746 = vmatpush1.msra.mxu0 0.0
        %1747 = vmatprep.subr.mxu0 0.0
        %1748 = vmatpush1.msra.mxu0 0.0
        %1749 = vmatprep.subr.mxu0 0.0
        %1750 = vmatpush1.msra.mxu0 0.0
        %1751 = vmatprep.subr.mxu0 0.0
        %1752 = vmatpush1.msra.mxu0 0.0
        %1753 = vmatprep.subr.mxu0 0.0
        %1754 = vmatpush1.msra.mxu0 0.0
        %1755 = vmatprep.subr.mxu0 0.0
        %1756 = vmatpush1.msra.mxu0 0.0
        %1757 = vmatprep.subr.mxu0 0.0
        %1758 = vmatpush1.msra.mxu0 0.0
        %1759 = vmatprep.subr.mxu0 0.0
        %1760 = vmatpush1.msra.mxu0 0.0
        %1761 = vmatprep.subr.mxu0 0.0
        %1762 = vmatpush1.msra.mxu0 0.0
        %1763 = vmatprep.subr.mxu0 0.0
        %1764 = vmatpush1.msra.mxu0 0.0
        %1765 = vmatprep.subr.mxu0 0.0
        %1766 = vmatpush1.msra.mxu0 0.0
        %1767 = vmatprep.subr.mxu0 0.0
        %1768 = vmatpush1.msra.mxu0 0.0
        %1769 = vmatprep.subr.mxu0 0.0
        %1770 = vmatpush1.msra.mxu0 0.0
        %1771 = vmatprep.subr.mxu0 0.0
        %1772 = vmatpush1.msra.mxu0 0.0
        %1773 = vmatprep.subr.mxu0 0.0
        %1774 = vmatpush1.msra.mxu0 0.0
        %1775 = vmatprep.subr.mxu0 0.0
        %1776 = vmatpush1.msra.mxu0 0.0
        %1777 = vmatprep.subr.mxu0 0.0
        %1778 = vmatpush1.msra.mxu0 0.0
        %1779 = vmatprep.subr.mxu0 0.0
        %1780 = vmatpush1.msra.mxu0 0.0
        %1781 = vmatprep.subr.mxu0 0.0
        %1782 = vmatpush1.msra.mxu0 0.0
        %1783 = vmatprep.subr.mxu0 0.0
        %1784 = vmatpush1.msra.mxu0 0.0
        %1785 = vmatprep.mubr.f32.mxu0 0.0
        %1786 = vmatmul.mubr.f32.gmra.mrb[0].mxu0 %v1710
        %v1787 = vpop.f32.mrb[0].mxu0
        %v1788 = vadd.f32 %v1696, %v1787
        %v1789 = vpop.f32.mrb[0].mxu0
        %1790 = vmatprep.mubr.f32.mxu0 0.0
        %1791 = vmatmul.mubr.f32.gmra.mrb[0].mxu0 %v1713
        %v1792 = vpop.f32.mrb[0].mxu0
        %v1793 = vadd.f32 %v1701, %v1792
        %v1794 = vpop.f32.mrb[0].mxu0
        %1795 = vmatprep.mubr.f32.mxu0 0.0
        %1796 = vmatmul.mubr.f32.gmra.mrb[0].mxu0 %v1716
        %v1797 = vpop.f32.mrb[0].mxu0
        %v1798 = vadd.f32 %v1706, %v1797
        %v1799 = vpop.f32.mrb[0].mxu0
        %1800 = vdwg.mxu0
        %1801 = vrot.lane.b32.xlu0 %v1130, 120
        %v1802 = vpop.permute.xlu0 %1801
        %1803 = vrot.lane.b32.xlu0 %v1135, 120
        %v1804 = vpop.permute.xlu0 %1803
        %1805 = vrot.lane.b32.xlu0 %v1140, 120
        %v1806 = vpop.permute.xlu0 %1805
        %1807 = vrot.lane.b32.xlu0 %v1130, 104
        %v1808 = vpop.permute.xlu0 %1807
        %1809 = vrot.lane.b32.xlu0 %v1135, 104
        %v1810 = vpop.permute.xlu0 %1809
        %1811 = vrot.lane.b32.xlu0 %v1140, 104
        %v1812 = vpop.permute.xlu0 %1811
        %v1813 = vsel %vm1152, %v1802, 0
        %v1815 = vsel %vm1152, %v1804, 0
        %v1817 = vsel %vm1152, %v1806, 0
        %v1819 = vsel %vm1152, %v1808, 0
        %v1821 = vsel %vm1152, %v1810, 0
        %v1823 = vsel %vm1152, %v1812, 0
        %1825 = vmatprep.subr.mxu0 0.0
        %1826 = vmatpush1.xpose.msra.mxu0 %v1819
        %1827 = vmatprep.subr.mxu0 0.0
        %1828 = vmatpush1.xpose.msra.mxu0 %v1821
        %1829 = vmatprep.subr.mxu0 0.0
        %1830 = vmatpush1.xpose.msra.mxu0 %v1823
        %1831 = vmatprep.subr.mxu0 0.0
        %1832 = vmatpush1.xpose.msra.mxu0 0.0
        %1833 = vmatprep.subr.mxu0 0.0
        %1834 = vmatpush1.xpose.msra.mxu0 0.0
        %1835 = vmatprep.subr.mxu0 0.0
        %1836 = vmatpush1.xpose.msra.mxu0 0.0
        %1837 = vmatprep.subr.mxu0 0.0
        %1838 = vmatpush1.xpose.msra.mxu0 0.0
        %1839 = vmatprep.subr.mxu0 0.0
        %1840 = vmatpush1.xpose.msra.mxu0 0.0
        %1841 = vmatprep.subr.mxu0 0.0
        %1842 = vmatpush1.xpose.msra.mxu0 0.0
        %1843 = vmatprep.subr.mxu0 0.0
        %1844 = vmatpush1.xpose.msra.mxu0 0.0
        %1845 = vmatprep.subr.mxu0 0.0
        %1846 = vmatpush1.xpose.msra.mxu0 0.0
        %1847 = vmatprep.subr.mxu0 0.0
        %1848 = vmatpush1.xpose.msra.mxu0 0.0
        %1849 = vmatprep.subr.mxu0 0.0
        %1850 = vmatpush1.xpose.msra.mxu0 0.0
        %1851 = vmatprep.subr.mxu0 0.0
        %1852 = vmatpush1.xpose.msra.mxu0 0.0
        %1853 = vmatprep.subr.mxu0 0.0
        %1854 = vmatpush1.xpose.msra.mxu0 0.0
        %1855 = vmatprep.subr.mxu0 0.0
        %1856 = vmatpush1.xpose.msra.mxu0 0.0
        %1857 = vmatprep.subr.mxu0 0.0
        %1858 = vmatpush1.xpose.msra.mxu0 0.0
        %1859 = vmatprep.subr.mxu0 0.0
        %1860 = vmatpush1.xpose.msra.mxu0 0.0
        %1861 = vmatprep.subr.mxu0 0.0
        %1862 = vmatpush1.xpose.msra.mxu0 0.0
        %1863 = vmatprep.subr.mxu0 0.0
        %1864 = vmatpush1.xpose.msra.mxu0 0.0
        %1865 = vmatprep.subr.mxu0 0.0
        %1866 = vmatpush1.xpose.msra.mxu0 0.0
        %1867 = vmatprep.subr.mxu0 0.0
        %1868 = vmatpush1.xpose.msra.mxu0 0.0
        %1869 = vmatprep.subr.mxu0 0.0
        %1870 = vmatpush1.xpose.msra.mxu0 0.0
        %1871 = vmatprep.subr.mxu0 0.0
        %1872 = vmatpush1.xpose.msra.mxu0 0.0
        %1873 = vmatprep.subr.mxu0 0.0
        %1874 = vmatpush1.xpose.msra.mxu0 0.0
        %1875 = vmatprep.subr.mxu0 0.0
        %1876 = vmatpush1.xpose.msra.mxu0 0.0
        %1877 = vmatprep.subr.mxu0 0.0
        %1878 = vmatpush1.xpose.msra.mxu0 0.0
        %1879 = vmatprep.subr.mxu0 0.0
        %1880 = vmatpush1.xpose.msra.mxu0 0.0
        %1881 = vmatprep.subr.mxu0 0.0
        %1882 = vmatpush1.xpose.msra.mxu0 0.0
        %1883 = vmatprep.subr.mxu0 0.0
        %1884 = vmatpush1.xpose.msra.mxu0 0.0
        %1885 = vmatprep.subr.mxu0 0.0
        %1886 = vmatpush1.xpose.msra.mxu0 0.0
        %1887 = vmatprep.subr.mxu0 0.0
        %1888 = vmatpush1.xpose.msra.mxu0 0.0
        %1889 = vmatprep.mubr.f32.mxu0 0.0
        %1890 = vmatmul.mubr.f32.gmra.mrb[0].mxu0 %v1813
        %v1891 = vpop.f32.mrb[0].mxu0
        %v1892 = vadd.f32 0.0, %v1891
        %v1893 = vpop.f32.mrb[0].mxu0
        %1894 = vmatprep.mubr.f32.mxu0 0.0
        %1895 = vmatmul.mubr.f32.gmra.mrb[0].mxu0 %v1815
        %v1896 = vpop.f32.mrb[0].mxu0
        %v1897 = vadd.f32 0.0, %v1896
        %v1898 = vpop.f32.mrb[0].mxu0
        %1899 = vmatprep.mubr.f32.mxu0 0.0
        %1900 = vmatmul.mubr.f32.gmra.mrb[0].mxu0 %v1817
        %v1901 = vpop.f32.mrb[0].mxu0
        %v1902 = vadd.f32 0.0, %v1901
        %v1903 = vpop.f32.mrb[0].mxu0
        %1904 = vdwg.mxu0
        %v1905 = vsel %vm1245, %v1892, -inf
        %1906 = vmax.xlane.f32.xlu0 %v1905
        %v1907 = vpop.xlane.xlu0 %1906
        %v1908 = vsel %vm1245, %v1897, -inf
        %1909 = vmax.xlane.f32.xlu0 %v1908
        %v1910 = vpop.xlane.xlu0 %1909
        %v1911 = vsel %vm1252, %v1902, -inf
        %1912 = vmax.xlane.f32.xlu0 %v1911
        %v1913 = vpop.xlane.xlu0 %1912
        %v1914 = vsub.f32 %v1892, %v1907
        %v1915 = vsub.f32 %v1897, %v1910
        %v1916 = vsub.f32 %v1902, %v1913
        %v1917 = vmul.f32 %v1914, 1.442695
        %v1918 = vpow.pop %v1917
        %v1919 = vmul.f32 %v1915, 1.442695
        %v1920 = vpow.pop %v1919
        %v1921 = vmul.f32 %v1916, 1.442695
        %v1922 = vpow.pop %v1921
        %v1923 = vsel %vm1245, %v1918, 0.0
        %1924 = vadd.xlane.f32.xlu0 %v1923
        %v1925 = vpop.xlane.xlu0 %1924
        %v1926 = vsel %vm1245, %v1920, 0.0
        %1927 = vadd.xlane.f32.xlu0 %v1926
        %v1928 = vpop.xlane.xlu0 %1927
        %v1929 = vsel %vm1252, %v1922, 0.0
        %1930 = vadd.xlane.f32.xlu0 %v1929
        %v1931 = vpop.xlane.xlu0 %1930
        %v1932 = vrcp.pop %v1925
        %v1933 = vrcp.pop %v1928
        %v1934 = vrcp.pop %v1931
        %v1935 = vmul.f32 %v1918, %v1932
        %v1936 = vmul.f32 %v1920, %v1933
        %v1937 = vmul.f32 %v1922, %v1934
        %1938 = vrot.lane.b32.xlu0 %v1130, 88
        %v1939 = vpop.permute.xlu0 %1938
        %1940 = vrot.lane.b32.xlu0 %v1135, 88
        %v1941 = vpop.permute.xlu0 %1940
        %1942 = vrot.lane.b32.xlu0 %v1140, 88
        %v1943 = vpop.permute.xlu0 %1942
        %v1947 = vsel %vm1245, %v1935, 0
        %v1950 = vsel %vm1245, %v1936, 0
        %v1953 = vsel %vm1245, %v1937, 0
        %v1955 = vsel %vm1297, %v1943, 0
        %1957 = vmatprep.subr.mxu0 0.0
        %1958 = vmatpush1.msra.mxu0 %v1939
        %1959 = vmatprep.subr.mxu0 0.0
        %1960 = vmatpush1.msra.mxu0 %v1941
        %1961 = vmatprep.subr.mxu0 0.0
        %1962 = vmatpush1.msra.mxu0 %v1955
        %1963 = vmatprep.subr.mxu0 0.0
        %1964 = vmatpush1.msra.mxu0 0.0
        %1965 = vmatprep.subr.mxu0 0.0
        %1966 = vmatpush1.msra.mxu0 0.0
        %1967 = vmatprep.subr.mxu0 0.0
        %1968 = vmatpush1.msra.mxu0 0.0
        %1969 = vmatprep.subr.mxu0 0.0
        %1970 = vmatpush1.msra.mxu0 0.0
        %1971 = vmatprep.subr.mxu0 0.0
        %1972 = vmatpush1.msra.mxu0 0.0
        %1973 = vmatprep.subr.mxu0 0.0
        %1974 = vmatpush1.msra.mxu0 0.0
        %1975 = vmatprep.subr.mxu0 0.0
        %1976 = vmatpush1.msra.mxu0 0.0
        %1977 = vmatprep.subr.mxu0 0.0
        %1978 = vmatpush1.msra.mxu0 0.0
        %1979 = vmatprep.subr.mxu0 0.0
        %1980 = vmatpush1.msra.mxu0 0.0
        %1981 = vmatprep.subr.mxu0 0.0
        %1982 = vmatpush1.msra.mxu0 0.0
        %1983 = vmatprep.subr.mxu0 0.0
        %1984 = vmatpush1.msra.mxu0 0.0
        %1985 = vmatprep.subr.mxu0 0.0
        %1986 = vmatpush1.msra.mxu0 0.0
        %1987 = vmatprep.subr.mxu0 0.0
        %1988 = vmatpush1.msra.mxu0 0.0
        %1989 = vmatprep.subr.mxu0 0.0
        %1990 = vmatpush1.msra.mxu0 0.0
        %1991 = vmatprep.subr.mxu0 0.0
        %1992 = vmatpush1.msra.mxu0 0.0
        %1993 = vmatprep.subr.mxu0 0.0
        %1994 = vmatpush1.msra.mxu0 0.0
        %1995 = vmatprep.subr.mxu0 0.0
        %1996 = vmatpush1.msra.mxu0 0.0
        %1997 = vmatprep.subr.mxu0 0.0
        %1998 = vmatpush1.msra.mxu0 0.0
        %1999 = vmatprep.subr.mxu0 0.0
        %2000 = vmatpush1.msra.mxu0 0.0
        %2001 = vmatprep.subr.mxu0 0.0
        %2002 = vmatpush1.msra.mxu0 0.0
        %2003 = vmatprep.subr.mxu0 0.0
        %2004 = vmatpush1.msra.mxu0 0.0
        %2005 = vmatprep.subr.mxu0 0.0
        %2006 = vmatpush1.msra.mxu0 0.0
        %2007 = vmatprep.subr.mxu0 0.0
        %2008 = vmatpush1.msra.mxu0 0.0
        %2009 = vmatprep.subr.mxu0 0.0
        %2010 = vmatpush1.msra.mxu0 0.0
        %2011 = vmatprep.subr.mxu0 0.0
        %2012 = vmatpush1.msra.mxu0 0.0
        %2013 = vmatprep.subr.mxu0 0.0
        %2014 = vmatpush1.msra.mxu0 0.0
        %2015 = vmatprep.subr.mxu0 0.0
        %2016 = vmatpush1.msra.mxu0 0.0
        %2017 = vmatprep.subr.mxu0 0.0
        %2018 = vmatpush1.msra.mxu0 0.0
        %2019 = vmatprep.subr.mxu0 0.0
        %2020 = vmatpush1.msra.mxu0 0.0
        %2021 = vmatprep.mubr.f32.mxu0 0.0
        %2022 = vmatmul.mubr.f32.gmra.mrb[0].mxu0 %v1947
        %v2023 = vpop.f32.mrb[0].mxu0
        %v2024 = vadd.f32 0.0, %v2023
        %v2025 = vpop.f32.mrb[0].mxu0
        %2026 = vmatprep.mubr.f32.mxu0 0.0
        %2027 = vmatmul.mubr.f32.gmra.mrb[0].mxu0 %v1950
        %v2028 = vpop.f32.mrb[0].mxu0
        %v2029 = vadd.f32 0.0, %v2028
        %v2030 = vpop.f32.mrb[0].mxu0
        %2031 = vmatprep.mubr.f32.mxu0 0.0
        %2032 = vmatmul.mubr.f32.gmra.mrb[0].mxu0 %v1953
        %v2033 = vpop.f32.mrb[0].mxu0
        %v2034 = vadd.f32 0.0, %v2033
        %v2035 = vpop.f32.mrb[0].mxu0
        %2036 = vdwg.mxu0
        %v2038 = vsel %vm1152, %v2024, 0
        %v2041 = vsel %vm1152, %v2029, 0
        %v2044 = vsel %vm1152, %v2034, 0
        %v2047 = vsel %vm1625, %v971, 0
        %2049 = vmatprep.subr.mxu0 0.0
        %2050 = vmatpush1.msra.mxu0 %v2047
        %2051 = vmatprep.subr.mxu0 0.0
        %2052 = vmatpush1.msra.mxu0 0.0
        %2053 = vmatprep.subr.mxu0 0.0
        %2054 = vmatpush1.msra.mxu0 0.0
        %2055 = vmatprep.subr.mxu0 0.0
        %2056 = vmatpush1.msra.mxu0 0.0
        %2057 = vmatprep.subr.mxu0 0.0
        %2058 = vmatpush1.msra.mxu0 0.0
        %2059 = vmatprep.subr.mxu0 0.0
        %2060 = vmatpush1.msra.mxu0 0.0
        %2061 = vmatprep.subr.mxu0 0.0
        %2062 = vmatpush1.msra.mxu0 0.0
        %2063 = vmatprep.subr.mxu0 0.0
        %2064 = vmatpush1.msra.mxu0 0.0
        %2065 = vmatprep.subr.mxu0 0.0
        %2066 = vmatpush1.msra.mxu0 0.0
        %2067 = vmatprep.subr.mxu0 0.0
        %2068 = vmatpush1.msra.mxu0 0.0
        %2069 = vmatprep.subr.mxu0 0.0
        %2070 = vmatpush1.msra.mxu0 0.0
        %2071 = vmatprep.subr.mxu0 0.0
        %2072 = vmatpush1.msra.mxu0 0.0
        %2073 = vmatprep.subr.mxu0 0.0
        %2074 = vmatpush1.msra.mxu0 0.0
        %2075 = vmatprep.subr.mxu0 0.0
        %2076 = vmatpush1.msra.mxu0 0.0
        %2077 = vmatprep.subr.mxu0 0.0
        %2078 = vmatpush1.msra.mxu0 0.0
        %2079 = vmatprep.subr.mxu0 0.0
        %2080 = vmatpush1.msra.mxu0 0.0
        %2081 = vmatprep.subr.mxu0 0.0
        %2082 = vmatpush1.msra.mxu0 0.0
        %2083 = vmatprep.subr.mxu0 0.0
        %2084 = vmatpush1.msra.mxu0 0.0
        %2085 = vmatprep.subr.mxu0 0.0
        %2086 = vmatpush1.msra.mxu0 0.0
        %2087 = vmatprep.subr.mxu0 0.0
        %2088 = vmatpush1.msra.mxu0 0.0
        %2089 = vmatprep.subr.mxu0 0.0
        %2090 = vmatpush1.msra.mxu0 0.0
        %2091 = vmatprep.subr.mxu0 0.0
        %2092 = vmatpush1.msra.mxu0 0.0
        %2093 = vmatprep.subr.mxu0 0.0
        %2094 = vmatpush1.msra.mxu0 0.0
        %2095 = vmatprep.subr.mxu0 0.0
        %2096 = vmatpush1.msra.mxu0 0.0
        %2097 = vmatprep.subr.mxu0 0.0
        %2098 = vmatpush1.msra.mxu0 0.0
        %2099 = vmatprep.subr.mxu0 0.0
        %2100 = vmatpush1.msra.mxu0 0.0
        %2101 = vmatprep.subr.mxu0 0.0
        %2102 = vmatpush1.msra.mxu0 0.0
        %2103 = vmatprep.subr.mxu0 0.0
        %2104 = vmatpush1.msra.mxu0 0.0
        %2105 = vmatprep.subr.mxu0 0.0
        %2106 = vmatpush1.msra.mxu0 0.0
        %2107 = vmatprep.subr.mxu0 0.0
        %2108 = vmatpush1.msra.mxu0 0.0
        %2109 = vmatprep.subr.mxu0 0.0
        %2110 = vmatpush1.msra.mxu0 0.0
        %2111 = vmatprep.subr.mxu0 0.0
        %2112 = vmatpush1.msra.mxu0 0.0
        %2113 = vmatprep.mubr.f32.mxu0 0.0
        %2114 = vmatmul.mubr.f32.gmra.mrb[0].mxu0 %v2038
        %v2115 = vpop.f32.mrb[0].mxu0
        %v2116 = vadd.f32 0.0, %v2115
        %v2117 = vpop.f32.mrb[0].mxu0
        %2118 = vmatprep.mubr.f32.mxu0 0.0
        %2119 = vmatmul.mubr.f32.gmra.mrb[0].mxu0 %v2041
        %v2120 = vpop.f32.mrb[0].mxu0
        %v2121 = vadd.f32 0.0, %v2120
        %v2122 = vpop.f32.mrb[0].mxu0
        %2123 = vmatprep.mubr.f32.mxu0 0.0
        %2124 = vmatmul.mubr.f32.gmra.mrb[0].mxu0 %v2044
        %v2125 = vpop.f32.mrb[0].mxu0
        %v2126 = vadd.f32 0.0, %v2125
        %v2127 = vpop.f32.mrb[0].mxu0
        %2128 = vdwg.mxu0
        %v2129 = vadd.f32 %v1788, %v2116
        %v2130 = vadd.f32 %v1793, %v2121
        %v2131 = vadd.f32 %v1798, %v2126
        %2132 = vrot.lane.b32.xlu0 %v1130, 116
        %v2133 = vpop.permute.xlu0 %2132
        %2134 = vrot.lane.b32.xlu0 %v1135, 116
        %v2135 = vpop.permute.xlu0 %2134
        %2136 = vrot.lane.b32.xlu0 %v1140, 116
        %v2137 = vpop.permute.xlu0 %2136
        %2138 = vrot.lane.b32.xlu0 %v1130, 100
        %v2139 = vpop.permute.xlu0 %2138
        %2140 = vrot.lane.b32.xlu0 %v1135, 100
        %v2141 = vpop.permute.xlu0 %2140
        %2142 = vrot.lane.b32.xlu0 %v1140, 100
        %v2143 = vpop.permute.xlu0 %2142
        %v2144 = vsel %vm1152, %v2133, 0
        %v2146 = vsel %vm1152, %v2135, 0
        %v2148 = vsel %vm1152, %v2137, 0
        %v2150 = vsel %vm1152, %v2139, 0
        %v2152 = vsel %vm1152, %v2141, 0
        %v2154 = vsel %vm1152, %v2143, 0
        %2156 = vmatprep.subr.mxu0 0.0
        %2157 = vmatpush1.xpose.msra.mxu0 %v2150
        %2158 = vmatprep.subr.mxu0 0.0
        %2159 = vmatpush1.xpose.msra.mxu0 %v2152
        %2160 = vmatprep.subr.mxu0 0.0
        %2161 = vmatpush1.xpose.msra.mxu0 %v2154
        %2162 = vmatprep.subr.mxu0 0.0
        %2163 = vmatpush1.xpose.msra.mxu0 0.0
        %2164 = vmatprep.subr.mxu0 0.0
        %2165 = vmatpush1.xpose.msra.mxu0 0.0
        %2166 = vmatprep.subr.mxu0 0.0
        %2167 = vmatpush1.xpose.msra.mxu0 0.0
        %2168 = vmatprep.subr.mxu0 0.0
        %2169 = vmatpush1.xpose.msra.mxu0 0.0
        %2170 = vmatprep.subr.mxu0 0.0
        %2171 = vmatpush1.xpose.msra.mxu0 0.0
        %2172 = vmatprep.subr.mxu0 0.0
        %2173 = vmatpush1.xpose.msra.mxu0 0.0
        %2174 = vmatprep.subr.mxu0 0.0
        %2175 = vmatpush1.xpose.msra.mxu0 0.0
        %2176 = vmatprep.subr.mxu0 0.0
        %2177 = vmatpush1.xpose.msra.mxu0 0.0
        %2178 = vmatprep.subr.mxu0 0.0
        %2179 = vmatpush1.xpose.msra.mxu0 0.0
        %2180 = vmatprep.subr.mxu0 0.0
        %2181 = vmatpush1.xpose.msra.mxu0 0.0
        %2182 = vmatprep.subr.mxu0 0.0
        %2183 = vmatpush1.xpose.msra.mxu0 0.0
        %2184 = vmatprep.subr.mxu0 0.0
        %2185 = vmatpush1.xpose.msra.mxu0 0.0
        %2186 = vmatprep.subr.mxu0 0.0
        %2187 = vmatpush1.xpose.msra.mxu0 0.0
        %2188 = vmatprep.subr.mxu0 0.0
        %2189 = vmatpush1.xpose.msra.mxu0 0.0
        %2190 = vmatprep.subr.mxu0 0.0
        %2191 = vmatpush1.xpose.msra.mxu0 0.0
        %2192 = vmatprep.subr.mxu0 0.0
        %2193 = vmatpush1.xpose.msra.mxu0 0.0
        %2194 = vmatprep.subr.mxu0 0.0
        %2195 = vmatpush1.xpose.msra.mxu0 0.0
        %2196 = vmatprep.subr.mxu0 0.0
        %2197 = vmatpush1.xpose.msra.mxu0 0.0
        %2198 = vmatprep.subr.mxu0 0.0
        %2199 = vmatpush1.xpose.msra.mxu0 0.0
        %2200 = vmatprep.subr.mxu0 0.0
        %2201 = vmatpush1.xpose.msra.mxu0 0.0
        %2202 = vmatprep.subr.mxu0 0.0
        %2203 = vmatpush1.xpose.msra.mxu0 0.0
        %2204 = vmatprep.subr.mxu0 0.0
        %2205 = vmatpush1.xpose.msra.mxu0 0.0
        %2206 = vmatprep.subr.mxu0 0.0
        %2207 = vmatpush1.xpose.msra.mxu0 0.0
        %2208 = vmatprep.subr.mxu0 0.0
        %2209 = vmatpush1.xpose.msra.mxu0 0.0
        %2210 = vmatprep.subr.mxu0 0.0
        %2211 = vmatpush1.xpose.msra.mxu0 0.0
        %2212 = vmatprep.subr.mxu0 0.0
        %2213 = vmatpush1.xpose.msra.mxu0 0.0
        %2214 = vmatprep.subr.mxu0 0.0
        %2215 = vmatpush1.xpose.msra.mxu0 0.0
        %2216 = vmatprep.subr.mxu0 0.0
        %2217 = vmatpush1.xpose.msra.mxu0 0.0
        %2218 = vmatprep.subr.mxu0 0.0
        %2219 = vmatpush1.xpose.msra.mxu0 0.0
        %2220 = vmatprep.mubr.f32.mxu0 0.0
        %2221 = vmatmul.mubr.f32.gmra.mrb[0].mxu0 %v2144
        %v2222 = vpop.f32.mrb[0].mxu0
        %v2223 = vadd.f32 0.0, %v2222
        %v2224 = vpop.f32.mrb[0].mxu0
        %2225 = vmatprep.mubr.f32.mxu0 0.0
        %2226 = vmatmul.mubr.f32.gmra.mrb[0].mxu0 %v2146
        %v2227 = vpop.f32.mrb[0].mxu0
        %v2228 = vadd.f32 0.0, %v2227
        %v2229 = vpop.f32.mrb[0].mxu0
        %2230 = vmatprep.mubr.f32.mxu0 0.0
        %2231 = vmatmul.mubr.f32.gmra.mrb[0].mxu0 %v2148
        %v2232 = vpop.f32.mrb[0].mxu0
        %v2233 = vadd.f32 0.0, %v2232
        %v2234 = vpop.f32.mrb[0].mxu0
        %2235 = vdwg.mxu0
        %v2236 = vsel %vm1245, %v2223, -inf
        %2237 = vmax.xlane.f32.xlu0 %v2236
        %v2238 = vpop.xlane.xlu0 %2237
        %v2239 = vsel %vm1245, %v2228, -inf
        %2240 = vmax.xlane.f32.xlu0 %v2239
        %v2241 = vpop.xlane.xlu0 %2240
        %v2242 = vsel %vm1252, %v2233, -inf
        %2243 = vmax.xlane.f32.xlu0 %v2242
        %v2244 = vpop.xlane.xlu0 %2243
        %v2245 = vsub.f32 %v2223, %v2238
        %v2246 = vsub.f32 %v2228, %v2241
        %v2247 = vsub.f32 %v2233, %v2244
        %v2248 = vmul.f32 %v2245, 1.442695
        %v2249 = vpow.pop %v2248
        %v2250 = vmul.f32 %v2246, 1.442695
        %v2251 = vpow.pop %v2250
        %v2252 = vmul.f32 %v2247, 1.442695
        %v2253 = vpow.pop %v2252
        %v2254 = vsel %vm1245, %v2249, 0.0
        %2255 = vadd.xlane.f32.xlu0 %v2254
        %v2256 = vpop.xlane.xlu0 %2255
        %v2257 = vsel %vm1245, %v2251, 0.0
        %2258 = vadd.xlane.f32.xlu0 %v2257
        %v2259 = vpop.xlane.xlu0 %2258
        %v2260 = vsel %vm1252, %v2253, 0.0
        %2261 = vadd.xlane.f32.xlu0 %v2260
        %v2262 = vpop.xlane.xlu0 %2261
        %v2263 = vrcp.pop %v2256
        %v2264 = vrcp.pop %v2259
        %v2265 = vrcp.pop %v2262
        %v2266 = vmul.f32 %v2249, %v2263
        %v2267 = vmul.f32 %v2251, %v2264
        %v2268 = vmul.f32 %v2253, %v2265
        %2269 = vrot.lane.b32.xlu0 %v1130, 84
        %v2270 = vpop.permute.xlu0 %2269
        %2271 = vrot.lane.b32.xlu0 %v1135, 84
        %v2272 = vpop.permute.xlu0 %2271
        %2273 = vrot.lane.b32.xlu0 %v1140, 84
        %v2274 = vpop.permute.xlu0 %2273
        %v2278 = vsel %vm1245, %v2266, 0
        %v2281 = vsel %vm1245, %v2267, 0
        %v2284 = vsel %vm1245, %v2268, 0
        %v2286 = vsel %vm1297, %v2274, 0
        %2288 = vmatprep.subr.mxu0 0.0
        %2289 = vmatpush1.msra.mxu0 %v2270
        %2290 = vmatprep.subr.mxu0 0.0
        %2291 = vmatpush1.msra.mxu0 %v2272
        %2292 = vmatprep.subr.mxu0 0.0
        %2293 = vmatpush1.msra.mxu0 %v2286
        %2294 = vmatprep.subr.mxu0 0.0
        %2295 = vmatpush1.msra.mxu0 0.0
        %2296 = vmatprep.subr.mxu0 0.0
        %2297 = vmatpush1.msra.mxu0 0.0
        %2298 = vmatprep.subr.mxu0 0.0
        %2299 = vmatpush1.msra.mxu0 0.0
        %2300 = vmatprep.subr.mxu0 0.0
        %2301 = vmatpush1.msra.mxu0 0.0
        %2302 = vmatprep.subr.mxu0 0.0
        %2303 = vmatpush1.msra.mxu0 0.0
        %2304 = vmatprep.subr.mxu0 0.0
        %2305 = vmatpush1.msra.mxu0 0.0
        %2306 = vmatprep.subr.mxu0 0.0
        %2307 = vmatpush1.msra.mxu0 0.0
        %2308 = vmatprep.subr.mxu0 0.0
        %2309 = vmatpush1.msra.mxu0 0.0
        %2310 = vmatprep.subr.mxu0 0.0
        %2311 = vmatpush1.msra.mxu0 0.0
        %2312 = vmatprep.subr.mxu0 0.0
        %2313 = vmatpush1.msra.mxu0 0.0
        %2314 = vmatprep.subr.mxu0 0.0
        %2315 = vmatpush1.msra.mxu0 0.0
        %2316 = vmatprep.subr.mxu0 0.0
        %2317 = vmatpush1.msra.mxu0 0.0
        %2318 = vmatprep.subr.mxu0 0.0
        %2319 = vmatpush1.msra.mxu0 0.0
        %2320 = vmatprep.subr.mxu0 0.0
        %2321 = vmatpush1.msra.mxu0 0.0
        %2322 = vmatprep.subr.mxu0 0.0
        %2323 = vmatpush1.msra.mxu0 0.0
        %2324 = vmatprep.subr.mxu0 0.0
        %2325 = vmatpush1.msra.mxu0 0.0
        %2326 = vmatprep.subr.mxu0 0.0
        %2327 = vmatpush1.msra.mxu0 0.0
        %2328 = vmatprep.subr.mxu0 0.0
        %2329 = vmatpush1.msra.mxu0 0.0
        %2330 = vmatprep.subr.mxu0 0.0
        %2331 = vmatpush1.msra.mxu0 0.0
        %2332 = vmatprep.subr.mxu0 0.0
        %2333 = vmatpush1.msra.mxu0 0.0
        %2334 = vmatprep.subr.mxu0 0.0
        %2335 = vmatpush1.msra.mxu0 0.0
        %2336 = vmatprep.subr.mxu0 0.0
        %2337 = vmatpush1.msra.mxu0 0.0
        %2338 = vmatprep.subr.mxu0 0.0
        %2339 = vmatpush1.msra.mxu0 0.0
        %2340 = vmatprep.subr.mxu0 0.0
        %2341 = vmatpush1.msra.mxu0 0.0
        %2342 = vmatprep.subr.mxu0 0.0
        %2343 = vmatpush1.msra.mxu0 0.0
        %2344 = vmatprep.subr.mxu0 0.0
        %2345 = vmatpush1.msra.mxu0 0.0
        %2346 = vmatprep.subr.mxu0 0.0
        %2347 = vmatpush1.msra.mxu0 0.0
        %2348 = vmatprep.subr.mxu0 0.0
        %2349 = vmatpush1.msra.mxu0 0.0
        %2350 = vmatprep.subr.mxu0 0.0
        %2351 = vmatpush1.msra.mxu0 0.0
        %2352 = vmatprep.mubr.f32.mxu0 0.0
        %2353 = vmatmul.mubr.f32.gmra.mrb[0].mxu0 %v2278
        %v2354 = vpop.f32.mrb[0].mxu0
        %v2355 = vadd.f32 0.0, %v2354
        %v2356 = vpop.f32.mrb[0].mxu0
        %2357 = vmatprep.mubr.f32.mxu0 0.0
        %2358 = vmatmul.mubr.f32.gmra.mrb[0].mxu0 %v2281
        %v2359 = vpop.f32.mrb[0].mxu0
        %v2360 = vadd.f32 0.0, %v2359
        %v2361 = vpop.f32.mrb[0].mxu0
        %2362 = vmatprep.mubr.f32.mxu0 0.0
        %2363 = vmatmul.mubr.f32.gmra.mrb[0].mxu0 %v2284
        %v2364 = vpop.f32.mrb[0].mxu0
        %v2365 = vadd.f32 0.0, %v2364
        %v2366 = vpop.f32.mrb[0].mxu0
        %2367 = vdwg.mxu0
        %v2369 = vsel %vm1152, %v2355, 0
        %v2372 = vsel %vm1152, %v2360, 0
        %v2375 = vsel %vm1152, %v2365, 0
        %v2378 = vsel %vm1625, %v972, 0
        %2380 = vmatprep.subr.mxu0 0.0
        %2381 = vmatpush1.msra.mxu0 %v2378
        %2382 = vmatprep.subr.mxu0 0.0
        %2383 = vmatpush1.msra.mxu0 0.0
        %2384 = vmatprep.subr.mxu0 0.0
        %2385 = vmatpush1.msra.mxu0 0.0
        %2386 = vmatprep.subr.mxu0 0.0
        %2387 = vmatpush1.msra.mxu0 0.0
        %2388 = vmatprep.subr.mxu0 0.0
        %2389 = vmatpush1.msra.mxu0 0.0
        %2390 = vmatprep.subr.mxu0 0.0
        %2391 = vmatpush1.msra.mxu0 0.0
        %2392 = vmatprep.subr.mxu0 0.0
        %2393 = vmatpush1.msra.mxu0 0.0
        %2394 = vmatprep.subr.mxu0 0.0
        %2395 = vmatpush1.msra.mxu0 0.0
        %2396 = vmatprep.subr.mxu0 0.0
        %2397 = vmatpush1.msra.mxu0 0.0
        %2398 = vmatprep.subr.mxu0 0.0
        %2399 = vmatpush1.msra.mxu0 0.0
        %2400 = vmatprep.subr.mxu0 0.0
        %2401 = vmatpush1.msra.mxu0 0.0
        %2402 = vmatprep.subr.mxu0 0.0
        %2403 = vmatpush1.msra.mxu0 0.0
        %2404 = vmatprep.subr.mxu0 0.0
        %2405 = vmatpush1.msra.mxu0 0.0
        %2406 = vmatprep.subr.mxu0 0.0
        %2407 = vmatpush1.msra.mxu0 0.0
        %2408 = vmatprep.subr.mxu0 0.0
        %2409 = vmatpush1.msra.mxu0 0.0
        %2410 = vmatprep.subr.mxu0 0.0
        %2411 = vmatpush1.msra.mxu0 0.0
        %2412 = vmatprep.subr.mxu0 0.0
        %2413 = vmatpush1.msra.mxu0 0.0
        %2414 = vmatprep.subr.mxu0 0.0
        %2415 = vmatpush1.msra.mxu0 0.0
        %2416 = vmatprep.subr.mxu0 0.0
        %2417 = vmatpush1.msra.mxu0 0.0
        %2418 = vmatprep.subr.mxu0 0.0
        %2419 = vmatpush1.msra.mxu0 0.0
        %2420 = vmatprep.subr.mxu0 0.0
        %2421 = vmatpush1.msra.mxu0 0.0
        %2422 = vmatprep.subr.mxu0 0.0
        %2423 = vmatpush1.msra.mxu0 0.0
        %2424 = vmatprep.subr.mxu0 0.0
        %2425 = vmatpush1.msra.mxu0 0.0
        %2426 = vmatprep.subr.mxu0 0.0
        %2427 = vmatpush1.msra.mxu0 0.0
        %2428 = vmatprep.subr.mxu0 0.0
        %2429 = vmatpush1.msra.mxu0 0.0
        %2430 = vmatprep.subr.mxu0 0.0
        %2431 = vmatpush1.msra.mxu0 0.0
        %2432 = vmatprep.subr.mxu0 0.0
        %2433 = vmatpush1.msra.mxu0 0.0
        %2434 = vmatprep.subr.mxu0 0.0
        %2435 = vmatpush1.msra.mxu0 0.0
        %2436 = vmatprep.subr.mxu0 0.0
        %2437 = vmatpush1.msra.mxu0 0.0
        %2438 = vmatprep.subr.mxu0 0.0
        %2439 = vmatpush1.msra.mxu0 0.0
        %2440 = vmatprep.subr.mxu0 0.0
        %2441 = vmatpush1.msra.mxu0 0.0
        %2442 = vmatprep.subr.mxu0 0.0
        %2443 = vmatpush1.msra.mxu0 0.0
        %2444 = vmatprep.mubr.f32.mxu0 0.0
        %2445 = vmatmul.mubr.f32.gmra.mrb[0].mxu0 %v2369
        %v2446 = vpop.f32.mrb[0].mxu0
        %v2447 = vadd.f32 0.0, %v2446
        %v2448 = vpop.f32.mrb[0].mxu0
        %2449 = vmatprep.mubr.f32.mxu0 0.0
        %2450 = vmatmul.mubr.f32.gmra.mrb[0].mxu0 %v2372
        %v2451 = vpop.f32.mrb[0].mxu0
        %v2452 = vadd.f32 0.0, %v2451
        %v2453 = vpop.f32.mrb[0].mxu0
        %2454 = vmatprep.mubr.f32.mxu0 0.0
        %2455 = vmatmul.mubr.f32.gmra.mrb[0].mxu0 %v2375
        %v2456 = vpop.f32.mrb[0].mxu0
        %v2457 = vadd.f32 0.0, %v2456
        %v2458 = vpop.f32.mrb[0].mxu0
        %2459 = vdwg.mxu0
        %v2460 = vadd.f32 %v2129, %v2447
        %v2461 = vadd.f32 %v2130, %v2452
        %v2462 = vadd.f32 %v2131, %v2457
        %v2463 = vadd.f32 %v961, %v2460
        %v2464 = vadd.f32 %v962, %v2461
        %v2465 = vadd.f32 %v963, %v2462
        %v2467 = vlaneseq
        %v2468 = vshrl.u32 %v2467, 7
        %v2469 = vsub.s32 0, %v2468
        %v2470 = vrot.slane %v973, %v2469
        %v2472 = vadd.f32 %v2463, %v2470
        %v2473 = vadd.f32 %v2464, %v2470
        %v2474 = vadd.f32 %v2465, %v2470
        %v2475 = vsel %vm988, %v2472, 0.0
        %2476 = vadd.xlane.f32.xlu0 %v2475
        %v2477 = vpop.xlane.xlu0 %2476
        %v2478 = vsel %vm988, %v2473, 0.0
        %2479 = vadd.xlane.f32.xlu0 %v2478
        %v2480 = vpop.xlane.xlu0 %2479
        %v2481 = vsel %vm995, %v2474, 0.0
        %2482 = vadd.xlane.f32.xlu0 %v2481
        %v2483 = vpop.xlane.xlu0 %2482
        %v2484 = vmul.f32 %v2477, %v999
        %v2485 = vmul.f32 %v2480, %v999
        %v2486 = vmul.f32 %v2483, %v999
        %v2487 = vsub.f32 %v2472, %v2484
        %v2488 = vsub.f32 %v2473, %v2485
        %v2489 = vsub.f32 %v2474, %v2486
        %v2490 = vmul.f32 %v2487, %v2487
        %v2491 = vmul.f32 %v2488, %v2488
        %v2492 = vmul.f32 %v2489, %v2489
        %v2493 = vsel %vm988, %v2490, 0.0
        %2494 = vadd.xlane.f32.xlu0 %v2493
        %v2495 = vpop.xlane.xlu0 %2494
        %v2496 = vsel %vm988, %v2491, 0.0
        %2497 = vadd.xlane.f32.xlu0 %v2496
        %v2498 = vpop.xlane.xlu0 %2497
        %v2499 = vsel %vm995, %v2492, 0.0
        %2500 = vadd.xlane.f32.xlu0 %v2499
        %v2501 = vpop.xlane.xlu0 %2500
        %v2502 = vmul.f32 %v2495, %v999
        %v2503 = vmul.f32 %v2498, %v999
        %v2504 = vmul.f32 %v2501, %v999
        %v2505 = vadd.f32 %v2502, 1e-06
        %v2506 = vadd.f32 %v2503, 1e-06
        %v2507 = vadd.f32 %v2504, 1e-06
        %v2508 = vrsqrt.pop %v2505
        %v2509 = vrsqrt.pop %v2506
        %v2510 = vrsqrt.pop %v2507
        %v2511 = vmul.f32 %v2487, %v2508
        %v2512 = vmul.f32 %v2488, %v2509
        %v2513 = vmul.f32 %v2489, %v2510
        %v2515 = vlaneseq
        %v2516 = vshrl.u32 %v2515, 7
        %v2517 = vsub.s32 0, %v2516
        %v2518 = vrot.slane %v974, %v2517
        %v2520 = vmul.f32 %v2511, %v2518
        %v2521 = vmul.f32 %v2512, %v2518
        %v2522 = vmul.f32 %v2513, %v2518
        %v2524 = vlaneseq
        %v2525 = vshrl.u32 %v2524, 7
        %v2526 = vsub.s32 0, %v2525
        %v2527 = vrot.slane %v975, %v2526
        %v2529 = vadd.f32 %v2520, %v2527
        %v2530 = vadd.f32 %v2521, %v2527
        %v2531 = vadd.f32 %v2522, %v2527
        %v2533 = vlaneseq
        %v2534 = vshrl.u32 %v2533, 7
        %v2535 = vsub.s32 0, %v2534
        %v2536 = vrot.slane %v978, %v2535
        %v2539 = vsel %vm988, %v2529, 0
        %v2542 = vsel %vm988, %v2530, 0
        %v2545 = vsel %vm988, %v2531, 0
        %2547 = vmatprep.subr.mxu0 0.0
        %2548 = vmatpush1.msra.mxu0 %v976
        %2549 = vmatprep.subr.mxu0 0.0
        %2550 = vmatpush1.msra.mxu0 %v977
        %2551 = vmatprep.subr.mxu0 0.0
        %2552 = vmatpush1.msra.mxu0 0.0
        %2553 = vmatprep.subr.mxu0 0.0
        %2554 = vmatpush1.msra.mxu0 0.0
        %2555 = vmatprep.subr.mxu0 0.0
        %2556 = vmatpush1.msra.mxu0 0.0
        %2557 = vmatprep.subr.mxu0 0.0
        %2558 = vmatpush1.msra.mxu0 0.0
        %2559 = vmatprep.subr.mxu0 0.0
        %2560 = vmatpush1.msra.mxu0 0.0
        %2561 = vmatprep.subr.mxu0 0.0
        %2562 = vmatpush1.msra.mxu0 0.0
        %2563 = vmatprep.subr.mxu0 0.0
        %2564 = vmatpush1.msra.mxu0 0.0
        %2565 = vmatprep.subr.mxu0 0.0
        %2566 = vmatpush1.msra.mxu0 0.0
        %2567 = vmatprep.subr.mxu0 0.0
        %2568 = vmatpush1.msra.mxu0 0.0
        %2569 = vmatprep.subr.mxu0 0.0
        %2570 = vmatpush1.msra.mxu0 0.0
        %2571 = vmatprep.subr.mxu0 0.0
        %2572 = vmatpush1.msra.mxu0 0.0
        %2573 = vmatprep.subr.mxu0 0.0
        %2574 = vmatpush1.msra.mxu0 0.0
        %2575 = vmatprep.subr.mxu0 0.0
        %2576 = vmatpush1.msra.mxu0 0.0
        %2577 = vmatprep.subr.mxu0 0.0
        %2578 = vmatpush1.msra.mxu0 0.0
        %2579 = vmatprep.subr.mxu0 0.0
        %2580 = vmatpush1.msra.mxu0 0.0
        %2581 = vmatprep.subr.mxu0 0.0
        %2582 = vmatpush1.msra.mxu0 0.0
        %2583 = vmatprep.subr.mxu0 0.0
        %2584 = vmatpush1.msra.mxu0 0.0
        %2585 = vmatprep.subr.mxu0 0.0
        %2586 = vmatpush1.msra.mxu0 0.0
        %2587 = vmatprep.subr.mxu0 0.0
        %2588 = vmatpush1.msra.mxu0 0.0
        %2589 = vmatprep.subr.mxu0 0.0
        %2590 = vmatpush1.msra.mxu0 0.0
        %2591 = vmatprep.subr.mxu0 0.0
        %2592 = vmatpush1.msra.mxu0 0.0
        %2593 = vmatprep.subr.mxu0 0.0
        %2594 = vmatpush1.msra.mxu0 0.0
        %2595 = vmatprep.subr.mxu0 0.0
        %2596 = vmatpush1.msra.mxu0 0.0
        %2597 = vmatprep.subr.mxu0 0.0
        %2598 = vmatpush1.msra.mxu0 0.0
        %2599 = vmatprep.subr.mxu0 0.0
        %2600 = vmatpush1.msra.mxu0 0.0
        %2601 = vmatprep.subr.mxu0 0.0
        %2602 = vmatpush1.msra.mxu0 0.0
        %2603 = vmatprep.subr.mxu0 0.0
        %2604 = vmatpush1.msra.mxu0 0.0
        %2605 = vmatprep.subr.mxu0 0.0
        %2606 = vmatpush1.msra.mxu0 0.0
        %2607 = vmatprep.subr.mxu0 0.0
        %2608 = vmatpush1.msra.mxu0 0.0
        %2609 = vmatprep.subr.mxu0 0.0
        %2610 = vmatpush1.msra.mxu0 0.0
        %2611 = vmatprep.mubr.f32.mxu0 0.0
        %2612 = vmatmul.mubr.f32.gmra.mrb[0].mxu0 %v2539
        %v2613 = vpop.f32.mrb[0].mxu0
        %v2614 = vadd.f32 %v2536, %v2613
        %v2615 = vpop.f32.mrb[0].mxu0
        %2616 = vmatprep.mubr.f32.mxu0 0.0
        %2617 = vmatmul.mubr.f32.gmra.mrb[0].mxu0 %v2542
        %v2618 = vpop.f32.mrb[0].mxu0
        %v2619 = vadd.f32 %v2536, %v2618
        %v2620 = vpop.f32.mrb[0].mxu0
        %2621 = vmatprep.mubr.f32.mxu0 0.0
        %2622 = vmatmul.mubr.f32.gmra.mrb[0].mxu0 %v2545
        %v2623 = vpop.f32.mrb[0].mxu0
        %v2624 = vadd.f32 %v2536, %v2623
        %v2625 = vpop.f32.mrb[0].mxu0
        %2626 = vdwg.mxu0
        %v2627 = vmul.f32 %v2614, 0.5
        %v2628 = vmul.f32 %v2619, 0.5
        %v2629 = vmul.f32 %v2624, 0.5
        %v2630 = vmul.f32 %v2614, 0.70710677
        %v2631 = vmul.f32 %v2619, 0.70710677
        %v2632 = vmul.f32 %v2624, 0.70710677
        %v2633 = verf.f32.pop %v2630
        %v2634 = verf.f32.pop %v2631
        %v2635 = verf.f32.pop %v2632
        %v2636 = vadd.f32 %v2633, 1.0
        %v2637 = vadd.f32 %v2634, 1.0
        %v2638 = vadd.f32 %v2635, 1.0
        %v2639 = vmul.f32 %v2627, %v2636
        %v2640 = vmul.f32 %v2628, %v2637
        %v2641 = vmul.f32 %v2629, %v2638
        %v2643 = vlaneseq
        %v2644 = vshrl.u32 %v2643, 7
        %v2645 = vsub.s32 0, %v2644
        %v2646 = vrot.slane %v987, %v2645
        %vm2648 = vcmask 523264
        %v2650 = vsel %vm2648, %v2639, 0
        %v2653 = vsel %vm2648, %v2640, 0
        %v2656 = vsel %vm2648, %v2641, 0
        %2658 = vmatprep.subr.mxu0 0.0
        %2659 = vmatpush1.msra.mxu0 %v979
        %2660 = vmatprep.subr.mxu0 0.0
        %2661 = vmatpush1.msra.mxu0 %v980
        %2662 = vmatprep.subr.mxu0 0.0
        %2663 = vmatpush1.msra.mxu0 %v981
        %2664 = vmatprep.subr.mxu0 0.0
        %2665 = vmatpush1.msra.mxu0 %v982
        %2666 = vmatprep.subr.mxu0 0.0
        %2667 = vmatpush1.msra.mxu0 %v983
        %2668 = vmatprep.subr.mxu0 0.0
        %2669 = vmatpush1.msra.mxu0 %v984
        %2670 = vmatprep.subr.mxu0 0.0
        %2671 = vmatpush1.msra.mxu0 %v985
        %2672 = vmatprep.subr.mxu0 0.0
        %2673 = vmatpush1.msra.mxu0 %v986
        %2674 = vmatprep.subr.mxu0 0.0
        %2675 = vmatpush1.msra.mxu0 0.0
        %2676 = vmatprep.subr.mxu0 0.0
        %2677 = vmatpush1.msra.mxu0 0.0
        %2678 = vmatprep.subr.mxu0 0.0
        %2679 = vmatpush1.msra.mxu0 0.0
        %2680 = vmatprep.subr.mxu0 0.0
        %2681 = vmatpush1.msra.mxu0 0.0
        %2682 = vmatprep.subr.mxu0 0.0
        %2683 = vmatpush1.msra.mxu0 0.0
        %2684 = vmatprep.subr.mxu0 0.0
        %2685 = vmatpush1.msra.mxu0 0.0
        %2686 = vmatprep.subr.mxu0 0.0
        %2687 = vmatpush1.msra.mxu0 0.0
        %2688 = vmatprep.subr.mxu0 0.0
        %2689 = vmatpush1.msra.mxu0 0.0
        %2690 = vmatprep.subr.mxu0 0.0
        %2691 = vmatpush1.msra.mxu0 0.0
        %2692 = vmatprep.subr.mxu0 0.0
        %2693 = vmatpush1.msra.mxu0 0.0
        %2694 = vmatprep.subr.mxu0 0.0
        %2695 = vmatpush1.msra.mxu0 0.0
        %2696 = vmatprep.subr.mxu0 0.0
        %2697 = vmatpush1.msra.mxu0 0.0
        %2698 = vmatprep.subr.mxu0 0.0
        %2699 = vmatpush1.msra.mxu0 0.0
        %2700 = vmatprep.subr.mxu0 0.0
        %2701 = vmatpush1.msra.mxu0 0.0
        %2702 = vmatprep.subr.mxu0 0.0
        %2703 = vmatpush1.msra.mxu0 0.0
        %2704 = vmatprep.subr.mxu0 0.0
        %2705 = vmatpush1.msra.mxu0 0.0
        %2706 = vmatprep.subr.mxu0 0.0
        %2707 = vmatpush1.msra.mxu0 0.0
        %2708 = vmatprep.subr.mxu0 0.0
        %2709 = vmatpush1.msra.mxu0 0.0
        %2710 = vmatprep.subr.mxu0 0.0
        %2711 = vmatpush1.msra.mxu0 0.0
        %2712 = vmatprep.subr.mxu0 0.0
        %2713 = vmatpush1.msra.mxu0 0.0
        %2714 = vmatprep.subr.mxu0 0.0
        %2715 = vmatpush1.msra.mxu0 0.0
        %2716 = vmatprep.subr.mxu0 0.0
        %2717 = vmatpush1.msra.mxu0 0.0
        %2718 = vmatprep.subr.mxu0 0.0
        %2719 = vmatpush1.msra.mxu0 0.0
        %2720 = vmatprep.subr.mxu0 0.0
        %2721 = vmatpush1.msra.mxu0 0.0
        %2722 = vmatprep.mubr.f32.mxu0 0.0
        %2723 = vmatmul.mubr.f32.gmra.mrb[0].mxu0 %v2650
        %v2724 = vpop.f32.mrb[0].mxu0
        %v2725 = vadd.f32 %v2646, %v2724
        %v2726 = vpop.f32.mrb[0].mxu0
        %2727 = vmatprep.mubr.f32.mxu0 0.0
        %2728 = vmatmul.mubr.f32.gmra.mrb[0].mxu0 %v2653
        %v2729 = vpop.f32.mrb[0].mxu0
        %v2730 = vadd.f32 %v2646, %v2729
        %v2731 = vpop.f32.mrb[0].mxu0
        %2732 = vmatprep.mubr.f32.mxu0 0.0
        %2733 = vmatmul.mubr.f32.gmra.mrb[0].mxu0 %v2656
        %v2734 = vpop.f32.mrb[0].mxu0
        %v2735 = vadd.f32 %v2646, %v2734
        %v2736 = vpop.f32.mrb[0].mxu0
        %2737 = vdwg.mxu0
        %v2738 = vadd.f32 %v2472, %v2725
        %v2739 = vadd.f32 %v2473, %v2730
        %v2740 = vadd.f32 %v2474, %v2735
        %2741 = vst.msk [vmem:[#allocation2] sm:$0xff] %vm988, %v2738
        %2742 = vst.msk [vmem:[#allocation2 + $0x8] sm:$0xff] %vm988, %v2739
        %2743 = vst.msk [vmem:[#allocation2 + $0x10] sm:$0x1] %vm995, %v2740
        // Predicated region
        $region105: #{mae_forward.5} parent=99 // pred_check
          %p2744 = pneg %p943
        $region106: #{mae_forward.5} parent=99 // pred_check_branch
          %2746 = sbr.rel (%p2744) target = $region108
        $region107: #{mae_forward.5} parent=99 // pred_region
          %v2747 = vld [vmem:[%s14] sm:$0x1]
          %v2748 = vld [vmem:[%s15] sm:$0x1]
          %vm2749 = vcmask 130049
          %v2750 = vsel %vm2749, %v2738, 0.0
          %2751 = vadd.xlane.f32.xlu0 %v2750
          %v2752 = vpop.xlane.xlu0 %2751
          %v2753 = vsel %vm988, %v2739, 0.0
          %2754 = vadd.xlane.f32.xlu0 %v2753
          %v2755 = vpop.xlane.xlu0 %2754
          %v2756 = vsel %vm995, %v2740, 0.0
          %2757 = vadd.xlane.f32.xlu0 %v2756
          %v2758 = vpop.xlane.xlu0 %2757
          %v2759 = vmul.f32 %v2752, %v999
          %v2760 = vmul.f32 %v2755, %v999
          %v2761 = vmul.f32 %v2758, %v999
          %v2762 = vsub.f32 %v2738, %v2759
          %v2763 = vsub.f32 %v2739, %v2760
          %v2764 = vsub.f32 %v2740, %v2761
          %v2765 = vmul.f32 %v2762, %v2762
          %v2766 = vmul.f32 %v2763, %v2763
          %v2767 = vmul.f32 %v2764, %v2764
          %v2768 = vsel %vm2749, %v2765, 0.0
          %2769 = vadd.xlane.f32.xlu0 %v2768
          %v2770 = vpop.xlane.xlu0 %2769
          %v2771 = vsel %vm988, %v2766, 0.0
          %2772 = vadd.xlane.f32.xlu0 %v2771
          %v2773 = vpop.xlane.xlu0 %2772
          %v2774 = vsel %vm995, %v2767, 0.0
          %2775 = vadd.xlane.f32.xlu0 %v2774
          %v2776 = vpop.xlane.xlu0 %2775
          %v2777 = vmul.f32 %v2770, %v999
          %v2778 = vmul.f32 %v2773, %v999
          %v2779 = vmul.f32 %v2776, %v999
          %v2780 = vadd.f32 %v2777, 1e-06
          %v2781 = vadd.f32 %v2778, 1e-06
          %v2782 = vadd.f32 %v2779, 1e-06
          %v2783 = vrsqrt.pop %v2780
          %v2784 = vrsqrt.pop %v2781
          %v2785 = vrsqrt.pop %v2782
          %v2786 = vmul.f32 %v2762, %v2783
          %v2787 = vmul.f32 %v2763, %v2784
          %v2788 = vmul.f32 %v2764, %v2785
          %v2790 = vlaneseq
          %v2791 = vshrl.u32 %v2790, 7
          %v2792 = vsub.s32 0, %v2791
          %v2793 = vrot.slane %v2747, %v2792
          %v2795 = vmul.f32 %v2786, %v2793
          %v2796 = vmul.f32 %v2787, %v2793
          %v2797 = vmul.f32 %v2788, %v2793
          %v2799 = vlaneseq
          %v2800 = vshrl.u32 %v2799, 7
          %v2801 = vsub.s32 0, %v2800
          %v2802 = vrot.slane %v2748, %v2801
          %v2804 = vadd.f32 %v2795, %v2802
          %v2805 = vadd.f32 %v2796, %v2802
          %v2806 = vadd.f32 %v2797, %v2802
          %v2807 = vld [vmem:[%s16] sm:$0xff]
          %v2808 = vld [vmem:[%s16 + $0x8] sm:$0xff]
          %v2809 = vld [vmem:[%s17] sm:$0x1]
          %v2811 = vlaneseq
          %v2812 = vshrl.u32 %v2811, 7
          %v2813 = vsub.s32 0, %v2812
          %v2814 = vrot.slane %v2809, %v2813
          %vm2819 = vcmask 1046528
          %v2820 = vrot.slane %v2804, 1
          %v2821 = vrot.slane %v2805, 1
          %v2822 = vsel %vm2819, %v2820, %v2821
          %v2823 = vrot.slane %v2806, 1
          %v2824 = vsel %vm2819, %v2821, %v2823
          %v2825 = vsel %vm988, %v2822, 0
          %v2827 = vsel %vm988, %v2824, 0
          %2829 = vmatprep.subr.mxu0 0.0
          %2830 = vmatpush1.msra.mxu0 %v2807
          %2831 = vmatprep.subr.mxu0 0.0
          %2832 = vmatpush1.msra.mxu0 %v2808
          %2833 = vmatprep.subr.mxu0 0.0
          %2834 = vmatpush1.msra.mxu0 0.0
          %2835 = vmatprep.subr.mxu0 0.0
          %2836 = vmatpush1.msra.mxu0 0.0
          %2837 = vmatprep.subr.mxu0 0.0
          %2838 = vmatpush1.msra.mxu0 0.0
          %2839 = vmatprep.subr.mxu0 0.0
          %2840 = vmatpush1.msra.mxu0 0.0
          %2841 = vmatprep.subr.mxu0 0.0
          %2842 = vmatpush1.msra.mxu0 0.0
          %2843 = vmatprep.subr.mxu0 0.0
          %2844 = vmatpush1.msra.mxu0 0.0
          %2845 = vmatprep.subr.mxu0 0.0
          %2846 = vmatpush1.msra.mxu0 0.0
          %2847 = vmatprep.subr.mxu0 0.0
          %2848 = vmatpush1.msra.mxu0 0.0
          %2849 = vmatprep.subr.mxu0 0.0
          %2850 = vmatpush1.msra.mxu0 0.0
          %2851 = vmatprep.subr.mxu0 0.0
          %2852 = vmatpush1.msra.mxu0 0.0
          %2853 = vmatprep.subr.mxu0 0.0
          %2854 = vmatpush1.msra.mxu0 0.0
          %2855 = vmatprep.subr.mxu0 0.0
          %2856 = vmatpush1.msra.mxu0 0.0
          %2857 = vmatprep.subr.mxu0 0.0
          %2858 = vmatpush1.msra.mxu0 0.0
          %2859 = vmatprep.subr.mxu0 0.0
          %2860 = vmatpush1.msra.mxu0 0.0
          %2861 = vmatprep.subr.mxu0 0.0
          %2862 = vmatpush1.msra.mxu0 0.0
          %2863 = vmatprep.subr.mxu0 0.0
          %2864 = vmatpush1.msra.mxu0 0.0
          %2865 = vmatprep.subr.mxu0 0.0
          %2866 = vmatpush1.msra.mxu0 0.0
          %2867 = vmatprep.subr.mxu0 0.0
          %2868 = vmatpush1.msra.mxu0 0.0
          %2869 = vmatprep.subr.mxu0 0.0
          %2870 = vmatpush1.msra.mxu0 0.0
          %2871 = vmatprep.subr.mxu0 0.0
          %2872 = vmatpush1.msra.mxu0 0.0
          %2873 = vmatprep.subr.mxu0 0.0
          %2874 = vmatpush1.msra.mxu0 0.0
          %2875 = vmatprep.subr.mxu0 0.0
          %2876 = vmatpush1.msra.mxu0 0.0
          %2877 = vmatprep.subr.mxu0 0.0
          %2878 = vmatpush1.msra.mxu0 0.0
          %2879 = vmatprep.subr.mxu0 0.0
          %2880 = vmatpush1.msra.mxu0 0.0
          %2881 = vmatprep.subr.mxu0 0.0
          %2882 = vmatpush1.msra.mxu0 0.0
          %2883 = vmatprep.subr.mxu0 0.0
          %2884 = vmatpush1.msra.mxu0 0.0
          %2885 = vmatprep.subr.mxu0 0.0
          %2886 = vmatpush1.msra.mxu0 0.0
          %2887 = vmatprep.subr.mxu0 0.0
          %2888 = vmatpush1.msra.mxu0 0.0
          %2889 = vmatprep.subr.mxu0 0.0
          %2890 = vmatpush1.msra.mxu0 0.0
          %2891 = vmatprep.subr.mxu0 0.0
          %2892 = vmatpush1.msra.mxu0 0.0
          %2893 = vmatprep.mubr.f32.mxu0 0.0
          %2894 = vmatmul.mubr.f32.gmra.mrb[0].mxu0 %v2825
          %v2895 = vpop.f32.mrb[0].mxu0
          %v2896 = vadd.f32 %v2814, %v2895
          %v2897 = vpop.f32.mrb[0].mxu0
          %2898 = vmatprep.mubr.f32.mxu0 0.0
          %2899 = vmatmul.mubr.f32.gmra.mrb[0].mxu0 %v2827
          %v2900 = vpop.f32.mrb[0].mxu0
          %v2901 = vadd.f32 %v2814, %v2900
          %v2902 = vpop.f32.mrb[0].mxu0
          %2903 = vdwg.mxu0
          %vm2904 = vcmask 392192
          %2905 = vst.msk [vmem:[%s867] sm:$0xff] %vm2904, %v2896
          %2906 = vst.msk [vmem:[%s867 + $0x8] sm:$0xff] %vm2904, %v2901
          %v2907 = vld [vmem:[%s931] sm:$0xff]
          %v2908 = vld [vmem:[%s931 + $0x8] sm:$0xff]
          %v2909 = vsub.f32 %v2896, %v2907
          %v2910 = vsub.f32 %v2901, %v2908
          %v2911 = vmul.f32 %v2909, %v2909
          %v2912 = vmul.f32 %v2910, %v2910
          %v2913 = vsel %vm2904, %v2911, 0.0
          %2914 = vadd.xlane.f32.xlu0 %v2913
          %v2915 = vpop.xlane.xlu0 %2914
          %v2916 = vsel %vm2904, %v2912, 0.0
          %2917 = vadd.xlane.f32.xlu0 %v2916
          %v2918 = vpop.xlane.xlu0 %2917
          %v2919 = vrcp.pop 48.0
          %v2920 = vmul.f32 %v2915, %v2919
          %v2921 = vmul.f32 %v2918, %v2919
          %v2922 = vld [vmem:[%s936] sm:$0xff]
          %v2923 = vld [vmem:[%s936 + $0x8] sm:$0xff]
          %v2924 = vmul.f32 %v2920, %v2922
          %v2925 = vmul.f32 %v2921, %v2923
          %vm2926 = vcmask 7168
          %v2927 = vsel %vm2926, %v2924, 0.0
          %v2928 = vsel %vm2926, %v2925, 0.0
          %v2929 = vadd.f32 %v2927, %v2928
          %2930 = vadd.xlane.f32.xlu0 %v2929
          %v2931 = vpop.xlane.xlu0 %2930
          %v2932 = vrot.slane %v2931, 4
          %v2933 = vadd.f32 %v2931, %v2932
          %v2934 = vrot.slane %v2933, 2
          %v2935 = vadd.f32 %v2933, %v2934
          %v2936 = vrot.slane %v2935, 1
          %v2937 = vadd.f32 %v2935, %v2936
          %s2938 = vtos %v2937
          %v2939 = vstv %s2938
          %vm2940 = vcmask 0
          %2941 = vst.msk [vmem:[%s939] sm:$0x1] %vm2940, %v2939
          %v2942 = vsel %vm2926, %v2922, 0.0
          %v2943 = vsel %vm2926, %v2923, 0.0
          %v2944 = vadd.f32 %v2942, %v2943
          %2945 = vadd.xlane.f32.xlu0 %v2944
          %v2946 = vpop.xlane.xlu0 %2945
          %v2947 = vrot.slane %v2946, 4
          %v2948 = vadd.f32 %v2946, %v2947
          %v2949 = vrot.slane %v2948, 2
          %v2950 = vadd.f32 %v2948, %v2949
          %v2951 = vrot.slane %v2950, 1
          %v2952 = vadd.f32 %v2950, %v2951
          %s2953 = vtos %v2952
          %v2954 = vstv %s2953
          %2955 = vst.msk [vmem:[%s942] sm:$0x1] %vm2940, %v2954
        $region108: #{mae_forward.5} parent=99 // pred_fallthru
          _
        %s2956 = sand.u32 %s552, 1
        %s2957 = scalar_lea.sflag [#allocation4], %s2956
        %s2958 = sand.u32 %s552, 1
        %s2959 = smul.addr %s2958, 16
        %s2960 = scalar_lea.vmem [#allocation3], %s2959
        %p2961 = scmp.lt.s32.totalorder %s41, 1
        %s2962 = scalar_select %p2961, %s41, 1
        %s2963 = scalar_lea.vmem %s21, %s2962
        %p2964 = scmp.lt.s32.totalorder %s41, 1
        %s2965 = scalar_select %p2964, %s41, 1
        %s2966 = scalar_lea.vmem %s22, %s2965
        // Predicated region
        $region109: #{mae_forward.5} parent=99 // pred_check
          %p2967 = pneg %p562
        $region110: #{mae_forward.5} parent=99 // pred_check_branch
          %2969 = sbr.rel (%p2967) target = $region112
        $region111: #{mae_forward.5} parent=99 // pred_region
          %s2971 = ssub.s32 256, 256
          %2972 = vsyncadd %s2957, %s2971
          %s2973 = smul.addr %s41, 2
          %s2974 = smul.addr %s2973, 128
          %s2975 = scalar_lea.hbm %s20, %s2974
          %s2976 = sshll.u32 %s2960, 4
          %s2977 = int_to_ptr.vmem [resolvable:$true] %s2976
          %2982 = dma.vmem_to_hbm [thread:$0]  %s2977, 256, %s2975, %s2957, 128, 128, 8
        $region112: #{mae_forward.5} parent=99 // pred_fallthru
          _
        // Predicated region
        $region113: #{mae_forward.5} parent=99 // pred_check
          %p2983 = pneg %p588
        $region114: #{mae_forward.5} parent=99 // pred_check_branch
          %2985 = sbr.rel (%p2983) target = $region116
        $region115: #{mae_forward.5} parent=99 // pred_region
          _
        $region116: #{mae_forward.5} parent=99 // pred_fallthru
          _
        // Predicated region
        $region117: #{mae_forward.5} parent=99 // pred_check
          %p2986 = pneg %p614
        $region118: #{mae_forward.5} parent=99 // pred_check_branch
          %2988 = sbr.rel (%p2986) target = $region120
        $region119: #{mae_forward.5} parent=99 // pred_region
          _
        $region120: #{mae_forward.5} parent=99 // pred_fallthru
          _
      $region100: #{mae_forward.5} parent=5 // pred_fallthru
        _
      %p2989 = scmp.le.s32.totalorder 2, %s32
      // Predicated region
      $region121: #{mae_forward.5} parent=5 // pred_check
        %p2990 = pneg %p2989
      $region122: #{mae_forward.5} parent=5 // pred_check_branch
        %2992 = sbr.rel (%p2990) target = $region124
      $region123: #{mae_forward.5} parent=5 // pred_region
        %s2993 = ssub.s32 %s32, 2
        // Predicated region
        $region125: #{mae_forward.5} parent=123 // pred_check
          %p2994 = pneg %p568
        $region126: #{mae_forward.5} parent=123 // pred_check_branch
          %2996 = sbr.rel (%p2994) target = $region128
        $region127: #{mae_forward.5} parent=123 // pred_region
          %s2997 = sand.u32 %s553, 1
          %s2998 = scalar_lea.sflag [#allocation4], %s2997
          %s2999 = sand.u32 %s553, 1
          %s3000 = smul.addr %s2999, 16
          %s3001 = scalar_lea.vmem [#allocation3], %s3000
          %3002 = dma.done %s2998, 256
        $region128: #{mae_forward.5} parent=123 // pred_fallthru
          _
        // Predicated region
        $region129: #{mae_forward.5} parent=123 // pred_check
          %p3003 = pneg %p594
        $region130: #{mae_forward.5} parent=123 // pred_check_branch
          %3005 = sbr.rel (%p3003) target = $region132
        $region131: #{mae_forward.5} parent=123 // pred_region
          %p3006 = scmp.lt.s32.totalorder %s43, 1
          %s3007 = scalar_select %p3006, %s43, 1
          %s3008 = scalar_lea.vmem %s21, %s3007
        $region132: #{mae_forward.5} parent=123 // pred_fallthru
          _
        // Predicated region
        $region133: #{mae_forward.5} parent=123 // pred_check
          %p3009 = pneg %p620
        $region134: #{mae_forward.5} parent=123 // pred_check_branch
          %3011 = sbr.rel (%p3009) target = $region136
        $region135: #{mae_forward.5} parent=123 // pred_region
          %p3012 = scmp.lt.s32.totalorder %s43, 1
          %s3013 = scalar_select %p3012, %s43, 1
          %s3014 = scalar_lea.vmem %s22, %s3013
        $region136: #{mae_forward.5} parent=123 // pred_fallthru
          _
      $region124: #{mae_forward.5} parent=5 // pred_fallthru
        _
    $region6: #{mae_forward.5} parent=1 // loop_footer
      %s36 = sadd.s32 1, %s32
    $region7: #{mae_forward.5} parent=1 // loop_footer_branch
      %31 = sbr.rel target = $region3
    $region8: #{mae_forward.5} parent=1 // loop_exit
      _
    %3015 = vsyncpa [#allocation4], 1
    %s3016 = scalar_lea.sflag [#allocation4], 1
    %3017 = vsyncpa %s3016, 1

</llo_original>
